<compile_context>
chip_gen: v6e
topology: v6e:2x2x1
jax: 0.10.0
libtpu: 0.0.40
codegen_flags: <defaults>
</compile_context>

<pallas_src>
import functools

import jax
import jax.numpy as jnp
from jax.experimental import pallas as pl
from jax.experimental.pallas import tpu as pltpu

EPS = 1e-5


def _spec(shape):
    # Whole-array VMEM block on the trivial (1,) grid.
    return pl.BlockSpec(shape, lambda i: (0,) * len(shape))


def _decoder_block_kernel(xa_ref, xb_ref, g1a_ref, b1a_ref, g1b_ref, b1b_ref,
                          w_ref, g2_ref, b2_ref, bs_ref, alpha_ref,
                          o_ref, y1pad_ref, patch_ref,
                          *, N, H, W, Ci, Cm, CP):
    Cin = Ci + Cm
    NHW = N * H * W
    inv_n = 1.0 / NHW
    a1 = alpha_ref[0]                       # PReLU alphas live in SMEM
    a2 = alpha_ref[1]

    # Zero the padded BN1/PReLU buffer once: this provides the true zero 'same'
    # padding of conv c1's *input* (i.e. after BN1/PReLU1), with no mask multiply.
    y1pad_ref[...] = jnp.zeros_like(y1pad_ref)

    xa = xa_ref[...].reshape(NHW, Ci)       # raw upsampled channels (pre-BN)
    xb = xb_ref[...].reshape(NHW, Cm)       # raw skip channels (pre-BN)

    def bn1_prelu(xf, g, b):
        # training-mode BN (biased variance, centered two-pass) + shared-alpha PReLU
        mean = jnp.sum(xf, axis=0, keepdims=True) * inv_n
        xc = xf - mean
        var = jnp.sum(xc * xc, axis=0, keepdims=True) * inv_n
        y = xc * (jax.lax.rsqrt(var + EPS) * g) + b
        return jnp.where(y >= 0.0, y, a1 * y)

    # BN stats are per-channel, so the two channel groups of the concat can be
    # normalized independently (identical to BN over the concatenated tensor).
    ya = bn1_prelu(xa, g1a_ref[...], b1a_ref[...])      # (NHW, Ci)
    yb = bn1_prelu(xb, g1b_ref[...], b1b_ref[...])      # (NHW, Cm)

    # Channel-concat happens for free via the two lane-offset interior stores.
    y1pad_ref[:, 1:H + 1, 1:W + 1, 0:Ci] = ya.reshape(N, H, W, Ci)
    y1pad_ref[:, 1:H + 1, 1:W + 1, Ci:Cin] = yb.reshape(N, H, W, Cm)

    # ---- build [im2col(y1) | x_raw] patch matrix (bf16) directly in VMEM scratch ----
    for t in range(9):
        dy, dx = t // 3, t % 3
        tap = y1pad_ref[:, dy:dy + H, dx:dx + W, :]                     # (N,H,W,Cin)
        patch_ref[:, t * Cin:(t + 1) * Cin] = (
            tap.reshape(NHW, Cin).astype(jnp.bfloat16))
    patch_ref[:, 9 * Cin:9 * Cin + Ci] = xa.astype(jnp.bfloat16)        # raw concat
    patch_ref[:, 9 * Cin + Ci:10 * Cin] = xb.astype(jnp.bfloat16)       # for shortcut

    # ---- ONE MXU pass: [z | s] = [im2col | x_raw] @ [[W_c1, 0], [0, W_s]] ----
    big = jnp.dot(patch_ref[...], w_ref[...], preferred_element_type=jnp.float32)
    z = big[:, :CP]                   # 3x3 conv output; c1's bias is omitted because
                                      # BN2's mean subtraction cancels it exactly.
    s = big[:, CP:] + bs_ref[...]     # 1x1 shortcut (with bias) on the raw input.

    # ---- BN2 + PReLU2 (padded channels are all-zero and stay zero) ----
    mean2 = jnp.sum(z, axis=0, keepdims=True) * inv_n
    zc = z - mean2
    var2 = jnp.sum(zc * zc, axis=0, keepdims=True) * inv_n
    y2 = zc * (jax.lax.rsqrt(var2 + EPS) * g2_ref[...]) + b2_ref[...]
    y2 = jnp.where(y2 >= 0.0, y2, a2 * y2)

    # c2 skipped: the reference computes `x - self.c2(x)` and discards the result.
    o_ref[...] = y2 + s               # lane-dense (CP = multiple of 128) store


def decoder_block_forward(params, inputs_nchw, skip_nchw):
    """inputs: (N, Ci, Hs, Ws); skip: (N, Cm, 2*Hs, 2*Ws); returns NCHW (N, Cout, H, W)."""
    N, Ci, Hs, Ws = inputs_nchw.shape
    _, Cm, H, W = skip_nchw.shape
    assert H == 2 * Hs and W == 2 * Ws
    Cin = Ci + Cm
    Cout = params["w1"].shape[-1]
    CP = max(128, ((Cout + 127) // 128) * 128)     # lane-dense padded output channels
    NHW = N * H * W
    f32 = jnp.float32

    # TODO(synk): the nearest-x2 upsample along W needs a sublane interleave Mosaic
    # lowers poorly, so the NCHW<->NHWC transposes and the broadcast-reshape upsample
    # stay as (fused) XLA glue; all compute-heavy work runs in the single pallas_call.
    xa = jnp.transpose(inputs_nchw, (0, 2, 3, 1)).astype(f32)              # (N,Hs,Ws,Ci)
    xa = jnp.broadcast_to(xa[:, :, None, :, None, :],
                          (N, Hs, 2, Ws, 2, Ci)).reshape(N, H, W, Ci)      # nearest x2
    xb = jnp.transpose(skip_nchw, (0, 2, 3, 1)).astype(f32)                # (N,H,W,Cm)

    # Block-structured merged weight producing [z | s]; bf16 operands, f32 accumulate.
    w_big = jnp.zeros((10 * Cin, 2 * CP), f32)
    w_big = w_big.at[:9 * Cin, :Cout].set(params["w1"].reshape(9 * Cin, Cout))
    w_big = w_big.at[9 * Cin:, CP:CP + Cout].set(params["ws"])
    w_big = w_big.astype(jnp.bfloat16)

    def pad_c(v):                                   # (Cout,) -> zero-padded (1, CP)
        return jnp.pad(v.astype(f32), (0, CP - Cout)).reshape(1, CP)

    g1a = params["gamma1"][:Ci].reshape(1, Ci)
    b1a = params["beta1"][:Ci].reshape(1, Ci)
    g1b = params["gamma1"][Ci:].reshape(1, Cm)
    b1b = params["beta1"][Ci:].reshape(1, Cm)
    alphas = jnp.concatenate([params["alpha1"], params["alpha2"]]).astype(f32)  # (2,)

    kern = functools.partial(_decoder_block_kernel,
                             N=N, H=H, W=W, Ci=Ci, Cm=Cm, CP=CP)

    flops = 2 * NHW * (10 * Cin) * (2 * CP)
    bytes_accessed = 4 * (xa.size + xb.size + NHW * CP) + 2 * w_big.size

    # TODO(synk): grid=(1,) whole-problem-in-VMEM is sized for these toy shapes; real
    # decoder resolutions need row/batch tiling + two-pass BN stats and a parallel
    # grid axis to use v7x's second TensorCore.
    out2d = pl.pallas_call(
        kern,
        grid=(1,),
        out_shape=jax.ShapeDtypeStruct((NHW, CP), f32),
        in_specs=[
            _spec(xa.shape),                  # upsampled input channels
            _spec(xb.shape),                  # skip channels
            _spec((1, Ci)), _spec((1, Ci)),   # gamma1 / beta1 (upsampled part)
            _spec((1, Cm)), _spec((1, Cm)),   # gamma1 / beta1 (skip part)
            _spec(w_big.shape),               # merged [conv3x3 | shortcut] weight
            _spec((1, CP)), _spec((1, CP)),   # gamma2 / beta2 (padded)
            _spec((1, CP)),                   # shortcut bias (padded)
            pl.BlockSpec((2,), lambda i: (0,),
                         memory_space=pltpu.MemorySpace.SMEM),   # PReLU alphas
        ],
        out_specs=_spec((NHW, CP)),
        scratch_shapes=[
            pltpu.VMEM((N, H + 2, W + 2, Cin), f32),      # zero-padded BN1/PReLU buffer
            pltpu.VMEM((NHW, 10 * Cin), jnp.bfloat16),    # [im2col | raw] patch matrix
        ],
        compiler_params=pltpu.CompilerParams(
            dimension_semantics=("arbitrary",),
            vmem_limit_bytes=32 * 1024 * 1024,
        ),
        cost_estimate=pl.CostEstimate(flops=flops, transcendentals=0,
                                      bytes_accessed=bytes_accessed),
    )(xa, xb, g1a, b1a, g1b, b1b, w_big,
      pad_c(params["gamma2"]), pad_c(params["beta2"]), pad_c(params["bs"]), alphas)

    out = out2d[:, :Cout].reshape(N, H, W, Cout)
    return jnp.transpose(out, (0, 3, 1, 2))                                # NHWC -> NCHW


# ---------------- parameter init (deterministic, PyTorch-like defaults) ----------------

def init_params(key, input_ch, mid_channel, output_ch):
    cin = input_ch + mid_channel
    k1, k2, k3, k4 = jax.random.split(key, 4)
    bound1 = 1.0 / (cin * 9) ** 0.5      # Conv2d default init range (fan_in = 9*cin)
    bound_s = 1.0 / cin ** 0.5           # 1x1 conv (fan_in = cin)
    return {
        # b1: BatchNorm2d + PReLU (fresh-module defaults)
        "gamma1": jnp.ones((cin,), jnp.float32),
        "beta1": jnp.zeros((cin,), jnp.float32),
        "alpha1": jnp.full((1,), 0.25, jnp.float32),
        # c1: 3x3 conv (HWIO).  Its bias exists in the module but is exactly
        # cancelled by BN2's mean subtraction (training mode), so it is unused.
        "w1": jax.random.uniform(k1, (3, 3, cin, output_ch), jnp.float32,
                                 -bound1, bound1),
        "b1": jax.random.uniform(k2, (output_ch,), jnp.float32, -bound1, bound1),
        # b2: BatchNorm2d + PReLU
        "gamma2": jnp.ones((output_ch,), jnp.float32),
        "beta2": jnp.zeros((output_ch,), jnp.float32),
        "alpha2": jnp.full((1,), 0.25, jnp.float32),
        # c2's output is discarded in the reference forward -> no params needed.
        # s: 1x1 shortcut conv
        "ws": jax.random.uniform(k3, (cin, output_ch), jnp.float32, -bound_s, bound_s),
        "bs": jax.random.uniform(k4, (output_ch,), jnp.float32, -bound_s, bound_s),
    }


if __name__ == "__main__":
    key = jax.random.PRNGKey(0)
    pkey, k_in, k_skip = jax.random.split(key, 3)

    N, Ci, Cm, Co = 2, 32, 32, 32
    Hs = Ws = 8                                   # decoder input is half resolution
    params = init_params(pkey, Ci, Cm, Co)
    inputs = jax.random.normal(k_in, (N, Ci, Hs, Ws), dtype=jnp.float32)
    skip = jax.random.normal(k_skip, (N, Cm, 2 * Hs, 2 * Ws), dtype=jnp.float32)

    out = jax.jit(decoder_block_forward)(params, inputs, skip)
    out = jax.block_until_ready(out)

    assert out.shape == (N, Co, 2 * Hs, 2 * Ws), out.shape
    assert out.dtype == jnp.float32
    assert bool(jnp.all(jnp.isfinite(out)))
    print("KERNEL_OK")
</pallas_src>

<mosaic_0001>
module attributes {stable_mosaic.version = 11 : i64} {
  func.func @_decoder_block_kernel(%arg0: i32, %arg1: memref<2x16x16x32xf32, #tpu.memory_space<vmem>>, %arg2: memref<2x16x16x32xf32, #tpu.memory_space<vmem>>, %arg3: memref<1x32xf32, #tpu.memory_space<vmem>>, %arg4: memref<1x32xf32, #tpu.memory_space<vmem>>, %arg5: memref<1x32xf32, #tpu.memory_space<vmem>>, %arg6: memref<1x32xf32, #tpu.memory_space<vmem>>, %arg7: memref<640x256xbf16, #tpu.memory_space<vmem>>, %arg8: memref<1x128xf32, #tpu.memory_space<vmem>>, %arg9: memref<1x128xf32, #tpu.memory_space<vmem>>, %arg10: memref<1x128xf32, #tpu.memory_space<vmem>>, %arg11: memref<2xf32, #tpu.memory_space<smem>>, %arg12: memref<512x128xf32, #tpu.memory_space<vmem>>, %arg13: memref<2x18x18x64xf32, #tpu.memory_space<vmem>>, %arg14: memref<512x640xbf16, #tpu.memory_space<vmem>>) attributes {dimension_semantics = [#tpu.dimension_semantics<arbitrary>], iteration_bounds = array<i64: 1>, scalar_prefetch = 0 : i64, scratch_operands = 2 : i64, tpu.core_type = #tpu.core_type<tc>, window_params = [{pipeline_mode = #tpu.pipeline_mode<synchronous>, transform_indices = @transform_0, window_bounds = array<i64: 2, 16, 16, 32>}, {pipeline_mode = #tpu.pipeline_mode<synchronous>, transform_indices = @transform_1, window_bounds = array<i64: 2, 16, 16, 32>}, {pipeline_mode = #tpu.pipeline_mode<synchronous>, transform_indices = @transform_2, window_bounds = array<i64: 1, 32>}, {pipeline_mode = #tpu.pipeline_mode<synchronous>, transform_indices = @transform_3, window_bounds = array<i64: 1, 32>}, {pipeline_mode = #tpu.pipeline_mode<synchronous>, transform_indices = @transform_4, window_bounds = array<i64: 1, 32>}, {pipeline_mode = #tpu.pipeline_mode<synchronous>, transform_indices = @transform_5, window_bounds = array<i64: 1, 32>}, {pipeline_mode = #tpu.pipeline_mode<synchronous>, transform_indices = @transform_6, window_bounds = array<i64: 640, 256>}, {pipeline_mode = #tpu.pipeline_mode<synchronous>, transform_indices = @transform_7, window_bounds = array<i64: 1, 128>}, {pipeline_mode = #tpu.pipeline_mode<synchronous>, transform_indices = @transform_8, window_bounds = array<i64: 1, 128>}, {pipeline_mode = #tpu.pipeline_mode<synchronous>, transform_indices = @transform_9, window_bounds = array<i64: 1, 128>}, {transform_indices = @transform_10, window_bounds = array<i64: 2>}, {pipeline_mode = #tpu.pipeline_mode<synchronous>, transform_indices = @transform_11, window_bounds = array<i64: 512, 128>}]} {
    %c0 = arith.constant 0 : index
    %0 = memref.load %arg11[%c0] : memref<2xf32, #tpu.memory_space<smem>>
    %c1 = arith.constant 1 : index
    %1 = memref.load %arg11[%c1] : memref<2xf32, #tpu.memory_space<smem>>
    %cst = arith.constant 0.000000e+00 : f32
    %2 = vector.broadcast %cst : f32 to vector<2x18x18x64xf32>
    %c0_0 = arith.constant 0 : index
    %c0_1 = arith.constant 0 : index
    %c0_2 = arith.constant 0 : index
    %c0_3 = arith.constant 0 : index
    %3 = vector.load %arg13[%c0_0, %c0_1, %c0_2, %c0_3] : memref<2x18x18x64xf32, #tpu.memory_space<vmem>>, vector<2x18x18x64xf32>
    tpu.vector_store %arg13[%c0_0, %c0_1, %c0_2, %c0_3], %2 {strides = array<i32>} : memref<2x18x18x64xf32, #tpu.memory_space<vmem>>, vector<2x18x18x64xf32>,
    %c0_4 = arith.constant 0 : index
    %c0_5 = arith.constant 0 : index
    %c0_6 = arith.constant 0 : index
    %c0_7 = arith.constant 0 : index
    %4 = vector.load %arg1[%c0_4, %c0_5, %c0_6, %c0_7] : memref<2x16x16x32xf32, #tpu.memory_space<vmem>>, vector<2x16x16x32xf32>
    %5 = vector.shape_cast %4 : vector<2x16x16x32xf32> to vector<512x32xf32>
    %c0_8 = arith.constant 0 : index
    %c0_9 = arith.constant 0 : index
    %c0_10 = arith.constant 0 : index
    %c0_11 = arith.constant 0 : index
    %6 = vector.load %arg2[%c0_8, %c0_9, %c0_10, %c0_11] : memref<2x16x16x32xf32, #tpu.memory_space<vmem>>, vector<2x16x16x32xf32>
    %7 = vector.shape_cast %6 : vector<2x16x16x32xf32> to vector<512x32xf32>
    %c0_12 = arith.constant 0 : index
    %c0_13 = arith.constant 0 : index
    %8 = vector.load %arg3[%c0_12, %c0_13] : memref<1x32xf32, #tpu.memory_space<vmem>>, vector<1x32xf32>
    %c0_14 = arith.constant 0 : index
    %c0_15 = arith.constant 0 : index
    %9 = vector.load %arg4[%c0_14, %c0_15] : memref<1x32xf32, #tpu.memory_space<vmem>>, vector<1x32xf32>
    %cst_16 = arith.constant dense<0.000000e+00> : vector<32xf32>
    %10 = vector.multi_reduction <add>, %5, %cst_16 [0] : vector<512x32xf32> to vector<32xf32>
    %11 = vector.shape_cast %10 : vector<32xf32> to vector<1x32xf32>
    %cst_17 = arith.constant 0.001953125 : f32
    %12 = vector.broadcast %cst_17 : f32 to vector<1x32xf32>
    %13 = arith.mulf %11, %12 : vector<1x32xf32>
    %14 = vector.broadcast %13 : vector<1x32xf32> to vector<512x32xf32>
    %15 = arith.subf %5, %14 : vector<512x32xf32>
    %16 = arith.mulf %15, %15 : vector<512x32xf32>
    %cst_18 = arith.constant dense<0.000000e+00> : vector<32xf32>
    %17 = vector.multi_reduction <add>, %16, %cst_18 [0] : vector<512x32xf32> to vector<32xf32>
    %18 = vector.shape_cast %17 : vector<32xf32> to vector<1x32xf32>
    %cst_19 = arith.constant 0.001953125 : f32
    %19 = vector.broadcast %cst_19 : f32 to vector<1x32xf32>
    %20 = arith.mulf %18, %19 : vector<1x32xf32>
    %cst_20 = arith.constant 9.99999974E-6 : f32
    %21 = vector.broadcast %cst_20 : f32 to vector<1x32xf32>
    %22 = arith.addf %20, %21 : vector<1x32xf32>
    %23 = math.rsqrt %22 : vector<1x32xf32>
    %24 = arith.mulf %23, %8 : vector<1x32xf32>
    %25 = vector.broadcast %24 : vector<1x32xf32> to vector<512x32xf32>
    %26 = arith.mulf %15, %25 : vector<512x32xf32>
    %27 = vector.broadcast %9 : vector<1x32xf32> to vector<512x32xf32>
    %28 = arith.addf %26, %27 : vector<512x32xf32>
    %cst_21 = arith.constant 0.000000e+00 : f32
    %29 = vector.broadcast %cst_21 : f32 to vector<512x32xf32>
    %30 = arith.cmpf oge, %28, %29 : vector<512x32xf32>
    %31 = vector.broadcast %0 : f32 to vector<512x32xf32>
    %32 = arith.mulf %31, %28 : vector<512x32xf32>
    %33 = arith.select %30, %28, %32 : vector<512x32xi1>, vector<512x32xf32>
    %c0_22 = arith.constant 0 : index
    %c0_23 = arith.constant 0 : index
    %34 = vector.load %arg5[%c0_22, %c0_23] : memref<1x32xf32, #tpu.memory_space<vmem>>, vector<1x32xf32>
    %c0_24 = arith.constant 0 : index
    %c0_25 = arith.constant 0 : index
    %35 = vector.load %arg6[%c0_24, %c0_25] : memref<1x32xf32, #tpu.memory_space<vmem>>, vector<1x32xf32>
    %cst_26 = arith.constant dense<0.000000e+00> : vector<32xf32>
    %36 = vector.multi_reduction <add>, %7, %cst_26 [0] : vector<512x32xf32> to vector<32xf32>
    %37 = vector.shape_cast %36 : vector<32xf32> to vector<1x32xf32>
    %cst_27 = arith.constant 0.001953125 : f32
    %38 = vector.broadcast %cst_27 : f32 to vector<1x32xf32>
    %39 = arith.mulf %37, %38 : vector<1x32xf32>
    %40 = vector.broadcast %39 : vector<1x32xf32> to vector<512x32xf32>
    %41 = arith.subf %7, %40 : vector<512x32xf32>
    %42 = arith.mulf %41, %41 : vector<512x32xf32>
    %cst_28 = arith.constant dense<0.000000e+00> : vector<32xf32>
    %43 = vector.multi_reduction <add>, %42, %cst_28 [0] : vector<512x32xf32> to vector<32xf32>
    %44 = vector.shape_cast %43 : vector<32xf32> to vector<1x32xf32>
    %cst_29 = arith.constant 0.001953125 : f32
    %45 = vector.broadcast %cst_29 : f32 to vector<1x32xf32>
    %46 = arith.mulf %44, %45 : vector<1x32xf32>
    %cst_30 = arith.constant 9.99999974E-6 : f32
    %47 = vector.broadcast %cst_30 : f32 to vector<1x32xf32>
    %48 = arith.addf %46, %47 : vector<1x32xf32>
    %49 = math.rsqrt %48 : vector<1x32xf32>
    %50 = arith.mulf %49, %34 : vector<1x32xf32>
    %51 = vector.broadcast %50 : vector<1x32xf32> to vector<512x32xf32>
    %52 = arith.mulf %41, %51 : vector<512x32xf32>
    %53 = vector.broadcast %35 : vector<1x32xf32> to vector<512x32xf32>
    %54 = arith.addf %52, %53 : vector<512x32xf32>
    %cst_31 = arith.constant 0.000000e+00 : f32
    %55 = vector.broadcast %cst_31 : f32 to vector<512x32xf32>
    %56 = arith.cmpf oge, %54, %55 : vector<512x32xf32>
    %57 = vector.broadcast %0 : f32 to vector<512x32xf32>
    %58 = arith.mulf %57, %54 : vector<512x32xf32>
    %59 = arith.select %56, %54, %58 : vector<512x32xi1>, vector<512x32xf32>
    %60 = vector.shape_cast %33 : vector<512x32xf32> to vector<2x16x16x32xf32>
    %c0_32 = arith.constant 0 : index
    %c1_33 = arith.constant 1 : index
    %c1_34 = arith.constant 1 : index
    %c0_35 = arith.constant 0 : index
    %61 = vector.load %arg13[%c0_32, %c1_33, %c1_34, %c0_35] : memref<2x18x18x64xf32, #tpu.memory_space<vmem>>, vector<2x16x16x32xf32>
    tpu.vector_store %arg13[%c0_32, %c1_33, %c1_34, %c0_35], %60 {strides = array<i32>} : memref<2x18x18x64xf32, #tpu.memory_space<vmem>>, vector<2x16x16x32xf32>,
    %62 = vector.shape_cast %59 : vector<512x32xf32> to vector<2x16x16x32xf32>
    %c0_36 = arith.constant 0 : index
    %c1_37 = arith.constant 1 : index
    %c1_38 = arith.constant 1 : index
    %c32 = arith.constant 32 : index
    %63 = vector.load %arg13[%c0_36, %c1_37, %c1_38, %c32] : memref<2x18x18x64xf32, #tpu.memory_space<vmem>>, vector<2x16x16x32xf32>
    tpu.vector_store %arg13[%c0_36, %c1_37, %c1_38, %c32], %62 {strides = array<i32>} : memref<2x18x18x64xf32, #tpu.memory_space<vmem>>, vector<2x16x16x32xf32>,
    %c0_39 = arith.constant 0 : index
    %c0_40 = arith.constant 0 : index
    %c0_41 = arith.constant 0 : index
    %c0_42 = arith.constant 0 : index
    %64 = vector.load %arg13[%c0_39, %c0_40, %c0_41, %c0_42] : memref<2x18x18x64xf32, #tpu.memory_space<vmem>>, vector<2x16x16x64xf32>
    %65 = vector.shape_cast %64 : vector<2x16x16x64xf32> to vector<512x64xf32>
    %66 = arith.truncf %65 : vector<512x64xf32> to vector<512x64xbf16>
    %c0_43 = arith.constant 0 : index
    %c0_44 = arith.constant 0 : index
    %67 = vector.load %arg14[%c0_43, %c0_44] : memref<512x640xbf16, #tpu.memory_space<vmem>>, vector<512x64xbf16>
    tpu.vector_store %arg14[%c0_43, %c0_44], %66 {strides = array<i32>} : memref<512x640xbf16, #tpu.memory_space<vmem>>, vector<512x64xbf16>,
    %c0_45 = arith.constant 0 : index
    %c0_46 = arith.constant 0 : index
    %c1_47 = arith.constant 1 : index
    %c0_48 = arith.constant 0 : index
    %68 = vector.load %arg13[%c0_45, %c0_46, %c1_47, %c0_48] : memref<2x18x18x64xf32, #tpu.memory_space<vmem>>, vector<2x16x16x64xf32>
    %69 = vector.shape_cast %68 : vector<2x16x16x64xf32> to vector<512x64xf32>
    %70 = arith.truncf %69 : vector<512x64xf32> to vector<512x64xbf16>
    %c0_49 = arith.constant 0 : index
    %c64 = arith.constant 64 : index
    %71 = vector.load %arg14[%c0_49, %c64] : memref<512x640xbf16, #tpu.memory_space<vmem>>, vector<512x64xbf16>
    tpu.vector_store %arg14[%c0_49, %c64], %70 {strides = array<i32>} : memref<512x640xbf16, #tpu.memory_space<vmem>>, vector<512x64xbf16>,
    %c0_50 = arith.constant 0 : index
    %c0_51 = arith.constant 0 : index
    %c2 = arith.constant 2 : index
    %c0_52 = arith.constant 0 : index
    %72 = vector.load %arg13[%c0_50, %c0_51, %c2, %c0_52] : memref<2x18x18x64xf32, #tpu.memory_space<vmem>>, vector<2x16x16x64xf32>
    %73 = vector.shape_cast %72 : vector<2x16x16x64xf32> to vector<512x64xf32>
    %74 = arith.truncf %73 : vector<512x64xf32> to vector<512x64xbf16>
    %c0_53 = arith.constant 0 : index
    %c128 = arith.constant 128 : index
    %75 = vector.load %arg14[%c0_53, %c128] : memref<512x640xbf16, #tpu.memory_space<vmem>>, vector<512x64xbf16>
    tpu.vector_store %arg14[%c0_53, %c128], %74 {strides = array<i32>} : memref<512x640xbf16, #tpu.memory_space<vmem>>, vector<512x64xbf16>,
    %c0_54 = arith.constant 0 : index
    %c1_55 = arith.constant 1 : index
    %c0_56 = arith.constant 0 : index
    %c0_57 = arith.constant 0 : index
    %76 = vector.load %arg13[%c0_54, %c1_55, %c0_56, %c0_57] : memref<2x18x18x64xf32, #tpu.memory_space<vmem>>, vector<2x16x16x64xf32>
    %77 = vector.shape_cast %76 : vector<2x16x16x64xf32> to vector<512x64xf32>
    %78 = arith.truncf %77 : vector<512x64xf32> to vector<512x64xbf16>
    %c0_58 = arith.constant 0 : index
    %c192 = arith.constant 192 : index
    %79 = vector.load %arg14[%c0_58, %c192] : memref<512x640xbf16, #tpu.memory_space<vmem>>, vector<512x64xbf16>
    tpu.vector_store %arg14[%c0_58, %c192], %78 {strides = array<i32>} : memref<512x640xbf16, #tpu.memory_space<vmem>>, vector<512x64xbf16>,
    %c0_59 = arith.constant 0 : index
    %c1_60 = arith.constant 1 : index
    %c1_61 = arith.constant 1 : index
    %c0_62 = arith.constant 0 : index
    %80 = vector.load %arg13[%c0_59, %c1_60, %c1_61, %c0_62] : memref<2x18x18x64xf32, #tpu.memory_space<vmem>>, vector<2x16x16x64xf32>
    %81 = vector.shape_cast %80 : vector<2x16x16x64xf32> to vector<512x64xf32>
    %82 = arith.truncf %81 : vector<512x64xf32> to vector<512x64xbf16>
    %c0_63 = arith.constant 0 : index
    %c256 = arith.constant 256 : index
    %83 = vector.load %arg14[%c0_63, %c256] : memref<512x640xbf16, #tpu.memory_space<vmem>>, vector<512x64xbf16>
    tpu.vector_store %arg14[%c0_63, %c256], %82 {strides = array<i32>} : memref<512x640xbf16, #tpu.memory_space<vmem>>, vector<512x64xbf16>,
    %c0_64 = arith.constant 0 : index
    %c1_65 = arith.constant 1 : index
    %c2_66 = arith.constant 2 : index
    %c0_67 = arith.constant 0 : index
    %84 = vector.load %arg13[%c0_64, %c1_65, %c2_66, %c0_67] : memref<2x18x18x64xf32, #tpu.memory_space<vmem>>, vector<2x16x16x64xf32>
    %85 = vector.shape_cast %84 : vector<2x16x16x64xf32> to vector<512x64xf32>
    %86 = arith.truncf %85 : vector<512x64xf32> to vector<512x64xbf16>
    %c0_68 = arith.constant 0 : index
    %c320 = arith.constant 320 : index
    %87 = vector.load %arg14[%c0_68, %c320] : memref<512x640xbf16, #tpu.memory_space<vmem>>, vector<512x64xbf16>
    tpu.vector_store %arg14[%c0_68, %c320], %86 {strides = array<i32>} : memref<512x640xbf16, #tpu.memory_space<vmem>>, vector<512x64xbf16>,
    %c0_69 = arith.constant 0 : index
    %c2_70 = arith.constant 2 : index
    %c0_71 = arith.constant 0 : index
    %c0_72 = arith.constant 0 : index
    %88 = vector.load %arg13[%c0_69, %c2_70, %c0_71, %c0_72] : memref<2x18x18x64xf32, #tpu.memory_space<vmem>>, vector<2x16x16x64xf32>
    %89 = vector.shape_cast %88 : vector<2x16x16x64xf32> to vector<512x64xf32>
    %90 = arith.truncf %89 : vector<512x64xf32> to vector<512x64xbf16>
    %c0_73 = arith.constant 0 : index
    %c384 = arith.constant 384 : index
    %91 = vector.load %arg14[%c0_73, %c384] : memref<512x640xbf16, #tpu.memory_space<vmem>>, vector<512x64xbf16>
    tpu.vector_store %arg14[%c0_73, %c384], %90 {strides = array<i32>} : memref<512x640xbf16, #tpu.memory_space<vmem>>, vector<512x64xbf16>,
    %c0_74 = arith.constant 0 : index
    %c2_75 = arith.constant 2 : index
    %c1_76 = arith.constant 1 : index
    %c0_77 = arith.constant 0 : index
    %92 = vector.load %arg13[%c0_74, %c2_75, %c1_76, %c0_77] : memref<2x18x18x64xf32, #tpu.memory_space<vmem>>, vector<2x16x16x64xf32>
    %93 = vector.shape_cast %92 : vector<2x16x16x64xf32> to vector<512x64xf32>
    %94 = arith.truncf %93 : vector<512x64xf32> to vector<512x64xbf16>
    %c0_78 = arith.constant 0 : index
    %c448 = arith.constant 448 : index
    %95 = vector.load %arg14[%c0_78, %c448] : memref<512x640xbf16, #tpu.memory_space<vmem>>, vector<512x64xbf16>
    tpu.vector_store %arg14[%c0_78, %c448], %94 {strides = array<i32>} : memref<512x640xbf16, #tpu.memory_space<vmem>>, vector<512x64xbf16>,
    %c0_79 = arith.constant 0 : index
    %c2_80 = arith.constant 2 : index
    %c2_81 = arith.constant 2 : index
    %c0_82 = arith.constant 0 : index
    %96 = vector.load %arg13[%c0_79, %c2_80, %c2_81, %c0_82] : memref<2x18x18x64xf32, #tpu.memory_space<vmem>>, vector<2x16x16x64xf32>
    %97 = vector.shape_cast %96 : vector<2x16x16x64xf32> to vector<512x64xf32>
    %98 = arith.truncf %97 : vector<512x64xf32> to vector<512x64xbf16>
    %c0_83 = arith.constant 0 : index
    %c512 = arith.constant 512 : index
    %99 = vector.load %arg14[%c0_83, %c512] : memref<512x640xbf16, #tpu.memory_space<vmem>>, vector<512x64xbf16>
    tpu.vector_store %arg14[%c0_83, %c512], %98 {strides = array<i32>} : memref<512x640xbf16, #tpu.memory_space<vmem>>, vector<512x64xbf16>,
    %100 = arith.truncf %5 : vector<512x32xf32> to vector<512x32xbf16>
    %c0_84 = arith.constant 0 : index
    %c576 = arith.constant 576 : index
    %101 = vector.load %arg14[%c0_84, %c576] : memref<512x640xbf16, #tpu.memory_space<vmem>>, vector<512x32xbf16>
    tpu.vector_store %arg14[%c0_84, %c576], %100 {strides = array<i32>} : memref<512x640xbf16, #tpu.memory_space<vmem>>, vector<512x32xbf16>,
    %102 = arith.truncf %7 : vector<512x32xf32> to vector<512x32xbf16>
    %c0_85 = arith.constant 0 : index
    %c608 = arith.constant 608 : index
    %103 = vector.load %arg14[%c0_85, %c608] : memref<512x640xbf16, #tpu.memory_space<vmem>>, vector<512x32xbf16>
    tpu.vector_store %arg14[%c0_85, %c608], %102 {strides = array<i32>} : memref<512x640xbf16, #tpu.memory_space<vmem>>, vector<512x32xbf16>,
    %c0_86 = arith.constant 0 : index
    %c0_87 = arith.constant 0 : index
    %104 = vector.load %arg14[%c0_86, %c0_87] : memref<512x640xbf16, #tpu.memory_space<vmem>>, vector<512x640xbf16>
    %c0_88 = arith.constant 0 : index
    %c0_89 = arith.constant 0 : index
    %105 = vector.load %arg7[%c0_88, %c0_89] : memref<640x256xbf16, #tpu.memory_space<vmem>>, vector<640x256xbf16>
    %cst_90 = arith.constant dense<0.000000e+00> : vector<512x256xf32>
    %106 = tpu.matmul %104, %105, %cst_90 {dimension_numbers = #tpu.dot_dimension_numbers<[1], [0], [0], [1], [0, 0, 1, 1], [], []>} : vector<512x640xbf16>, vector<640x256xbf16>, vector<512x256xf32> -> vector<512x256xf32>
    %107 = vector.extract_strided_slice %106 {offsets = [0, 0], sizes = [512, 128], strides = [1, 1]} : vector<512x256xf32> to vector<512x128xf32>
    %108 = vector.extract_strided_slice %106 {offsets = [0, 128], sizes = [512, 128], strides = [1, 1]} : vector<512x256xf32> to vector<512x128xf32>
    %c0_91 = arith.constant 0 : index
    %c0_92 = arith.constant 0 : index
    %109 = vector.load %arg10[%c0_91, %c0_92] : memref<1x128xf32, #tpu.memory_space<vmem>>, vector<1x128xf32>
    %110 = vector.broadcast %109 : vector<1x128xf32> to vector<512x128xf32>
    %111 = arith.addf %108, %110 : vector<512x128xf32>
    %cst_93 = arith.constant dense<0.000000e+00> : vector<128xf32>
    %112 = vector.multi_reduction <add>, %107, %cst_93 [0] : vector<512x128xf32> to vector<128xf32>
    %113 = vector.shape_cast %112 : vector<128xf32> to vector<1x128xf32>
    %cst_94 = arith.constant 0.001953125 : f32
    %114 = vector.broadcast %cst_94 : f32 to vector<1x128xf32>
    %115 = arith.mulf %113, %114 : vector<1x128xf32>
    %116 = vector.broadcast %115 : vector<1x128xf32> to vector<512x128xf32>
    %117 = arith.subf %107, %116 : vector<512x128xf32>
    %118 = arith.mulf %117, %117 : vector<512x128xf32>
    %cst_95 = arith.constant dense<0.000000e+00> : vector<128xf32>
    %119 = vector.multi_reduction <add>, %118, %cst_95 [0] : vector<512x128xf32> to vector<128xf32>
    %120 = vector.shape_cast %119 : vector<128xf32> to vector<1x128xf32>
    %cst_96 = arith.constant 0.001953125 : f32
    %121 = vector.broadcast %cst_96 : f32 to vector<1x128xf32>
    %122 = arith.mulf %120, %121 : vector<1x128xf32>
    %cst_97 = arith.constant 9.99999974E-6 : f32
    %123 = vector.broadcast %cst_97 : f32 to vector<1x128xf32>
    %124 = arith.addf %122, %123 : vector<1x128xf32>
    %125 = math.rsqrt %124 : vector<1x128xf32>
    %c0_98 = arith.constant 0 : index
    %c0_99 = arith.constant 0 : index
    %126 = vector.load %arg8[%c0_98, %c0_99] : memref<1x128xf32, #tpu.memory_space<vmem>>, vector<1x128xf32>
    %127 = arith.mulf %125, %126 : vector<1x128xf32>
    %128 = vector.broadcast %127 : vector<1x128xf32> to vector<512x128xf32>
    %129 = arith.mulf %117, %128 : vector<512x128xf32>
    %c0_100 = arith.constant 0 : index
    %c0_101 = arith.constant 0 : index
    %130 = vector.load %arg9[%c0_100, %c0_101] : memref<1x128xf32, #tpu.memory_space<vmem>>, vector<1x128xf32>
    %131 = vector.broadcast %130 : vector<1x128xf32> to vector<512x128xf32>
    %132 = arith.addf %129, %131 : vector<512x128xf32>
    %cst_102 = arith.constant 0.000000e+00 : f32
    %133 = vector.broadcast %cst_102 : f32 to vector<512x128xf32>
    %134 = arith.cmpf oge, %132, %133 : vector<512x128xf32>
    %135 = vector.broadcast %1 : f32 to vector<512x128xf32>
    %136 = arith.mulf %135, %132 : vector<512x128xf32>
    %137 = arith.select %134, %132, %136 : vector<512x128xi1>, vector<512x128xf32>
    %138 = arith.addf %137, %111 : vector<512x128xf32>
    %c0_103 = arith.constant 0 : index
    %c0_104 = arith.constant 0 : index
    %139 = vector.load %arg12[%c0_103, %c0_104] : memref<512x128xf32, #tpu.memory_space<vmem>>, vector<512x128xf32>
    tpu.vector_store %arg12[%c0_103, %c0_104], %138 {strides = array<i32>} : memref<512x128xf32, #tpu.memory_space<vmem>>, vector<512x128xf32>,
    return
  }
  func.func @transform_0(%arg0: i32) -> (i32, i32, i32, i32) {
    %c0_i32 = arith.constant 0 : i32
    %c0_i32_0 = arith.constant 0 : i32
    %c0_i32_1 = arith.constant 0 : i32
    %c0_i32_2 = arith.constant 0 : i32
    %c0_i32_3 = arith.constant 0 : i32
    return %c0_i32, %c0_i32_0, %c0_i32_1, %c0_i32_2 : i32, i32, i32, i32
  }
  func.func @transform_1(%arg0: i32) -> (i32, i32, i32, i32) {
    %c0_i32 = arith.constant 0 : i32
    %c0_i32_0 = arith.constant 0 : i32
    %c0_i32_1 = arith.constant 0 : i32
    %c0_i32_2 = arith.constant 0 : i32
    %c0_i32_3 = arith.constant 0 : i32
    return %c0_i32, %c0_i32_0, %c0_i32_1, %c0_i32_2 : i32, i32, i32, i32
  }
  func.func @transform_2(%arg0: i32) -> (i32, i32) {
    %c0_i32 = arith.constant 0 : i32
    %c0_i32_0 = arith.constant 0 : i32
    %c0_i32_1 = arith.constant 0 : i32
    return %c0_i32, %c0_i32_0 : i32, i32
  }
  func.func @transform_3(%arg0: i32) -> (i32, i32) {
    %c0_i32 = arith.constant 0 : i32
    %c0_i32_0 = arith.constant 0 : i32
    %c0_i32_1 = arith.constant 0 : i32
    return %c0_i32, %c0_i32_0 : i32, i32
  }
  func.func @transform_4(%arg0: i32) -> (i32, i32) {
    %c0_i32 = arith.constant 0 : i32
    %c0_i32_0 = arith.constant 0 : i32
    %c0_i32_1 = arith.constant 0 : i32
    return %c0_i32, %c0_i32_0 : i32, i32
  }
  func.func @transform_5(%arg0: i32) -> (i32, i32) {
    %c0_i32 = arith.constant 0 : i32
    %c0_i32_0 = arith.constant 0 : i32
    %c0_i32_1 = arith.constant 0 : i32
    return %c0_i32, %c0_i32_0 : i32, i32
  }
  func.func @transform_6(%arg0: i32) -> (i32, i32) {
    %c0_i32 = arith.constant 0 : i32
    %c0_i32_0 = arith.constant 0 : i32
    %c0_i32_1 = arith.constant 0 : i32
    return %c0_i32, %c0_i32_0 : i32, i32
  }
  func.func @transform_7(%arg0: i32) -> (i32, i32) {
    %c0_i32 = arith.constant 0 : i32
    %c0_i32_0 = arith.constant 0 : i32
    %c0_i32_1 = arith.constant 0 : i32
    return %c0_i32, %c0_i32_0 : i32, i32
  }
  func.func @transform_8(%arg0: i32) -> (i32, i32) {
    %c0_i32 = arith.constant 0 : i32
    %c0_i32_0 = arith.constant 0 : i32
    %c0_i32_1 = arith.constant 0 : i32
    return %c0_i32, %c0_i32_0 : i32, i32
  }
  func.func @transform_9(%arg0: i32) -> (i32, i32) {
    %c0_i32 = arith.constant 0 : i32
    %c0_i32_0 = arith.constant 0 : i32
    %c0_i32_1 = arith.constant 0 : i32
    return %c0_i32, %c0_i32_0 : i32, i32
  }
  func.func @transform_10(%arg0: i32) -> i32 {
    %c0_i32 = arith.constant 0 : i32
    %c0_i32_0 = arith.constant 0 : i32
    return %c0_i32 : i32
  }
  func.func @transform_11(%arg0: i32) -> (i32, i32) {
    %c0_i32 = arith.constant 0 : i32
    %c0_i32_0 = arith.constant 0 : i32
    %c0_i32_1 = arith.constant 0 : i32
    return %c0_i32, %c0_i32_0 : i32, i32
  }
}

</mosaic_0001>

<llo_original>
// kernel: decoder_block_forward.1
$region0: #{decoder_block_forward.1}
  #allocation0 [shape = 'u32[]', space=smem, size = 0x4, offset = 0x4, fixed_abs, tag = 'smem constant byte address 0x4 - core index']
  #allocation1 [shape = 'u32[144,128]{1,0:T(1,128)}', space=vmem, size = 0x12000, scoped, tag = 'internal scratch']
  #allocation2 [shape = 'f32[2,18,18,64]{3,2,1,0:T(8,128)}', space=vmem, size = 0x6c000, scoped, tag = 'scratch operand']
  #allocation3 [shape = 'bf16[512,640]{1,0:T(8,128)(2,1)}', space=vmem, size = 0xa0000, scoped, tag = 'scratch operand']
  %s0 = inlined_call_operand.vmem [shape: f32[2,16,16,32], index: 0, kind: input, shape index: {}]
  %s1 = inlined_call_operand.vmem [shape: f32[2,16,16,32], index: 1, kind: input, shape index: {}]
  %s2 = inlined_call_operand.vmem [shape: f32[1,32], index: 2, kind: input, shape index: {}]
  %s3 = inlined_call_operand.vmem [shape: f32[1,32], index: 3, kind: input, shape index: {}]
  %s4 = inlined_call_operand.vmem [shape: f32[1,32], index: 4, kind: input, shape index: {}]
  %s5 = inlined_call_operand.vmem [shape: f32[1,32], index: 5, kind: input, shape index: {}]
  %s6 = inlined_call_operand.vmem [shape: bf16[640,256], index: 6, kind: input, shape index: {}]
  %s7 = inlined_call_operand.vmem [shape: f32[1,128], index: 7, kind: input, shape index: {}]
  %s8 = inlined_call_operand.vmem [shape: f32[1,128], index: 8, kind: input, shape index: {}]
  %s9 = inlined_call_operand.vmem [shape: f32[1,128], index: 9, kind: input, shape index: {}]
  %s10 = inlined_call_operand.vmem [shape: f32[2], index: 10, kind: input, shape index: {}]
  %s11 = inlined_call_operand.hbm [shape: f32[512,128], index: 11, kind: output, shape index: {}]
  %s12 = sld [smem:[#allocation0]]
  $region58: #{decoder_block_forward.1} parent=0
    _
  %s14 = ssub.s32 1, %s12
  %s15 = scalar_select 0, %s14, %s12
  $region1: #{decoder_block_forward.1} parent=0
    #allocation4 [shape = 'u8[512]{0}', space=smem, size = 0x200, scoped, tag = 'input window, operand 10, single buffered']
    #allocation5 [shape = 's32[1]{0}', space=sflag, size = 0x4, scoped, tag = 'scoped memory for decoder_block_forward.1']
    #allocation6 [shape = 's32[1]{0}', space=sflag, size = 0x4, scoped, tag = 'scoped memory for decoder_block_forward.1']
    #allocation7 [shape = 'u8[262144]{0}', space=vmem, size = 0x40000, scoped, tag = 'output window, operand 0, single buffered']
    %16 = vsyncpa [#allocation6], 0
    %17 = vsyncpa [#allocation5], 0
    // Predicated region
    $region2: #{decoder_block_forward.1} parent=1 // pred_check
      _
    $region3: #{decoder_block_forward.1} parent=1 // pred_check_branch
      %19 = sbr.rel (0) target = $region5
    $region4: #{decoder_block_forward.1} parent=1 // pred_region
      _
    $region5: #{decoder_block_forward.1} parent=1 // pred_fallthru
      _
    // Predicated region
    $region6: #{decoder_block_forward.1} parent=1 // pred_check
      _
    $region7: #{decoder_block_forward.1} parent=1 // pred_check_branch
      %21 = sbr.rel (0) target = $region9
    $region8: #{decoder_block_forward.1} parent=1 // pred_region
      _
    $region9: #{decoder_block_forward.1} parent=1 // pred_fallthru
      _
    // Predicated region
    $region10: #{decoder_block_forward.1} parent=1 // pred_check
      _
    $region11: #{decoder_block_forward.1} parent=1 // pred_check_branch
      %23 = sbr.rel (0) target = $region13
    $region12: #{decoder_block_forward.1} parent=1 // pred_region
      _
    $region13: #{decoder_block_forward.1} parent=1 // pred_fallthru
      _
    // Predicated region
    $region14: #{decoder_block_forward.1} parent=1 // pred_check
      _
    $region15: #{decoder_block_forward.1} parent=1 // pred_check_branch
      %25 = sbr.rel (0) target = $region17
    $region16: #{decoder_block_forward.1} parent=1 // pred_region
      _
    $region17: #{decoder_block_forward.1} parent=1 // pred_fallthru
      _
    // Predicated region
    $region18: #{decoder_block_forward.1} parent=1 // pred_check
      _
    $region19: #{decoder_block_forward.1} parent=1 // pred_check_branch
      %27 = sbr.rel (0) target = $region21
    $region20: #{decoder_block_forward.1} parent=1 // pred_region
      _
    $region21: #{decoder_block_forward.1} parent=1 // pred_fallthru
      _
    // Predicated region
    $region22: #{decoder_block_forward.1} parent=1 // pred_check
      _
    $region23: #{decoder_block_forward.1} parent=1 // pred_check_branch
      %29 = sbr.rel (0) target = $region25
    $region24: #{decoder_block_forward.1} parent=1 // pred_region
      _
    $region25: #{decoder_block_forward.1} parent=1 // pred_fallthru
      _
    // Predicated region
    $region26: #{decoder_block_forward.1} parent=1 // pred_check
      _
    $region27: #{decoder_block_forward.1} parent=1 // pred_check_branch
      %31 = sbr.rel (0) target = $region29
    $region28: #{decoder_block_forward.1} parent=1 // pred_region
      _
    $region29: #{decoder_block_forward.1} parent=1 // pred_fallthru
      _
    // Predicated region
    $region30: #{decoder_block_forward.1} parent=1 // pred_check
      _
    $region31: #{decoder_block_forward.1} parent=1 // pred_check_branch
      %33 = sbr.rel (0) target = $region33
    $region32: #{decoder_block_forward.1} parent=1 // pred_region
      _
    $region33: #{decoder_block_forward.1} parent=1 // pred_fallthru
      _
    // Predicated region
    $region34: #{decoder_block_forward.1} parent=1 // pred_check
      _
    $region35: #{decoder_block_forward.1} parent=1 // pred_check_branch
      %35 = sbr.rel (0) target = $region37
    $region36: #{decoder_block_forward.1} parent=1 // pred_region
      _
    $region37: #{decoder_block_forward.1} parent=1 // pred_fallthru
      _
    // Predicated region
    $region38: #{decoder_block_forward.1} parent=1 // pred_check
      _
    $region39: #{decoder_block_forward.1} parent=1 // pred_check_branch
      %37 = sbr.rel (0) target = $region41
    $region40: #{decoder_block_forward.1} parent=1 // pred_region
      _
    $region41: #{decoder_block_forward.1} parent=1 // pred_fallthru
      _
    // Predicated region
    $region42: #{decoder_block_forward.1} parent=1 // pred_check
      _
    $region43: #{decoder_block_forward.1} parent=1 // pred_check_branch
      %39 = sbr.rel (0) target = $region45
    $region44: #{decoder_block_forward.1} parent=1 // pred_region
      %s41 = ssub.s32 16, 16
      %42 = vsyncadd [#allocation6], %s41
      %s44 = sshll.u32 %s10, 4
      %s45 = int_to_ptr.vmem [resolvable:$true] %s44
      %47 = dma.vmem_to_smem %s45, 16, [#allocation4], [#allocation6]
    $region45: #{decoder_block_forward.1} parent=1 // pred_fallthru
      _
    // Predicated region
    $region46: #{decoder_block_forward.1} parent=1 // pred_check
      _
    $region47: #{decoder_block_forward.1} parent=1 // pred_check_branch
      %49 = sbr.rel (0) target = $region49
    $region48: #{decoder_block_forward.1} parent=1 // pred_region
      %50 = dma.done [#allocation6], 16
    $region49: #{decoder_block_forward.1} parent=1 // pred_fallthru
      _
    %51 = sfence
    %s53 = sld [smem:[#allocation4]]
    %s54 = sld [smem:[#allocation4 + $0x1]]
    %vm55 = vcmask 523264
    %56 = vst.msk [vmem:[#allocation2] sm:$0xff] %vm55, 0.0
    %57 = vst.msk [vmem:[#allocation2 + $0x8] sm:$0xff] %vm55, 0.0
    %vm58 = vcmask 517120
    %59 = vst.msk [vmem:[#allocation2 + $0x10] sm:$0x3] %vm58, 0.0
    %60 = vst.msk [vmem:[#allocation2 + $0x18] sm:$0xff] %vm55, 0.0
    %61 = vst.msk [vmem:[#allocation2 + $0x20] sm:$0xff] %vm55, 0.0
    %62 = vst.msk [vmem:[#allocation2 + $0x28] sm:$0x3] %vm58, 0.0
    %63 = vst.msk [vmem:[#allocation2 + $0x30] sm:$0xff] %vm55, 0.0
    %64 = vst.msk [vmem:[#allocation2 + $0x38] sm:$0xff] %vm55, 0.0
    %65 = vst.msk [vmem:[#allocation2 + $0x40] sm:$0x3] %vm58, 0.0
    %66 = vst.msk [vmem:[#allocation2 + $0x48] sm:$0xff] %vm55, 0.0
    %67 = vst.msk [vmem:[#allocation2 + $0x50] sm:$0xff] %vm55, 0.0
    %68 = vst.msk [vmem:[#allocation2 + $0x58] sm:$0x3] %vm58, 0.0
    %69 = vst.msk [vmem:[#allocation2 + $0x60] sm:$0xff] %vm55, 0.0
    %70 = vst.msk [vmem:[#allocation2 + $0x68] sm:$0xff] %vm55, 0.0
    %71 = vst.msk [vmem:[#allocation2 + $0x70] sm:$0x3] %vm58, 0.0
    %72 = vst.msk [vmem:[#allocation2 + $0x78] sm:$0xff] %vm55, 0.0
    %73 = vst.msk [vmem:[#allocation2 + $0x80] sm:$0xff] %vm55, 0.0
    %74 = vst.msk [vmem:[#allocation2 + $0x88] sm:$0x3] %vm58, 0.0
    %75 = vst.msk [vmem:[#allocation2 + $0x90] sm:$0xff] %vm55, 0.0
    %76 = vst.msk [vmem:[#allocation2 + $0x98] sm:$0xff] %vm55, 0.0
    %77 = vst.msk [vmem:[#allocation2 + $0xa0] sm:$0x3] %vm58, 0.0
    %78 = vst.msk [vmem:[#allocation2 + $0xa8] sm:$0xff] %vm55, 0.0
    %79 = vst.msk [vmem:[#allocation2 + $0xb0] sm:$0xff] %vm55, 0.0
    %80 = vst.msk [vmem:[#allocation2 + $0xb8] sm:$0x3] %vm58, 0.0
    %81 = vst.msk [vmem:[#allocation2 + $0xc0] sm:$0xff] %vm55, 0.0
    %82 = vst.msk [vmem:[#allocation2 + $0xc8] sm:$0xff] %vm55, 0.0
    %83 = vst.msk [vmem:[#allocation2 + $0xd0] sm:$0x3] %vm58, 0.0
    %84 = vst.msk [vmem:[#allocation2 + $0xd8] sm:$0xff] %vm55, 0.0
    %85 = vst.msk [vmem:[#allocation2 + $0xe0] sm:$0xff] %vm55, 0.0
    %86 = vst.msk [vmem:[#allocation2 + $0xe8] sm:$0x3] %vm58, 0.0
    %87 = vst.msk [vmem:[#allocation2 + $0xf0] sm:$0xff] %vm55, 0.0
    %88 = vst.msk [vmem:[#allocation2 + $0xf8] sm:$0xff] %vm55, 0.0
    %89 = vst.msk [vmem:[#allocation2 + $0x100] sm:$0x3] %vm58, 0.0
    %90 = vst.msk [vmem:[#allocation2 + $0x108] sm:$0xff] %vm55, 0.0
    %91 = vst.msk [vmem:[#allocation2 + $0x110] sm:$0xff] %vm55, 0.0
    %92 = vst.msk [vmem:[#allocation2 + $0x118] sm:$0x3] %vm58, 0.0
    %93 = vst.msk [vmem:[#allocation2 + $0x120] sm:$0xff] %vm55, 0.0
    %94 = vst.msk [vmem:[#allocation2 + $0x128] sm:$0xff] %vm55, 0.0
    %95 = vst.msk [vmem:[#allocation2 + $0x130] sm:$0x3] %vm58, 0.0
    %96 = vst.msk [vmem:[#allocation2 + $0x138] sm:$0xff] %vm55, 0.0
    %97 = vst.msk [vmem:[#allocation2 + $0x140] sm:$0xff] %vm55, 0.0
    %98 = vst.msk [vmem:[#allocation2 + $0x148] sm:$0x3] %vm58, 0.0
    %99 = vst.msk [vmem:[#allocation2 + $0x150] sm:$0xff] %vm55, 0.0
    %100 = vst.msk [vmem:[#allocation2 + $0x158] sm:$0xff] %vm55, 0.0
    %101 = vst.msk [vmem:[#allocation2 + $0x160] sm:$0x3] %vm58, 0.0
    %102 = vst.msk [vmem:[#allocation2 + $0x168] sm:$0xff] %vm55, 0.0
    %103 = vst.msk [vmem:[#allocation2 + $0x170] sm:$0xff] %vm55, 0.0
    %104 = vst.msk [vmem:[#allocation2 + $0x178] sm:$0x3] %vm58, 0.0
    %105 = vst.msk [vmem:[#allocation2 + $0x180] sm:$0xff] %vm55, 0.0
    %106 = vst.msk [vmem:[#allocation2 + $0x188] sm:$0xff] %vm55, 0.0
    %107 = vst.msk [vmem:[#allocation2 + $0x190] sm:$0x3] %vm58, 0.0
    %108 = vst.msk [vmem:[#allocation2 + $0x198] sm:$0xff] %vm55, 0.0
    %109 = vst.msk [vmem:[#allocation2 + $0x1a0] sm:$0xff] %vm55, 0.0
    %110 = vst.msk [vmem:[#allocation2 + $0x1a8] sm:$0x3] %vm58, 0.0
    %111 = vst.msk [vmem:[#allocation2 + $0x1b0] sm:$0xff] %vm55, 0.0
    %112 = vst.msk [vmem:[#allocation2 + $0x1b8] sm:$0xff] %vm55, 0.0
    %113 = vst.msk [vmem:[#allocation2 + $0x1c0] sm:$0x3] %vm58, 0.0
    %114 = vst.msk [vmem:[#allocation2 + $0x1c8] sm:$0xff] %vm55, 0.0
    %115 = vst.msk [vmem:[#allocation2 + $0x1d0] sm:$0xff] %vm55, 0.0
    %116 = vst.msk [vmem:[#allocation2 + $0x1d8] sm:$0x3] %vm58, 0.0
    %117 = vst.msk [vmem:[#allocation2 + $0x1e0] sm:$0xff] %vm55, 0.0
    %118 = vst.msk [vmem:[#allocation2 + $0x1e8] sm:$0xff] %vm55, 0.0
    %119 = vst.msk [vmem:[#allocation2 + $0x1f0] sm:$0x3] %vm58, 0.0
    %120 = vst.msk [vmem:[#allocation2 + $0x1f8] sm:$0xff] %vm55, 0.0
    %121 = vst.msk [vmem:[#allocation2 + $0x200] sm:$0xff] %vm55, 0.0
    %122 = vst.msk [vmem:[#allocation2 + $0x208] sm:$0x3] %vm58, 0.0
    %123 = vst.msk [vmem:[#allocation2 + $0x210] sm:$0xff] %vm55, 0.0
    %124 = vst.msk [vmem:[#allocation2 + $0x218] sm:$0xff] %vm55, 0.0
    %125 = vst.msk [vmem:[#allocation2 + $0x220] sm:$0x3] %vm58, 0.0
    %126 = vst.msk [vmem:[#allocation2 + $0x228] sm:$0xff] %vm55, 0.0
    %127 = vst.msk [vmem:[#allocation2 + $0x230] sm:$0xff] %vm55, 0.0
    %128 = vst.msk [vmem:[#allocation2 + $0x238] sm:$0x3] %vm58, 0.0
    %129 = vst.msk [vmem:[#allocation2 + $0x240] sm:$0xff] %vm55, 0.0
    %130 = vst.msk [vmem:[#allocation2 + $0x248] sm:$0xff] %vm55, 0.0
    %131 = vst.msk [vmem:[#allocation2 + $0x250] sm:$0x3] %vm58, 0.0
    %132 = vst.msk [vmem:[#allocation2 + $0x258] sm:$0xff] %vm55, 0.0
    %133 = vst.msk [vmem:[#allocation2 + $0x260] sm:$0xff] %vm55, 0.0
    %134 = vst.msk [vmem:[#allocation2 + $0x268] sm:$0x3] %vm58, 0.0
    %135 = vst.msk [vmem:[#allocation2 + $0x270] sm:$0xff] %vm55, 0.0
    %136 = vst.msk [vmem:[#allocation2 + $0x278] sm:$0xff] %vm55, 0.0
    %137 = vst.msk [vmem:[#allocation2 + $0x280] sm:$0x3] %vm58, 0.0
    %138 = vst.msk [vmem:[#allocation2 + $0x288] sm:$0xff] %vm55, 0.0
    %139 = vst.msk [vmem:[#allocation2 + $0x290] sm:$0xff] %vm55, 0.0
    %140 = vst.msk [vmem:[#allocation2 + $0x298] sm:$0x3] %vm58, 0.0
    %141 = vst.msk [vmem:[#allocation2 + $0x2a0] sm:$0xff] %vm55, 0.0
    %142 = vst.msk [vmem:[#allocation2 + $0x2a8] sm:$0xff] %vm55, 0.0
    %143 = vst.msk [vmem:[#allocation2 + $0x2b0] sm:$0x3] %vm58, 0.0
    %144 = vst.msk [vmem:[#allocation2 + $0x2b8] sm:$0xff] %vm55, 0.0
    %145 = vst.msk [vmem:[#allocation2 + $0x2c0] sm:$0xff] %vm55, 0.0
    %146 = vst.msk [vmem:[#allocation2 + $0x2c8] sm:$0x3] %vm58, 0.0
    %147 = vst.msk [vmem:[#allocation2 + $0x2d0] sm:$0xff] %vm55, 0.0
    %148 = vst.msk [vmem:[#allocation2 + $0x2d8] sm:$0xff] %vm55, 0.0
    %149 = vst.msk [vmem:[#allocation2 + $0x2e0] sm:$0x3] %vm58, 0.0
    %150 = vst.msk [vmem:[#allocation2 + $0x2e8] sm:$0xff] %vm55, 0.0
    %151 = vst.msk [vmem:[#allocation2 + $0x2f0] sm:$0xff] %vm55, 0.0
    %152 = vst.msk [vmem:[#allocation2 + $0x2f8] sm:$0x3] %vm58, 0.0
    %153 = vst.msk [vmem:[#allocation2 + $0x300] sm:$0xff] %vm55, 0.0
    %154 = vst.msk [vmem:[#allocation2 + $0x308] sm:$0xff] %vm55, 0.0
    %155 = vst.msk [vmem:[#allocation2 + $0x310] sm:$0x3] %vm58, 0.0
    %156 = vst.msk [vmem:[#allocation2 + $0x318] sm:$0xff] %vm55, 0.0
    %157 = vst.msk [vmem:[#allocation2 + $0x320] sm:$0xff] %vm55, 0.0
    %158 = vst.msk [vmem:[#allocation2 + $0x328] sm:$0x3] %vm58, 0.0
    %159 = vst.msk [vmem:[#allocation2 + $0x330] sm:$0xff] %vm55, 0.0
    %160 = vst.msk [vmem:[#allocation2 + $0x338] sm:$0xff] %vm55, 0.0
    %161 = vst.msk [vmem:[#allocation2 + $0x340] sm:$0x3] %vm58, 0.0
    %162 = vst.msk [vmem:[#allocation2 + $0x348] sm:$0xff] %vm55, 0.0
    %163 = vst.msk [vmem:[#allocation2 + $0x350] sm:$0xff] %vm55, 0.0
    %164 = vst.msk [vmem:[#allocation2 + $0x358] sm:$0x3] %vm58, 0.0
    %v165 = vld [vmem:[%s0] sm:$0xff]
    %v166 = vld [vmem:[%s0 + $0x8] sm:$0xff]
    %v167 = vld [vmem:[%s0 + $0x10] sm:$0xff]
    %v168 = vld [vmem:[%s0 + $0x18] sm:$0xff]
    %v169 = vld [vmem:[%s0 + $0x20] sm:$0xff]
    %v170 = vld [vmem:[%s0 + $0x28] sm:$0xff]
    %v171 = vld [vmem:[%s0 + $0x30] sm:$0xff]
    %v172 = vld [vmem:[%s0 + $0x38] sm:$0xff]
    %v173 = vld [vmem:[%s0 + $0x40] sm:$0xff]
    %v174 = vld [vmem:[%s0 + $0x48] sm:$0xff]
    %v175 = vld [vmem:[%s0 + $0x50] sm:$0xff]
    %v176 = vld [vmem:[%s0 + $0x58] sm:$0xff]
    %v177 = vld [vmem:[%s0 + $0x60] sm:$0xff]
    %v178 = vld [vmem:[%s0 + $0x68] sm:$0xff]
    %v179 = vld [vmem:[%s0 + $0x70] sm:$0xff]
    %v180 = vld [vmem:[%s0 + $0x78] sm:$0xff]
    %v181 = vld [vmem:[%s0 + $0x80] sm:$0xff]
    %v182 = vld [vmem:[%s0 + $0x88] sm:$0xff]
    %v183 = vld [vmem:[%s0 + $0x90] sm:$0xff]
    %v184 = vld [vmem:[%s0 + $0x98] sm:$0xff]
    %v185 = vld [vmem:[%s0 + $0xa0] sm:$0xff]
    %v186 = vld [vmem:[%s0 + $0xa8] sm:$0xff]
    %v187 = vld [vmem:[%s0 + $0xb0] sm:$0xff]
    %v188 = vld [vmem:[%s0 + $0xb8] sm:$0xff]
    %v189 = vld [vmem:[%s0 + $0xc0] sm:$0xff]
    %v190 = vld [vmem:[%s0 + $0xc8] sm:$0xff]
    %v191 = vld [vmem:[%s0 + $0xd0] sm:$0xff]
    %v192 = vld [vmem:[%s0 + $0xd8] sm:$0xff]
    %v193 = vld [vmem:[%s0 + $0xe0] sm:$0xff]
    %v194 = vld [vmem:[%s0 + $0xe8] sm:$0xff]
    %v195 = vld [vmem:[%s0 + $0xf0] sm:$0xff]
    %v196 = vld [vmem:[%s0 + $0xf8] sm:$0xff]
    %v197 = vld [vmem:[%s0 + $0x100] sm:$0xff]
    %v198 = vld [vmem:[%s0 + $0x108] sm:$0xff]
    %v199 = vld [vmem:[%s0 + $0x110] sm:$0xff]
    %v200 = vld [vmem:[%s0 + $0x118] sm:$0xff]
    %v201 = vld [vmem:[%s0 + $0x120] sm:$0xff]
    %v202 = vld [vmem:[%s0 + $0x128] sm:$0xff]
    %v203 = vld [vmem:[%s0 + $0x130] sm:$0xff]
    %v204 = vld [vmem:[%s0 + $0x138] sm:$0xff]
    %v205 = vld [vmem:[%s0 + $0x140] sm:$0xff]
    %v206 = vld [vmem:[%s0 + $0x148] sm:$0xff]
    %v207 = vld [vmem:[%s0 + $0x150] sm:$0xff]
    %v208 = vld [vmem:[%s0 + $0x158] sm:$0xff]
    %v209 = vld [vmem:[%s0 + $0x160] sm:$0xff]
    %v210 = vld [vmem:[%s0 + $0x168] sm:$0xff]
    %v211 = vld [vmem:[%s0 + $0x170] sm:$0xff]
    %v212 = vld [vmem:[%s0 + $0x178] sm:$0xff]
    %v213 = vld [vmem:[%s0 + $0x180] sm:$0xff]
    %v214 = vld [vmem:[%s0 + $0x188] sm:$0xff]
    %v215 = vld [vmem:[%s0 + $0x190] sm:$0xff]
    %v216 = vld [vmem:[%s0 + $0x198] sm:$0xff]
    %v217 = vld [vmem:[%s0 + $0x1a0] sm:$0xff]
    %v218 = vld [vmem:[%s0 + $0x1a8] sm:$0xff]
    %v219 = vld [vmem:[%s0 + $0x1b0] sm:$0xff]
    %v220 = vld [vmem:[%s0 + $0x1b8] sm:$0xff]
    %v221 = vld [vmem:[%s0 + $0x1c0] sm:$0xff]
    %v222 = vld [vmem:[%s0 + $0x1c8] sm:$0xff]
    %v223 = vld [vmem:[%s0 + $0x1d0] sm:$0xff]
    %v224 = vld [vmem:[%s0 + $0x1d8] sm:$0xff]
    %v225 = vld [vmem:[%s0 + $0x1e0] sm:$0xff]
    %v226 = vld [vmem:[%s0 + $0x1e8] sm:$0xff]
    %v227 = vld [vmem:[%s0 + $0x1f0] sm:$0xff]
    %v228 = vld [vmem:[%s0 + $0x1f8] sm:$0xff]
    %v229 = vld [vmem:[%s1] sm:$0xff]
    %v230 = vld [vmem:[%s1 + $0x8] sm:$0xff]
    %v231 = vld [vmem:[%s1 + $0x10] sm:$0xff]
    %v232 = vld [vmem:[%s1 + $0x18] sm:$0xff]
    %v233 = vld [vmem:[%s1 + $0x20] sm:$0xff]
    %v234 = vld [vmem:[%s1 + $0x28] sm:$0xff]
    %v235 = vld [vmem:[%s1 + $0x30] sm:$0xff]
    %v236 = vld [vmem:[%s1 + $0x38] sm:$0xff]
    %v237 = vld [vmem:[%s1 + $0x40] sm:$0xff]
    %v238 = vld [vmem:[%s1 + $0x48] sm:$0xff]
    %v239 = vld [vmem:[%s1 + $0x50] sm:$0xff]
    %v240 = vld [vmem:[%s1 + $0x58] sm:$0xff]
    %v241 = vld [vmem:[%s1 + $0x60] sm:$0xff]
    %v242 = vld [vmem:[%s1 + $0x68] sm:$0xff]
    %v243 = vld [vmem:[%s1 + $0x70] sm:$0xff]
    %v244 = vld [vmem:[%s1 + $0x78] sm:$0xff]
    %v245 = vld [vmem:[%s1 + $0x80] sm:$0xff]
    %v246 = vld [vmem:[%s1 + $0x88] sm:$0xff]
    %v247 = vld [vmem:[%s1 + $0x90] sm:$0xff]
    %v248 = vld [vmem:[%s1 + $0x98] sm:$0xff]
    %v249 = vld [vmem:[%s1 + $0xa0] sm:$0xff]
    %v250 = vld [vmem:[%s1 + $0xa8] sm:$0xff]
    %v251 = vld [vmem:[%s1 + $0xb0] sm:$0xff]
    %v252 = vld [vmem:[%s1 + $0xb8] sm:$0xff]
    %v253 = vld [vmem:[%s1 + $0xc0] sm:$0xff]
    %v254 = vld [vmem:[%s1 + $0xc8] sm:$0xff]
    %v255 = vld [vmem:[%s1 + $0xd0] sm:$0xff]
    %v256 = vld [vmem:[%s1 + $0xd8] sm:$0xff]
    %v257 = vld [vmem:[%s1 + $0xe0] sm:$0xff]
    %v258 = vld [vmem:[%s1 + $0xe8] sm:$0xff]
    %v259 = vld [vmem:[%s1 + $0xf0] sm:$0xff]
    %v260 = vld [vmem:[%s1 + $0xf8] sm:$0xff]
    %v261 = vld [vmem:[%s1 + $0x100] sm:$0xff]
    %v262 = vld [vmem:[%s1 + $0x108] sm:$0xff]
    %v263 = vld [vmem:[%s1 + $0x110] sm:$0xff]
    %v264 = vld [vmem:[%s1 + $0x118] sm:$0xff]
    %v265 = vld [vmem:[%s1 + $0x120] sm:$0xff]
    %v266 = vld [vmem:[%s1 + $0x128] sm:$0xff]
    %v267 = vld [vmem:[%s1 + $0x130] sm:$0xff]
    %v268 = vld [vmem:[%s1 + $0x138] sm:$0xff]
    %v269 = vld [vmem:[%s1 + $0x140] sm:$0xff]
    %v270 = vld [vmem:[%s1 + $0x148] sm:$0xff]
    %v271 = vld [vmem:[%s1 + $0x150] sm:$0xff]
    %v272 = vld [vmem:[%s1 + $0x158] sm:$0xff]
    %v273 = vld [vmem:[%s1 + $0x160] sm:$0xff]
    %v274 = vld [vmem:[%s1 + $0x168] sm:$0xff]
    %v275 = vld [vmem:[%s1 + $0x170] sm:$0xff]
    %v276 = vld [vmem:[%s1 + $0x178] sm:$0xff]
    %v277 = vld [vmem:[%s1 + $0x180] sm:$0xff]
    %v278 = vld [vmem:[%s1 + $0x188] sm:$0xff]
    %v279 = vld [vmem:[%s1 + $0x190] sm:$0xff]
    %v280 = vld [vmem:[%s1 + $0x198] sm:$0xff]
    %v281 = vld [vmem:[%s1 + $0x1a0] sm:$0xff]
    %v282 = vld [vmem:[%s1 + $0x1a8] sm:$0xff]
    %v283 = vld [vmem:[%s1 + $0x1b0] sm:$0xff]
    %v284 = vld [vmem:[%s1 + $0x1b8] sm:$0xff]
    %v285 = vld [vmem:[%s1 + $0x1c0] sm:$0xff]
    %v286 = vld [vmem:[%s1 + $0x1c8] sm:$0xff]
    %v287 = vld [vmem:[%s1 + $0x1d0] sm:$0xff]
    %v288 = vld [vmem:[%s1 + $0x1d8] sm:$0xff]
    %v289 = vld [vmem:[%s1 + $0x1e0] sm:$0xff]
    %v290 = vld [vmem:[%s1 + $0x1e8] sm:$0xff]
    %v291 = vld [vmem:[%s1 + $0x1f0] sm:$0xff]
    %v292 = vld [vmem:[%s1 + $0x1f8] sm:$0xff]
    %v293 = vld [vmem:[%s2] sm:$0x1]
    %v294 = vld [vmem:[%s3] sm:$0x1]
    %vm295 = vcmask 261120
    %v296 = vsel %vm295, %v165, 0.0
    %v297 = vsel %vm295, %v166, 0.0
    %v298 = vadd.f32 %v296, %v297
    %v299 = vsel %vm295, %v167, 0.0
    %v300 = vadd.f32 %v298, %v299
    %v301 = vsel %vm295, %v168, 0.0
    %v302 = vadd.f32 %v300, %v301
    %v303 = vsel %vm295, %v169, 0.0
    %v304 = vadd.f32 %v302, %v303
    %v305 = vsel %vm295, %v170, 0.0
    %v306 = vadd.f32 %v304, %v305
    %v307 = vsel %vm295, %v171, 0.0
    %v308 = vadd.f32 %v306, %v307
    %v309 = vsel %vm295, %v172, 0.0
    %v310 = vadd.f32 %v308, %v309
    %v311 = vsel %vm295, %v173, 0.0
    %v312 = vadd.f32 %v310, %v311
    %v313 = vsel %vm295, %v174, 0.0
    %v314 = vadd.f32 %v312, %v313
    %v315 = vsel %vm295, %v175, 0.0
    %v316 = vadd.f32 %v314, %v315
    %v317 = vsel %vm295, %v176, 0.0
    %v318 = vadd.f32 %v316, %v317
    %v319 = vsel %vm295, %v177, 0.0
    %v320 = vadd.f32 %v318, %v319
    %v321 = vsel %vm295, %v178, 0.0
    %v322 = vadd.f32 %v320, %v321
    %v323 = vsel %vm295, %v179, 0.0
    %v324 = vadd.f32 %v322, %v323
    %v325 = vsel %vm295, %v180, 0.0
    %v326 = vadd.f32 %v324, %v325
    %v327 = vsel %vm295, %v181, 0.0
    %v328 = vadd.f32 %v326, %v327
    %v329 = vsel %vm295, %v182, 0.0
    %v330 = vadd.f32 %v328, %v329
    %v331 = vsel %vm295, %v183, 0.0
    %v332 = vadd.f32 %v330, %v331
    %v333 = vsel %vm295, %v184, 0.0
    %v334 = vadd.f32 %v332, %v333
    %v335 = vsel %vm295, %v185, 0.0
    %v336 = vadd.f32 %v334, %v335
    %v337 = vsel %vm295, %v186, 0.0
    %v338 = vadd.f32 %v336, %v337
    %v339 = vsel %vm295, %v187, 0.0
    %v340 = vadd.f32 %v338, %v339
    %v341 = vsel %vm295, %v188, 0.0
    %v342 = vadd.f32 %v340, %v341
    %v343 = vsel %vm295, %v189, 0.0
    %v344 = vadd.f32 %v342, %v343
    %v345 = vsel %vm295, %v190, 0.0
    %v346 = vadd.f32 %v344, %v345
    %v347 = vsel %vm295, %v191, 0.0
    %v348 = vadd.f32 %v346, %v347
    %v349 = vsel %vm295, %v192, 0.0
    %v350 = vadd.f32 %v348, %v349
    %v351 = vsel %vm295, %v193, 0.0
    %v352 = vadd.f32 %v350, %v351
    %v353 = vsel %vm295, %v194, 0.0
    %v354 = vadd.f32 %v352, %v353
    %v355 = vsel %vm295, %v195, 0.0
    %v356 = vadd.f32 %v354, %v355
    %v357 = vsel %vm295, %v196, 0.0
    %v358 = vadd.f32 %v356, %v357
    %v359 = vsel %vm295, %v197, 0.0
    %v360 = vadd.f32 %v358, %v359
    %v361 = vsel %vm295, %v198, 0.0
    %v362 = vadd.f32 %v360, %v361
    %v363 = vsel %vm295, %v199, 0.0
    %v364 = vadd.f32 %v362, %v363
    %v365 = vsel %vm295, %v200, 0.0
    %v366 = vadd.f32 %v364, %v365
    %v367 = vsel %vm295, %v201, 0.0
    %v368 = vadd.f32 %v366, %v367
    %v369 = vsel %vm295, %v202, 0.0
    %v370 = vadd.f32 %v368, %v369
    %v371 = vsel %vm295, %v203, 0.0
    %v372 = vadd.f32 %v370, %v371
    %v373 = vsel %vm295, %v204, 0.0
    %v374 = vadd.f32 %v372, %v373
    %v375 = vsel %vm295, %v205, 0.0
    %v376 = vadd.f32 %v374, %v375
    %v377 = vsel %vm295, %v206, 0.0
    %v378 = vadd.f32 %v376, %v377
    %v379 = vsel %vm295, %v207, 0.0
    %v380 = vadd.f32 %v378, %v379
    %v381 = vsel %vm295, %v208, 0.0
    %v382 = vadd.f32 %v380, %v381
    %v383 = vsel %vm295, %v209, 0.0
    %v384 = vadd.f32 %v382, %v383
    %v385 = vsel %vm295, %v210, 0.0
    %v386 = vadd.f32 %v384, %v385
    %v387 = vsel %vm295, %v211, 0.0
    %v388 = vadd.f32 %v386, %v387
    %v389 = vsel %vm295, %v212, 0.0
    %v390 = vadd.f32 %v388, %v389
    %v391 = vsel %vm295, %v213, 0.0
    %v392 = vadd.f32 %v390, %v391
    %v393 = vsel %vm295, %v214, 0.0
    %v394 = vadd.f32 %v392, %v393
    %v395 = vsel %vm295, %v215, 0.0
    %v396 = vadd.f32 %v394, %v395
    %v397 = vsel %vm295, %v216, 0.0
    %v398 = vadd.f32 %v396, %v397
    %v399 = vsel %vm295, %v217, 0.0
    %v400 = vadd.f32 %v398, %v399
    %v401 = vsel %vm295, %v218, 0.0
    %v402 = vadd.f32 %v400, %v401
    %v403 = vsel %vm295, %v219, 0.0
    %v404 = vadd.f32 %v402, %v403
    %v405 = vsel %vm295, %v220, 0.0
    %v406 = vadd.f32 %v404, %v405
    %v407 = vsel %vm295, %v221, 0.0
    %v408 = vadd.f32 %v406, %v407
    %v409 = vsel %vm295, %v222, 0.0
    %v410 = vadd.f32 %v408, %v409
    %v411 = vsel %vm295, %v223, 0.0
    %v412 = vadd.f32 %v410, %v411
    %v413 = vsel %vm295, %v224, 0.0
    %v414 = vadd.f32 %v412, %v413
    %v415 = vsel %vm295, %v225, 0.0
    %v416 = vadd.f32 %v414, %v415
    %v417 = vsel %vm295, %v226, 0.0
    %v418 = vadd.f32 %v416, %v417
    %v419 = vsel %vm295, %v227, 0.0
    %v420 = vadd.f32 %v418, %v419
    %v421 = vsel %vm295, %v228, 0.0
    %v422 = vadd.f32 %v420, %v421
    %v423 = vrot.slane %v422, 4
    %v424 = vadd.f32 %v422, %v423
    %v425 = vrot.slane %v424, 2
    %v426 = vadd.f32 %v424, %v425
    %v427 = vrot.slane %v426, 1
    %v428 = vadd.f32 %v426, %v427
    %v429 = vmul.f32 %v428, 0.001953125
    %v430 = vsub.f32 %v165, %v429
    %v431 = vsub.f32 %v166, %v429
    %v432 = vsub.f32 %v167, %v429
    %v433 = vsub.f32 %v168, %v429
    %v434 = vsub.f32 %v169, %v429
    %v435 = vsub.f32 %v170, %v429
    %v436 = vsub.f32 %v171, %v429
    %v437 = vsub.f32 %v172, %v429
    %v438 = vsub.f32 %v173, %v429
    %v439 = vsub.f32 %v174, %v429
    %v440 = vsub.f32 %v175, %v429
    %v441 = vsub.f32 %v176, %v429
    %v442 = vsub.f32 %v177, %v429
    %v443 = vsub.f32 %v178, %v429
    %v444 = vsub.f32 %v179, %v429
    %v445 = vsub.f32 %v180, %v429
    %v446 = vsub.f32 %v181, %v429
    %v447 = vsub.f32 %v182, %v429
    %v448 = vsub.f32 %v183, %v429
    %v449 = vsub.f32 %v184, %v429
    %v450 = vsub.f32 %v185, %v429
    %v451 = vsub.f32 %v186, %v429
    %v452 = vsub.f32 %v187, %v429
    %v453 = vsub.f32 %v188, %v429
    %v454 = vsub.f32 %v189, %v429
    %v455 = vsub.f32 %v190, %v429
    %v456 = vsub.f32 %v191, %v429
    %v457 = vsub.f32 %v192, %v429
    %v458 = vsub.f32 %v193, %v429
    %v459 = vsub.f32 %v194, %v429
    %v460 = vsub.f32 %v195, %v429
    %v461 = vsub.f32 %v196, %v429
    %v462 = vsub.f32 %v197, %v429
    %v463 = vsub.f32 %v198, %v429
    %v464 = vsub.f32 %v199, %v429
    %v465 = vsub.f32 %v200, %v429
    %v466 = vsub.f32 %v201, %v429
    %v467 = vsub.f32 %v202, %v429
    %v468 = vsub.f32 %v203, %v429
    %v469 = vsub.f32 %v204, %v429
    %v470 = vsub.f32 %v205, %v429
    %v471 = vsub.f32 %v206, %v429
    %v472 = vsub.f32 %v207, %v429
    %v473 = vsub.f32 %v208, %v429
    %v474 = vsub.f32 %v209, %v429
    %v475 = vsub.f32 %v210, %v429
    %v476 = vsub.f32 %v211, %v429
    %v477 = vsub.f32 %v212, %v429
    %v478 = vsub.f32 %v213, %v429
    %v479 = vsub.f32 %v214, %v429
    %v480 = vsub.f32 %v215, %v429
    %v481 = vsub.f32 %v216, %v429
    %v482 = vsub.f32 %v217, %v429
    %v483 = vsub.f32 %v218, %v429
    %v484 = vsub.f32 %v219, %v429
    %v485 = vsub.f32 %v220, %v429
    %v486 = vsub.f32 %v221, %v429
    %v487 = vsub.f32 %v222, %v429
    %v488 = vsub.f32 %v223, %v429
    %v489 = vsub.f32 %v224, %v429
    %v490 = vsub.f32 %v225, %v429
    %v491 = vsub.f32 %v226, %v429
    %v492 = vsub.f32 %v227, %v429
    %v493 = vsub.f32 %v228, %v429
    %v494 = vmul.f32 %v430, %v430
    %v495 = vmul.f32 %v431, %v431
    %v496 = vmul.f32 %v432, %v432
    %v497 = vmul.f32 %v433, %v433
    %v498 = vmul.f32 %v434, %v434
    %v499 = vmul.f32 %v435, %v435
    %v500 = vmul.f32 %v436, %v436
    %v501 = vmul.f32 %v437, %v437
    %v502 = vmul.f32 %v438, %v438
    %v503 = vmul.f32 %v439, %v439
    %v504 = vmul.f32 %v440, %v440
    %v505 = vmul.f32 %v441, %v441
    %v506 = vmul.f32 %v442, %v442
    %v507 = vmul.f32 %v443, %v443
    %v508 = vmul.f32 %v444, %v444
    %v509 = vmul.f32 %v445, %v445
    %v510 = vmul.f32 %v446, %v446
    %v511 = vmul.f32 %v447, %v447
    %v512 = vmul.f32 %v448, %v448
    %v513 = vmul.f32 %v449, %v449
    %v514 = vmul.f32 %v450, %v450
    %v515 = vmul.f32 %v451, %v451
    %v516 = vmul.f32 %v452, %v452
    %v517 = vmul.f32 %v453, %v453
    %v518 = vmul.f32 %v454, %v454
    %v519 = vmul.f32 %v455, %v455
    %v520 = vmul.f32 %v456, %v456
    %v521 = vmul.f32 %v457, %v457
    %v522 = vmul.f32 %v458, %v458
    %v523 = vmul.f32 %v459, %v459
    %v524 = vmul.f32 %v460, %v460
    %v525 = vmul.f32 %v461, %v461
    %v526 = vmul.f32 %v462, %v462
    %v527 = vmul.f32 %v463, %v463
    %v528 = vmul.f32 %v464, %v464
    %v529 = vmul.f32 %v465, %v465
    %v530 = vmul.f32 %v466, %v466
    %v531 = vmul.f32 %v467, %v467
    %v532 = vmul.f32 %v468, %v468
    %v533 = vmul.f32 %v469, %v469
    %v534 = vmul.f32 %v470, %v470
    %v535 = vmul.f32 %v471, %v471
    %v536 = vmul.f32 %v472, %v472
    %v537 = vmul.f32 %v473, %v473
    %v538 = vmul.f32 %v474, %v474
    %v539 = vmul.f32 %v475, %v475
    %v540 = vmul.f32 %v476, %v476
    %v541 = vmul.f32 %v477, %v477
    %v542 = vmul.f32 %v478, %v478
    %v543 = vmul.f32 %v479, %v479
    %v544 = vmul.f32 %v480, %v480
    %v545 = vmul.f32 %v481, %v481
    %v546 = vmul.f32 %v482, %v482
    %v547 = vmul.f32 %v483, %v483
    %v548 = vmul.f32 %v484, %v484
    %v549 = vmul.f32 %v485, %v485
    %v550 = vmul.f32 %v486, %v486
    %v551 = vmul.f32 %v487, %v487
    %v552 = vmul.f32 %v488, %v488
    %v553 = vmul.f32 %v489, %v489
    %v554 = vmul.f32 %v490, %v490
    %v555 = vmul.f32 %v491, %v491
    %v556 = vmul.f32 %v492, %v492
    %v557 = vmul.f32 %v493, %v493
    %v558 = vsel %vm295, %v494, 0.0
    %v559 = vsel %vm295, %v495, 0.0
    %v560 = vadd.f32 %v558, %v559
    %v561 = vsel %vm295, %v496, 0.0
    %v562 = vadd.f32 %v560, %v561
    %v563 = vsel %vm295, %v497, 0.0
    %v564 = vadd.f32 %v562, %v563
    %v565 = vsel %vm295, %v498, 0.0
    %v566 = vadd.f32 %v564, %v565
    %v567 = vsel %vm295, %v499, 0.0
    %v568 = vadd.f32 %v566, %v567
    %v569 = vsel %vm295, %v500, 0.0
    %v570 = vadd.f32 %v568, %v569
    %v571 = vsel %vm295, %v501, 0.0
    %v572 = vadd.f32 %v570, %v571
    %v573 = vsel %vm295, %v502, 0.0
    %v574 = vadd.f32 %v572, %v573
    %v575 = vsel %vm295, %v503, 0.0
    %v576 = vadd.f32 %v574, %v575
    %v577 = vsel %vm295, %v504, 0.0
    %v578 = vadd.f32 %v576, %v577
    %v579 = vsel %vm295, %v505, 0.0
    %v580 = vadd.f32 %v578, %v579
    %v581 = vsel %vm295, %v506, 0.0
    %v582 = vadd.f32 %v580, %v581
    %v583 = vsel %vm295, %v507, 0.0
    %v584 = vadd.f32 %v582, %v583
    %v585 = vsel %vm295, %v508, 0.0
    %v586 = vadd.f32 %v584, %v585
    %v587 = vsel %vm295, %v509, 0.0
    %v588 = vadd.f32 %v586, %v587
    %v589 = vsel %vm295, %v510, 0.0
    %v590 = vadd.f32 %v588, %v589
    %v591 = vsel %vm295, %v511, 0.0
    %v592 = vadd.f32 %v590, %v591
    %v593 = vsel %vm295, %v512, 0.0
    %v594 = vadd.f32 %v592, %v593
    %v595 = vsel %vm295, %v513, 0.0
    %v596 = vadd.f32 %v594, %v595
    %v597 = vsel %vm295, %v514, 0.0
    %v598 = vadd.f32 %v596, %v597
    %v599 = vsel %vm295, %v515, 0.0
    %v600 = vadd.f32 %v598, %v599
    %v601 = vsel %vm295, %v516, 0.0
    %v602 = vadd.f32 %v600, %v601
    %v603 = vsel %vm295, %v517, 0.0
    %v604 = vadd.f32 %v602, %v603
    %v605 = vsel %vm295, %v518, 0.0
    %v606 = vadd.f32 %v604, %v605
    %v607 = vsel %vm295, %v519, 0.0
    %v608 = vadd.f32 %v606, %v607
    %v609 = vsel %vm295, %v520, 0.0
    %v610 = vadd.f32 %v608, %v609
    %v611 = vsel %vm295, %v521, 0.0
    %v612 = vadd.f32 %v610, %v611
    %v613 = vsel %vm295, %v522, 0.0
    %v614 = vadd.f32 %v612, %v613
    %v615 = vsel %vm295, %v523, 0.0
    %v616 = vadd.f32 %v614, %v615
    %v617 = vsel %vm295, %v524, 0.0
    %v618 = vadd.f32 %v616, %v617
    %v619 = vsel %vm295, %v525, 0.0
    %v620 = vadd.f32 %v618, %v619
    %v621 = vsel %vm295, %v526, 0.0
    %v622 = vadd.f32 %v620, %v621
    %v623 = vsel %vm295, %v527, 0.0
    %v624 = vadd.f32 %v622, %v623
    %v625 = vsel %vm295, %v528, 0.0
    %v626 = vadd.f32 %v624, %v625
    %v627 = vsel %vm295, %v529, 0.0
    %v628 = vadd.f32 %v626, %v627
    %v629 = vsel %vm295, %v530, 0.0
    %v630 = vadd.f32 %v628, %v629
    %v631 = vsel %vm295, %v531, 0.0
    %v632 = vadd.f32 %v630, %v631
    %v633 = vsel %vm295, %v532, 0.0
    %v634 = vadd.f32 %v632, %v633
    %v635 = vsel %vm295, %v533, 0.0
    %v636 = vadd.f32 %v634, %v635
    %v637 = vsel %vm295, %v534, 0.0
    %v638 = vadd.f32 %v636, %v637
    %v639 = vsel %vm295, %v535, 0.0
    %v640 = vadd.f32 %v638, %v639
    %v641 = vsel %vm295, %v536, 0.0
    %v642 = vadd.f32 %v640, %v641
    %v643 = vsel %vm295, %v537, 0.0
    %v644 = vadd.f32 %v642, %v643
    %v645 = vsel %vm295, %v538, 0.0
    %v646 = vadd.f32 %v644, %v645
    %v647 = vsel %vm295, %v539, 0.0
    %v648 = vadd.f32 %v646, %v647
    %v649 = vsel %vm295, %v540, 0.0
    %v650 = vadd.f32 %v648, %v649
    %v651 = vsel %vm295, %v541, 0.0
    %v652 = vadd.f32 %v650, %v651
    %v653 = vsel %vm295, %v542, 0.0
    %v654 = vadd.f32 %v652, %v653
    %v655 = vsel %vm295, %v543, 0.0
    %v656 = vadd.f32 %v654, %v655
    %v657 = vsel %vm295, %v544, 0.0
    %v658 = vadd.f32 %v656, %v657
    %v659 = vsel %vm295, %v545, 0.0
    %v660 = vadd.f32 %v658, %v659
    %v661 = vsel %vm295, %v546, 0.0
    %v662 = vadd.f32 %v660, %v661
    %v663 = vsel %vm295, %v547, 0.0
    %v664 = vadd.f32 %v662, %v663
    %v665 = vsel %vm295, %v548, 0.0
    %v666 = vadd.f32 %v664, %v665
    %v667 = vsel %vm295, %v549, 0.0
    %v668 = vadd.f32 %v666, %v667
    %v669 = vsel %vm295, %v550, 0.0
    %v670 = vadd.f32 %v668, %v669
    %v671 = vsel %vm295, %v551, 0.0
    %v672 = vadd.f32 %v670, %v671
    %v673 = vsel %vm295, %v552, 0.0
    %v674 = vadd.f32 %v672, %v673
    %v675 = vsel %vm295, %v553, 0.0
    %v676 = vadd.f32 %v674, %v675
    %v677 = vsel %vm295, %v554, 0.0
    %v678 = vadd.f32 %v676, %v677
    %v679 = vsel %vm295, %v555, 0.0
    %v680 = vadd.f32 %v678, %v679
    %v681 = vsel %vm295, %v556, 0.0
    %v682 = vadd.f32 %v680, %v681
    %v683 = vsel %vm295, %v557, 0.0
    %v684 = vadd.f32 %v682, %v683
    %v685 = vrot.slane %v684, 4
    %v686 = vadd.f32 %v684, %v685
    %v687 = vrot.slane %v686, 2
    %v688 = vadd.f32 %v686, %v687
    %v689 = vrot.slane %v688, 1
    %v690 = vadd.f32 %v688, %v689
    %v691 = vmul.f32 %v690, 0.001953125
    %v692 = vadd.f32 %v691, 1e-05
    %v693 = vrsqrt.pop %v692
    %v694 = vmul.f32 %v693, %v293
    %v695 = vlaneseq
    %v696 = vshrl.u32 %v695, 7
    %v697 = vsub.s32 0, %v696
    %v698 = vrot.slane %v694, %v697
    %v699 = vmul.f32 %v430, %v698
    %v700 = vmul.f32 %v431, %v698
    %v701 = vmul.f32 %v432, %v698
    %v702 = vmul.f32 %v433, %v698
    %v703 = vmul.f32 %v434, %v698
    %v704 = vmul.f32 %v435, %v698
    %v705 = vmul.f32 %v436, %v698
    %v706 = vmul.f32 %v437, %v698
    %v707 = vmul.f32 %v438, %v698
    %v708 = vmul.f32 %v439, %v698
    %v709 = vmul.f32 %v440, %v698
    %v710 = vmul.f32 %v441, %v698
    %v711 = vmul.f32 %v442, %v698
    %v712 = vmul.f32 %v443, %v698
    %v713 = vmul.f32 %v444, %v698
    %v714 = vmul.f32 %v445, %v698
    %v715 = vmul.f32 %v446, %v698
    %v716 = vmul.f32 %v447, %v698
    %v717 = vmul.f32 %v448, %v698
    %v718 = vmul.f32 %v449, %v698
    %v719 = vmul.f32 %v450, %v698
    %v720 = vmul.f32 %v451, %v698
    %v721 = vmul.f32 %v452, %v698
    %v722 = vmul.f32 %v453, %v698
    %v723 = vmul.f32 %v454, %v698
    %v724 = vmul.f32 %v455, %v698
    %v725 = vmul.f32 %v456, %v698
    %v726 = vmul.f32 %v457, %v698
    %v727 = vmul.f32 %v458, %v698
    %v728 = vmul.f32 %v459, %v698
    %v729 = vmul.f32 %v460, %v698
    %v730 = vmul.f32 %v461, %v698
    %v731 = vmul.f32 %v462, %v698
    %v732 = vmul.f32 %v463, %v698
    %v733 = vmul.f32 %v464, %v698
    %v734 = vmul.f32 %v465, %v698
    %v735 = vmul.f32 %v466, %v698
    %v736 = vmul.f32 %v467, %v698
    %v737 = vmul.f32 %v468, %v698
    %v738 = vmul.f32 %v469, %v698
    %v739 = vmul.f32 %v470, %v698
    %v740 = vmul.f32 %v471, %v698
    %v741 = vmul.f32 %v472, %v698
    %v742 = vmul.f32 %v473, %v698
    %v743 = vmul.f32 %v474, %v698
    %v744 = vmul.f32 %v475, %v698
    %v745 = vmul.f32 %v476, %v698
    %v746 = vmul.f32 %v477, %v698
    %v747 = vmul.f32 %v478, %v698
    %v748 = vmul.f32 %v479, %v698
    %v749 = vmul.f32 %v480, %v698
    %v750 = vmul.f32 %v481, %v698
    %v751 = vmul.f32 %v482, %v698
    %v752 = vmul.f32 %v483, %v698
    %v753 = vmul.f32 %v484, %v698
    %v754 = vmul.f32 %v485, %v698
    %v755 = vmul.f32 %v486, %v698
    %v756 = vmul.f32 %v487, %v698
    %v757 = vmul.f32 %v488, %v698
    %v758 = vmul.f32 %v489, %v698
    %v759 = vmul.f32 %v490, %v698
    %v760 = vmul.f32 %v491, %v698
    %v761 = vmul.f32 %v492, %v698
    %v762 = vmul.f32 %v493, %v698
    %v764 = vlaneseq
    %v765 = vshrl.u32 %v764, 7
    %v766 = vsub.s32 0, %v765
    %v767 = vrot.slane %v294, %v766
    %v769 = vadd.f32 %v699, %v767
    %v770 = vadd.f32 %v700, %v767
    %v771 = vadd.f32 %v701, %v767
    %v772 = vadd.f32 %v702, %v767
    %v773 = vadd.f32 %v703, %v767
    %v774 = vadd.f32 %v704, %v767
    %v775 = vadd.f32 %v705, %v767
    %v776 = vadd.f32 %v706, %v767
    %v777 = vadd.f32 %v707, %v767
    %v778 = vadd.f32 %v708, %v767
    %v779 = vadd.f32 %v709, %v767
    %v780 = vadd.f32 %v710, %v767
    %v781 = vadd.f32 %v711, %v767
    %v782 = vadd.f32 %v712, %v767
    %v783 = vadd.f32 %v713, %v767
    %v784 = vadd.f32 %v714, %v767
    %v785 = vadd.f32 %v715, %v767
    %v786 = vadd.f32 %v716, %v767
    %v787 = vadd.f32 %v717, %v767
    %v788 = vadd.f32 %v718, %v767
    %v789 = vadd.f32 %v719, %v767
    %v790 = vadd.f32 %v720, %v767
    %v791 = vadd.f32 %v721, %v767
    %v792 = vadd.f32 %v722, %v767
    %v793 = vadd.f32 %v723, %v767
    %v794 = vadd.f32 %v724, %v767
    %v795 = vadd.f32 %v725, %v767
    %v796 = vadd.f32 %v726, %v767
    %v797 = vadd.f32 %v727, %v767
    %v798 = vadd.f32 %v728, %v767
    %v799 = vadd.f32 %v729, %v767
    %v800 = vadd.f32 %v730, %v767
    %v801 = vadd.f32 %v731, %v767
    %v802 = vadd.f32 %v732, %v767
    %v803 = vadd.f32 %v733, %v767
    %v804 = vadd.f32 %v734, %v767
    %v805 = vadd.f32 %v735, %v767
    %v806 = vadd.f32 %v736, %v767
    %v807 = vadd.f32 %v737, %v767
    %v808 = vadd.f32 %v738, %v767
    %v809 = vadd.f32 %v739, %v767
    %v810 = vadd.f32 %v740, %v767
    %v811 = vadd.f32 %v741, %v767
    %v812 = vadd.f32 %v742, %v767
    %v813 = vadd.f32 %v743, %v767
    %v814 = vadd.f32 %v744, %v767
    %v815 = vadd.f32 %v745, %v767
    %v816 = vadd.f32 %v746, %v767
    %v817 = vadd.f32 %v747, %v767
    %v818 = vadd.f32 %v748, %v767
    %v819 = vadd.f32 %v749, %v767
    %v820 = vadd.f32 %v750, %v767
    %v821 = vadd.f32 %v751, %v767
    %v822 = vadd.f32 %v752, %v767
    %v823 = vadd.f32 %v753, %v767
    %v824 = vadd.f32 %v754, %v767
    %v825 = vadd.f32 %v755, %v767
    %v826 = vadd.f32 %v756, %v767
    %v827 = vadd.f32 %v757, %v767
    %v828 = vadd.f32 %v758, %v767
    %v829 = vadd.f32 %v759, %v767
    %v830 = vadd.f32 %v760, %v767
    %v831 = vadd.f32 %v761, %v767
    %v832 = vadd.f32 %v762, %v767
    %vm833 = vcmp.ge.f32.partialorder %v769, 0.0
    %vm834 = vcmp.ge.f32.partialorder %v770, 0.0
    %vm835 = vcmp.ge.f32.partialorder %v771, 0.0
    %vm836 = vcmp.ge.f32.partialorder %v772, 0.0
    %vm837 = vcmp.ge.f32.partialorder %v773, 0.0
    %vm838 = vcmp.ge.f32.partialorder %v774, 0.0
    %vm839 = vcmp.ge.f32.partialorder %v775, 0.0
    %vm840 = vcmp.ge.f32.partialorder %v776, 0.0
    %vm841 = vcmp.ge.f32.partialorder %v777, 0.0
    %vm842 = vcmp.ge.f32.partialorder %v778, 0.0
    %vm843 = vcmp.ge.f32.partialorder %v779, 0.0
    %vm844 = vcmp.ge.f32.partialorder %v780, 0.0
    %vm845 = vcmp.ge.f32.partialorder %v781, 0.0
    %vm846 = vcmp.ge.f32.partialorder %v782, 0.0
    %vm847 = vcmp.ge.f32.partialorder %v783, 0.0
    %vm848 = vcmp.ge.f32.partialorder %v784, 0.0
    %vm849 = vcmp.ge.f32.partialorder %v785, 0.0
    %vm850 = vcmp.ge.f32.partialorder %v786, 0.0
    %vm851 = vcmp.ge.f32.partialorder %v787, 0.0
    %vm852 = vcmp.ge.f32.partialorder %v788, 0.0
    %vm853 = vcmp.ge.f32.partialorder %v789, 0.0
    %vm854 = vcmp.ge.f32.partialorder %v790, 0.0
    %vm855 = vcmp.ge.f32.partialorder %v791, 0.0
    %vm856 = vcmp.ge.f32.partialorder %v792, 0.0
    %vm857 = vcmp.ge.f32.partialorder %v793, 0.0
    %vm858 = vcmp.ge.f32.partialorder %v794, 0.0
    %vm859 = vcmp.ge.f32.partialorder %v795, 0.0
    %vm860 = vcmp.ge.f32.partialorder %v796, 0.0
    %vm861 = vcmp.ge.f32.partialorder %v797, 0.0
    %vm862 = vcmp.ge.f32.partialorder %v798, 0.0
    %vm863 = vcmp.ge.f32.partialorder %v799, 0.0
    %vm864 = vcmp.ge.f32.partialorder %v800, 0.0
    %vm865 = vcmp.ge.f32.partialorder %v801, 0.0
    %vm866 = vcmp.ge.f32.partialorder %v802, 0.0
    %vm867 = vcmp.ge.f32.partialorder %v803, 0.0
    %vm868 = vcmp.ge.f32.partialorder %v804, 0.0
    %vm869 = vcmp.ge.f32.partialorder %v805, 0.0
    %vm870 = vcmp.ge.f32.partialorder %v806, 0.0
    %vm871 = vcmp.ge.f32.partialorder %v807, 0.0
    %vm872 = vcmp.ge.f32.partialorder %v808, 0.0
    %vm873 = vcmp.ge.f32.partialorder %v809, 0.0
    %vm874 = vcmp.ge.f32.partialorder %v810, 0.0
    %vm875 = vcmp.ge.f32.partialorder %v811, 0.0
    %vm876 = vcmp.ge.f32.partialorder %v812, 0.0
    %vm877 = vcmp.ge.f32.partialorder %v813, 0.0
    %vm878 = vcmp.ge.f32.partialorder %v814, 0.0
    %vm879 = vcmp.ge.f32.partialorder %v815, 0.0
    %vm880 = vcmp.ge.f32.partialorder %v816, 0.0
    %vm881 = vcmp.ge.f32.partialorder %v817, 0.0
    %vm882 = vcmp.ge.f32.partialorder %v818, 0.0
    %vm883 = vcmp.ge.f32.partialorder %v819, 0.0
    %vm884 = vcmp.ge.f32.partialorder %v820, 0.0
    %vm885 = vcmp.ge.f32.partialorder %v821, 0.0
    %vm886 = vcmp.ge.f32.partialorder %v822, 0.0
    %vm887 = vcmp.ge.f32.partialorder %v823, 0.0
    %vm888 = vcmp.ge.f32.partialorder %v824, 0.0
    %vm889 = vcmp.ge.f32.partialorder %v825, 0.0
    %vm890 = vcmp.ge.f32.partialorder %v826, 0.0
    %vm891 = vcmp.ge.f32.partialorder %v827, 0.0
    %vm892 = vcmp.ge.f32.partialorder %v828, 0.0
    %vm893 = vcmp.ge.f32.partialorder %v829, 0.0
    %vm894 = vcmp.ge.f32.partialorder %v830, 0.0
    %vm895 = vcmp.ge.f32.partialorder %v831, 0.0
    %vm896 = vcmp.ge.f32.partialorder %v832, 0.0
    %v897 = vstv %s53
    %v898 = vmul.f32 %v897, %v769
    %v899 = vmul.f32 %v897, %v770
    %v900 = vmul.f32 %v897, %v771
    %v901 = vmul.f32 %v897, %v772
    %v902 = vmul.f32 %v897, %v773
    %v903 = vmul.f32 %v897, %v774
    %v904 = vmul.f32 %v897, %v775
    %v905 = vmul.f32 %v897, %v776
    %v906 = vmul.f32 %v897, %v777
    %v907 = vmul.f32 %v897, %v778
    %v908 = vmul.f32 %v897, %v779
    %v909 = vmul.f32 %v897, %v780
    %v910 = vmul.f32 %v897, %v781
    %v911 = vmul.f32 %v897, %v782
    %v912 = vmul.f32 %v897, %v783
    %v913 = vmul.f32 %v897, %v784
    %v914 = vmul.f32 %v897, %v785
    %v915 = vmul.f32 %v897, %v786
    %v916 = vmul.f32 %v897, %v787
    %v917 = vmul.f32 %v897, %v788
    %v918 = vmul.f32 %v897, %v789
    %v919 = vmul.f32 %v897, %v790
    %v920 = vmul.f32 %v897, %v791
    %v921 = vmul.f32 %v897, %v792
    %v922 = vmul.f32 %v897, %v793
    %v923 = vmul.f32 %v897, %v794
    %v924 = vmul.f32 %v897, %v795
    %v925 = vmul.f32 %v897, %v796
    %v926 = vmul.f32 %v897, %v797
    %v927 = vmul.f32 %v897, %v798
    %v928 = vmul.f32 %v897, %v799
    %v929 = vmul.f32 %v897, %v800
    %v930 = vmul.f32 %v897, %v801
    %v931 = vmul.f32 %v897, %v802
    %v932 = vmul.f32 %v897, %v803
    %v933 = vmul.f32 %v897, %v804
    %v934 = vmul.f32 %v897, %v805
    %v935 = vmul.f32 %v897, %v806
    %v936 = vmul.f32 %v897, %v807
    %v937 = vmul.f32 %v897, %v808
    %v938 = vmul.f32 %v897, %v809
    %v939 = vmul.f32 %v897, %v810
    %v940 = vmul.f32 %v897, %v811
    %v941 = vmul.f32 %v897, %v812
    %v942 = vmul.f32 %v897, %v813
    %v943 = vmul.f32 %v897, %v814
    %v944 = vmul.f32 %v897, %v815
    %v945 = vmul.f32 %v897, %v816
    %v946 = vmul.f32 %v897, %v817
    %v947 = vmul.f32 %v897, %v818
    %v948 = vmul.f32 %v897, %v819
    %v949 = vmul.f32 %v897, %v820
    %v950 = vmul.f32 %v897, %v821
    %v951 = vmul.f32 %v897, %v822
    %v952 = vmul.f32 %v897, %v823
    %v953 = vmul.f32 %v897, %v824
    %v954 = vmul.f32 %v897, %v825
    %v955 = vmul.f32 %v897, %v826
    %v956 = vmul.f32 %v897, %v827
    %v957 = vmul.f32 %v897, %v828
    %v958 = vmul.f32 %v897, %v829
    %v959 = vmul.f32 %v897, %v830
    %v960 = vmul.f32 %v897, %v831
    %v961 = vmul.f32 %v897, %v832
    %v962 = vsel %vm833, %v769, %v898
    %v963 = vsel %vm834, %v770, %v899
    %v964 = vsel %vm835, %v771, %v900
    %v965 = vsel %vm836, %v772, %v901
    %v966 = vsel %vm837, %v773, %v902
    %v967 = vsel %vm838, %v774, %v903
    %v968 = vsel %vm839, %v775, %v904
    %v969 = vsel %vm840, %v776, %v905
    %v970 = vsel %vm841, %v777, %v906
    %v971 = vsel %vm842, %v778, %v907
    %v972 = vsel %vm843, %v779, %v908
    %v973 = vsel %vm844, %v780, %v909
    %v974 = vsel %vm845, %v781, %v910
    %v975 = vsel %vm846, %v782, %v911
    %v976 = vsel %vm847, %v783, %v912
    %v977 = vsel %vm848, %v784, %v913
    %v978 = vsel %vm849, %v785, %v914
    %v979 = vsel %vm850, %v786, %v915
    %v980 = vsel %vm851, %v787, %v916
    %v981 = vsel %vm852, %v788, %v917
    %v982 = vsel %vm853, %v789, %v918
    %v983 = vsel %vm854, %v790, %v919
    %v984 = vsel %vm855, %v791, %v920
    %v985 = vsel %vm856, %v792, %v921
    %v986 = vsel %vm857, %v793, %v922
    %v987 = vsel %vm858, %v794, %v923
    %v988 = vsel %vm859, %v795, %v924
    %v989 = vsel %vm860, %v796, %v925
    %v990 = vsel %vm861, %v797, %v926
    %v991 = vsel %vm862, %v798, %v927
    %v992 = vsel %vm863, %v799, %v928
    %v993 = vsel %vm864, %v800, %v929
    %v994 = vsel %vm865, %v801, %v930
    %v995 = vsel %vm866, %v802, %v931
    %v996 = vsel %vm867, %v803, %v932
    %v997 = vsel %vm868, %v804, %v933
    %v998 = vsel %vm869, %v805, %v934
    %v999 = vsel %vm870, %v806, %v935
    %v1000 = vsel %vm871, %v807, %v936
    %v1001 = vsel %vm872, %v808, %v937
    %v1002 = vsel %vm873, %v809, %v938
    %v1003 = vsel %vm874, %v810, %v939
    %v1004 = vsel %vm875, %v811, %v940
    %v1005 = vsel %vm876, %v812, %v941
    %v1006 = vsel %vm877, %v813, %v942
    %v1007 = vsel %vm878, %v814, %v943
    %v1008 = vsel %vm879, %v815, %v944
    %v1009 = vsel %vm880, %v816, %v945
    %v1010 = vsel %vm881, %v817, %v946
    %v1011 = vsel %vm882, %v818, %v947
    %v1012 = vsel %vm883, %v819, %v948
    %v1013 = vsel %vm884, %v820, %v949
    %v1014 = vsel %vm885, %v821, %v950
    %v1015 = vsel %vm886, %v822, %v951
    %v1016 = vsel %vm887, %v823, %v952
    %v1017 = vsel %vm888, %v824, %v953
    %v1018 = vsel %vm889, %v825, %v954
    %v1019 = vsel %vm890, %v826, %v955
    %v1020 = vsel %vm891, %v827, %v956
    %v1021 = vsel %vm892, %v828, %v957
    %v1022 = vsel %vm893, %v829, %v958
    %v1023 = vsel %vm894, %v830, %v959
    %v1024 = vsel %vm895, %v831, %v960
    %v1025 = vsel %vm896, %v832, %v961
    %v1026 = vld [vmem:[%s4] sm:$0x1]
    %v1027 = vld [vmem:[%s5] sm:$0x1]
    %v1028 = vsel %vm295, %v229, 0.0
    %v1029 = vsel %vm295, %v230, 0.0
    %v1030 = vadd.f32 %v1028, %v1029
    %v1031 = vsel %vm295, %v231, 0.0
    %v1032 = vadd.f32 %v1030, %v1031
    %v1033 = vsel %vm295, %v232, 0.0
    %v1034 = vadd.f32 %v1032, %v1033
    %v1035 = vsel %vm295, %v233, 0.0
    %v1036 = vadd.f32 %v1034, %v1035
    %v1037 = vsel %vm295, %v234, 0.0
    %v1038 = vadd.f32 %v1036, %v1037
    %v1039 = vsel %vm295, %v235, 0.0
    %v1040 = vadd.f32 %v1038, %v1039
    %v1041 = vsel %vm295, %v236, 0.0
    %v1042 = vadd.f32 %v1040, %v1041
    %v1043 = vsel %vm295, %v237, 0.0
    %v1044 = vadd.f32 %v1042, %v1043
    %v1045 = vsel %vm295, %v238, 0.0
    %v1046 = vadd.f32 %v1044, %v1045
    %v1047 = vsel %vm295, %v239, 0.0
    %v1048 = vadd.f32 %v1046, %v1047
    %v1049 = vsel %vm295, %v240, 0.0
    %v1050 = vadd.f32 %v1048, %v1049
    %v1051 = vsel %vm295, %v241, 0.0
    %v1052 = vadd.f32 %v1050, %v1051
    %v1053 = vsel %vm295, %v242, 0.0
    %v1054 = vadd.f32 %v1052, %v1053
    %v1055 = vsel %vm295, %v243, 0.0
    %v1056 = vadd.f32 %v1054, %v1055
    %v1057 = vsel %vm295, %v244, 0.0
    %v1058 = vadd.f32 %v1056, %v1057
    %v1059 = vsel %vm295, %v245, 0.0
    %v1060 = vadd.f32 %v1058, %v1059
    %v1061 = vsel %vm295, %v246, 0.0
    %v1062 = vadd.f32 %v1060, %v1061
    %v1063 = vsel %vm295, %v247, 0.0
    %v1064 = vadd.f32 %v1062, %v1063
    %v1065 = vsel %vm295, %v248, 0.0
    %v1066 = vadd.f32 %v1064, %v1065
    %v1067 = vsel %vm295, %v249, 0.0
    %v1068 = vadd.f32 %v1066, %v1067
    %v1069 = vsel %vm295, %v250, 0.0
    %v1070 = vadd.f32 %v1068, %v1069
    %v1071 = vsel %vm295, %v251, 0.0
    %v1072 = vadd.f32 %v1070, %v1071
    %v1073 = vsel %vm295, %v252, 0.0
    %v1074 = vadd.f32 %v1072, %v1073
    %v1075 = vsel %vm295, %v253, 0.0
    %v1076 = vadd.f32 %v1074, %v1075
    %v1077 = vsel %vm295, %v254, 0.0
    %v1078 = vadd.f32 %v1076, %v1077
    %v1079 = vsel %vm295, %v255, 0.0
    %v1080 = vadd.f32 %v1078, %v1079
    %v1081 = vsel %vm295, %v256, 0.0
    %v1082 = vadd.f32 %v1080, %v1081
    %v1083 = vsel %vm295, %v257, 0.0
    %v1084 = vadd.f32 %v1082, %v1083
    %v1085 = vsel %vm295, %v258, 0.0
    %v1086 = vadd.f32 %v1084, %v1085
    %v1087 = vsel %vm295, %v259, 0.0
    %v1088 = vadd.f32 %v1086, %v1087
    %v1089 = vsel %vm295, %v260, 0.0
    %v1090 = vadd.f32 %v1088, %v1089
    %v1091 = vsel %vm295, %v261, 0.0
    %v1092 = vadd.f32 %v1090, %v1091
    %v1093 = vsel %vm295, %v262, 0.0
    %v1094 = vadd.f32 %v1092, %v1093
    %v1095 = vsel %vm295, %v263, 0.0
    %v1096 = vadd.f32 %v1094, %v1095
    %v1097 = vsel %vm295, %v264, 0.0
    %v1098 = vadd.f32 %v1096, %v1097
    %v1099 = vsel %vm295, %v265, 0.0
    %v1100 = vadd.f32 %v1098, %v1099
    %v1101 = vsel %vm295, %v266, 0.0
    %v1102 = vadd.f32 %v1100, %v1101
    %v1103 = vsel %vm295, %v267, 0.0
    %v1104 = vadd.f32 %v1102, %v1103
    %v1105 = vsel %vm295, %v268, 0.0
    %v1106 = vadd.f32 %v1104, %v1105
    %v1107 = vsel %vm295, %v269, 0.0
    %v1108 = vadd.f32 %v1106, %v1107
    %v1109 = vsel %vm295, %v270, 0.0
    %v1110 = vadd.f32 %v1108, %v1109
    %v1111 = vsel %vm295, %v271, 0.0
    %v1112 = vadd.f32 %v1110, %v1111
    %v1113 = vsel %vm295, %v272, 0.0
    %v1114 = vadd.f32 %v1112, %v1113
    %v1115 = vsel %vm295, %v273, 0.0
    %v1116 = vadd.f32 %v1114, %v1115
    %v1117 = vsel %vm295, %v274, 0.0
    %v1118 = vadd.f32 %v1116, %v1117
    %v1119 = vsel %vm295, %v275, 0.0
    %v1120 = vadd.f32 %v1118, %v1119
    %v1121 = vsel %vm295, %v276, 0.0
    %v1122 = vadd.f32 %v1120, %v1121
    %v1123 = vsel %vm295, %v277, 0.0
    %v1124 = vadd.f32 %v1122, %v1123
    %v1125 = vsel %vm295, %v278, 0.0
    %v1126 = vadd.f32 %v1124, %v1125
    %v1127 = vsel %vm295, %v279, 0.0
    %v1128 = vadd.f32 %v1126, %v1127
    %v1129 = vsel %vm295, %v280, 0.0
    %v1130 = vadd.f32 %v1128, %v1129
    %v1131 = vsel %vm295, %v281, 0.0
    %v1132 = vadd.f32 %v1130, %v1131
    %v1133 = vsel %vm295, %v282, 0.0
    %v1134 = vadd.f32 %v1132, %v1133
    %v1135 = vsel %vm295, %v283, 0.0
    %v1136 = vadd.f32 %v1134, %v1135
    %v1137 = vsel %vm295, %v284, 0.0
    %v1138 = vadd.f32 %v1136, %v1137
    %v1139 = vsel %vm295, %v285, 0.0
    %v1140 = vadd.f32 %v1138, %v1139
    %v1141 = vsel %vm295, %v286, 0.0
    %v1142 = vadd.f32 %v1140, %v1141
    %v1143 = vsel %vm295, %v287, 0.0
    %v1144 = vadd.f32 %v1142, %v1143
    %v1145 = vsel %vm295, %v288, 0.0
    %v1146 = vadd.f32 %v1144, %v1145
    %v1147 = vsel %vm295, %v289, 0.0
    %v1148 = vadd.f32 %v1146, %v1147
    %v1149 = vsel %vm295, %v290, 0.0
    %v1150 = vadd.f32 %v1148, %v1149
    %v1151 = vsel %vm295, %v291, 0.0
    %v1152 = vadd.f32 %v1150, %v1151
    %v1153 = vsel %vm295, %v292, 0.0
    %v1154 = vadd.f32 %v1152, %v1153
    %v1155 = vrot.slane %v1154, 4
    %v1156 = vadd.f32 %v1154, %v1155
    %v1157 = vrot.slane %v1156, 2
    %v1158 = vadd.f32 %v1156, %v1157
    %v1159 = vrot.slane %v1158, 1
    %v1160 = vadd.f32 %v1158, %v1159
    %v1161 = vmul.f32 %v1160, 0.001953125
    %v1162 = vsub.f32 %v229, %v1161
    %v1163 = vsub.f32 %v230, %v1161
    %v1164 = vsub.f32 %v231, %v1161
    %v1165 = vsub.f32 %v232, %v1161
    %v1166 = vsub.f32 %v233, %v1161
    %v1167 = vsub.f32 %v234, %v1161
    %v1168 = vsub.f32 %v235, %v1161
    %v1169 = vsub.f32 %v236, %v1161
    %v1170 = vsub.f32 %v237, %v1161
    %v1171 = vsub.f32 %v238, %v1161
    %v1172 = vsub.f32 %v239, %v1161
    %v1173 = vsub.f32 %v240, %v1161
    %v1174 = vsub.f32 %v241, %v1161
    %v1175 = vsub.f32 %v242, %v1161
    %v1176 = vsub.f32 %v243, %v1161
    %v1177 = vsub.f32 %v244, %v1161
    %v1178 = vsub.f32 %v245, %v1161
    %v1179 = vsub.f32 %v246, %v1161
    %v1180 = vsub.f32 %v247, %v1161
    %v1181 = vsub.f32 %v248, %v1161
    %v1182 = vsub.f32 %v249, %v1161
    %v1183 = vsub.f32 %v250, %v1161
    %v1184 = vsub.f32 %v251, %v1161
    %v1185 = vsub.f32 %v252, %v1161
    %v1186 = vsub.f32 %v253, %v1161
    %v1187 = vsub.f32 %v254, %v1161
    %v1188 = vsub.f32 %v255, %v1161
    %v1189 = vsub.f32 %v256, %v1161
    %v1190 = vsub.f32 %v257, %v1161
    %v1191 = vsub.f32 %v258, %v1161
    %v1192 = vsub.f32 %v259, %v1161
    %v1193 = vsub.f32 %v260, %v1161
    %v1194 = vsub.f32 %v261, %v1161
    %v1195 = vsub.f32 %v262, %v1161
    %v1196 = vsub.f32 %v263, %v1161
    %v1197 = vsub.f32 %v264, %v1161
    %v1198 = vsub.f32 %v265, %v1161
    %v1199 = vsub.f32 %v266, %v1161
    %v1200 = vsub.f32 %v267, %v1161
    %v1201 = vsub.f32 %v268, %v1161
    %v1202 = vsub.f32 %v269, %v1161
    %v1203 = vsub.f32 %v270, %v1161
    %v1204 = vsub.f32 %v271, %v1161
    %v1205 = vsub.f32 %v272, %v1161
    %v1206 = vsub.f32 %v273, %v1161
    %v1207 = vsub.f32 %v274, %v1161
    %v1208 = vsub.f32 %v275, %v1161
    %v1209 = vsub.f32 %v276, %v1161
    %v1210 = vsub.f32 %v277, %v1161
    %v1211 = vsub.f32 %v278, %v1161
    %v1212 = vsub.f32 %v279, %v1161
    %v1213 = vsub.f32 %v280, %v1161
    %v1214 = vsub.f32 %v281, %v1161
    %v1215 = vsub.f32 %v282, %v1161
    %v1216 = vsub.f32 %v283, %v1161
    %v1217 = vsub.f32 %v284, %v1161
    %v1218 = vsub.f32 %v285, %v1161
    %v1219 = vsub.f32 %v286, %v1161
    %v1220 = vsub.f32 %v287, %v1161
    %v1221 = vsub.f32 %v288, %v1161
    %v1222 = vsub.f32 %v289, %v1161
    %v1223 = vsub.f32 %v290, %v1161
    %v1224 = vsub.f32 %v291, %v1161
    %v1225 = vsub.f32 %v292, %v1161
    %v1226 = vmul.f32 %v1162, %v1162
    %v1227 = vmul.f32 %v1163, %v1163
    %v1228 = vmul.f32 %v1164, %v1164
    %v1229 = vmul.f32 %v1165, %v1165
    %v1230 = vmul.f32 %v1166, %v1166
    %v1231 = vmul.f32 %v1167, %v1167
    %v1232 = vmul.f32 %v1168, %v1168
    %v1233 = vmul.f32 %v1169, %v1169
    %v1234 = vmul.f32 %v1170, %v1170
    %v1235 = vmul.f32 %v1171, %v1171
    %v1236 = vmul.f32 %v1172, %v1172
    %v1237 = vmul.f32 %v1173, %v1173
    %v1238 = vmul.f32 %v1174, %v1174
    %v1239 = vmul.f32 %v1175, %v1175
    %v1240 = vmul.f32 %v1176, %v1176
    %v1241 = vmul.f32 %v1177, %v1177
    %v1242 = vmul.f32 %v1178, %v1178
    %v1243 = vmul.f32 %v1179, %v1179
    %v1244 = vmul.f32 %v1180, %v1180
    %v1245 = vmul.f32 %v1181, %v1181
    %v1246 = vmul.f32 %v1182, %v1182
    %v1247 = vmul.f32 %v1183, %v1183
    %v1248 = vmul.f32 %v1184, %v1184
    %v1249 = vmul.f32 %v1185, %v1185
    %v1250 = vmul.f32 %v1186, %v1186
    %v1251 = vmul.f32 %v1187, %v1187
    %v1252 = vmul.f32 %v1188, %v1188
    %v1253 = vmul.f32 %v1189, %v1189
    %v1254 = vmul.f32 %v1190, %v1190
    %v1255 = vmul.f32 %v1191, %v1191
    %v1256 = vmul.f32 %v1192, %v1192
    %v1257 = vmul.f32 %v1193, %v1193
    %v1258 = vmul.f32 %v1194, %v1194
    %v1259 = vmul.f32 %v1195, %v1195
    %v1260 = vmul.f32 %v1196, %v1196
    %v1261 = vmul.f32 %v1197, %v1197
    %v1262 = vmul.f32 %v1198, %v1198
    %v1263 = vmul.f32 %v1199, %v1199
    %v1264 = vmul.f32 %v1200, %v1200
    %v1265 = vmul.f32 %v1201, %v1201
    %v1266 = vmul.f32 %v1202, %v1202
    %v1267 = vmul.f32 %v1203, %v1203
    %v1268 = vmul.f32 %v1204, %v1204
    %v1269 = vmul.f32 %v1205, %v1205
    %v1270 = vmul.f32 %v1206, %v1206
    %v1271 = vmul.f32 %v1207, %v1207
    %v1272 = vmul.f32 %v1208, %v1208
    %v1273 = vmul.f32 %v1209, %v1209
    %v1274 = vmul.f32 %v1210, %v1210
    %v1275 = vmul.f32 %v1211, %v1211
    %v1276 = vmul.f32 %v1212, %v1212
    %v1277 = vmul.f32 %v1213, %v1213
    %v1278 = vmul.f32 %v1214, %v1214
    %v1279 = vmul.f32 %v1215, %v1215
    %v1280 = vmul.f32 %v1216, %v1216
    %v1281 = vmul.f32 %v1217, %v1217
    %v1282 = vmul.f32 %v1218, %v1218
    %v1283 = vmul.f32 %v1219, %v1219
    %v1284 = vmul.f32 %v1220, %v1220
    %v1285 = vmul.f32 %v1221, %v1221
    %v1286 = vmul.f32 %v1222, %v1222
    %v1287 = vmul.f32 %v1223, %v1223
    %v1288 = vmul.f32 %v1224, %v1224
    %v1289 = vmul.f32 %v1225, %v1225
    %v1290 = vsel %vm295, %v1226, 0.0
    %v1291 = vsel %vm295, %v1227, 0.0
    %v1292 = vadd.f32 %v1290, %v1291
    %v1293 = vsel %vm295, %v1228, 0.0
    %v1294 = vadd.f32 %v1292, %v1293
    %v1295 = vsel %vm295, %v1229, 0.0
    %v1296 = vadd.f32 %v1294, %v1295
    %v1297 = vsel %vm295, %v1230, 0.0
    %v1298 = vadd.f32 %v1296, %v1297
    %v1299 = vsel %vm295, %v1231, 0.0
    %v1300 = vadd.f32 %v1298, %v1299
    %v1301 = vsel %vm295, %v1232, 0.0
    %v1302 = vadd.f32 %v1300, %v1301
    %v1303 = vsel %vm295, %v1233, 0.0
    %v1304 = vadd.f32 %v1302, %v1303
    %v1305 = vsel %vm295, %v1234, 0.0
    %v1306 = vadd.f32 %v1304, %v1305
    %v1307 = vsel %vm295, %v1235, 0.0
    %v1308 = vadd.f32 %v1306, %v1307
    %v1309 = vsel %vm295, %v1236, 0.0
    %v1310 = vadd.f32 %v1308, %v1309
    %v1311 = vsel %vm295, %v1237, 0.0
    %v1312 = vadd.f32 %v1310, %v1311
    %v1313 = vsel %vm295, %v1238, 0.0
    %v1314 = vadd.f32 %v1312, %v1313
    %v1315 = vsel %vm295, %v1239, 0.0
    %v1316 = vadd.f32 %v1314, %v1315
    %v1317 = vsel %vm295, %v1240, 0.0
    %v1318 = vadd.f32 %v1316, %v1317
    %v1319 = vsel %vm295, %v1241, 0.0
    %v1320 = vadd.f32 %v1318, %v1319
    %v1321 = vsel %vm295, %v1242, 0.0
    %v1322 = vadd.f32 %v1320, %v1321
    %v1323 = vsel %vm295, %v1243, 0.0
    %v1324 = vadd.f32 %v1322, %v1323
    %v1325 = vsel %vm295, %v1244, 0.0
    %v1326 = vadd.f32 %v1324, %v1325
    %v1327 = vsel %vm295, %v1245, 0.0
    %v1328 = vadd.f32 %v1326, %v1327
    %v1329 = vsel %vm295, %v1246, 0.0
    %v1330 = vadd.f32 %v1328, %v1329
    %v1331 = vsel %vm295, %v1247, 0.0
    %v1332 = vadd.f32 %v1330, %v1331
    %v1333 = vsel %vm295, %v1248, 0.0
    %v1334 = vadd.f32 %v1332, %v1333
    %v1335 = vsel %vm295, %v1249, 0.0
    %v1336 = vadd.f32 %v1334, %v1335
    %v1337 = vsel %vm295, %v1250, 0.0
    %v1338 = vadd.f32 %v1336, %v1337
    %v1339 = vsel %vm295, %v1251, 0.0
    %v1340 = vadd.f32 %v1338, %v1339
    %v1341 = vsel %vm295, %v1252, 0.0
    %v1342 = vadd.f32 %v1340, %v1341
    %v1343 = vsel %vm295, %v1253, 0.0
    %v1344 = vadd.f32 %v1342, %v1343
    %v1345 = vsel %vm295, %v1254, 0.0
    %v1346 = vadd.f32 %v1344, %v1345
    %v1347 = vsel %vm295, %v1255, 0.0
    %v1348 = vadd.f32 %v1346, %v1347
    %v1349 = vsel %vm295, %v1256, 0.0
    %v1350 = vadd.f32 %v1348, %v1349
    %v1351 = vsel %vm295, %v1257, 0.0
    %v1352 = vadd.f32 %v1350, %v1351
    %v1353 = vsel %vm295, %v1258, 0.0
    %v1354 = vadd.f32 %v1352, %v1353
    %v1355 = vsel %vm295, %v1259, 0.0
    %v1356 = vadd.f32 %v1354, %v1355
    %v1357 = vsel %vm295, %v1260, 0.0
    %v1358 = vadd.f32 %v1356, %v1357
    %v1359 = vsel %vm295, %v1261, 0.0
    %v1360 = vadd.f32 %v1358, %v1359
    %v1361 = vsel %vm295, %v1262, 0.0
    %v1362 = vadd.f32 %v1360, %v1361
    %v1363 = vsel %vm295, %v1263, 0.0
    %v1364 = vadd.f32 %v1362, %v1363
    %v1365 = vsel %vm295, %v1264, 0.0
    %v1366 = vadd.f32 %v1364, %v1365
    %v1367 = vsel %vm295, %v1265, 0.0
    %v1368 = vadd.f32 %v1366, %v1367
    %v1369 = vsel %vm295, %v1266, 0.0
    %v1370 = vadd.f32 %v1368, %v1369
    %v1371 = vsel %vm295, %v1267, 0.0
    %v1372 = vadd.f32 %v1370, %v1371
    %v1373 = vsel %vm295, %v1268, 0.0
    %v1374 = vadd.f32 %v1372, %v1373
    %v1375 = vsel %vm295, %v1269, 0.0
    %v1376 = vadd.f32 %v1374, %v1375
    %v1377 = vsel %vm295, %v1270, 0.0
    %v1378 = vadd.f32 %v1376, %v1377
    %v1379 = vsel %vm295, %v1271, 0.0
    %v1380 = vadd.f32 %v1378, %v1379
    %v1381 = vsel %vm295, %v1272, 0.0
    %v1382 = vadd.f32 %v1380, %v1381
    %v1383 = vsel %vm295, %v1273, 0.0
    %v1384 = vadd.f32 %v1382, %v1383
    %v1385 = vsel %vm295, %v1274, 0.0
    %v1386 = vadd.f32 %v1384, %v1385
    %v1387 = vsel %vm295, %v1275, 0.0
    %v1388 = vadd.f32 %v1386, %v1387
    %v1389 = vsel %vm295, %v1276, 0.0
    %v1390 = vadd.f32 %v1388, %v1389
    %v1391 = vsel %vm295, %v1277, 0.0
    %v1392 = vadd.f32 %v1390, %v1391
    %v1393 = vsel %vm295, %v1278, 0.0
    %v1394 = vadd.f32 %v1392, %v1393
    %v1395 = vsel %vm295, %v1279, 0.0
    %v1396 = vadd.f32 %v1394, %v1395
    %v1397 = vsel %vm295, %v1280, 0.0
    %v1398 = vadd.f32 %v1396, %v1397
    %v1399 = vsel %vm295, %v1281, 0.0
    %v1400 = vadd.f32 %v1398, %v1399
    %v1401 = vsel %vm295, %v1282, 0.0
    %v1402 = vadd.f32 %v1400, %v1401
    %v1403 = vsel %vm295, %v1283, 0.0
    %v1404 = vadd.f32 %v1402, %v1403
    %v1405 = vsel %vm295, %v1284, 0.0
    %v1406 = vadd.f32 %v1404, %v1405
    %v1407 = vsel %vm295, %v1285, 0.0
    %v1408 = vadd.f32 %v1406, %v1407
    %v1409 = vsel %vm295, %v1286, 0.0
    %v1410 = vadd.f32 %v1408, %v1409
    %v1411 = vsel %vm295, %v1287, 0.0
    %v1412 = vadd.f32 %v1410, %v1411
    %v1413 = vsel %vm295, %v1288, 0.0
    %v1414 = vadd.f32 %v1412, %v1413
    %v1415 = vsel %vm295, %v1289, 0.0
    %v1416 = vadd.f32 %v1414, %v1415
    %v1417 = vrot.slane %v1416, 4
    %v1418 = vadd.f32 %v1416, %v1417
    %v1419 = vrot.slane %v1418, 2
    %v1420 = vadd.f32 %v1418, %v1419
    %v1421 = vrot.slane %v1420, 1
    %v1422 = vadd.f32 %v1420, %v1421
    %v1423 = vmul.f32 %v1422, 0.001953125
    %v1424 = vadd.f32 %v1423, 1e-05
    %v1425 = vrsqrt.pop %v1424
    %v1426 = vmul.f32 %v1425, %v1026
    %v1427 = vlaneseq
    %v1428 = vshrl.u32 %v1427, 7
    %v1429 = vsub.s32 0, %v1428
    %v1430 = vrot.slane %v1426, %v1429
    %v1431 = vmul.f32 %v1162, %v1430
    %v1432 = vmul.f32 %v1163, %v1430
    %v1433 = vmul.f32 %v1164, %v1430
    %v1434 = vmul.f32 %v1165, %v1430
    %v1435 = vmul.f32 %v1166, %v1430
    %v1436 = vmul.f32 %v1167, %v1430
    %v1437 = vmul.f32 %v1168, %v1430
    %v1438 = vmul.f32 %v1169, %v1430
    %v1439 = vmul.f32 %v1170, %v1430
    %v1440 = vmul.f32 %v1171, %v1430
    %v1441 = vmul.f32 %v1172, %v1430
    %v1442 = vmul.f32 %v1173, %v1430
    %v1443 = vmul.f32 %v1174, %v1430
    %v1444 = vmul.f32 %v1175, %v1430
    %v1445 = vmul.f32 %v1176, %v1430
    %v1446 = vmul.f32 %v1177, %v1430
    %v1447 = vmul.f32 %v1178, %v1430
    %v1448 = vmul.f32 %v1179, %v1430
    %v1449 = vmul.f32 %v1180, %v1430
    %v1450 = vmul.f32 %v1181, %v1430
    %v1451 = vmul.f32 %v1182, %v1430
    %v1452 = vmul.f32 %v1183, %v1430
    %v1453 = vmul.f32 %v1184, %v1430
    %v1454 = vmul.f32 %v1185, %v1430
    %v1455 = vmul.f32 %v1186, %v1430
    %v1456 = vmul.f32 %v1187, %v1430
    %v1457 = vmul.f32 %v1188, %v1430
    %v1458 = vmul.f32 %v1189, %v1430
    %v1459 = vmul.f32 %v1190, %v1430
    %v1460 = vmul.f32 %v1191, %v1430
    %v1461 = vmul.f32 %v1192, %v1430
    %v1462 = vmul.f32 %v1193, %v1430
    %v1463 = vmul.f32 %v1194, %v1430
    %v1464 = vmul.f32 %v1195, %v1430
    %v1465 = vmul.f32 %v1196, %v1430
    %v1466 = vmul.f32 %v1197, %v1430
    %v1467 = vmul.f32 %v1198, %v1430
    %v1468 = vmul.f32 %v1199, %v1430
    %v1469 = vmul.f32 %v1200, %v1430
    %v1470 = vmul.f32 %v1201, %v1430
    %v1471 = vmul.f32 %v1202, %v1430
    %v1472 = vmul.f32 %v1203, %v1430
    %v1473 = vmul.f32 %v1204, %v1430
    %v1474 = vmul.f32 %v1205, %v1430
    %v1475 = vmul.f32 %v1206, %v1430
    %v1476 = vmul.f32 %v1207, %v1430
    %v1477 = vmul.f32 %v1208, %v1430
    %v1478 = vmul.f32 %v1209, %v1430
    %v1479 = vmul.f32 %v1210, %v1430
    %v1480 = vmul.f32 %v1211, %v1430
    %v1481 = vmul.f32 %v1212, %v1430
    %v1482 = vmul.f32 %v1213, %v1430
    %v1483 = vmul.f32 %v1214, %v1430
    %v1484 = vmul.f32 %v1215, %v1430
    %v1485 = vmul.f32 %v1216, %v1430
    %v1486 = vmul.f32 %v1217, %v1430
    %v1487 = vmul.f32 %v1218, %v1430
    %v1488 = vmul.f32 %v1219, %v1430
    %v1489 = vmul.f32 %v1220, %v1430
    %v1490 = vmul.f32 %v1221, %v1430
    %v1491 = vmul.f32 %v1222, %v1430
    %v1492 = vmul.f32 %v1223, %v1430
    %v1493 = vmul.f32 %v1224, %v1430
    %v1494 = vmul.f32 %v1225, %v1430
    %v1496 = vlaneseq
    %v1497 = vshrl.u32 %v1496, 7
    %v1498 = vsub.s32 0, %v1497
    %v1499 = vrot.slane %v1027, %v1498
    %v1501 = vadd.f32 %v1431, %v1499
    %v1502 = vadd.f32 %v1432, %v1499
    %v1503 = vadd.f32 %v1433, %v1499
    %v1504 = vadd.f32 %v1434, %v1499
    %v1505 = vadd.f32 %v1435, %v1499
    %v1506 = vadd.f32 %v1436, %v1499
    %v1507 = vadd.f32 %v1437, %v1499
    %v1508 = vadd.f32 %v1438, %v1499
    %v1509 = vadd.f32 %v1439, %v1499
    %v1510 = vadd.f32 %v1440, %v1499
    %v1511 = vadd.f32 %v1441, %v1499
    %v1512 = vadd.f32 %v1442, %v1499
    %v1513 = vadd.f32 %v1443, %v1499
    %v1514 = vadd.f32 %v1444, %v1499
    %v1515 = vadd.f32 %v1445, %v1499
    %v1516 = vadd.f32 %v1446, %v1499
    %v1517 = vadd.f32 %v1447, %v1499
    %v1518 = vadd.f32 %v1448, %v1499
    %v1519 = vadd.f32 %v1449, %v1499
    %v1520 = vadd.f32 %v1450, %v1499
    %v1521 = vadd.f32 %v1451, %v1499
    %v1522 = vadd.f32 %v1452, %v1499
    %v1523 = vadd.f32 %v1453, %v1499
    %v1524 = vadd.f32 %v1454, %v1499
    %v1525 = vadd.f32 %v1455, %v1499
    %v1526 = vadd.f32 %v1456, %v1499
    %v1527 = vadd.f32 %v1457, %v1499
    %v1528 = vadd.f32 %v1458, %v1499
    %v1529 = vadd.f32 %v1459, %v1499
    %v1530 = vadd.f32 %v1460, %v1499
    %v1531 = vadd.f32 %v1461, %v1499
    %v1532 = vadd.f32 %v1462, %v1499
    %v1533 = vadd.f32 %v1463, %v1499
    %v1534 = vadd.f32 %v1464, %v1499
    %v1535 = vadd.f32 %v1465, %v1499
    %v1536 = vadd.f32 %v1466, %v1499
    %v1537 = vadd.f32 %v1467, %v1499
    %v1538 = vadd.f32 %v1468, %v1499
    %v1539 = vadd.f32 %v1469, %v1499
    %v1540 = vadd.f32 %v1470, %v1499
    %v1541 = vadd.f32 %v1471, %v1499
    %v1542 = vadd.f32 %v1472, %v1499
    %v1543 = vadd.f32 %v1473, %v1499
    %v1544 = vadd.f32 %v1474, %v1499
    %v1545 = vadd.f32 %v1475, %v1499
    %v1546 = vadd.f32 %v1476, %v1499
    %v1547 = vadd.f32 %v1477, %v1499
    %v1548 = vadd.f32 %v1478, %v1499
    %v1549 = vadd.f32 %v1479, %v1499
    %v1550 = vadd.f32 %v1480, %v1499
    %v1551 = vadd.f32 %v1481, %v1499
    %v1552 = vadd.f32 %v1482, %v1499
    %v1553 = vadd.f32 %v1483, %v1499
    %v1554 = vadd.f32 %v1484, %v1499
    %v1555 = vadd.f32 %v1485, %v1499
    %v1556 = vadd.f32 %v1486, %v1499
    %v1557 = vadd.f32 %v1487, %v1499
    %v1558 = vadd.f32 %v1488, %v1499
    %v1559 = vadd.f32 %v1489, %v1499
    %v1560 = vadd.f32 %v1490, %v1499
    %v1561 = vadd.f32 %v1491, %v1499
    %v1562 = vadd.f32 %v1492, %v1499
    %v1563 = vadd.f32 %v1493, %v1499
    %v1564 = vadd.f32 %v1494, %v1499
    %vm1565 = vcmp.ge.f32.partialorder %v1501, 0.0
    %vm1566 = vcmp.ge.f32.partialorder %v1502, 0.0
    %vm1567 = vcmp.ge.f32.partialorder %v1503, 0.0
    %vm1568 = vcmp.ge.f32.partialorder %v1504, 0.0
    %vm1569 = vcmp.ge.f32.partialorder %v1505, 0.0
    %vm1570 = vcmp.ge.f32.partialorder %v1506, 0.0
    %vm1571 = vcmp.ge.f32.partialorder %v1507, 0.0
    %vm1572 = vcmp.ge.f32.partialorder %v1508, 0.0
    %vm1573 = vcmp.ge.f32.partialorder %v1509, 0.0
    %vm1574 = vcmp.ge.f32.partialorder %v1510, 0.0
    %vm1575 = vcmp.ge.f32.partialorder %v1511, 0.0
    %vm1576 = vcmp.ge.f32.partialorder %v1512, 0.0
    %vm1577 = vcmp.ge.f32.partialorder %v1513, 0.0
    %vm1578 = vcmp.ge.f32.partialorder %v1514, 0.0
    %vm1579 = vcmp.ge.f32.partialorder %v1515, 0.0
    %vm1580 = vcmp.ge.f32.partialorder %v1516, 0.0
    %vm1581 = vcmp.ge.f32.partialorder %v1517, 0.0
    %vm1582 = vcmp.ge.f32.partialorder %v1518, 0.0
    %vm1583 = vcmp.ge.f32.partialorder %v1519, 0.0
    %vm1584 = vcmp.ge.f32.partialorder %v1520, 0.0
    %vm1585 = vcmp.ge.f32.partialorder %v1521, 0.0
    %vm1586 = vcmp.ge.f32.partialorder %v1522, 0.0
    %vm1587 = vcmp.ge.f32.partialorder %v1523, 0.0
    %vm1588 = vcmp.ge.f32.partialorder %v1524, 0.0
    %vm1589 = vcmp.ge.f32.partialorder %v1525, 0.0
    %vm1590 = vcmp.ge.f32.partialorder %v1526, 0.0
    %vm1591 = vcmp.ge.f32.partialorder %v1527, 0.0
    %vm1592 = vcmp.ge.f32.partialorder %v1528, 0.0
    %vm1593 = vcmp.ge.f32.partialorder %v1529, 0.0
    %vm1594 = vcmp.ge.f32.partialorder %v1530, 0.0
    %vm1595 = vcmp.ge.f32.partialorder %v1531, 0.0
    %vm1596 = vcmp.ge.f32.partialorder %v1532, 0.0
    %vm1597 = vcmp.ge.f32.partialorder %v1533, 0.0
    %vm1598 = vcmp.ge.f32.partialorder %v1534, 0.0
    %vm1599 = vcmp.ge.f32.partialorder %v1535, 0.0
    %vm1600 = vcmp.ge.f32.partialorder %v1536, 0.0
    %vm1601 = vcmp.ge.f32.partialorder %v1537, 0.0
    %vm1602 = vcmp.ge.f32.partialorder %v1538, 0.0
    %vm1603 = vcmp.ge.f32.partialorder %v1539, 0.0
    %vm1604 = vcmp.ge.f32.partialorder %v1540, 0.0
    %vm1605 = vcmp.ge.f32.partialorder %v1541, 0.0
    %vm1606 = vcmp.ge.f32.partialorder %v1542, 0.0
    %vm1607 = vcmp.ge.f32.partialorder %v1543, 0.0
    %vm1608 = vcmp.ge.f32.partialorder %v1544, 0.0
    %vm1609 = vcmp.ge.f32.partialorder %v1545, 0.0
    %vm1610 = vcmp.ge.f32.partialorder %v1546, 0.0
    %vm1611 = vcmp.ge.f32.partialorder %v1547, 0.0
    %vm1612 = vcmp.ge.f32.partialorder %v1548, 0.0
    %vm1613 = vcmp.ge.f32.partialorder %v1549, 0.0
    %vm1614 = vcmp.ge.f32.partialorder %v1550, 0.0
    %vm1615 = vcmp.ge.f32.partialorder %v1551, 0.0
    %vm1616 = vcmp.ge.f32.partialorder %v1552, 0.0
    %vm1617 = vcmp.ge.f32.partialorder %v1553, 0.0
    %vm1618 = vcmp.ge.f32.partialorder %v1554, 0.0
    %vm1619 = vcmp.ge.f32.partialorder %v1555, 0.0
    %vm1620 = vcmp.ge.f32.partialorder %v1556, 0.0
    %vm1621 = vcmp.ge.f32.partialorder %v1557, 0.0
    %vm1622 = vcmp.ge.f32.partialorder %v1558, 0.0
    %vm1623 = vcmp.ge.f32.partialorder %v1559, 0.0
    %vm1624 = vcmp.ge.f32.partialorder %v1560, 0.0
    %vm1625 = vcmp.ge.f32.partialorder %v1561, 0.0
    %vm1626 = vcmp.ge.f32.partialorder %v1562, 0.0
    %vm1627 = vcmp.ge.f32.partialorder %v1563, 0.0
    %vm1628 = vcmp.ge.f32.partialorder %v1564, 0.0
    %v1629 = vmul.f32 %v897, %v1501
    %v1630 = vmul.f32 %v897, %v1502
    %v1631 = vmul.f32 %v897, %v1503
    %v1632 = vmul.f32 %v897, %v1504
    %v1633 = vmul.f32 %v897, %v1505
    %v1634 = vmul.f32 %v897, %v1506
    %v1635 = vmul.f32 %v897, %v1507
    %v1636 = vmul.f32 %v897, %v1508
    %v1637 = vmul.f32 %v897, %v1509
    %v1638 = vmul.f32 %v897, %v1510
    %v1639 = vmul.f32 %v897, %v1511
    %v1640 = vmul.f32 %v897, %v1512
    %v1641 = vmul.f32 %v897, %v1513
    %v1642 = vmul.f32 %v897, %v1514
    %v1643 = vmul.f32 %v897, %v1515
    %v1644 = vmul.f32 %v897, %v1516
    %v1645 = vmul.f32 %v897, %v1517
    %v1646 = vmul.f32 %v897, %v1518
    %v1647 = vmul.f32 %v897, %v1519
    %v1648 = vmul.f32 %v897, %v1520
    %v1649 = vmul.f32 %v897, %v1521
    %v1650 = vmul.f32 %v897, %v1522
    %v1651 = vmul.f32 %v897, %v1523
    %v1652 = vmul.f32 %v897, %v1524
    %v1653 = vmul.f32 %v897, %v1525
    %v1654 = vmul.f32 %v897, %v1526
    %v1655 = vmul.f32 %v897, %v1527
    %v1656 = vmul.f32 %v897, %v1528
    %v1657 = vmul.f32 %v897, %v1529
    %v1658 = vmul.f32 %v897, %v1530
    %v1659 = vmul.f32 %v897, %v1531
    %v1660 = vmul.f32 %v897, %v1532
    %v1661 = vmul.f32 %v897, %v1533
    %v1662 = vmul.f32 %v897, %v1534
    %v1663 = vmul.f32 %v897, %v1535
    %v1664 = vmul.f32 %v897, %v1536
    %v1665 = vmul.f32 %v897, %v1537
    %v1666 = vmul.f32 %v897, %v1538
    %v1667 = vmul.f32 %v897, %v1539
    %v1668 = vmul.f32 %v897, %v1540
    %v1669 = vmul.f32 %v897, %v1541
    %v1670 = vmul.f32 %v897, %v1542
    %v1671 = vmul.f32 %v897, %v1543
    %v1672 = vmul.f32 %v897, %v1544
    %v1673 = vmul.f32 %v897, %v1545
    %v1674 = vmul.f32 %v897, %v1546
    %v1675 = vmul.f32 %v897, %v1547
    %v1676 = vmul.f32 %v897, %v1548
    %v1677 = vmul.f32 %v897, %v1549
    %v1678 = vmul.f32 %v897, %v1550
    %v1679 = vmul.f32 %v897, %v1551
    %v1680 = vmul.f32 %v897, %v1552
    %v1681 = vmul.f32 %v897, %v1553
    %v1682 = vmul.f32 %v897, %v1554
    %v1683 = vmul.f32 %v897, %v1555
    %v1684 = vmul.f32 %v897, %v1556
    %v1685 = vmul.f32 %v897, %v1557
    %v1686 = vmul.f32 %v897, %v1558
    %v1687 = vmul.f32 %v897, %v1559
    %v1688 = vmul.f32 %v897, %v1560
    %v1689 = vmul.f32 %v897, %v1561
    %v1690 = vmul.f32 %v897, %v1562
    %v1691 = vmul.f32 %v897, %v1563
    %v1692 = vmul.f32 %v897, %v1564
    %v1693 = vsel %vm1565, %v1501, %v1629
    %v1694 = vsel %vm1566, %v1502, %v1630
    %v1695 = vsel %vm1567, %v1503, %v1631
    %v1696 = vsel %vm1568, %v1504, %v1632
    %v1697 = vsel %vm1569, %v1505, %v1633
    %v1698 = vsel %vm1570, %v1506, %v1634
    %v1699 = vsel %vm1571, %v1507, %v1635
    %v1700 = vsel %vm1572, %v1508, %v1636
    %v1701 = vsel %vm1573, %v1509, %v1637
    %v1702 = vsel %vm1574, %v1510, %v1638
    %v1703 = vsel %vm1575, %v1511, %v1639
    %v1704 = vsel %vm1576, %v1512, %v1640
    %v1705 = vsel %vm1577, %v1513, %v1641
    %v1706 = vsel %vm1578, %v1514, %v1642
    %v1707 = vsel %vm1579, %v1515, %v1643
    %v1708 = vsel %vm1580, %v1516, %v1644
    %v1709 = vsel %vm1581, %v1517, %v1645
    %v1710 = vsel %vm1582, %v1518, %v1646
    %v1711 = vsel %vm1583, %v1519, %v1647
    %v1712 = vsel %vm1584, %v1520, %v1648
    %v1713 = vsel %vm1585, %v1521, %v1649
    %v1714 = vsel %vm1586, %v1522, %v1650
    %v1715 = vsel %vm1587, %v1523, %v1651
    %v1716 = vsel %vm1588, %v1524, %v1652
    %v1717 = vsel %vm1589, %v1525, %v1653
    %v1718 = vsel %vm1590, %v1526, %v1654
    %v1719 = vsel %vm1591, %v1527, %v1655
    %v1720 = vsel %vm1592, %v1528, %v1656
    %v1721 = vsel %vm1593, %v1529, %v1657
    %v1722 = vsel %vm1594, %v1530, %v1658
    %v1723 = vsel %vm1595, %v1531, %v1659
    %v1724 = vsel %vm1596, %v1532, %v1660
    %v1725 = vsel %vm1597, %v1533, %v1661
    %v1726 = vsel %vm1598, %v1534, %v1662
    %v1727 = vsel %vm1599, %v1535, %v1663
    %v1728 = vsel %vm1600, %v1536, %v1664
    %v1729 = vsel %vm1601, %v1537, %v1665
    %v1730 = vsel %vm1602, %v1538, %v1666
    %v1731 = vsel %vm1603, %v1539, %v1667
    %v1732 = vsel %vm1604, %v1540, %v1668
    %v1733 = vsel %vm1605, %v1541, %v1669
    %v1734 = vsel %vm1606, %v1542, %v1670
    %v1735 = vsel %vm1607, %v1543, %v1671
    %v1736 = vsel %vm1608, %v1544, %v1672
    %v1737 = vsel %vm1609, %v1545, %v1673
    %v1738 = vsel %vm1610, %v1546, %v1674
    %v1739 = vsel %vm1611, %v1547, %v1675
    %v1740 = vsel %vm1612, %v1548, %v1676
    %v1741 = vsel %vm1613, %v1549, %v1677
    %v1742 = vsel %vm1614, %v1550, %v1678
    %v1743 = vsel %vm1615, %v1551, %v1679
    %v1744 = vsel %vm1616, %v1552, %v1680
    %v1745 = vsel %vm1617, %v1553, %v1681
    %v1746 = vsel %vm1618, %v1554, %v1682
    %v1747 = vsel %vm1619, %v1555, %v1683
    %v1748 = vsel %vm1620, %v1556, %v1684
    %v1749 = vsel %vm1621, %v1557, %v1685
    %v1750 = vsel %vm1622, %v1558, %v1686
    %v1751 = vsel %vm1623, %v1559, %v1687
    %v1752 = vsel %vm1624, %v1560, %v1688
    %v1753 = vsel %vm1625, %v1561, %v1689
    %v1754 = vsel %vm1626, %v1562, %v1690
    %v1755 = vsel %vm1627, %v1563, %v1691
    %v1756 = vsel %vm1628, %v1564, %v1692
    %s1757 = scalar_lea.vmem [#allocation2], 24
    %1758 = vst.msk [vmem:[%s1757 + $0x1] sm:$0xff] %vm295, %v962
    %1759 = vst.msk [vmem:[%s1757 + $0x9] sm:$0xff] %vm295, %v963
    %1760 = vst.msk [vmem:[%s1757 + $0x19] sm:$0xff] %vm295, %v964
    %1761 = vst.msk [vmem:[%s1757 + $0x21] sm:$0xff] %vm295, %v965
    %1762 = vst.msk [vmem:[%s1757 + $0x31] sm:$0xff] %vm295, %v966
    %1763 = vst.msk [vmem:[%s1757 + $0x39] sm:$0xff] %vm295, %v967
    %1764 = vst.msk [vmem:[%s1757 + $0x49] sm:$0xff] %vm295, %v968
    %1765 = vst.msk [vmem:[%s1757 + $0x51] sm:$0xff] %vm295, %v969
    %1766 = vst.msk [vmem:[%s1757 + $0x61] sm:$0xff] %vm295, %v970
    %1767 = vst.msk [vmem:[%s1757 + $0x69] sm:$0xff] %vm295, %v971
    %1768 = vst.msk [vmem:[%s1757 + $0x79] sm:$0xff] %vm295, %v972
    %1769 = vst.msk [vmem:[%s1757 + $0x81] sm:$0xff] %vm295, %v973
    %1770 = vst.msk [vmem:[%s1757 + $0x91] sm:$0xff] %vm295, %v974
    %1771 = vst.msk [vmem:[%s1757 + $0x99] sm:$0xff] %vm295, %v975
    %1772 = vst.msk [vmem:[%s1757 + $0xa9] sm:$0xff] %vm295, %v976
    %1773 = vst.msk [vmem:[%s1757 + $0xb1] sm:$0xff] %vm295, %v977
    %1774 = vst.msk [vmem:[%s1757 + $0xc1] sm:$0xff] %vm295, %v978
    %1775 = vst.msk [vmem:[%s1757 + $0xc9] sm:$0xff] %vm295, %v979
    %1776 = vst.msk [vmem:[%s1757 + $0xd9] sm:$0xff] %vm295, %v980
    %1777 = vst.msk [vmem:[%s1757 + $0xe1] sm:$0xff] %vm295, %v981
    %1778 = vst.msk [vmem:[%s1757 + $0xf1] sm:$0xff] %vm295, %v982
    %1779 = vst.msk [vmem:[%s1757 + $0xf9] sm:$0xff] %vm295, %v983
    %1780 = vst.msk [vmem:[%s1757 + $0x109] sm:$0xff] %vm295, %v984
    %1781 = vst.msk [vmem:[%s1757 + $0x111] sm:$0xff] %vm295, %v985
    %1782 = vst.msk [vmem:[%s1757 + $0x121] sm:$0xff] %vm295, %v986
    %1783 = vst.msk [vmem:[%s1757 + $0x129] sm:$0xff] %vm295, %v987
    %1784 = vst.msk [vmem:[%s1757 + $0x139] sm:$0xff] %vm295, %v988
    %1785 = vst.msk [vmem:[%s1757 + $0x141] sm:$0xff] %vm295, %v989
    %1786 = vst.msk [vmem:[%s1757 + $0x151] sm:$0xff] %vm295, %v990
    %1787 = vst.msk [vmem:[%s1757 + $0x159] sm:$0xff] %vm295, %v991
    %1788 = vst.msk [vmem:[%s1757 + $0x169] sm:$0xff] %vm295, %v992
    %1789 = vst.msk [vmem:[%s1757 + $0x171] sm:$0xff] %vm295, %v993
    %1790 = vst.msk [vmem:[%s1757 + $0x1b1] sm:$0xff] %vm295, %v994
    %1791 = vst.msk [vmem:[%s1757 + $0x1b9] sm:$0xff] %vm295, %v995
    %1792 = vst.msk [vmem:[%s1757 + $0x1c9] sm:$0xff] %vm295, %v996
    %1793 = vst.msk [vmem:[%s1757 + $0x1d1] sm:$0xff] %vm295, %v997
    %1794 = vst.msk [vmem:[%s1757 + $0x1e1] sm:$0xff] %vm295, %v998
    %1795 = vst.msk [vmem:[%s1757 + $0x1e9] sm:$0xff] %vm295, %v999
    %1796 = vst.msk [vmem:[%s1757 + $0x1f9] sm:$0xff] %vm295, %v1000
    %1797 = vst.msk [vmem:[%s1757 + $0x201] sm:$0xff] %vm295, %v1001
    %1798 = vst.msk [vmem:[%s1757 + $0x211] sm:$0xff] %vm295, %v1002
    %1799 = vst.msk [vmem:[%s1757 + $0x219] sm:$0xff] %vm295, %v1003
    %1800 = vst.msk [vmem:[%s1757 + $0x229] sm:$0xff] %vm295, %v1004
    %1801 = vst.msk [vmem:[%s1757 + $0x231] sm:$0xff] %vm295, %v1005
    %1802 = vst.msk [vmem:[%s1757 + $0x241] sm:$0xff] %vm295, %v1006
    %1803 = vst.msk [vmem:[%s1757 + $0x249] sm:$0xff] %vm295, %v1007
    %1804 = vst.msk [vmem:[%s1757 + $0x259] sm:$0xff] %vm295, %v1008
    %1805 = vst.msk [vmem:[%s1757 + $0x261] sm:$0xff] %vm295, %v1009
    %1806 = vst.msk [vmem:[%s1757 + $0x271] sm:$0xff] %vm295, %v1010
    %1807 = vst.msk [vmem:[%s1757 + $0x279] sm:$0xff] %vm295, %v1011
    %1808 = vst.msk [vmem:[%s1757 + $0x289] sm:$0xff] %vm295, %v1012
    %1809 = vst.msk [vmem:[%s1757 + $0x291] sm:$0xff] %vm295, %v1013
    %1810 = vst.msk [vmem:[%s1757 + $0x2a1] sm:$0xff] %vm295, %v1014
    %1811 = vst.msk [vmem:[%s1757 + $0x2a9] sm:$0xff] %vm295, %v1015
    %1812 = vst.msk [vmem:[%s1757 + $0x2b9] sm:$0xff] %vm295, %v1016
    %1813 = vst.msk [vmem:[%s1757 + $0x2c1] sm:$0xff] %vm295, %v1017
    %1814 = vst.msk [vmem:[%s1757 + $0x2d1] sm:$0xff] %vm295, %v1018
    %1815 = vst.msk [vmem:[%s1757 + $0x2d9] sm:$0xff] %vm295, %v1019
    %1816 = vst.msk [vmem:[%s1757 + $0x2e9] sm:$0xff] %vm295, %v1020
    %1817 = vst.msk [vmem:[%s1757 + $0x2f1] sm:$0xff] %vm295, %v1021
    %1818 = vst.msk [vmem:[%s1757 + $0x301] sm:$0xff] %vm295, %v1022
    %1819 = vst.msk [vmem:[%s1757 + $0x309] sm:$0xff] %vm295, %v1023
    %1820 = vst.msk [vmem:[%s1757 + $0x319] sm:$0xff] %vm295, %v1024
    %1821 = vst.msk [vmem:[%s1757 + $0x321] sm:$0xff] %vm295, %v1025
    %1886 = vrot.lane.b32.xlu0 %v1693, 32
    %v1887 = vpop.permute.xlu0 %1886
    %1888 = vrot.lane.b32.xlu0 %v1694, 32
    %v1889 = vpop.permute.xlu0 %1888
    %1890 = vrot.lane.b32.xlu0 %v1695, 32
    %v1891 = vpop.permute.xlu0 %1890
    %1892 = vrot.lane.b32.xlu0 %v1696, 32
    %v1893 = vpop.permute.xlu0 %1892
    %1894 = vrot.lane.b32.xlu0 %v1697, 32
    %v1895 = vpop.permute.xlu0 %1894
    %1896 = vrot.lane.b32.xlu0 %v1698, 32
    %v1897 = vpop.permute.xlu0 %1896
    %1898 = vrot.lane.b32.xlu0 %v1699, 32
    %v1899 = vpop.permute.xlu0 %1898
    %1900 = vrot.lane.b32.xlu0 %v1700, 32
    %v1901 = vpop.permute.xlu0 %1900
    %1902 = vrot.lane.b32.xlu0 %v1701, 32
    %v1903 = vpop.permute.xlu0 %1902
    %1904 = vrot.lane.b32.xlu0 %v1702, 32
    %v1905 = vpop.permute.xlu0 %1904
    %1906 = vrot.lane.b32.xlu0 %v1703, 32
    %v1907 = vpop.permute.xlu0 %1906
    %1908 = vrot.lane.b32.xlu0 %v1704, 32
    %v1909 = vpop.permute.xlu0 %1908
    %1910 = vrot.lane.b32.xlu0 %v1705, 32
    %v1911 = vpop.permute.xlu0 %1910
    %1912 = vrot.lane.b32.xlu0 %v1706, 32
    %v1913 = vpop.permute.xlu0 %1912
    %1914 = vrot.lane.b32.xlu0 %v1707, 32
    %v1915 = vpop.permute.xlu0 %1914
    %1916 = vrot.lane.b32.xlu0 %v1708, 32
    %v1917 = vpop.permute.xlu0 %1916
    %1918 = vrot.lane.b32.xlu0 %v1709, 32
    %v1919 = vpop.permute.xlu0 %1918
    %1920 = vrot.lane.b32.xlu0 %v1710, 32
    %v1921 = vpop.permute.xlu0 %1920
    %1922 = vrot.lane.b32.xlu0 %v1711, 32
    %v1923 = vpop.permute.xlu0 %1922
    %1924 = vrot.lane.b32.xlu0 %v1712, 32
    %v1925 = vpop.permute.xlu0 %1924
    %1926 = vrot.lane.b32.xlu0 %v1713, 32
    %v1927 = vpop.permute.xlu0 %1926
    %1928 = vrot.lane.b32.xlu0 %v1714, 32
    %v1929 = vpop.permute.xlu0 %1928
    %1930 = vrot.lane.b32.xlu0 %v1715, 32
    %v1931 = vpop.permute.xlu0 %1930
    %1932 = vrot.lane.b32.xlu0 %v1716, 32
    %v1933 = vpop.permute.xlu0 %1932
    %1934 = vrot.lane.b32.xlu0 %v1717, 32
    %v1935 = vpop.permute.xlu0 %1934
    %1936 = vrot.lane.b32.xlu0 %v1718, 32
    %v1937 = vpop.permute.xlu0 %1936
    %1938 = vrot.lane.b32.xlu0 %v1719, 32
    %v1939 = vpop.permute.xlu0 %1938
    %1940 = vrot.lane.b32.xlu0 %v1720, 32
    %v1941 = vpop.permute.xlu0 %1940
    %1942 = vrot.lane.b32.xlu0 %v1721, 32
    %v1943 = vpop.permute.xlu0 %1942
    %1944 = vrot.lane.b32.xlu0 %v1722, 32
    %v1945 = vpop.permute.xlu0 %1944
    %1946 = vrot.lane.b32.xlu0 %v1723, 32
    %v1947 = vpop.permute.xlu0 %1946
    %1948 = vrot.lane.b32.xlu0 %v1724, 32
    %v1949 = vpop.permute.xlu0 %1948
    %1950 = vrot.lane.b32.xlu0 %v1725, 32
    %v1951 = vpop.permute.xlu0 %1950
    %1952 = vrot.lane.b32.xlu0 %v1726, 32
    %v1953 = vpop.permute.xlu0 %1952
    %1954 = vrot.lane.b32.xlu0 %v1727, 32
    %v1955 = vpop.permute.xlu0 %1954
    %1956 = vrot.lane.b32.xlu0 %v1728, 32
    %v1957 = vpop.permute.xlu0 %1956
    %1958 = vrot.lane.b32.xlu0 %v1729, 32
    %v1959 = vpop.permute.xlu0 %1958
    %1960 = vrot.lane.b32.xlu0 %v1730, 32
    %v1961 = vpop.permute.xlu0 %1960
    %1962 = vrot.lane.b32.xlu0 %v1731, 32
    %v1963 = vpop.permute.xlu0 %1962
    %1964 = vrot.lane.b32.xlu0 %v1732, 32
    %v1965 = vpop.permute.xlu0 %1964
    %1966 = vrot.lane.b32.xlu0 %v1733, 32
    %v1967 = vpop.permute.xlu0 %1966
    %1968 = vrot.lane.b32.xlu0 %v1734, 32
    %v1969 = vpop.permute.xlu0 %1968
    %1970 = vrot.lane.b32.xlu0 %v1735, 32
    %v1971 = vpop.permute.xlu0 %1970
    %1972 = vrot.lane.b32.xlu0 %v1736, 32
    %v1973 = vpop.permute.xlu0 %1972
    %1974 = vrot.lane.b32.xlu0 %v1737, 32
    %v1975 = vpop.permute.xlu0 %1974
    %1976 = vrot.lane.b32.xlu0 %v1738, 32
    %v1977 = vpop.permute.xlu0 %1976
    %1978 = vrot.lane.b32.xlu0 %v1739, 32
    %v1979 = vpop.permute.xlu0 %1978
    %1980 = vrot.lane.b32.xlu0 %v1740, 32
    %v1981 = vpop.permute.xlu0 %1980
    %1982 = vrot.lane.b32.xlu0 %v1741, 32
    %v1983 = vpop.permute.xlu0 %1982
    %1984 = vrot.lane.b32.xlu0 %v1742, 32
    %v1985 = vpop.permute.xlu0 %1984
    %1986 = vrot.lane.b32.xlu0 %v1743, 32
    %v1987 = vpop.permute.xlu0 %1986
    %1988 = vrot.lane.b32.xlu0 %v1744, 32
    %v1989 = vpop.permute.xlu0 %1988
    %1990 = vrot.lane.b32.xlu0 %v1745, 32
    %v1991 = vpop.permute.xlu0 %1990
    %1992 = vrot.lane.b32.xlu0 %v1746, 32
    %v1993 = vpop.permute.xlu0 %1992
    %1994 = vrot.lane.b32.xlu0 %v1747, 32
    %v1995 = vpop.permute.xlu0 %1994
    %1996 = vrot.lane.b32.xlu0 %v1748, 32
    %v1997 = vpop.permute.xlu0 %1996
    %1998 = vrot.lane.b32.xlu0 %v1749, 32
    %v1999 = vpop.permute.xlu0 %1998
    %2000 = vrot.lane.b32.xlu0 %v1750, 32
    %v2001 = vpop.permute.xlu0 %2000
    %2002 = vrot.lane.b32.xlu0 %v1751, 32
    %v2003 = vpop.permute.xlu0 %2002
    %2004 = vrot.lane.b32.xlu0 %v1752, 32
    %v2005 = vpop.permute.xlu0 %2004
    %2006 = vrot.lane.b32.xlu0 %v1753, 32
    %v2007 = vpop.permute.xlu0 %2006
    %2008 = vrot.lane.b32.xlu0 %v1754, 32
    %v2009 = vpop.permute.xlu0 %2008
    %2010 = vrot.lane.b32.xlu0 %v1755, 32
    %v2011 = vpop.permute.xlu0 %2010
    %2012 = vrot.lane.b32.xlu0 %v1756, 32
    %v2013 = vpop.permute.xlu0 %2012
    %vm2078 = vcmask 523520
    %2079 = vst.msk [vmem:[%s1757 + $0x1] sm:$0xff] %vm2078, %v1887
    %2080 = vst.msk [vmem:[%s1757 + $0x9] sm:$0xff] %vm2078, %v1889
    %2081 = vst.msk [vmem:[%s1757 + $0x19] sm:$0xff] %vm2078, %v1891
    %2082 = vst.msk [vmem:[%s1757 + $0x21] sm:$0xff] %vm2078, %v1893
    %2083 = vst.msk [vmem:[%s1757 + $0x31] sm:$0xff] %vm2078, %v1895
    %2084 = vst.msk [vmem:[%s1757 + $0x39] sm:$0xff] %vm2078, %v1897
    %2085 = vst.msk [vmem:[%s1757 + $0x49] sm:$0xff] %vm2078, %v1899
    %2086 = vst.msk [vmem:[%s1757 + $0x51] sm:$0xff] %vm2078, %v1901
    %2087 = vst.msk [vmem:[%s1757 + $0x61] sm:$0xff] %vm2078, %v1903
    %2088 = vst.msk [vmem:[%s1757 + $0x69] sm:$0xff] %vm2078, %v1905
    %2089 = vst.msk [vmem:[%s1757 + $0x79] sm:$0xff] %vm2078, %v1907
    %2090 = vst.msk [vmem:[%s1757 + $0x81] sm:$0xff] %vm2078, %v1909
    %2091 = vst.msk [vmem:[%s1757 + $0x91] sm:$0xff] %vm2078, %v1911
    %2092 = vst.msk [vmem:[%s1757 + $0x99] sm:$0xff] %vm2078, %v1913
    %2093 = vst.msk [vmem:[%s1757 + $0xa9] sm:$0xff] %vm2078, %v1915
    %2094 = vst.msk [vmem:[%s1757 + $0xb1] sm:$0xff] %vm2078, %v1917
    %2095 = vst.msk [vmem:[%s1757 + $0xc1] sm:$0xff] %vm2078, %v1919
    %2096 = vst.msk [vmem:[%s1757 + $0xc9] sm:$0xff] %vm2078, %v1921
    %2097 = vst.msk [vmem:[%s1757 + $0xd9] sm:$0xff] %vm2078, %v1923
    %2098 = vst.msk [vmem:[%s1757 + $0xe1] sm:$0xff] %vm2078, %v1925
    %2099 = vst.msk [vmem:[%s1757 + $0xf1] sm:$0xff] %vm2078, %v1927
    %2100 = vst.msk [vmem:[%s1757 + $0xf9] sm:$0xff] %vm2078, %v1929
    %2101 = vst.msk [vmem:[%s1757 + $0x109] sm:$0xff] %vm2078, %v1931
    %2102 = vst.msk [vmem:[%s1757 + $0x111] sm:$0xff] %vm2078, %v1933
    %2103 = vst.msk [vmem:[%s1757 + $0x121] sm:$0xff] %vm2078, %v1935
    %2104 = vst.msk [vmem:[%s1757 + $0x129] sm:$0xff] %vm2078, %v1937
    %2105 = vst.msk [vmem:[%s1757 + $0x139] sm:$0xff] %vm2078, %v1939
    %2106 = vst.msk [vmem:[%s1757 + $0x141] sm:$0xff] %vm2078, %v1941
    %2107 = vst.msk [vmem:[%s1757 + $0x151] sm:$0xff] %vm2078, %v1943
    %2108 = vst.msk [vmem:[%s1757 + $0x159] sm:$0xff] %vm2078, %v1945
    %2109 = vst.msk [vmem:[%s1757 + $0x169] sm:$0xff] %vm2078, %v1947
    %2110 = vst.msk [vmem:[%s1757 + $0x171] sm:$0xff] %vm2078, %v1949
    %2111 = vst.msk [vmem:[%s1757 + $0x1b1] sm:$0xff] %vm2078, %v1951
    %2112 = vst.msk [vmem:[%s1757 + $0x1b9] sm:$0xff] %vm2078, %v1953
    %2113 = vst.msk [vmem:[%s1757 + $0x1c9] sm:$0xff] %vm2078, %v1955
    %2114 = vst.msk [vmem:[%s1757 + $0x1d1] sm:$0xff] %vm2078, %v1957
    %2115 = vst.msk [vmem:[%s1757 + $0x1e1] sm:$0xff] %vm2078, %v1959
    %2116 = vst.msk [vmem:[%s1757 + $0x1e9] sm:$0xff] %vm2078, %v1961
    %2117 = vst.msk [vmem:[%s1757 + $0x1f9] sm:$0xff] %vm2078, %v1963
    %2118 = vst.msk [vmem:[%s1757 + $0x201] sm:$0xff] %vm2078, %v1965
    %2119 = vst.msk [vmem:[%s1757 + $0x211] sm:$0xff] %vm2078, %v1967
    %2120 = vst.msk [vmem:[%s1757 + $0x219] sm:$0xff] %vm2078, %v1969
    %2121 = vst.msk [vmem:[%s1757 + $0x229] sm:$0xff] %vm2078, %v1971
    %2122 = vst.msk [vmem:[%s1757 + $0x231] sm:$0xff] %vm2078, %v1973
    %2123 = vst.msk [vmem:[%s1757 + $0x241] sm:$0xff] %vm2078, %v1975
    %2124 = vst.msk [vmem:[%s1757 + $0x249] sm:$0xff] %vm2078, %v1977
    %2125 = vst.msk [vmem:[%s1757 + $0x259] sm:$0xff] %vm2078, %v1979
    %2126 = vst.msk [vmem:[%s1757 + $0x261] sm:$0xff] %vm2078, %v1981
    %2127 = vst.msk [vmem:[%s1757 + $0x271] sm:$0xff] %vm2078, %v1983
    %2128 = vst.msk [vmem:[%s1757 + $0x279] sm:$0xff] %vm2078, %v1985
    %2129 = vst.msk [vmem:[%s1757 + $0x289] sm:$0xff] %vm2078, %v1987
    %2130 = vst.msk [vmem:[%s1757 + $0x291] sm:$0xff] %vm2078, %v1989
    %2131 = vst.msk [vmem:[%s1757 + $0x2a1] sm:$0xff] %vm2078, %v1991
    %2132 = vst.msk [vmem:[%s1757 + $0x2a9] sm:$0xff] %vm2078, %v1993
    %2133 = vst.msk [vmem:[%s1757 + $0x2b9] sm:$0xff] %vm2078, %v1995
    %2134 = vst.msk [vmem:[%s1757 + $0x2c1] sm:$0xff] %vm2078, %v1997
    %2135 = vst.msk [vmem:[%s1757 + $0x2d1] sm:$0xff] %vm2078, %v1999
    %2136 = vst.msk [vmem:[%s1757 + $0x2d9] sm:$0xff] %vm2078, %v2001
    %2137 = vst.msk [vmem:[%s1757 + $0x2e9] sm:$0xff] %vm2078, %v2003
    %2138 = vst.msk [vmem:[%s1757 + $0x2f1] sm:$0xff] %vm2078, %v2005
    %2139 = vst.msk [vmem:[%s1757 + $0x301] sm:$0xff] %vm2078, %v2007
    %2140 = vst.msk [vmem:[%s1757 + $0x309] sm:$0xff] %vm2078, %v2009
    %2141 = vst.msk [vmem:[%s1757 + $0x319] sm:$0xff] %vm2078, %v2011
    %2142 = vst.msk [vmem:[%s1757 + $0x321] sm:$0xff] %vm2078, %v2013
    %v2143 = vld [vmem:[#allocation2] sm:$0xff]
    %v2144 = vld [vmem:[#allocation2 + $0x8] sm:$0xff]
    %v2145 = vld [vmem:[#allocation2 + $0x18] sm:$0xff]
    %v2146 = vld [vmem:[#allocation2 + $0x20] sm:$0xff]
    %v2147 = vld [vmem:[#allocation2 + $0x30] sm:$0xff]
    %v2148 = vld [vmem:[#allocation2 + $0x38] sm:$0xff]
    %v2149 = vld [vmem:[#allocation2 + $0x48] sm:$0xff]
    %v2150 = vld [vmem:[#allocation2 + $0x50] sm:$0xff]
    %v2151 = vld [vmem:[#allocation2 + $0x60] sm:$0xff]
    %v2152 = vld [vmem:[#allocation2 + $0x68] sm:$0xff]
    %v2153 = vld [vmem:[#allocation2 + $0x78] sm:$0xff]
    %v2154 = vld [vmem:[#allocation2 + $0x80] sm:$0xff]
    %v2155 = vld [vmem:[#allocation2 + $0x90] sm:$0xff]
    %v2156 = vld [vmem:[#allocation2 + $0x98] sm:$0xff]
    %v2157 = vld [vmem:[#allocation2 + $0xa8] sm:$0xff]
    %v2158 = vld [vmem:[#allocation2 + $0xb0] sm:$0xff]
    %v2159 = vld [vmem:[#allocation2 + $0xc0] sm:$0xff]
    %v2160 = vld [vmem:[#allocation2 + $0xc8] sm:$0xff]
    %v2161 = vld [vmem:[#allocation2 + $0xd8] sm:$0xff]
    %v2162 = vld [vmem:[#allocation2 + $0xe0] sm:$0xff]
    %v2163 = vld [vmem:[#allocation2 + $0xf0] sm:$0xff]
    %v2164 = vld [vmem:[#allocation2 + $0xf8] sm:$0xff]
    %v2165 = vld [vmem:[#allocation2 + $0x108] sm:$0xff]
    %v2166 = vld [vmem:[#allocation2 + $0x110] sm:$0xff]
    %v2167 = vld [vmem:[#allocation2 + $0x120] sm:$0xff]
    %v2168 = vld [vmem:[#allocation2 + $0x128] sm:$0xff]
    %v2169 = vld [vmem:[#allocation2 + $0x138] sm:$0xff]
    %v2170 = vld [vmem:[#allocation2 + $0x140] sm:$0xff]
    %v2171 = vld [vmem:[#allocation2 + $0x150] sm:$0xff]
    %v2172 = vld [vmem:[#allocation2 + $0x158] sm:$0xff]
    %v2173 = vld [vmem:[#allocation2 + $0x168] sm:$0xff]
    %v2174 = vld [vmem:[#allocation2 + $0x170] sm:$0xff]
    %v2175 = vld [vmem:[#allocation2 + $0x1b0] sm:$0xff]
    %v2176 = vld [vmem:[#allocation2 + $0x1b8] sm:$0xff]
    %v2177 = vld [vmem:[#allocation2 + $0x1c8] sm:$0xff]
    %v2178 = vld [vmem:[#allocation2 + $0x1d0] sm:$0xff]
    %v2179 = vld [vmem:[#allocation2 + $0x1e0] sm:$0xff]
    %v2180 = vld [vmem:[#allocation2 + $0x1e8] sm:$0xff]
    %v2181 = vld [vmem:[#allocation2 + $0x1f8] sm:$0xff]
    %v2182 = vld [vmem:[#allocation2 + $0x200] sm:$0xff]
    %v2183 = vld [vmem:[#allocation2 + $0x210] sm:$0xff]
    %v2184 = vld [vmem:[#allocation2 + $0x218] sm:$0xff]
    %v2185 = vld [vmem:[#allocation2 + $0x228] sm:$0xff]
    %v2186 = vld [vmem:[#allocation2 + $0x230] sm:$0xff]
    %v2187 = vld [vmem:[#allocation2 + $0x240] sm:$0xff]
    %v2188 = vld [vmem:[#allocation2 + $0x248] sm:$0xff]
    %v2189 = vld [vmem:[#allocation2 + $0x258] sm:$0xff]
    %v2190 = vld [vmem:[#allocation2 + $0x260] sm:$0xff]
    %v2191 = vld [vmem:[#allocation2 + $0x270] sm:$0xff]
    %v2192 = vld [vmem:[#allocation2 + $0x278] sm:$0xff]
    %v2193 = vld [vmem:[#allocation2 + $0x288] sm:$0xff]
    %v2194 = vld [vmem:[#allocation2 + $0x290] sm:$0xff]
    %v2195 = vld [vmem:[#allocation2 + $0x2a0] sm:$0xff]
    %v2196 = vld [vmem:[#allocation2 + $0x2a8] sm:$0xff]
    %v2197 = vld [vmem:[#allocation2 + $0x2b8] sm:$0xff]
    %v2198 = vld [vmem:[#allocation2 + $0x2c0] sm:$0xff]
    %v2199 = vld [vmem:[#allocation2 + $0x2d0] sm:$0xff]
    %v2200 = vld [vmem:[#allocation2 + $0x2d8] sm:$0xff]
    %v2201 = vld [vmem:[#allocation2 + $0x2e8] sm:$0xff]
    %v2202 = vld [vmem:[#allocation2 + $0x2f0] sm:$0xff]
    %v2203 = vld [vmem:[#allocation2 + $0x300] sm:$0xff]
    %v2204 = vld [vmem:[#allocation2 + $0x308] sm:$0xff]
    %v2205 = vld [vmem:[#allocation2 + $0x318] sm:$0xff]
    %v2206 = vld [vmem:[#allocation2 + $0x320] sm:$0xff]
    %v2207 = vpack.c.bf16 %v2144, %v2143
    %v2208 = vpack.c.bf16 %v2146, %v2145
    %v2209 = vpack.c.bf16 %v2148, %v2147
    %v2210 = vpack.c.bf16 %v2150, %v2149
    %v2211 = vpack.c.bf16 %v2152, %v2151
    %v2212 = vpack.c.bf16 %v2154, %v2153
    %v2213 = vpack.c.bf16 %v2156, %v2155
    %v2214 = vpack.c.bf16 %v2158, %v2157
    %v2215 = vpack.c.bf16 %v2160, %v2159
    %v2216 = vpack.c.bf16 %v2162, %v2161
    %v2217 = vpack.c.bf16 %v2164, %v2163
    %v2218 = vpack.c.bf16 %v2166, %v2165
    %v2219 = vpack.c.bf16 %v2168, %v2167
    %v2220 = vpack.c.bf16 %v2170, %v2169
    %v2221 = vpack.c.bf16 %v2172, %v2171
    %v2222 = vpack.c.bf16 %v2174, %v2173
    %v2223 = vpack.c.bf16 %v2176, %v2175
    %v2224 = vpack.c.bf16 %v2178, %v2177
    %v2225 = vpack.c.bf16 %v2180, %v2179
    %v2226 = vpack.c.bf16 %v2182, %v2181
    %v2227 = vpack.c.bf16 %v2184, %v2183
    %v2228 = vpack.c.bf16 %v2186, %v2185
    %v2229 = vpack.c.bf16 %v2188, %v2187
    %v2230 = vpack.c.bf16 %v2190, %v2189
    %v2231 = vpack.c.bf16 %v2192, %v2191
    %v2232 = vpack.c.bf16 %v2194, %v2193
    %v2233 = vpack.c.bf16 %v2196, %v2195
    %v2234 = vpack.c.bf16 %v2198, %v2197
    %v2235 = vpack.c.bf16 %v2200, %v2199
    %v2236 = vpack.c.bf16 %v2202, %v2201
    %v2237 = vpack.c.bf16 %v2204, %v2203
    %v2238 = vpack.c.bf16 %v2206, %v2205
    %v2271 = vunpack.c.l.b16 %v2207
    %v2272 = vunpack.c.h.b16 %v2207
    %v2273 = vunpack.c.l.b16 %v2208
    %v2274 = vunpack.c.h.b16 %v2208
    %v2275 = vunpack.c.l.b16 %v2209
    %v2276 = vunpack.c.h.b16 %v2209
    %v2277 = vunpack.c.l.b16 %v2210
    %v2278 = vunpack.c.h.b16 %v2210
    %v2279 = vunpack.c.l.b16 %v2211
    %v2280 = vunpack.c.h.b16 %v2211
    %v2281 = vunpack.c.l.b16 %v2212
    %v2282 = vunpack.c.h.b16 %v2212
    %v2283 = vunpack.c.l.b16 %v2213
    %v2284 = vunpack.c.h.b16 %v2213
    %v2285 = vunpack.c.l.b16 %v2214
    %v2286 = vunpack.c.h.b16 %v2214
    %v2287 = vunpack.c.l.b16 %v2215
    %v2288 = vunpack.c.h.b16 %v2215
    %v2289 = vunpack.c.l.b16 %v2216
    %v2290 = vunpack.c.h.b16 %v2216
    %v2291 = vunpack.c.l.b16 %v2217
    %v2292 = vunpack.c.h.b16 %v2217
    %v2293 = vunpack.c.l.b16 %v2218
    %v2294 = vunpack.c.h.b16 %v2218
    %v2295 = vunpack.c.l.b16 %v2219
    %v2296 = vunpack.c.h.b16 %v2219
    %v2297 = vunpack.c.l.b16 %v2220
    %v2298 = vunpack.c.h.b16 %v2220
    %v2299 = vunpack.c.l.b16 %v2221
    %v2300 = vunpack.c.h.b16 %v2221
    %v2301 = vunpack.c.l.b16 %v2222
    %v2302 = vunpack.c.h.b16 %v2222
    %v2303 = vunpack.c.l.b16 %v2223
    %v2304 = vunpack.c.h.b16 %v2223
    %v2305 = vunpack.c.l.b16 %v2224
    %v2306 = vunpack.c.h.b16 %v2224
    %v2307 = vunpack.c.l.b16 %v2225
    %v2308 = vunpack.c.h.b16 %v2225
    %v2309 = vunpack.c.l.b16 %v2226
    %v2310 = vunpack.c.h.b16 %v2226
    %v2311 = vunpack.c.l.b16 %v2227
    %v2312 = vunpack.c.h.b16 %v2227
    %v2313 = vunpack.c.l.b16 %v2228
    %v2314 = vunpack.c.h.b16 %v2228
    %v2315 = vunpack.c.l.b16 %v2229
    %v2316 = vunpack.c.h.b16 %v2229
    %v2317 = vunpack.c.l.b16 %v2230
    %v2318 = vunpack.c.h.b16 %v2230
    %v2319 = vunpack.c.l.b16 %v2231
    %v2320 = vunpack.c.h.b16 %v2231
    %v2321 = vunpack.c.l.b16 %v2232
    %v2322 = vunpack.c.h.b16 %v2232
    %v2323 = vunpack.c.l.b16 %v2233
    %v2324 = vunpack.c.h.b16 %v2233
    %v2325 = vunpack.c.l.b16 %v2234
    %v2326 = vunpack.c.h.b16 %v2234
    %v2327 = vunpack.c.l.b16 %v2235
    %v2328 = vunpack.c.h.b16 %v2235
    %v2329 = vunpack.c.l.b16 %v2236
    %v2330 = vunpack.c.h.b16 %v2236
    %v2331 = vunpack.c.l.b16 %v2237
    %v2332 = vunpack.c.h.b16 %v2237
    %v2333 = vunpack.c.l.b16 %v2238
    %v2334 = vunpack.c.h.b16 %v2238
    %v2335 = vpack.c.b16 %v2271, %v2271
    %v2336 = vpack.c.b16 %v2272, %v2272
    %v2337 = vpack.c.b16 %v2273, %v2273
    %v2338 = vpack.c.b16 %v2274, %v2274
    %v2339 = vpack.c.b16 %v2275, %v2275
    %v2340 = vpack.c.b16 %v2276, %v2276
    %v2341 = vpack.c.b16 %v2277, %v2277
    %v2342 = vpack.c.b16 %v2278, %v2278
    %v2343 = vpack.c.b16 %v2279, %v2279
    %v2344 = vpack.c.b16 %v2280, %v2280
    %v2345 = vpack.c.b16 %v2281, %v2281
    %v2346 = vpack.c.b16 %v2282, %v2282
    %v2347 = vpack.c.b16 %v2283, %v2283
    %v2348 = vpack.c.b16 %v2284, %v2284
    %v2349 = vpack.c.b16 %v2285, %v2285
    %v2350 = vpack.c.b16 %v2286, %v2286
    %v2351 = vpack.c.b16 %v2287, %v2287
    %v2352 = vpack.c.b16 %v2288, %v2288
    %v2353 = vpack.c.b16 %v2289, %v2289
    %v2354 = vpack.c.b16 %v2290, %v2290
    %v2355 = vpack.c.b16 %v2291, %v2291
    %v2356 = vpack.c.b16 %v2292, %v2292
    %v2357 = vpack.c.b16 %v2293, %v2293
    %v2358 = vpack.c.b16 %v2294, %v2294
    %v2359 = vpack.c.b16 %v2295, %v2295
    %v2360 = vpack.c.b16 %v2296, %v2296
    %v2361 = vpack.c.b16 %v2297, %v2297
    %v2362 = vpack.c.b16 %v2298, %v2298
    %v2363 = vpack.c.b16 %v2299, %v2299
    %v2364 = vpack.c.b16 %v2300, %v2300
    %v2365 = vpack.c.b16 %v2301, %v2301
    %v2366 = vpack.c.b16 %v2302, %v2302
    %v2367 = vpack.c.b16 %v2303, %v2303
    %v2368 = vpack.c.b16 %v2304, %v2304
    %v2369 = vpack.c.b16 %v2305, %v2305
    %v2370 = vpack.c.b16 %v2306, %v2306
    %v2371 = vpack.c.b16 %v2307, %v2307
    %v2372 = vpack.c.b16 %v2308, %v2308
    %v2373 = vpack.c.b16 %v2309, %v2309
    %v2374 = vpack.c.b16 %v2310, %v2310
    %v2375 = vpack.c.b16 %v2311, %v2311
    %v2376 = vpack.c.b16 %v2312, %v2312
    %v2377 = vpack.c.b16 %v2313, %v2313
    %v2378 = vpack.c.b16 %v2314, %v2314
    %v2379 = vpack.c.b16 %v2315, %v2315
    %v2380 = vpack.c.b16 %v2316, %v2316
    %v2381 = vpack.c.b16 %v2317, %v2317
    %v2382 = vpack.c.b16 %v2318, %v2318
    %v2383 = vpack.c.b16 %v2319, %v2319
    %v2384 = vpack.c.b16 %v2320, %v2320
    %v2385 = vpack.c.b16 %v2321, %v2321
    %v2386 = vpack.c.b16 %v2322, %v2322
    %v2387 = vpack.c.b16 %v2323, %v2323
    %v2388 = vpack.c.b16 %v2324, %v2324
    %v2389 = vpack.c.b16 %v2325, %v2325
    %v2390 = vpack.c.b16 %v2326, %v2326
    %v2391 = vpack.c.b16 %v2327, %v2327
    %v2392 = vpack.c.b16 %v2328, %v2328
    %v2393 = vpack.c.b16 %v2329, %v2329
    %v2394 = vpack.c.b16 %v2330, %v2330
    %v2395 = vpack.c.b16 %v2331, %v2331
    %v2396 = vpack.c.b16 %v2332, %v2332
    %v2397 = vpack.c.b16 %v2333, %v2333
    %v2398 = vpack.c.b16 %v2334, %v2334
    %vm2463 = vcmask 519168
    %2464 = vst.msk [vmem:[#allocation3] sm:$0xf] %vm2463, %v2335
    %2465 = vst.msk [vmem:[#allocation3 + $0x14] sm:$0xf] %vm2463, %v2336
    %2466 = vst.msk [vmem:[#allocation3 + $0x28] sm:$0xf] %vm2463, %v2337
    %2467 = vst.msk [vmem:[#allocation3 + $0x3c] sm:$0xf] %vm2463, %v2338
    %2468 = vst.msk [vmem:[#allocation3 + $0x50] sm:$0xf] %vm2463, %v2339
    %2469 = vst.msk [vmem:[#allocation3 + $0x64] sm:$0xf] %vm2463, %v2340
    %2470 = vst.msk [vmem:[#allocation3 + $0x78] sm:$0xf] %vm2463, %v2341
    %2471 = vst.msk [vmem:[#allocation3 + $0x8c] sm:$0xf] %vm2463, %v2342
    %2472 = vst.msk [vmem:[#allocation3 + $0xa0] sm:$0xf] %vm2463, %v2343
    %2473 = vst.msk [vmem:[#allocation3 + $0xb4] sm:$0xf] %vm2463, %v2344
    %2474 = vst.msk [vmem:[#allocation3 + $0xc8] sm:$0xf] %vm2463, %v2345
    %2475 = vst.msk [vmem:[#allocation3 + $0xdc] sm:$0xf] %vm2463, %v2346
    %2476 = vst.msk [vmem:[#allocation3 + $0xf0] sm:$0xf] %vm2463, %v2347
    %2477 = vst.msk [vmem:[#allocation3 + $0x104] sm:$0xf] %vm2463, %v2348
    %2478 = vst.msk [vmem:[#allocation3 + $0x118] sm:$0xf] %vm2463, %v2349
    %2479 = vst.msk [vmem:[#allocation3 + $0x12c] sm:$0xf] %vm2463, %v2350
    %2480 = vst.msk [vmem:[#allocation3 + $0x140] sm:$0xf] %vm2463, %v2351
    %2481 = vst.msk [vmem:[#allocation3 + $0x154] sm:$0xf] %vm2463, %v2352
    %2482 = vst.msk [vmem:[#allocation3 + $0x168] sm:$0xf] %vm2463, %v2353
    %2483 = vst.msk [vmem:[#allocation3 + $0x17c] sm:$0xf] %vm2463, %v2354
    %2484 = vst.msk [vmem:[#allocation3 + $0x190] sm:$0xf] %vm2463, %v2355
    %2485 = vst.msk [vmem:[#allocation3 + $0x1a4] sm:$0xf] %vm2463, %v2356
    %2486 = vst.msk [vmem:[#allocation3 + $0x1b8] sm:$0xf] %vm2463, %v2357
    %2487 = vst.msk [vmem:[#allocation3 + $0x1cc] sm:$0xf] %vm2463, %v2358
    %2488 = vst.msk [vmem:[#allocation3 + $0x1e0] sm:$0xf] %vm2463, %v2359
    %2489 = vst.msk [vmem:[#allocation3 + $0x1f4] sm:$0xf] %vm2463, %v2360
    %2490 = vst.msk [vmem:[#allocation3 + $0x208] sm:$0xf] %vm2463, %v2361
    %2491 = vst.msk [vmem:[#allocation3 + $0x21c] sm:$0xf] %vm2463, %v2362
    %2492 = vst.msk [vmem:[#allocation3 + $0x230] sm:$0xf] %vm2463, %v2363
    %2493 = vst.msk [vmem:[#allocation3 + $0x244] sm:$0xf] %vm2463, %v2364
    %2494 = vst.msk [vmem:[#allocation3 + $0x258] sm:$0xf] %vm2463, %v2365
    %2495 = vst.msk [vmem:[#allocation3 + $0x26c] sm:$0xf] %vm2463, %v2366
    %2496 = vst.msk [vmem:[#allocation3 + $0x280] sm:$0xf] %vm2463, %v2367
    %2497 = vst.msk [vmem:[#allocation3 + $0x294] sm:$0xf] %vm2463, %v2368
    %2498 = vst.msk [vmem:[#allocation3 + $0x2a8] sm:$0xf] %vm2463, %v2369
    %2499 = vst.msk [vmem:[#allocation3 + $0x2bc] sm:$0xf] %vm2463, %v2370
    %2500 = vst.msk [vmem:[#allocation3 + $0x2d0] sm:$0xf] %vm2463, %v2371
    %2501 = vst.msk [vmem:[#allocation3 + $0x2e4] sm:$0xf] %vm2463, %v2372
    %2502 = vst.msk [vmem:[#allocation3 + $0x2f8] sm:$0xf] %vm2463, %v2373
    %2503 = vst.msk [vmem:[#allocation3 + $0x30c] sm:$0xf] %vm2463, %v2374
    %2504 = vst.msk [vmem:[#allocation3 + $0x320] sm:$0xf] %vm2463, %v2375
    %2505 = vst.msk [vmem:[#allocation3 + $0x334] sm:$0xf] %vm2463, %v2376
    %2506 = vst.msk [vmem:[#allocation3 + $0x348] sm:$0xf] %vm2463, %v2377
    %2507 = vst.msk [vmem:[#allocation3 + $0x35c] sm:$0xf] %vm2463, %v2378
    %2508 = vst.msk [vmem:[#allocation3 + $0x370] sm:$0xf] %vm2463, %v2379
    %2509 = vst.msk [vmem:[#allocation3 + $0x384] sm:$0xf] %vm2463, %v2380
    %2510 = vst.msk [vmem:[#allocation3 + $0x398] sm:$0xf] %vm2463, %v2381
    %2511 = vst.msk [vmem:[#allocation3 + $0x3ac] sm:$0xf] %vm2463, %v2382
    %2512 = vst.msk [vmem:[#allocation3 + $0x3c0] sm:$0xf] %vm2463, %v2383
    %2513 = vst.msk [vmem:[#allocation3 + $0x3d4] sm:$0xf] %vm2463, %v2384
    %2514 = vst.msk [vmem:[#allocation3 + $0x3e8] sm:$0xf] %vm2463, %v2385
    %2515 = vst.msk [vmem:[#allocation3 + $0x3fc] sm:$0xf] %vm2463, %v2386
    %2516 = vst.msk [vmem:[#allocation3 + $0x410] sm:$0xf] %vm2463, %v2387
    %2517 = vst.msk [vmem:[#allocation3 + $0x424] sm:$0xf] %vm2463, %v2388
    %2518 = vst.msk [vmem:[#allocation3 + $0x438] sm:$0xf] %vm2463, %v2389
    %2519 = vst.msk [vmem:[#allocation3 + $0x44c] sm:$0xf] %vm2463, %v2390
    %2520 = vst.msk [vmem:[#allocation3 + $0x460] sm:$0xf] %vm2463, %v2391
    %2521 = vst.msk [vmem:[#allocation3 + $0x474] sm:$0xf] %vm2463, %v2392
    %2522 = vst.msk [vmem:[#allocation3 + $0x488] sm:$0xf] %vm2463, %v2393
    %2523 = vst.msk [vmem:[#allocation3 + $0x49c] sm:$0xf] %vm2463, %v2394
    %2524 = vst.msk [vmem:[#allocation3 + $0x4b0] sm:$0xf] %vm2463, %v2395
    %2525 = vst.msk [vmem:[#allocation3 + $0x4c4] sm:$0xf] %vm2463, %v2396
    %2526 = vst.msk [vmem:[#allocation3 + $0x4d8] sm:$0xf] %vm2463, %v2397
    %2527 = vst.msk [vmem:[#allocation3 + $0x4ec] sm:$0xf] %vm2463, %v2398
    %v2528 = vld [vmem:[#allocation2 + $0x1] sm:$0xff]
    %v2529 = vld [vmem:[#allocation2 + $0x9] sm:$0xff]
    %v2530 = vld [vmem:[#allocation2 + $0x19] sm:$0xff]
    %v2531 = vld [vmem:[#allocation2 + $0x21] sm:$0xff]
    %v2532 = vld [vmem:[#allocation2 + $0x31] sm:$0xff]
    %v2533 = vld [vmem:[#allocation2 + $0x39] sm:$0xff]
    %v2534 = vld [vmem:[#allocation2 + $0x49] sm:$0xff]
    %v2535 = vld [vmem:[#allocation2 + $0x51] sm:$0xff]
    %v2536 = vld [vmem:[#allocation2 + $0x61] sm:$0xff]
    %v2537 = vld [vmem:[#allocation2 + $0x69] sm:$0xff]
    %v2538 = vld [vmem:[#allocation2 + $0x79] sm:$0xff]
    %v2539 = vld [vmem:[#allocation2 + $0x81] sm:$0xff]
    %v2540 = vld [vmem:[#allocation2 + $0x91] sm:$0xff]
    %v2541 = vld [vmem:[#allocation2 + $0x99] sm:$0xff]
    %v2542 = vld [vmem:[#allocation2 + $0xa9] sm:$0xff]
    %v2543 = vld [vmem:[#allocation2 + $0xb1] sm:$0xff]
    %v2544 = vld [vmem:[#allocation2 + $0xc1] sm:$0xff]
    %v2545 = vld [vmem:[#allocation2 + $0xc9] sm:$0xff]
    %v2546 = vld [vmem:[#allocation2 + $0xd9] sm:$0xff]
    %v2547 = vld [vmem:[#allocation2 + $0xe1] sm:$0xff]
    %v2548 = vld [vmem:[#allocation2 + $0xf1] sm:$0xff]
    %v2549 = vld [vmem:[#allocation2 + $0xf9] sm:$0xff]
    %v2550 = vld [vmem:[#allocation2 + $0x109] sm:$0xff]
    %v2551 = vld [vmem:[#allocation2 + $0x111] sm:$0xff]
    %v2552 = vld [vmem:[#allocation2 + $0x121] sm:$0xff]
    %v2553 = vld [vmem:[#allocation2 + $0x129] sm:$0xff]
    %v2554 = vld [vmem:[#allocation2 + $0x139] sm:$0xff]
    %v2555 = vld [vmem:[#allocation2 + $0x141] sm:$0xff]
    %v2556 = vld [vmem:[#allocation2 + $0x151] sm:$0xff]
    %v2557 = vld [vmem:[#allocation2 + $0x159] sm:$0xff]
    %v2558 = vld [vmem:[#allocation2 + $0x169] sm:$0xff]
    %v2559 = vld [vmem:[#allocation2 + $0x171] sm:$0xff]
    %v2560 = vld [vmem:[#allocation2 + $0x1b1] sm:$0xff]
    %v2561 = vld [vmem:[#allocation2 + $0x1b9] sm:$0xff]
    %v2562 = vld [vmem:[#allocation2 + $0x1c9] sm:$0xff]
    %v2563 = vld [vmem:[#allocation2 + $0x1d1] sm:$0xff]
    %v2564 = vld [vmem:[#allocation2 + $0x1e1] sm:$0xff]
    %v2565 = vld [vmem:[#allocation2 + $0x1e9] sm:$0xff]
    %v2566 = vld [vmem:[#allocation2 + $0x1f9] sm:$0xff]
    %v2567 = vld [vmem:[#allocation2 + $0x201] sm:$0xff]
    %v2568 = vld [vmem:[#allocation2 + $0x211] sm:$0xff]
    %v2569 = vld [vmem:[#allocation2 + $0x219] sm:$0xff]
    %v2570 = vld [vmem:[#allocation2 + $0x229] sm:$0xff]
    %v2571 = vld [vmem:[#allocation2 + $0x231] sm:$0xff]
    %v2572 = vld [vmem:[#allocation2 + $0x241] sm:$0xff]
    %v2573 = vld [vmem:[#allocation2 + $0x249] sm:$0xff]
    %v2574 = vld [vmem:[#allocation2 + $0x259] sm:$0xff]
    %v2575 = vld [vmem:[#allocation2 + $0x261] sm:$0xff]
    %v2576 = vld [vmem:[#allocation2 + $0x271] sm:$0xff]
    %v2577 = vld [vmem:[#allocation2 + $0x279] sm:$0xff]
    %v2578 = vld [vmem:[#allocation2 + $0x289] sm:$0xff]
    %v2579 = vld [vmem:[#allocation2 + $0x291] sm:$0xff]
    %v2580 = vld [vmem:[#allocation2 + $0x2a1] sm:$0xff]
    %v2581 = vld [vmem:[#allocation2 + $0x2a9] sm:$0xff]
    %v2582 = vld [vmem:[#allocation2 + $0x2b9] sm:$0xff]
    %v2583 = vld [vmem:[#allocation2 + $0x2c1] sm:$0xff]
    %v2584 = vld [vmem:[#allocation2 + $0x2d1] sm:$0xff]
    %v2585 = vld [vmem:[#allocation2 + $0x2d9] sm:$0xff]
    %v2586 = vld [vmem:[#allocation2 + $0x2e9] sm:$0xff]
    %v2587 = vld [vmem:[#allocation2 + $0x2f1] sm:$0xff]
    %v2588 = vld [vmem:[#allocation2 + $0x301] sm:$0xff]
    %v2589 = vld [vmem:[#allocation2 + $0x309] sm:$0xff]
    %v2590 = vld [vmem:[#allocation2 + $0x319] sm:$0xff]
    %v2591 = vld [vmem:[#allocation2 + $0x321] sm:$0xff]
    %v2592 = vpack.c.bf16 %v2529, %v2528
    %v2593 = vpack.c.bf16 %v2531, %v2530
    %v2594 = vpack.c.bf16 %v2533, %v2532
    %v2595 = vpack.c.bf16 %v2535, %v2534
    %v2596 = vpack.c.bf16 %v2537, %v2536
    %v2597 = vpack.c.bf16 %v2539, %v2538
    %v2598 = vpack.c.bf16 %v2541, %v2540
    %v2599 = vpack.c.bf16 %v2543, %v2542
    %v2600 = vpack.c.bf16 %v2545, %v2544
    %v2601 = vpack.c.bf16 %v2547, %v2546
    %v2602 = vpack.c.bf16 %v2549, %v2548
    %v2603 = vpack.c.bf16 %v2551, %v2550
    %v2604 = vpack.c.bf16 %v2553, %v2552
    %v2605 = vpack.c.bf16 %v2555, %v2554
    %v2606 = vpack.c.bf16 %v2557, %v2556
    %v2607 = vpack.c.bf16 %v2559, %v2558
    %v2608 = vpack.c.bf16 %v2561, %v2560
    %v2609 = vpack.c.bf16 %v2563, %v2562
    %v2610 = vpack.c.bf16 %v2565, %v2564
    %v2611 = vpack.c.bf16 %v2567, %v2566
    %v2612 = vpack.c.bf16 %v2569, %v2568
    %v2613 = vpack.c.bf16 %v2571, %v2570
    %v2614 = vpack.c.bf16 %v2573, %v2572
    %v2615 = vpack.c.bf16 %v2575, %v2574
    %v2616 = vpack.c.bf16 %v2577, %v2576
    %v2617 = vpack.c.bf16 %v2579, %v2578
    %v2618 = vpack.c.bf16 %v2581, %v2580
    %v2619 = vpack.c.bf16 %v2583, %v2582
    %v2620 = vpack.c.bf16 %v2585, %v2584
    %v2621 = vpack.c.bf16 %v2587, %v2586
    %v2622 = vpack.c.bf16 %v2589, %v2588
    %v2623 = vpack.c.bf16 %v2591, %v2590
    %v2656 = vunpack.c.l.b16 %v2592
    %v2657 = vunpack.c.h.b16 %v2592
    %v2658 = vunpack.c.l.b16 %v2593
    %v2659 = vunpack.c.h.b16 %v2593
    %v2660 = vunpack.c.l.b16 %v2594
    %v2661 = vunpack.c.h.b16 %v2594
    %v2662 = vunpack.c.l.b16 %v2595
    %v2663 = vunpack.c.h.b16 %v2595
    %v2664 = vunpack.c.l.b16 %v2596
    %v2665 = vunpack.c.h.b16 %v2596
    %v2666 = vunpack.c.l.b16 %v2597
    %v2667 = vunpack.c.h.b16 %v2597
    %v2668 = vunpack.c.l.b16 %v2598
    %v2669 = vunpack.c.h.b16 %v2598
    %v2670 = vunpack.c.l.b16 %v2599
    %v2671 = vunpack.c.h.b16 %v2599
    %v2672 = vunpack.c.l.b16 %v2600
    %v2673 = vunpack.c.h.b16 %v2600
    %v2674 = vunpack.c.l.b16 %v2601
    %v2675 = vunpack.c.h.b16 %v2601
    %v2676 = vunpack.c.l.b16 %v2602
    %v2677 = vunpack.c.h.b16 %v2602
    %v2678 = vunpack.c.l.b16 %v2603
    %v2679 = vunpack.c.h.b16 %v2603
    %v2680 = vunpack.c.l.b16 %v2604
    %v2681 = vunpack.c.h.b16 %v2604
    %v2682 = vunpack.c.l.b16 %v2605
    %v2683 = vunpack.c.h.b16 %v2605
    %v2684 = vunpack.c.l.b16 %v2606
    %v2685 = vunpack.c.h.b16 %v2606
    %v2686 = vunpack.c.l.b16 %v2607
    %v2687 = vunpack.c.h.b16 %v2607
    %v2688 = vunpack.c.l.b16 %v2608
    %v2689 = vunpack.c.h.b16 %v2608
    %v2690 = vunpack.c.l.b16 %v2609
    %v2691 = vunpack.c.h.b16 %v2609
    %v2692 = vunpack.c.l.b16 %v2610
    %v2693 = vunpack.c.h.b16 %v2610
    %v2694 = vunpack.c.l.b16 %v2611
    %v2695 = vunpack.c.h.b16 %v2611
    %v2696 = vunpack.c.l.b16 %v2612
    %v2697 = vunpack.c.h.b16 %v2612
    %v2698 = vunpack.c.l.b16 %v2613
    %v2699 = vunpack.c.h.b16 %v2613
    %v2700 = vunpack.c.l.b16 %v2614
    %v2701 = vunpack.c.h.b16 %v2614
    %v2702 = vunpack.c.l.b16 %v2615
    %v2703 = vunpack.c.h.b16 %v2615
    %v2704 = vunpack.c.l.b16 %v2616
    %v2705 = vunpack.c.h.b16 %v2616
    %v2706 = vunpack.c.l.b16 %v2617
    %v2707 = vunpack.c.h.b16 %v2617
    %v2708 = vunpack.c.l.b16 %v2618
    %v2709 = vunpack.c.h.b16 %v2618
    %v2710 = vunpack.c.l.b16 %v2619
    %v2711 = vunpack.c.h.b16 %v2619
    %v2712 = vunpack.c.l.b16 %v2620
    %v2713 = vunpack.c.h.b16 %v2620
    %v2714 = vunpack.c.l.b16 %v2621
    %v2715 = vunpack.c.h.b16 %v2621
    %v2716 = vunpack.c.l.b16 %v2622
    %v2717 = vunpack.c.h.b16 %v2622
    %v2718 = vunpack.c.l.b16 %v2623
    %v2719 = vunpack.c.h.b16 %v2623
    %v2720 = vpack.c.b16 %v2656, %v2656
    %v2721 = vpack.c.b16 %v2657, %v2657
    %v2722 = vpack.c.b16 %v2658, %v2658
    %v2723 = vpack.c.b16 %v2659, %v2659
    %v2724 = vpack.c.b16 %v2660, %v2660
    %v2725 = vpack.c.b16 %v2661, %v2661
    %v2726 = vpack.c.b16 %v2662, %v2662
    %v2727 = vpack.c.b16 %v2663, %v2663
    %v2728 = vpack.c.b16 %v2664, %v2664
    %v2729 = vpack.c.b16 %v2665, %v2665
    %v2730 = vpack.c.b16 %v2666, %v2666
    %v2731 = vpack.c.b16 %v2667, %v2667
    %v2732 = vpack.c.b16 %v2668, %v2668
    %v2733 = vpack.c.b16 %v2669, %v2669
    %v2734 = vpack.c.b16 %v2670, %v2670
    %v2735 = vpack.c.b16 %v2671, %v2671
    %v2736 = vpack.c.b16 %v2672, %v2672
    %v2737 = vpack.c.b16 %v2673, %v2673
    %v2738 = vpack.c.b16 %v2674, %v2674
    %v2739 = vpack.c.b16 %v2675, %v2675
    %v2740 = vpack.c.b16 %v2676, %v2676
    %v2741 = vpack.c.b16 %v2677, %v2677
    %v2742 = vpack.c.b16 %v2678, %v2678
    %v2743 = vpack.c.b16 %v2679, %v2679
    %v2744 = vpack.c.b16 %v2680, %v2680
    %v2745 = vpack.c.b16 %v2681, %v2681
    %v2746 = vpack.c.b16 %v2682, %v2682
    %v2747 = vpack.c.b16 %v2683, %v2683
    %v2748 = vpack.c.b16 %v2684, %v2684
    %v2749 = vpack.c.b16 %v2685, %v2685
    %v2750 = vpack.c.b16 %v2686, %v2686
    %v2751 = vpack.c.b16 %v2687, %v2687
    %v2752 = vpack.c.b16 %v2688, %v2688
    %v2753 = vpack.c.b16 %v2689, %v2689
    %v2754 = vpack.c.b16 %v2690, %v2690
    %v2755 = vpack.c.b16 %v2691, %v2691
    %v2756 = vpack.c.b16 %v2692, %v2692
    %v2757 = vpack.c.b16 %v2693, %v2693
    %v2758 = vpack.c.b16 %v2694, %v2694
    %v2759 = vpack.c.b16 %v2695, %v2695
    %v2760 = vpack.c.b16 %v2696, %v2696
    %v2761 = vpack.c.b16 %v2697, %v2697
    %v2762 = vpack.c.b16 %v2698, %v2698
    %v2763 = vpack.c.b16 %v2699, %v2699
    %v2764 = vpack.c.b16 %v2700, %v2700
    %v2765 = vpack.c.b16 %v2701, %v2701
    %v2766 = vpack.c.b16 %v2702, %v2702
    %v2767 = vpack.c.b16 %v2703, %v2703
    %v2768 = vpack.c.b16 %v2704, %v2704
    %v2769 = vpack.c.b16 %v2705, %v2705
    %v2770 = vpack.c.b16 %v2706, %v2706
    %v2771 = vpack.c.b16 %v2707, %v2707
    %v2772 = vpack.c.b16 %v2708, %v2708
    %v2773 = vpack.c.b16 %v2709, %v2709
    %v2774 = vpack.c.b16 %v2710, %v2710
    %v2775 = vpack.c.b16 %v2711, %v2711
    %v2776 = vpack.c.b16 %v2712, %v2712
    %v2777 = vpack.c.b16 %v2713, %v2713
    %v2778 = vpack.c.b16 %v2714, %v2714
    %v2779 = vpack.c.b16 %v2715, %v2715
    %v2780 = vpack.c.b16 %v2716, %v2716
    %v2781 = vpack.c.b16 %v2717, %v2717
    %v2782 = vpack.c.b16 %v2718, %v2718
    %v2783 = vpack.c.b16 %v2719, %v2719
    %2784 = vrot.lane.b32.xlu0 %v2720, 64
    %v2785 = vpop.permute.xlu0 %2784
    %2786 = vrot.lane.b32.xlu0 %v2721, 64
    %v2787 = vpop.permute.xlu0 %2786
    %2788 = vrot.lane.b32.xlu0 %v2722, 64
    %v2789 = vpop.permute.xlu0 %2788
    %2790 = vrot.lane.b32.xlu0 %v2723, 64
    %v2791 = vpop.permute.xlu0 %2790
    %2792 = vrot.lane.b32.xlu0 %v2724, 64
    %v2793 = vpop.permute.xlu0 %2792
    %2794 = vrot.lane.b32.xlu0 %v2725, 64
    %v2795 = vpop.permute.xlu0 %2794
    %2796 = vrot.lane.b32.xlu0 %v2726, 64
    %v2797 = vpop.permute.xlu0 %2796
    %2798 = vrot.lane.b32.xlu0 %v2727, 64
    %v2799 = vpop.permute.xlu0 %2798
    %2800 = vrot.lane.b32.xlu0 %v2728, 64
    %v2801 = vpop.permute.xlu0 %2800
    %2802 = vrot.lane.b32.xlu0 %v2729, 64
    %v2803 = vpop.permute.xlu0 %2802
    %2804 = vrot.lane.b32.xlu0 %v2730, 64
    %v2805 = vpop.permute.xlu0 %2804
    %2806 = vrot.lane.b32.xlu0 %v2731, 64
    %v2807 = vpop.permute.xlu0 %2806
    %2808 = vrot.lane.b32.xlu0 %v2732, 64
    %v2809 = vpop.permute.xlu0 %2808
    %2810 = vrot.lane.b32.xlu0 %v2733, 64
    %v2811 = vpop.permute.xlu0 %2810
    %2812 = vrot.lane.b32.xlu0 %v2734, 64
    %v2813 = vpop.permute.xlu0 %2812
    %2814 = vrot.lane.b32.xlu0 %v2735, 64
    %v2815 = vpop.permute.xlu0 %2814
    %2816 = vrot.lane.b32.xlu0 %v2736, 64
    %v2817 = vpop.permute.xlu0 %2816
    %2818 = vrot.lane.b32.xlu0 %v2737, 64
    %v2819 = vpop.permute.xlu0 %2818
    %2820 = vrot.lane.b32.xlu0 %v2738, 64
    %v2821 = vpop.permute.xlu0 %2820
    %2822 = vrot.lane.b32.xlu0 %v2739, 64
    %v2823 = vpop.permute.xlu0 %2822
    %2824 = vrot.lane.b32.xlu0 %v2740, 64
    %v2825 = vpop.permute.xlu0 %2824
    %2826 = vrot.lane.b32.xlu0 %v2741, 64
    %v2827 = vpop.permute.xlu0 %2826
    %2828 = vrot.lane.b32.xlu0 %v2742, 64
    %v2829 = vpop.permute.xlu0 %2828
    %2830 = vrot.lane.b32.xlu0 %v2743, 64
    %v2831 = vpop.permute.xlu0 %2830
    %2832 = vrot.lane.b32.xlu0 %v2744, 64
    %v2833 = vpop.permute.xlu0 %2832
    %2834 = vrot.lane.b32.xlu0 %v2745, 64
    %v2835 = vpop.permute.xlu0 %2834
    %2836 = vrot.lane.b32.xlu0 %v2746, 64
    %v2837 = vpop.permute.xlu0 %2836
    %2838 = vrot.lane.b32.xlu0 %v2747, 64
    %v2839 = vpop.permute.xlu0 %2838
    %2840 = vrot.lane.b32.xlu0 %v2748, 64
    %v2841 = vpop.permute.xlu0 %2840
    %2842 = vrot.lane.b32.xlu0 %v2749, 64
    %v2843 = vpop.permute.xlu0 %2842
    %2844 = vrot.lane.b32.xlu0 %v2750, 64
    %v2845 = vpop.permute.xlu0 %2844
    %2846 = vrot.lane.b32.xlu0 %v2751, 64
    %v2847 = vpop.permute.xlu0 %2846
    %2848 = vrot.lane.b32.xlu0 %v2752, 64
    %v2849 = vpop.permute.xlu0 %2848
    %2850 = vrot.lane.b32.xlu0 %v2753, 64
    %v2851 = vpop.permute.xlu0 %2850
    %2852 = vrot.lane.b32.xlu0 %v2754, 64
    %v2853 = vpop.permute.xlu0 %2852
    %2854 = vrot.lane.b32.xlu0 %v2755, 64
    %v2855 = vpop.permute.xlu0 %2854
    %2856 = vrot.lane.b32.xlu0 %v2756, 64
    %v2857 = vpop.permute.xlu0 %2856
    %2858 = vrot.lane.b32.xlu0 %v2757, 64
    %v2859 = vpop.permute.xlu0 %2858
    %2860 = vrot.lane.b32.xlu0 %v2758, 64
    %v2861 = vpop.permute.xlu0 %2860
    %2862 = vrot.lane.b32.xlu0 %v2759, 64
    %v2863 = vpop.permute.xlu0 %2862
    %2864 = vrot.lane.b32.xlu0 %v2760, 64
    %v2865 = vpop.permute.xlu0 %2864
    %2866 = vrot.lane.b32.xlu0 %v2761, 64
    %v2867 = vpop.permute.xlu0 %2866
    %2868 = vrot.lane.b32.xlu0 %v2762, 64
    %v2869 = vpop.permute.xlu0 %2868
    %2870 = vrot.lane.b32.xlu0 %v2763, 64
    %v2871 = vpop.permute.xlu0 %2870
    %2872 = vrot.lane.b32.xlu0 %v2764, 64
    %v2873 = vpop.permute.xlu0 %2872
    %2874 = vrot.lane.b32.xlu0 %v2765, 64
    %v2875 = vpop.permute.xlu0 %2874
    %2876 = vrot.lane.b32.xlu0 %v2766, 64
    %v2877 = vpop.permute.xlu0 %2876
    %2878 = vrot.lane.b32.xlu0 %v2767, 64
    %v2879 = vpop.permute.xlu0 %2878
    %2880 = vrot.lane.b32.xlu0 %v2768, 64
    %v2881 = vpop.permute.xlu0 %2880
    %2882 = vrot.lane.b32.xlu0 %v2769, 64
    %v2883 = vpop.permute.xlu0 %2882
    %2884 = vrot.lane.b32.xlu0 %v2770, 64
    %v2885 = vpop.permute.xlu0 %2884
    %2886 = vrot.lane.b32.xlu0 %v2771, 64
    %v2887 = vpop.permute.xlu0 %2886
    %2888 = vrot.lane.b32.xlu0 %v2772, 64
    %v2889 = vpop.permute.xlu0 %2888
    %2890 = vrot.lane.b32.xlu0 %v2773, 64
    %v2891 = vpop.permute.xlu0 %2890
    %2892 = vrot.lane.b32.xlu0 %v2774, 64
    %v2893 = vpop.permute.xlu0 %2892
    %2894 = vrot.lane.b32.xlu0 %v2775, 64
    %v2895 = vpop.permute.xlu0 %2894
    %2896 = vrot.lane.b32.xlu0 %v2776, 64
    %v2897 = vpop.permute.xlu0 %2896
    %2898 = vrot.lane.b32.xlu0 %v2777, 64
    %v2899 = vpop.permute.xlu0 %2898
    %2900 = vrot.lane.b32.xlu0 %v2778, 64
    %v2901 = vpop.permute.xlu0 %2900
    %2902 = vrot.lane.b32.xlu0 %v2779, 64
    %v2903 = vpop.permute.xlu0 %2902
    %2904 = vrot.lane.b32.xlu0 %v2780, 64
    %v2905 = vpop.permute.xlu0 %2904
    %2906 = vrot.lane.b32.xlu0 %v2781, 64
    %v2907 = vpop.permute.xlu0 %2906
    %2908 = vrot.lane.b32.xlu0 %v2782, 64
    %v2909 = vpop.permute.xlu0 %2908
    %2910 = vrot.lane.b32.xlu0 %v2783, 64
    %v2911 = vpop.permute.xlu0 %2910
    %vm2976 = vcmask 1043968
    %2977 = vst.msk [vmem:[#allocation3] sm:$0xf] %vm2976, %v2785
    %2978 = vst.msk [vmem:[#allocation3 + $0x14] sm:$0xf] %vm2976, %v2787
    %2979 = vst.msk [vmem:[#allocation3 + $0x28] sm:$0xf] %vm2976, %v2789
    %2980 = vst.msk [vmem:[#allocation3 + $0x3c] sm:$0xf] %vm2976, %v2791
    %2981 = vst.msk [vmem:[#allocation3 + $0x50] sm:$0xf] %vm2976, %v2793
    %2982 = vst.msk [vmem:[#allocation3 + $0x64] sm:$0xf] %vm2976, %v2795
    %2983 = vst.msk [vmem:[#allocation3 + $0x78] sm:$0xf] %vm2976, %v2797
    %2984 = vst.msk [vmem:[#allocation3 + $0x8c] sm:$0xf] %vm2976, %v2799
    %2985 = vst.msk [vmem:[#allocation3 + $0xa0] sm:$0xf] %vm2976, %v2801
    %2986 = vst.msk [vmem:[#allocation3 + $0xb4] sm:$0xf] %vm2976, %v2803
    %2987 = vst.msk [vmem:[#allocation3 + $0xc8] sm:$0xf] %vm2976, %v2805
    %2988 = vst.msk [vmem:[#allocation3 + $0xdc] sm:$0xf] %vm2976, %v2807
    %2989 = vst.msk [vmem:[#allocation3 + $0xf0] sm:$0xf] %vm2976, %v2809
    %2990 = vst.msk [vmem:[#allocation3 + $0x104] sm:$0xf] %vm2976, %v2811
    %2991 = vst.msk [vmem:[#allocation3 + $0x118] sm:$0xf] %vm2976, %v2813
    %2992 = vst.msk [vmem:[#allocation3 + $0x12c] sm:$0xf] %vm2976, %v2815
    %2993 = vst.msk [vmem:[#allocation3 + $0x140] sm:$0xf] %vm2976, %v2817
    %2994 = vst.msk [vmem:[#allocation3 + $0x154] sm:$0xf] %vm2976, %v2819
    %2995 = vst.msk [vmem:[#allocation3 + $0x168] sm:$0xf] %vm2976, %v2821
    %2996 = vst.msk [vmem:[#allocation3 + $0x17c] sm:$0xf] %vm2976, %v2823
    %2997 = vst.msk [vmem:[#allocation3 + $0x190] sm:$0xf] %vm2976, %v2825
    %2998 = vst.msk [vmem:[#allocation3 + $0x1a4] sm:$0xf] %vm2976, %v2827
    %2999 = vst.msk [vmem:[#allocation3 + $0x1b8] sm:$0xf] %vm2976, %v2829
    %3000 = vst.msk [vmem:[#allocation3 + $0x1cc] sm:$0xf] %vm2976, %v2831
    %3001 = vst.msk [vmem:[#allocation3 + $0x1e0] sm:$0xf] %vm2976, %v2833
    %3002 = vst.msk [vmem:[#allocation3 + $0x1f4] sm:$0xf] %vm2976, %v2835
    %3003 = vst.msk [vmem:[#allocation3 + $0x208] sm:$0xf] %vm2976, %v2837
    %3004 = vst.msk [vmem:[#allocation3 + $0x21c] sm:$0xf] %vm2976, %v2839
    %3005 = vst.msk [vmem:[#allocation3 + $0x230] sm:$0xf] %vm2976, %v2841
    %3006 = vst.msk [vmem:[#allocation3 + $0x244] sm:$0xf] %vm2976, %v2843
    %3007 = vst.msk [vmem:[#allocation3 + $0x258] sm:$0xf] %vm2976, %v2845
    %3008 = vst.msk [vmem:[#allocation3 + $0x26c] sm:$0xf] %vm2976, %v2847
    %3009 = vst.msk [vmem:[#allocation3 + $0x280] sm:$0xf] %vm2976, %v2849
    %3010 = vst.msk [vmem:[#allocation3 + $0x294] sm:$0xf] %vm2976, %v2851
    %3011 = vst.msk [vmem:[#allocation3 + $0x2a8] sm:$0xf] %vm2976, %v2853
    %3012 = vst.msk [vmem:[#allocation3 + $0x2bc] sm:$0xf] %vm2976, %v2855
    %3013 = vst.msk [vmem:[#allocation3 + $0x2d0] sm:$0xf] %vm2976, %v2857
    %3014 = vst.msk [vmem:[#allocation3 + $0x2e4] sm:$0xf] %vm2976, %v2859
    %3015 = vst.msk [vmem:[#allocation3 + $0x2f8] sm:$0xf] %vm2976, %v2861
    %3016 = vst.msk [vmem:[#allocation3 + $0x30c] sm:$0xf] %vm2976, %v2863
    %3017 = vst.msk [vmem:[#allocation3 + $0x320] sm:$0xf] %vm2976, %v2865
    %3018 = vst.msk [vmem:[#allocation3 + $0x334] sm:$0xf] %vm2976, %v2867
    %3019 = vst.msk [vmem:[#allocation3 + $0x348] sm:$0xf] %vm2976, %v2869
    %3020 = vst.msk [vmem:[#allocation3 + $0x35c] sm:$0xf] %vm2976, %v2871
    %3021 = vst.msk [vmem:[#allocation3 + $0x370] sm:$0xf] %vm2976, %v2873
    %3022 = vst.msk [vmem:[#allocation3 + $0x384] sm:$0xf] %vm2976, %v2875
    %3023 = vst.msk [vmem:[#allocation3 + $0x398] sm:$0xf] %vm2976, %v2877
    %3024 = vst.msk [vmem:[#allocation3 + $0x3ac] sm:$0xf] %vm2976, %v2879
    %3025 = vst.msk [vmem:[#allocation3 + $0x3c0] sm:$0xf] %vm2976, %v2881
    %3026 = vst.msk [vmem:[#allocation3 + $0x3d4] sm:$0xf] %vm2976, %v2883
    %3027 = vst.msk [vmem:[#allocation3 + $0x3e8] sm:$0xf] %vm2976, %v2885
    %3028 = vst.msk [vmem:[#allocation3 + $0x3fc] sm:$0xf] %vm2976, %v2887
    %3029 = vst.msk [vmem:[#allocation3 + $0x410] sm:$0xf] %vm2976, %v2889
    %3030 = vst.msk [vmem:[#allocation3 + $0x424] sm:$0xf] %vm2976, %v2891
    %3031 = vst.msk [vmem:[#allocation3 + $0x438] sm:$0xf] %vm2976, %v2893
    %3032 = vst.msk [vmem:[#allocation3 + $0x44c] sm:$0xf] %vm2976, %v2895
    %3033 = vst.msk [vmem:[#allocation3 + $0x460] sm:$0xf] %vm2976, %v2897
    %3034 = vst.msk [vmem:[#allocation3 + $0x474] sm:$0xf] %vm2976, %v2899
    %3035 = vst.msk [vmem:[#allocation3 + $0x488] sm:$0xf] %vm2976, %v2901
    %3036 = vst.msk [vmem:[#allocation3 + $0x49c] sm:$0xf] %vm2976, %v2903
    %3037 = vst.msk [vmem:[#allocation3 + $0x4b0] sm:$0xf] %vm2976, %v2905
    %3038 = vst.msk [vmem:[#allocation3 + $0x4c4] sm:$0xf] %vm2976, %v2907
    %3039 = vst.msk [vmem:[#allocation3 + $0x4d8] sm:$0xf] %vm2976, %v2909
    %3040 = vst.msk [vmem:[#allocation3 + $0x4ec] sm:$0xf] %vm2976, %v2911
    %v3041 = vld [vmem:[#allocation2 + $0x2] sm:$0xff]
    %v3042 = vld [vmem:[#allocation2 + $0xa] sm:$0xff]
    %v3043 = vld [vmem:[#allocation2 + $0x1a] sm:$0xff]
    %v3044 = vld [vmem:[#allocation2 + $0x22] sm:$0xff]
    %v3045 = vld [vmem:[#allocation2 + $0x32] sm:$0xff]
    %v3046 = vld [vmem:[#allocation2 + $0x3a] sm:$0xff]
    %v3047 = vld [vmem:[#allocation2 + $0x4a] sm:$0xff]
    %v3048 = vld [vmem:[#allocation2 + $0x52] sm:$0xff]
    %v3049 = vld [vmem:[#allocation2 + $0x62] sm:$0xff]
    %v3050 = vld [vmem:[#allocation2 + $0x6a] sm:$0xff]
    %v3051 = vld [vmem:[#allocation2 + $0x7a] sm:$0xff]
    %v3052 = vld [vmem:[#allocation2 + $0x82] sm:$0xff]
    %v3053 = vld [vmem:[#allocation2 + $0x92] sm:$0xff]
    %v3054 = vld [vmem:[#allocation2 + $0x9a] sm:$0xff]
    %v3055 = vld [vmem:[#allocation2 + $0xaa] sm:$0xff]
    %v3056 = vld [vmem:[#allocation2 + $0xb2] sm:$0xff]
    %v3057 = vld [vmem:[#allocation2 + $0xc2] sm:$0xff]
    %v3058 = vld [vmem:[#allocation2 + $0xca] sm:$0xff]
    %v3059 = vld [vmem:[#allocation2 + $0xda] sm:$0xff]
    %v3060 = vld [vmem:[#allocation2 + $0xe2] sm:$0xff]
    %v3061 = vld [vmem:[#allocation2 + $0xf2] sm:$0xff]
    %v3062 = vld [vmem:[#allocation2 + $0xfa] sm:$0xff]
    %v3063 = vld [vmem:[#allocation2 + $0x10a] sm:$0xff]
    %v3064 = vld [vmem:[#allocation2 + $0x112] sm:$0xff]
    %v3065 = vld [vmem:[#allocation2 + $0x122] sm:$0xff]
    %v3066 = vld [vmem:[#allocation2 + $0x12a] sm:$0xff]
    %v3067 = vld [vmem:[#allocation2 + $0x13a] sm:$0xff]
    %v3068 = vld [vmem:[#allocation2 + $0x142] sm:$0xff]
    %v3069 = vld [vmem:[#allocation2 + $0x152] sm:$0xff]
    %v3070 = vld [vmem:[#allocation2 + $0x15a] sm:$0xff]
    %v3071 = vld [vmem:[#allocation2 + $0x16a] sm:$0xff]
    %v3072 = vld [vmem:[#allocation2 + $0x172] sm:$0xff]
    %v3073 = vld [vmem:[#allocation2 + $0x1b2] sm:$0xff]
    %v3074 = vld [vmem:[#allocation2 + $0x1ba] sm:$0xff]
    %v3075 = vld [vmem:[#allocation2 + $0x1ca] sm:$0xff]
    %v3076 = vld [vmem:[#allocation2 + $0x1d2] sm:$0xff]
    %v3077 = vld [vmem:[#allocation2 + $0x1e2] sm:$0xff]
    %v3078 = vld [vmem:[#allocation2 + $0x1ea] sm:$0xff]
    %v3079 = vld [vmem:[#allocation2 + $0x1fa] sm:$0xff]
    %v3080 = vld [vmem:[#allocation2 + $0x202] sm:$0xff]
    %v3081 = vld [vmem:[#allocation2 + $0x212] sm:$0xff]
    %v3082 = vld [vmem:[#allocation2 + $0x21a] sm:$0xff]
    %v3083 = vld [vmem:[#allocation2 + $0x22a] sm:$0xff]
    %v3084 = vld [vmem:[#allocation2 + $0x232] sm:$0xff]
    %v3085 = vld [vmem:[#allocation2 + $0x242] sm:$0xff]
    %v3086 = vld [vmem:[#allocation2 + $0x24a] sm:$0xff]
    %v3087 = vld [vmem:[#allocation2 + $0x25a] sm:$0xff]
    %v3088 = vld [vmem:[#allocation2 + $0x262] sm:$0xff]
    %v3089 = vld [vmem:[#allocation2 + $0x272] sm:$0xff]
    %v3090 = vld [vmem:[#allocation2 + $0x27a] sm:$0xff]
    %v3091 = vld [vmem:[#allocation2 + $0x28a] sm:$0xff]
    %v3092 = vld [vmem:[#allocation2 + $0x292] sm:$0xff]
    %v3093 = vld [vmem:[#allocation2 + $0x2a2] sm:$0xff]
    %v3094 = vld [vmem:[#allocation2 + $0x2aa] sm:$0xff]
    %v3095 = vld [vmem:[#allocation2 + $0x2ba] sm:$0xff]
    %v3096 = vld [vmem:[#allocation2 + $0x2c2] sm:$0xff]
    %v3097 = vld [vmem:[#allocation2 + $0x2d2] sm:$0xff]
    %v3098 = vld [vmem:[#allocation2 + $0x2da] sm:$0xff]
    %v3099 = vld [vmem:[#allocation2 + $0x2ea] sm:$0xff]
    %v3100 = vld [vmem:[#allocation2 + $0x2f2] sm:$0xff]
    %v3101 = vld [vmem:[#allocation2 + $0x302] sm:$0xff]
    %v3102 = vld [vmem:[#allocation2 + $0x30a] sm:$0xff]
    %v3103 = vld [vmem:[#allocation2 + $0x31a] sm:$0xff]
    %v3104 = vld [vmem:[#allocation2 + $0x322] sm:$0xff]
    %v3105 = vpack.c.bf16 %v3042, %v3041
    %v3106 = vpack.c.bf16 %v3044, %v3043
    %v3107 = vpack.c.bf16 %v3046, %v3045
    %v3108 = vpack.c.bf16 %v3048, %v3047
    %v3109 = vpack.c.bf16 %v3050, %v3049
    %v3110 = vpack.c.bf16 %v3052, %v3051
    %v3111 = vpack.c.bf16 %v3054, %v3053
    %v3112 = vpack.c.bf16 %v3056, %v3055
    %v3113 = vpack.c.bf16 %v3058, %v3057
    %v3114 = vpack.c.bf16 %v3060, %v3059
    %v3115 = vpack.c.bf16 %v3062, %v3061
    %v3116 = vpack.c.bf16 %v3064, %v3063
    %v3117 = vpack.c.bf16 %v3066, %v3065
    %v3118 = vpack.c.bf16 %v3068, %v3067
    %v3119 = vpack.c.bf16 %v3070, %v3069
    %v3120 = vpack.c.bf16 %v3072, %v3071
    %v3121 = vpack.c.bf16 %v3074, %v3073
    %v3122 = vpack.c.bf16 %v3076, %v3075
    %v3123 = vpack.c.bf16 %v3078, %v3077
    %v3124 = vpack.c.bf16 %v3080, %v3079
    %v3125 = vpack.c.bf16 %v3082, %v3081
    %v3126 = vpack.c.bf16 %v3084, %v3083
    %v3127 = vpack.c.bf16 %v3086, %v3085
    %v3128 = vpack.c.bf16 %v3088, %v3087
    %v3129 = vpack.c.bf16 %v3090, %v3089
    %v3130 = vpack.c.bf16 %v3092, %v3091
    %v3131 = vpack.c.bf16 %v3094, %v3093
    %v3132 = vpack.c.bf16 %v3096, %v3095
    %v3133 = vpack.c.bf16 %v3098, %v3097
    %v3134 = vpack.c.bf16 %v3100, %v3099
    %v3135 = vpack.c.bf16 %v3102, %v3101
    %v3136 = vpack.c.bf16 %v3104, %v3103
    %v3169 = vunpack.c.l.b16 %v3105
    %v3170 = vunpack.c.h.b16 %v3105
    %v3171 = vunpack.c.l.b16 %v3106
    %v3172 = vunpack.c.h.b16 %v3106
    %v3173 = vunpack.c.l.b16 %v3107
    %v3174 = vunpack.c.h.b16 %v3107
    %v3175 = vunpack.c.l.b16 %v3108
    %v3176 = vunpack.c.h.b16 %v3108
    %v3177 = vunpack.c.l.b16 %v3109
    %v3178 = vunpack.c.h.b16 %v3109
    %v3179 = vunpack.c.l.b16 %v3110
    %v3180 = vunpack.c.h.b16 %v3110
    %v3181 = vunpack.c.l.b16 %v3111
    %v3182 = vunpack.c.h.b16 %v3111
    %v3183 = vunpack.c.l.b16 %v3112
    %v3184 = vunpack.c.h.b16 %v3112
    %v3185 = vunpack.c.l.b16 %v3113
    %v3186 = vunpack.c.h.b16 %v3113
    %v3187 = vunpack.c.l.b16 %v3114
    %v3188 = vunpack.c.h.b16 %v3114
    %v3189 = vunpack.c.l.b16 %v3115
    %v3190 = vunpack.c.h.b16 %v3115
    %v3191 = vunpack.c.l.b16 %v3116
    %v3192 = vunpack.c.h.b16 %v3116
    %v3193 = vunpack.c.l.b16 %v3117
    %v3194 = vunpack.c.h.b16 %v3117
    %v3195 = vunpack.c.l.b16 %v3118
    %v3196 = vunpack.c.h.b16 %v3118
    %v3197 = vunpack.c.l.b16 %v3119
    %v3198 = vunpack.c.h.b16 %v3119
    %v3199 = vunpack.c.l.b16 %v3120
    %v3200 = vunpack.c.h.b16 %v3120
    %v3201 = vunpack.c.l.b16 %v3121
    %v3202 = vunpack.c.h.b16 %v3121
    %v3203 = vunpack.c.l.b16 %v3122
    %v3204 = vunpack.c.h.b16 %v3122
    %v3205 = vunpack.c.l.b16 %v3123
    %v3206 = vunpack.c.h.b16 %v3123
    %v3207 = vunpack.c.l.b16 %v3124
    %v3208 = vunpack.c.h.b16 %v3124
    %v3209 = vunpack.c.l.b16 %v3125
    %v3210 = vunpack.c.h.b16 %v3125
    %v3211 = vunpack.c.l.b16 %v3126
    %v3212 = vunpack.c.h.b16 %v3126
    %v3213 = vunpack.c.l.b16 %v3127
    %v3214 = vunpack.c.h.b16 %v3127
    %v3215 = vunpack.c.l.b16 %v3128
    %v3216 = vunpack.c.h.b16 %v3128
    %v3217 = vunpack.c.l.b16 %v3129
    %v3218 = vunpack.c.h.b16 %v3129
    %v3219 = vunpack.c.l.b16 %v3130
    %v3220 = vunpack.c.h.b16 %v3130
    %v3221 = vunpack.c.l.b16 %v3131
    %v3222 = vunpack.c.h.b16 %v3131
    %v3223 = vunpack.c.l.b16 %v3132
    %v3224 = vunpack.c.h.b16 %v3132
    %v3225 = vunpack.c.l.b16 %v3133
    %v3226 = vunpack.c.h.b16 %v3133
    %v3227 = vunpack.c.l.b16 %v3134
    %v3228 = vunpack.c.h.b16 %v3134
    %v3229 = vunpack.c.l.b16 %v3135
    %v3230 = vunpack.c.h.b16 %v3135
    %v3231 = vunpack.c.l.b16 %v3136
    %v3232 = vunpack.c.h.b16 %v3136
    %v3233 = vpack.c.b16 %v3169, %v3169
    %v3234 = vpack.c.b16 %v3170, %v3170
    %v3235 = vpack.c.b16 %v3171, %v3171
    %v3236 = vpack.c.b16 %v3172, %v3172
    %v3237 = vpack.c.b16 %v3173, %v3173
    %v3238 = vpack.c.b16 %v3174, %v3174
    %v3239 = vpack.c.b16 %v3175, %v3175
    %v3240 = vpack.c.b16 %v3176, %v3176
    %v3241 = vpack.c.b16 %v3177, %v3177
    %v3242 = vpack.c.b16 %v3178, %v3178
    %v3243 = vpack.c.b16 %v3179, %v3179
    %v3244 = vpack.c.b16 %v3180, %v3180
    %v3245 = vpack.c.b16 %v3181, %v3181
    %v3246 = vpack.c.b16 %v3182, %v3182
    %v3247 = vpack.c.b16 %v3183, %v3183
    %v3248 = vpack.c.b16 %v3184, %v3184
    %v3249 = vpack.c.b16 %v3185, %v3185
    %v3250 = vpack.c.b16 %v3186, %v3186
    %v3251 = vpack.c.b16 %v3187, %v3187
    %v3252 = vpack.c.b16 %v3188, %v3188
    %v3253 = vpack.c.b16 %v3189, %v3189
    %v3254 = vpack.c.b16 %v3190, %v3190
    %v3255 = vpack.c.b16 %v3191, %v3191
    %v3256 = vpack.c.b16 %v3192, %v3192
    %v3257 = vpack.c.b16 %v3193, %v3193
    %v3258 = vpack.c.b16 %v3194, %v3194
    %v3259 = vpack.c.b16 %v3195, %v3195
    %v3260 = vpack.c.b16 %v3196, %v3196
    %v3261 = vpack.c.b16 %v3197, %v3197
    %v3262 = vpack.c.b16 %v3198, %v3198
    %v3263 = vpack.c.b16 %v3199, %v3199
    %v3264 = vpack.c.b16 %v3200, %v3200
    %v3265 = vpack.c.b16 %v3201, %v3201
    %v3266 = vpack.c.b16 %v3202, %v3202
    %v3267 = vpack.c.b16 %v3203, %v3203
    %v3268 = vpack.c.b16 %v3204, %v3204
    %v3269 = vpack.c.b16 %v3205, %v3205
    %v3270 = vpack.c.b16 %v3206, %v3206
    %v3271 = vpack.c.b16 %v3207, %v3207
    %v3272 = vpack.c.b16 %v3208, %v3208
    %v3273 = vpack.c.b16 %v3209, %v3209
    %v3274 = vpack.c.b16 %v3210, %v3210
    %v3275 = vpack.c.b16 %v3211, %v3211
    %v3276 = vpack.c.b16 %v3212, %v3212
    %v3277 = vpack.c.b16 %v3213, %v3213
    %v3278 = vpack.c.b16 %v3214, %v3214
    %v3279 = vpack.c.b16 %v3215, %v3215
    %v3280 = vpack.c.b16 %v3216, %v3216
    %v3281 = vpack.c.b16 %v3217, %v3217
    %v3282 = vpack.c.b16 %v3218, %v3218
    %v3283 = vpack.c.b16 %v3219, %v3219
    %v3284 = vpack.c.b16 %v3220, %v3220
    %v3285 = vpack.c.b16 %v3221, %v3221
    %v3286 = vpack.c.b16 %v3222, %v3222
    %v3287 = vpack.c.b16 %v3223, %v3223
    %v3288 = vpack.c.b16 %v3224, %v3224
    %v3289 = vpack.c.b16 %v3225, %v3225
    %v3290 = vpack.c.b16 %v3226, %v3226
    %v3291 = vpack.c.b16 %v3227, %v3227
    %v3292 = vpack.c.b16 %v3228, %v3228
    %v3293 = vpack.c.b16 %v3229, %v3229
    %v3294 = vpack.c.b16 %v3230, %v3230
    %v3295 = vpack.c.b16 %v3231, %v3231
    %v3296 = vpack.c.b16 %v3232, %v3232
    %3361 = vst.msk [vmem:[#allocation3 + $0x4] sm:$0xf] %vm2463, %v3233
    %3362 = vst.msk [vmem:[#allocation3 + $0x18] sm:$0xf] %vm2463, %v3234
    %3363 = vst.msk [vmem:[#allocation3 + $0x2c] sm:$0xf] %vm2463, %v3235
    %3364 = vst.msk [vmem:[#allocation3 + $0x40] sm:$0xf] %vm2463, %v3236
    %3365 = vst.msk [vmem:[#allocation3 + $0x54] sm:$0xf] %vm2463, %v3237
    %3366 = vst.msk [vmem:[#allocation3 + $0x68] sm:$0xf] %vm2463, %v3238
    %3367 = vst.msk [vmem:[#allocation3 + $0x7c] sm:$0xf] %vm2463, %v3239
    %3368 = vst.msk [vmem:[#allocation3 + $0x90] sm:$0xf] %vm2463, %v3240
    %3369 = vst.msk [vmem:[#allocation3 + $0xa4] sm:$0xf] %vm2463, %v3241
    %3370 = vst.msk [vmem:[#allocation3 + $0xb8] sm:$0xf] %vm2463, %v3242
    %3371 = vst.msk [vmem:[#allocation3 + $0xcc] sm:$0xf] %vm2463, %v3243
    %3372 = vst.msk [vmem:[#allocation3 + $0xe0] sm:$0xf] %vm2463, %v3244
    %3373 = vst.msk [vmem:[#allocation3 + $0xf4] sm:$0xf] %vm2463, %v3245
    %3374 = vst.msk [vmem:[#allocation3 + $0x108] sm:$0xf] %vm2463, %v3246
    %3375 = vst.msk [vmem:[#allocation3 + $0x11c] sm:$0xf] %vm2463, %v3247
    %3376 = vst.msk [vmem:[#allocation3 + $0x130] sm:$0xf] %vm2463, %v3248
    %3377 = vst.msk [vmem:[#allocation3 + $0x144] sm:$0xf] %vm2463, %v3249
    %3378 = vst.msk [vmem:[#allocation3 + $0x158] sm:$0xf] %vm2463, %v3250
    %3379 = vst.msk [vmem:[#allocation3 + $0x16c] sm:$0xf] %vm2463, %v3251
    %3380 = vst.msk [vmem:[#allocation3 + $0x180] sm:$0xf] %vm2463, %v3252
    %3381 = vst.msk [vmem:[#allocation3 + $0x194] sm:$0xf] %vm2463, %v3253
    %3382 = vst.msk [vmem:[#allocation3 + $0x1a8] sm:$0xf] %vm2463, %v3254
    %3383 = vst.msk [vmem:[#allocation3 + $0x1bc] sm:$0xf] %vm2463, %v3255
    %3384 = vst.msk [vmem:[#allocation3 + $0x1d0] sm:$0xf] %vm2463, %v3256
    %3385 = vst.msk [vmem:[#allocation3 + $0x1e4] sm:$0xf] %vm2463, %v3257
    %3386 = vst.msk [vmem:[#allocation3 + $0x1f8] sm:$0xf] %vm2463, %v3258
    %3387 = vst.msk [vmem:[#allocation3 + $0x20c] sm:$0xf] %vm2463, %v3259
    %3388 = vst.msk [vmem:[#allocation3 + $0x220] sm:$0xf] %vm2463, %v3260
    %3389 = vst.msk [vmem:[#allocation3 + $0x234] sm:$0xf] %vm2463, %v3261
    %3390 = vst.msk [vmem:[#allocation3 + $0x248] sm:$0xf] %vm2463, %v3262
    %3391 = vst.msk [vmem:[#allocation3 + $0x25c] sm:$0xf] %vm2463, %v3263
    %3392 = vst.msk [vmem:[#allocation3 + $0x270] sm:$0xf] %vm2463, %v3264
    %3393 = vst.msk [vmem:[#allocation3 + $0x284] sm:$0xf] %vm2463, %v3265
    %3394 = vst.msk [vmem:[#allocation3 + $0x298] sm:$0xf] %vm2463, %v3266
    %3395 = vst.msk [vmem:[#allocation3 + $0x2ac] sm:$0xf] %vm2463, %v3267
    %3396 = vst.msk [vmem:[#allocation3 + $0x2c0] sm:$0xf] %vm2463, %v3268
    %3397 = vst.msk [vmem:[#allocation3 + $0x2d4] sm:$0xf] %vm2463, %v3269
    %3398 = vst.msk [vmem:[#allocation3 + $0x2e8] sm:$0xf] %vm2463, %v3270
    %3399 = vst.msk [vmem:[#allocation3 + $0x2fc] sm:$0xf] %vm2463, %v3271
    %3400 = vst.msk [vmem:[#allocation3 + $0x310] sm:$0xf] %vm2463, %v3272
    %3401 = vst.msk [vmem:[#allocation3 + $0x324] sm:$0xf] %vm2463, %v3273
    %3402 = vst.msk [vmem:[#allocation3 + $0x338] sm:$0xf] %vm2463, %v3274
    %3403 = vst.msk [vmem:[#allocation3 + $0x34c] sm:$0xf] %vm2463, %v3275
    %3404 = vst.msk [vmem:[#allocation3 + $0x360] sm:$0xf] %vm2463, %v3276
    %3405 = vst.msk [vmem:[#allocation3 + $0x374] sm:$0xf] %vm2463, %v3277
    %3406 = vst.msk [vmem:[#allocation3 + $0x388] sm:$0xf] %vm2463, %v3278
    %3407 = vst.msk [vmem:[#allocation3 + $0x39c] sm:$0xf] %vm2463, %v3279
    %3408 = vst.msk [vmem:[#allocation3 + $0x3b0] sm:$0xf] %vm2463, %v3280
    %3409 = vst.msk [vmem:[#allocation3 + $0x3c4] sm:$0xf] %vm2463, %v3281
    %3410 = vst.msk [vmem:[#allocation3 + $0x3d8] sm:$0xf] %vm2463, %v3282
    %3411 = vst.msk [vmem:[#allocation3 + $0x3ec] sm:$0xf] %vm2463, %v3283
    %3412 = vst.msk [vmem:[#allocation3 + $0x400] sm:$0xf] %vm2463, %v3284
    %3413 = vst.msk [vmem:[#allocation3 + $0x414] sm:$0xf] %vm2463, %v3285
    %3414 = vst.msk [vmem:[#allocation3 + $0x428] sm:$0xf] %vm2463, %v3286
    %3415 = vst.msk [vmem:[#allocation3 + $0x43c] sm:$0xf] %vm2463, %v3287
    %3416 = vst.msk [vmem:[#allocation3 + $0x450] sm:$0xf] %vm2463, %v3288
    %3417 = vst.msk [vmem:[#allocation3 + $0x464] sm:$0xf] %vm2463, %v3289
    %3418 = vst.msk [vmem:[#allocation3 + $0x478] sm:$0xf] %vm2463, %v3290
    %3419 = vst.msk [vmem:[#allocation3 + $0x48c] sm:$0xf] %vm2463, %v3291
    %3420 = vst.msk [vmem:[#allocation3 + $0x4a0] sm:$0xf] %vm2463, %v3292
    %3421 = vst.msk [vmem:[#allocation3 + $0x4b4] sm:$0xf] %vm2463, %v3293
    %3422 = vst.msk [vmem:[#allocation3 + $0x4c8] sm:$0xf] %vm2463, %v3294
    %3423 = vst.msk [vmem:[#allocation3 + $0x4dc] sm:$0xf] %vm2463, %v3295
    %3424 = vst.msk [vmem:[#allocation3 + $0x4f0] sm:$0xf] %vm2463, %v3296
    %v3425 = vld [vmem:[%s1757] sm:$0xff]
    %v3426 = vld [vmem:[%s1757 + $0x8] sm:$0xff]
    %v3427 = vld [vmem:[%s1757 + $0x18] sm:$0xff]
    %v3428 = vld [vmem:[%s1757 + $0x20] sm:$0xff]
    %v3429 = vld [vmem:[%s1757 + $0x30] sm:$0xff]
    %v3430 = vld [vmem:[%s1757 + $0x38] sm:$0xff]
    %v3431 = vld [vmem:[%s1757 + $0x48] sm:$0xff]
    %v3432 = vld [vmem:[%s1757 + $0x50] sm:$0xff]
    %v3433 = vld [vmem:[%s1757 + $0x60] sm:$0xff]
    %v3434 = vld [vmem:[%s1757 + $0x68] sm:$0xff]
    %v3435 = vld [vmem:[%s1757 + $0x78] sm:$0xff]
    %v3436 = vld [vmem:[%s1757 + $0x80] sm:$0xff]
    %v3437 = vld [vmem:[%s1757 + $0x90] sm:$0xff]
    %v3438 = vld [vmem:[%s1757 + $0x98] sm:$0xff]
    %v3439 = vld [vmem:[%s1757 + $0xa8] sm:$0xff]
    %v3440 = vld [vmem:[%s1757 + $0xb0] sm:$0xff]
    %v3441 = vld [vmem:[%s1757 + $0xc0] sm:$0xff]
    %v3442 = vld [vmem:[%s1757 + $0xc8] sm:$0xff]
    %v3443 = vld [vmem:[%s1757 + $0xd8] sm:$0xff]
    %v3444 = vld [vmem:[%s1757 + $0xe0] sm:$0xff]
    %v3445 = vld [vmem:[%s1757 + $0xf0] sm:$0xff]
    %v3446 = vld [vmem:[%s1757 + $0xf8] sm:$0xff]
    %v3447 = vld [vmem:[%s1757 + $0x108] sm:$0xff]
    %v3448 = vld [vmem:[%s1757 + $0x110] sm:$0xff]
    %v3449 = vld [vmem:[%s1757 + $0x120] sm:$0xff]
    %v3450 = vld [vmem:[%s1757 + $0x128] sm:$0xff]
    %v3451 = vld [vmem:[%s1757 + $0x138] sm:$0xff]
    %v3452 = vld [vmem:[%s1757 + $0x140] sm:$0xff]
    %v3453 = vld [vmem:[%s1757 + $0x150] sm:$0xff]
    %v3454 = vld [vmem:[%s1757 + $0x158] sm:$0xff]
    %v3455 = vld [vmem:[%s1757 + $0x168] sm:$0xff]
    %v3456 = vld [vmem:[%s1757 + $0x170] sm:$0xff]
    %v3457 = vld [vmem:[%s1757 + $0x1b0] sm:$0xff]
    %v3458 = vld [vmem:[%s1757 + $0x1b8] sm:$0xff]
    %v3459 = vld [vmem:[%s1757 + $0x1c8] sm:$0xff]
    %v3460 = vld [vmem:[%s1757 + $0x1d0] sm:$0xff]
    %v3461 = vld [vmem:[%s1757 + $0x1e0] sm:$0xff]
    %v3462 = vld [vmem:[%s1757 + $0x1e8] sm:$0xff]
    %v3463 = vld [vmem:[%s1757 + $0x1f8] sm:$0xff]
    %v3464 = vld [vmem:[%s1757 + $0x200] sm:$0xff]
    %v3465 = vld [vmem:[%s1757 + $0x210] sm:$0xff]
    %v3466 = vld [vmem:[%s1757 + $0x218] sm:$0xff]
    %v3467 = vld [vmem:[%s1757 + $0x228] sm:$0xff]
    %v3468 = vld [vmem:[%s1757 + $0x230] sm:$0xff]
    %v3469 = vld [vmem:[%s1757 + $0x240] sm:$0xff]
    %v3470 = vld [vmem:[%s1757 + $0x248] sm:$0xff]
    %v3471 = vld [vmem:[%s1757 + $0x258] sm:$0xff]
    %v3472 = vld [vmem:[%s1757 + $0x260] sm:$0xff]
    %v3473 = vld [vmem:[%s1757 + $0x270] sm:$0xff]
    %v3474 = vld [vmem:[%s1757 + $0x278] sm:$0xff]
    %v3475 = vld [vmem:[%s1757 + $0x288] sm:$0xff]
    %v3476 = vld [vmem:[%s1757 + $0x290] sm:$0xff]
    %v3477 = vld [vmem:[%s1757 + $0x2a0] sm:$0xff]
    %v3478 = vld [vmem:[%s1757 + $0x2a8] sm:$0xff]
    %v3479 = vld [vmem:[%s1757 + $0x2b8] sm:$0xff]
    %v3480 = vld [vmem:[%s1757 + $0x2c0] sm:$0xff]
    %v3481 = vld [vmem:[%s1757 + $0x2d0] sm:$0xff]
    %v3482 = vld [vmem:[%s1757 + $0x2d8] sm:$0xff]
    %v3483 = vld [vmem:[%s1757 + $0x2e8] sm:$0xff]
    %v3484 = vld [vmem:[%s1757 + $0x2f0] sm:$0xff]
    %v3485 = vld [vmem:[%s1757 + $0x300] sm:$0xff]
    %v3486 = vld [vmem:[%s1757 + $0x308] sm:$0xff]
    %v3487 = vld [vmem:[%s1757 + $0x318] sm:$0xff]
    %v3488 = vld [vmem:[%s1757 + $0x320] sm:$0xff]
    %v3489 = vpack.c.bf16 %v3426, %v3425
    %v3490 = vpack.c.bf16 %v3428, %v3427
    %v3491 = vpack.c.bf16 %v3430, %v3429
    %v3492 = vpack.c.bf16 %v3432, %v3431
    %v3493 = vpack.c.bf16 %v3434, %v3433
    %v3494 = vpack.c.bf16 %v3436, %v3435
    %v3495 = vpack.c.bf16 %v3438, %v3437
    %v3496 = vpack.c.bf16 %v3440, %v3439
    %v3497 = vpack.c.bf16 %v3442, %v3441
    %v3498 = vpack.c.bf16 %v3444, %v3443
    %v3499 = vpack.c.bf16 %v3446, %v3445
    %v3500 = vpack.c.bf16 %v3448, %v3447
    %v3501 = vpack.c.bf16 %v3450, %v3449
    %v3502 = vpack.c.bf16 %v3452, %v3451
    %v3503 = vpack.c.bf16 %v3454, %v3453
    %v3504 = vpack.c.bf16 %v3456, %v3455
    %v3505 = vpack.c.bf16 %v3458, %v3457
    %v3506 = vpack.c.bf16 %v3460, %v3459
    %v3507 = vpack.c.bf16 %v3462, %v3461
    %v3508 = vpack.c.bf16 %v3464, %v3463
    %v3509 = vpack.c.bf16 %v3466, %v3465
    %v3510 = vpack.c.bf16 %v3468, %v3467
    %v3511 = vpack.c.bf16 %v3470, %v3469
    %v3512 = vpack.c.bf16 %v3472, %v3471
    %v3513 = vpack.c.bf16 %v3474, %v3473
    %v3514 = vpack.c.bf16 %v3476, %v3475
    %v3515 = vpack.c.bf16 %v3478, %v3477
    %v3516 = vpack.c.bf16 %v3480, %v3479
    %v3517 = vpack.c.bf16 %v3482, %v3481
    %v3518 = vpack.c.bf16 %v3484, %v3483
    %v3519 = vpack.c.bf16 %v3486, %v3485
    %v3520 = vpack.c.bf16 %v3488, %v3487
    %v3553 = vunpack.c.l.b16 %v3489
    %v3554 = vunpack.c.h.b16 %v3489
    %v3555 = vunpack.c.l.b16 %v3490
    %v3556 = vunpack.c.h.b16 %v3490
    %v3557 = vunpack.c.l.b16 %v3491
    %v3558 = vunpack.c.h.b16 %v3491
    %v3559 = vunpack.c.l.b16 %v3492
    %v3560 = vunpack.c.h.b16 %v3492
    %v3561 = vunpack.c.l.b16 %v3493
    %v3562 = vunpack.c.h.b16 %v3493
    %v3563 = vunpack.c.l.b16 %v3494
    %v3564 = vunpack.c.h.b16 %v3494
    %v3565 = vunpack.c.l.b16 %v3495
    %v3566 = vunpack.c.h.b16 %v3495
    %v3567 = vunpack.c.l.b16 %v3496
    %v3568 = vunpack.c.h.b16 %v3496
    %v3569 = vunpack.c.l.b16 %v3497
    %v3570 = vunpack.c.h.b16 %v3497
    %v3571 = vunpack.c.l.b16 %v3498
    %v3572 = vunpack.c.h.b16 %v3498
    %v3573 = vunpack.c.l.b16 %v3499
    %v3574 = vunpack.c.h.b16 %v3499
    %v3575 = vunpack.c.l.b16 %v3500
    %v3576 = vunpack.c.h.b16 %v3500
    %v3577 = vunpack.c.l.b16 %v3501
    %v3578 = vunpack.c.h.b16 %v3501
    %v3579 = vunpack.c.l.b16 %v3502
    %v3580 = vunpack.c.h.b16 %v3502
    %v3581 = vunpack.c.l.b16 %v3503
    %v3582 = vunpack.c.h.b16 %v3503
    %v3583 = vunpack.c.l.b16 %v3504
    %v3584 = vunpack.c.h.b16 %v3504
    %v3585 = vunpack.c.l.b16 %v3505
    %v3586 = vunpack.c.h.b16 %v3505
    %v3587 = vunpack.c.l.b16 %v3506
    %v3588 = vunpack.c.h.b16 %v3506
    %v3589 = vunpack.c.l.b16 %v3507
    %v3590 = vunpack.c.h.b16 %v3507
    %v3591 = vunpack.c.l.b16 %v3508
    %v3592 = vunpack.c.h.b16 %v3508
    %v3593 = vunpack.c.l.b16 %v3509
    %v3594 = vunpack.c.h.b16 %v3509
    %v3595 = vunpack.c.l.b16 %v3510
    %v3596 = vunpack.c.h.b16 %v3510
    %v3597 = vunpack.c.l.b16 %v3511
    %v3598 = vunpack.c.h.b16 %v3511
    %v3599 = vunpack.c.l.b16 %v3512
    %v3600 = vunpack.c.h.b16 %v3512
    %v3601 = vunpack.c.l.b16 %v3513
    %v3602 = vunpack.c.h.b16 %v3513
    %v3603 = vunpack.c.l.b16 %v3514
    %v3604 = vunpack.c.h.b16 %v3514
    %v3605 = vunpack.c.l.b16 %v3515
    %v3606 = vunpack.c.h.b16 %v3515
    %v3607 = vunpack.c.l.b16 %v3516
    %v3608 = vunpack.c.h.b16 %v3516
    %v3609 = vunpack.c.l.b16 %v3517
    %v3610 = vunpack.c.h.b16 %v3517
    %v3611 = vunpack.c.l.b16 %v3518
    %v3612 = vunpack.c.h.b16 %v3518
    %v3613 = vunpack.c.l.b16 %v3519
    %v3614 = vunpack.c.h.b16 %v3519
    %v3615 = vunpack.c.l.b16 %v3520
    %v3616 = vunpack.c.h.b16 %v3520
    %v3617 = vpack.c.b16 %v3553, %v3553
    %v3618 = vpack.c.b16 %v3554, %v3554
    %v3619 = vpack.c.b16 %v3555, %v3555
    %v3620 = vpack.c.b16 %v3556, %v3556
    %v3621 = vpack.c.b16 %v3557, %v3557
    %v3622 = vpack.c.b16 %v3558, %v3558
    %v3623 = vpack.c.b16 %v3559, %v3559
    %v3624 = vpack.c.b16 %v3560, %v3560
    %v3625 = vpack.c.b16 %v3561, %v3561
    %v3626 = vpack.c.b16 %v3562, %v3562
    %v3627 = vpack.c.b16 %v3563, %v3563
    %v3628 = vpack.c.b16 %v3564, %v3564
    %v3629 = vpack.c.b16 %v3565, %v3565
    %v3630 = vpack.c.b16 %v3566, %v3566
    %v3631 = vpack.c.b16 %v3567, %v3567
    %v3632 = vpack.c.b16 %v3568, %v3568
    %v3633 = vpack.c.b16 %v3569, %v3569
    %v3634 = vpack.c.b16 %v3570, %v3570
    %v3635 = vpack.c.b16 %v3571, %v3571
    %v3636 = vpack.c.b16 %v3572, %v3572
    %v3637 = vpack.c.b16 %v3573, %v3573
    %v3638 = vpack.c.b16 %v3574, %v3574
    %v3639 = vpack.c.b16 %v3575, %v3575
    %v3640 = vpack.c.b16 %v3576, %v3576
    %v3641 = vpack.c.b16 %v3577, %v3577
    %v3642 = vpack.c.b16 %v3578, %v3578
    %v3643 = vpack.c.b16 %v3579, %v3579
    %v3644 = vpack.c.b16 %v3580, %v3580
    %v3645 = vpack.c.b16 %v3581, %v3581
    %v3646 = vpack.c.b16 %v3582, %v3582
    %v3647 = vpack.c.b16 %v3583, %v3583
    %v3648 = vpack.c.b16 %v3584, %v3584
    %v3649 = vpack.c.b16 %v3585, %v3585
    %v3650 = vpack.c.b16 %v3586, %v3586
    %v3651 = vpack.c.b16 %v3587, %v3587
    %v3652 = vpack.c.b16 %v3588, %v3588
    %v3653 = vpack.c.b16 %v3589, %v3589
    %v3654 = vpack.c.b16 %v3590, %v3590
    %v3655 = vpack.c.b16 %v3591, %v3591
    %v3656 = vpack.c.b16 %v3592, %v3592
    %v3657 = vpack.c.b16 %v3593, %v3593
    %v3658 = vpack.c.b16 %v3594, %v3594
    %v3659 = vpack.c.b16 %v3595, %v3595
    %v3660 = vpack.c.b16 %v3596, %v3596
    %v3661 = vpack.c.b16 %v3597, %v3597
    %v3662 = vpack.c.b16 %v3598, %v3598
    %v3663 = vpack.c.b16 %v3599, %v3599
    %v3664 = vpack.c.b16 %v3600, %v3600
    %v3665 = vpack.c.b16 %v3601, %v3601
    %v3666 = vpack.c.b16 %v3602, %v3602
    %v3667 = vpack.c.b16 %v3603, %v3603
    %v3668 = vpack.c.b16 %v3604, %v3604
    %v3669 = vpack.c.b16 %v3605, %v3605
    %v3670 = vpack.c.b16 %v3606, %v3606
    %v3671 = vpack.c.b16 %v3607, %v3607
    %v3672 = vpack.c.b16 %v3608, %v3608
    %v3673 = vpack.c.b16 %v3609, %v3609
    %v3674 = vpack.c.b16 %v3610, %v3610
    %v3675 = vpack.c.b16 %v3611, %v3611
    %v3676 = vpack.c.b16 %v3612, %v3612
    %v3677 = vpack.c.b16 %v3613, %v3613
    %v3678 = vpack.c.b16 %v3614, %v3614
    %v3679 = vpack.c.b16 %v3615, %v3615
    %v3680 = vpack.c.b16 %v3616, %v3616
    %3681 = vrot.lane.b32.xlu0 %v3617, 64
    %v3682 = vpop.permute.xlu0 %3681
    %3683 = vrot.lane.b32.xlu0 %v3618, 64
    %v3684 = vpop.permute.xlu0 %3683
    %3685 = vrot.lane.b32.xlu0 %v3619, 64
    %v3686 = vpop.permute.xlu0 %3685
    %3687 = vrot.lane.b32.xlu0 %v3620, 64
    %v3688 = vpop.permute.xlu0 %3687
    %3689 = vrot.lane.b32.xlu0 %v3621, 64
    %v3690 = vpop.permute.xlu0 %3689
    %3691 = vrot.lane.b32.xlu0 %v3622, 64
    %v3692 = vpop.permute.xlu0 %3691
    %3693 = vrot.lane.b32.xlu0 %v3623, 64
    %v3694 = vpop.permute.xlu0 %3693
    %3695 = vrot.lane.b32.xlu0 %v3624, 64
    %v3696 = vpop.permute.xlu0 %3695
    %3697 = vrot.lane.b32.xlu0 %v3625, 64
    %v3698 = vpop.permute.xlu0 %3697
    %3699 = vrot.lane.b32.xlu0 %v3626, 64
    %v3700 = vpop.permute.xlu0 %3699
    %3701 = vrot.lane.b32.xlu0 %v3627, 64
    %v3702 = vpop.permute.xlu0 %3701
    %3703 = vrot.lane.b32.xlu0 %v3628, 64
    %v3704 = vpop.permute.xlu0 %3703
    %3705 = vrot.lane.b32.xlu0 %v3629, 64
    %v3706 = vpop.permute.xlu0 %3705
    %3707 = vrot.lane.b32.xlu0 %v3630, 64
    %v3708 = vpop.permute.xlu0 %3707
    %3709 = vrot.lane.b32.xlu0 %v3631, 64
    %v3710 = vpop.permute.xlu0 %3709
    %3711 = vrot.lane.b32.xlu0 %v3632, 64
    %v3712 = vpop.permute.xlu0 %3711
    %3713 = vrot.lane.b32.xlu0 %v3633, 64
    %v3714 = vpop.permute.xlu0 %3713
    %3715 = vrot.lane.b32.xlu0 %v3634, 64
    %v3716 = vpop.permute.xlu0 %3715
    %3717 = vrot.lane.b32.xlu0 %v3635, 64
    %v3718 = vpop.permute.xlu0 %3717
    %3719 = vrot.lane.b32.xlu0 %v3636, 64
    %v3720 = vpop.permute.xlu0 %3719
    %3721 = vrot.lane.b32.xlu0 %v3637, 64
    %v3722 = vpop.permute.xlu0 %3721
    %3723 = vrot.lane.b32.xlu0 %v3638, 64
    %v3724 = vpop.permute.xlu0 %3723
    %3725 = vrot.lane.b32.xlu0 %v3639, 64
    %v3726 = vpop.permute.xlu0 %3725
    %3727 = vrot.lane.b32.xlu0 %v3640, 64
    %v3728 = vpop.permute.xlu0 %3727
    %3729 = vrot.lane.b32.xlu0 %v3641, 64
    %v3730 = vpop.permute.xlu0 %3729
    %3731 = vrot.lane.b32.xlu0 %v3642, 64
    %v3732 = vpop.permute.xlu0 %3731
    %3733 = vrot.lane.b32.xlu0 %v3643, 64
    %v3734 = vpop.permute.xlu0 %3733
    %3735 = vrot.lane.b32.xlu0 %v3644, 64
    %v3736 = vpop.permute.xlu0 %3735
    %3737 = vrot.lane.b32.xlu0 %v3645, 64
    %v3738 = vpop.permute.xlu0 %3737
    %3739 = vrot.lane.b32.xlu0 %v3646, 64
    %v3740 = vpop.permute.xlu0 %3739
    %3741 = vrot.lane.b32.xlu0 %v3647, 64
    %v3742 = vpop.permute.xlu0 %3741
    %3743 = vrot.lane.b32.xlu0 %v3648, 64
    %v3744 = vpop.permute.xlu0 %3743
    %3745 = vrot.lane.b32.xlu0 %v3649, 64
    %v3746 = vpop.permute.xlu0 %3745
    %3747 = vrot.lane.b32.xlu0 %v3650, 64
    %v3748 = vpop.permute.xlu0 %3747
    %3749 = vrot.lane.b32.xlu0 %v3651, 64
    %v3750 = vpop.permute.xlu0 %3749
    %3751 = vrot.lane.b32.xlu0 %v3652, 64
    %v3752 = vpop.permute.xlu0 %3751
    %3753 = vrot.lane.b32.xlu0 %v3653, 64
    %v3754 = vpop.permute.xlu0 %3753
    %3755 = vrot.lane.b32.xlu0 %v3654, 64
    %v3756 = vpop.permute.xlu0 %3755
    %3757 = vrot.lane.b32.xlu0 %v3655, 64
    %v3758 = vpop.permute.xlu0 %3757
    %3759 = vrot.lane.b32.xlu0 %v3656, 64
    %v3760 = vpop.permute.xlu0 %3759
    %3761 = vrot.lane.b32.xlu0 %v3657, 64
    %v3762 = vpop.permute.xlu0 %3761
    %3763 = vrot.lane.b32.xlu0 %v3658, 64
    %v3764 = vpop.permute.xlu0 %3763
    %3765 = vrot.lane.b32.xlu0 %v3659, 64
    %v3766 = vpop.permute.xlu0 %3765
    %3767 = vrot.lane.b32.xlu0 %v3660, 64
    %v3768 = vpop.permute.xlu0 %3767
    %3769 = vrot.lane.b32.xlu0 %v3661, 64
    %v3770 = vpop.permute.xlu0 %3769
    %3771 = vrot.lane.b32.xlu0 %v3662, 64
    %v3772 = vpop.permute.xlu0 %3771
    %3773 = vrot.lane.b32.xlu0 %v3663, 64
    %v3774 = vpop.permute.xlu0 %3773
    %3775 = vrot.lane.b32.xlu0 %v3664, 64
    %v3776 = vpop.permute.xlu0 %3775
    %3777 = vrot.lane.b32.xlu0 %v3665, 64
    %v3778 = vpop.permute.xlu0 %3777
    %3779 = vrot.lane.b32.xlu0 %v3666, 64
    %v3780 = vpop.permute.xlu0 %3779
    %3781 = vrot.lane.b32.xlu0 %v3667, 64
    %v3782 = vpop.permute.xlu0 %3781
    %3783 = vrot.lane.b32.xlu0 %v3668, 64
    %v3784 = vpop.permute.xlu0 %3783
    %3785 = vrot.lane.b32.xlu0 %v3669, 64
    %v3786 = vpop.permute.xlu0 %3785
    %3787 = vrot.lane.b32.xlu0 %v3670, 64
    %v3788 = vpop.permute.xlu0 %3787
    %3789 = vrot.lane.b32.xlu0 %v3671, 64
    %v3790 = vpop.permute.xlu0 %3789
    %3791 = vrot.lane.b32.xlu0 %v3672, 64
    %v3792 = vpop.permute.xlu0 %3791
    %3793 = vrot.lane.b32.xlu0 %v3673, 64
    %v3794 = vpop.permute.xlu0 %3793
    %3795 = vrot.lane.b32.xlu0 %v3674, 64
    %v3796 = vpop.permute.xlu0 %3795
    %3797 = vrot.lane.b32.xlu0 %v3675, 64
    %v3798 = vpop.permute.xlu0 %3797
    %3799 = vrot.lane.b32.xlu0 %v3676, 64
    %v3800 = vpop.permute.xlu0 %3799
    %3801 = vrot.lane.b32.xlu0 %v3677, 64
    %v3802 = vpop.permute.xlu0 %3801
    %3803 = vrot.lane.b32.xlu0 %v3678, 64
    %v3804 = vpop.permute.xlu0 %3803
    %3805 = vrot.lane.b32.xlu0 %v3679, 64
    %v3806 = vpop.permute.xlu0 %3805
    %3807 = vrot.lane.b32.xlu0 %v3680, 64
    %v3808 = vpop.permute.xlu0 %3807
    %3873 = vst.msk [vmem:[#allocation3 + $0x4] sm:$0xf] %vm2976, %v3682
    %3874 = vst.msk [vmem:[#allocation3 + $0x18] sm:$0xf] %vm2976, %v3684
    %3875 = vst.msk [vmem:[#allocation3 + $0x2c] sm:$0xf] %vm2976, %v3686
    %3876 = vst.msk [vmem:[#allocation3 + $0x40] sm:$0xf] %vm2976, %v3688
    %3877 = vst.msk [vmem:[#allocation3 + $0x54] sm:$0xf] %vm2976, %v3690
    %3878 = vst.msk [vmem:[#allocation3 + $0x68] sm:$0xf] %vm2976, %v3692
    %3879 = vst.msk [vmem:[#allocation3 + $0x7c] sm:$0xf] %vm2976, %v3694
    %3880 = vst.msk [vmem:[#allocation3 + $0x90] sm:$0xf] %vm2976, %v3696
    %3881 = vst.msk [vmem:[#allocation3 + $0xa4] sm:$0xf] %vm2976, %v3698
    %3882 = vst.msk [vmem:[#allocation3 + $0xb8] sm:$0xf] %vm2976, %v3700
    %3883 = vst.msk [vmem:[#allocation3 + $0xcc] sm:$0xf] %vm2976, %v3702
    %3884 = vst.msk [vmem:[#allocation3 + $0xe0] sm:$0xf] %vm2976, %v3704
    %3885 = vst.msk [vmem:[#allocation3 + $0xf4] sm:$0xf] %vm2976, %v3706
    %3886 = vst.msk [vmem:[#allocation3 + $0x108] sm:$0xf] %vm2976, %v3708
    %3887 = vst.msk [vmem:[#allocation3 + $0x11c] sm:$0xf] %vm2976, %v3710
    %3888 = vst.msk [vmem:[#allocation3 + $0x130] sm:$0xf] %vm2976, %v3712
    %3889 = vst.msk [vmem:[#allocation3 + $0x144] sm:$0xf] %vm2976, %v3714
    %3890 = vst.msk [vmem:[#allocation3 + $0x158] sm:$0xf] %vm2976, %v3716
    %3891 = vst.msk [vmem:[#allocation3 + $0x16c] sm:$0xf] %vm2976, %v3718
    %3892 = vst.msk [vmem:[#allocation3 + $0x180] sm:$0xf] %vm2976, %v3720
    %3893 = vst.msk [vmem:[#allocation3 + $0x194] sm:$0xf] %vm2976, %v3722
    %3894 = vst.msk [vmem:[#allocation3 + $0x1a8] sm:$0xf] %vm2976, %v3724
    %3895 = vst.msk [vmem:[#allocation3 + $0x1bc] sm:$0xf] %vm2976, %v3726
    %3896 = vst.msk [vmem:[#allocation3 + $0x1d0] sm:$0xf] %vm2976, %v3728
    %3897 = vst.msk [vmem:[#allocation3 + $0x1e4] sm:$0xf] %vm2976, %v3730
    %3898 = vst.msk [vmem:[#allocation3 + $0x1f8] sm:$0xf] %vm2976, %v3732
    %3899 = vst.msk [vmem:[#allocation3 + $0x20c] sm:$0xf] %vm2976, %v3734
    %3900 = vst.msk [vmem:[#allocation3 + $0x220] sm:$0xf] %vm2976, %v3736
    %3901 = vst.msk [vmem:[#allocation3 + $0x234] sm:$0xf] %vm2976, %v3738
    %3902 = vst.msk [vmem:[#allocation3 + $0x248] sm:$0xf] %vm2976, %v3740
    %3903 = vst.msk [vmem:[#allocation3 + $0x25c] sm:$0xf] %vm2976, %v3742
    %3904 = vst.msk [vmem:[#allocation3 + $0x270] sm:$0xf] %vm2976, %v3744
    %3905 = vst.msk [vmem:[#allocation3 + $0x284] sm:$0xf] %vm2976, %v3746
    %3906 = vst.msk [vmem:[#allocation3 + $0x298] sm:$0xf] %vm2976, %v3748
    %3907 = vst.msk [vmem:[#allocation3 + $0x2ac] sm:$0xf] %vm2976, %v3750
    %3908 = vst.msk [vmem:[#allocation3 + $0x2c0] sm:$0xf] %vm2976, %v3752
    %3909 = vst.msk [vmem:[#allocation3 + $0x2d4] sm:$0xf] %vm2976, %v3754
    %3910 = vst.msk [vmem:[#allocation3 + $0x2e8] sm:$0xf] %vm2976, %v3756
    %3911 = vst.msk [vmem:[#allocation3 + $0x2fc] sm:$0xf] %vm2976, %v3758
    %3912 = vst.msk [vmem:[#allocation3 + $0x310] sm:$0xf] %vm2976, %v3760
    %3913 = vst.msk [vmem:[#allocation3 + $0x324] sm:$0xf] %vm2976, %v3762
    %3914 = vst.msk [vmem:[#allocation3 + $0x338] sm:$0xf] %vm2976, %v3764
    %3915 = vst.msk [vmem:[#allocation3 + $0x34c] sm:$0xf] %vm2976, %v3766
    %3916 = vst.msk [vmem:[#allocation3 + $0x360] sm:$0xf] %vm2976, %v3768
    %3917 = vst.msk [vmem:[#allocation3 + $0x374] sm:$0xf] %vm2976, %v3770
    %3918 = vst.msk [vmem:[#allocation3 + $0x388] sm:$0xf] %vm2976, %v3772
    %3919 = vst.msk [vmem:[#allocation3 + $0x39c] sm:$0xf] %vm2976, %v3774
    %3920 = vst.msk [vmem:[#allocation3 + $0x3b0] sm:$0xf] %vm2976, %v3776
    %3921 = vst.msk [vmem:[#allocation3 + $0x3c4] sm:$0xf] %vm2976, %v3778
    %3922 = vst.msk [vmem:[#allocation3 + $0x3d8] sm:$0xf] %vm2976, %v3780
    %3923 = vst.msk [vmem:[#allocation3 + $0x3ec] sm:$0xf] %vm2976, %v3782
    %3924 = vst.msk [vmem:[#allocation3 + $0x400] sm:$0xf] %vm2976, %v3784
    %3925 = vst.msk [vmem:[#allocation3 + $0x414] sm:$0xf] %vm2976, %v3786
    %3926 = vst.msk [vmem:[#allocation3 + $0x428] sm:$0xf] %vm2976, %v3788
    %3927 = vst.msk [vmem:[#allocation3 + $0x43c] sm:$0xf] %vm2976, %v3790
    %3928 = vst.msk [vmem:[#allocation3 + $0x450] sm:$0xf] %vm2976, %v3792
    %3929 = vst.msk [vmem:[#allocation3 + $0x464] sm:$0xf] %vm2976, %v3794
    %3930 = vst.msk [vmem:[#allocation3 + $0x478] sm:$0xf] %vm2976, %v3796
    %3931 = vst.msk [vmem:[#allocation3 + $0x48c] sm:$0xf] %vm2976, %v3798
    %3932 = vst.msk [vmem:[#allocation3 + $0x4a0] sm:$0xf] %vm2976, %v3800
    %3933 = vst.msk [vmem:[#allocation3 + $0x4b4] sm:$0xf] %vm2976, %v3802
    %3934 = vst.msk [vmem:[#allocation3 + $0x4c8] sm:$0xf] %vm2976, %v3804
    %3935 = vst.msk [vmem:[#allocation3 + $0x4dc] sm:$0xf] %vm2976, %v3806
    %3936 = vst.msk [vmem:[#allocation3 + $0x4f0] sm:$0xf] %vm2976, %v3808
    %v3937 = vld [vmem:[%s1757 + $0x1] sm:$0xff]
    %v3938 = vld [vmem:[%s1757 + $0x9] sm:$0xff]
    %v3939 = vld [vmem:[%s1757 + $0x19] sm:$0xff]
    %v3940 = vld [vmem:[%s1757 + $0x21] sm:$0xff]
    %v3941 = vld [vmem:[%s1757 + $0x31] sm:$0xff]
    %v3942 = vld [vmem:[%s1757 + $0x39] sm:$0xff]
    %v3943 = vld [vmem:[%s1757 + $0x49] sm:$0xff]
    %v3944 = vld [vmem:[%s1757 + $0x51] sm:$0xff]
    %v3945 = vld [vmem:[%s1757 + $0x61] sm:$0xff]
    %v3946 = vld [vmem:[%s1757 + $0x69] sm:$0xff]
    %v3947 = vld [vmem:[%s1757 + $0x79] sm:$0xff]
    %v3948 = vld [vmem:[%s1757 + $0x81] sm:$0xff]
    %v3949 = vld [vmem:[%s1757 + $0x91] sm:$0xff]
    %v3950 = vld [vmem:[%s1757 + $0x99] sm:$0xff]
    %v3951 = vld [vmem:[%s1757 + $0xa9] sm:$0xff]
    %v3952 = vld [vmem:[%s1757 + $0xb1] sm:$0xff]
    %v3953 = vld [vmem:[%s1757 + $0xc1] sm:$0xff]
    %v3954 = vld [vmem:[%s1757 + $0xc9] sm:$0xff]
    %v3955 = vld [vmem:[%s1757 + $0xd9] sm:$0xff]
    %v3956 = vld [vmem:[%s1757 + $0xe1] sm:$0xff]
    %v3957 = vld [vmem:[%s1757 + $0xf1] sm:$0xff]
    %v3958 = vld [vmem:[%s1757 + $0xf9] sm:$0xff]
    %v3959 = vld [vmem:[%s1757 + $0x109] sm:$0xff]
    %v3960 = vld [vmem:[%s1757 + $0x111] sm:$0xff]
    %v3961 = vld [vmem:[%s1757 + $0x121] sm:$0xff]
    %v3962 = vld [vmem:[%s1757 + $0x129] sm:$0xff]
    %v3963 = vld [vmem:[%s1757 + $0x139] sm:$0xff]
    %v3964 = vld [vmem:[%s1757 + $0x141] sm:$0xff]
    %v3965 = vld [vmem:[%s1757 + $0x151] sm:$0xff]
    %v3966 = vld [vmem:[%s1757 + $0x159] sm:$0xff]
    %v3967 = vld [vmem:[%s1757 + $0x169] sm:$0xff]
    %v3968 = vld [vmem:[%s1757 + $0x171] sm:$0xff]
    %v3969 = vld [vmem:[%s1757 + $0x1b1] sm:$0xff]
    %v3970 = vld [vmem:[%s1757 + $0x1b9] sm:$0xff]
    %v3971 = vld [vmem:[%s1757 + $0x1c9] sm:$0xff]
    %v3972 = vld [vmem:[%s1757 + $0x1d1] sm:$0xff]
    %v3973 = vld [vmem:[%s1757 + $0x1e1] sm:$0xff]
    %v3974 = vld [vmem:[%s1757 + $0x1e9] sm:$0xff]
    %v3975 = vld [vmem:[%s1757 + $0x1f9] sm:$0xff]
    %v3976 = vld [vmem:[%s1757 + $0x201] sm:$0xff]
    %v3977 = vld [vmem:[%s1757 + $0x211] sm:$0xff]
    %v3978 = vld [vmem:[%s1757 + $0x219] sm:$0xff]
    %v3979 = vld [vmem:[%s1757 + $0x229] sm:$0xff]
    %v3980 = vld [vmem:[%s1757 + $0x231] sm:$0xff]
    %v3981 = vld [vmem:[%s1757 + $0x241] sm:$0xff]
    %v3982 = vld [vmem:[%s1757 + $0x249] sm:$0xff]
    %v3983 = vld [vmem:[%s1757 + $0x259] sm:$0xff]
    %v3984 = vld [vmem:[%s1757 + $0x261] sm:$0xff]
    %v3985 = vld [vmem:[%s1757 + $0x271] sm:$0xff]
    %v3986 = vld [vmem:[%s1757 + $0x279] sm:$0xff]
    %v3987 = vld [vmem:[%s1757 + $0x289] sm:$0xff]
    %v3988 = vld [vmem:[%s1757 + $0x291] sm:$0xff]
    %v3989 = vld [vmem:[%s1757 + $0x2a1] sm:$0xff]
    %v3990 = vld [vmem:[%s1757 + $0x2a9] sm:$0xff]
    %v3991 = vld [vmem:[%s1757 + $0x2b9] sm:$0xff]
    %v3992 = vld [vmem:[%s1757 + $0x2c1] sm:$0xff]
    %v3993 = vld [vmem:[%s1757 + $0x2d1] sm:$0xff]
    %v3994 = vld [vmem:[%s1757 + $0x2d9] sm:$0xff]
    %v3995 = vld [vmem:[%s1757 + $0x2e9] sm:$0xff]
    %v3996 = vld [vmem:[%s1757 + $0x2f1] sm:$0xff]
    %v3997 = vld [vmem:[%s1757 + $0x301] sm:$0xff]
    %v3998 = vld [vmem:[%s1757 + $0x309] sm:$0xff]
    %v3999 = vld [vmem:[%s1757 + $0x319] sm:$0xff]
    %v4000 = vld [vmem:[%s1757 + $0x321] sm:$0xff]
    %v4001 = vpack.c.bf16 %v3938, %v3937
    %v4002 = vpack.c.bf16 %v3940, %v3939
    %v4003 = vpack.c.bf16 %v3942, %v3941
    %v4004 = vpack.c.bf16 %v3944, %v3943
    %v4005 = vpack.c.bf16 %v3946, %v3945
    %v4006 = vpack.c.bf16 %v3948, %v3947
    %v4007 = vpack.c.bf16 %v3950, %v3949
    %v4008 = vpack.c.bf16 %v3952, %v3951
    %v4009 = vpack.c.bf16 %v3954, %v3953
    %v4010 = vpack.c.bf16 %v3956, %v3955
    %v4011 = vpack.c.bf16 %v3958, %v3957
    %v4012 = vpack.c.bf16 %v3960, %v3959
    %v4013 = vpack.c.bf16 %v3962, %v3961
    %v4014 = vpack.c.bf16 %v3964, %v3963
    %v4015 = vpack.c.bf16 %v3966, %v3965
    %v4016 = vpack.c.bf16 %v3968, %v3967
    %v4017 = vpack.c.bf16 %v3970, %v3969
    %v4018 = vpack.c.bf16 %v3972, %v3971
    %v4019 = vpack.c.bf16 %v3974, %v3973
    %v4020 = vpack.c.bf16 %v3976, %v3975
    %v4021 = vpack.c.bf16 %v3978, %v3977
    %v4022 = vpack.c.bf16 %v3980, %v3979
    %v4023 = vpack.c.bf16 %v3982, %v3981
    %v4024 = vpack.c.bf16 %v3984, %v3983
    %v4025 = vpack.c.bf16 %v3986, %v3985
    %v4026 = vpack.c.bf16 %v3988, %v3987
    %v4027 = vpack.c.bf16 %v3990, %v3989
    %v4028 = vpack.c.bf16 %v3992, %v3991
    %v4029 = vpack.c.bf16 %v3994, %v3993
    %v4030 = vpack.c.bf16 %v3996, %v3995
    %v4031 = vpack.c.bf16 %v3998, %v3997
    %v4032 = vpack.c.bf16 %v4000, %v3999
    %v4065 = vunpack.c.l.b16 %v4001
    %v4066 = vunpack.c.h.b16 %v4001
    %v4067 = vunpack.c.l.b16 %v4002
    %v4068 = vunpack.c.h.b16 %v4002
    %v4069 = vunpack.c.l.b16 %v4003
    %v4070 = vunpack.c.h.b16 %v4003
    %v4071 = vunpack.c.l.b16 %v4004
    %v4072 = vunpack.c.h.b16 %v4004
    %v4073 = vunpack.c.l.b16 %v4005
    %v4074 = vunpack.c.h.b16 %v4005
    %v4075 = vunpack.c.l.b16 %v4006
    %v4076 = vunpack.c.h.b16 %v4006
    %v4077 = vunpack.c.l.b16 %v4007
    %v4078 = vunpack.c.h.b16 %v4007
    %v4079 = vunpack.c.l.b16 %v4008
    %v4080 = vunpack.c.h.b16 %v4008
    %v4081 = vunpack.c.l.b16 %v4009
    %v4082 = vunpack.c.h.b16 %v4009
    %v4083 = vunpack.c.l.b16 %v4010
    %v4084 = vunpack.c.h.b16 %v4010
    %v4085 = vunpack.c.l.b16 %v4011
    %v4086 = vunpack.c.h.b16 %v4011
    %v4087 = vunpack.c.l.b16 %v4012
    %v4088 = vunpack.c.h.b16 %v4012
    %v4089 = vunpack.c.l.b16 %v4013
    %v4090 = vunpack.c.h.b16 %v4013
    %v4091 = vunpack.c.l.b16 %v4014
    %v4092 = vunpack.c.h.b16 %v4014
    %v4093 = vunpack.c.l.b16 %v4015
    %v4094 = vunpack.c.h.b16 %v4015
    %v4095 = vunpack.c.l.b16 %v4016
    %v4096 = vunpack.c.h.b16 %v4016
    %v4097 = vunpack.c.l.b16 %v4017
    %v4098 = vunpack.c.h.b16 %v4017
    %v4099 = vunpack.c.l.b16 %v4018
    %v4100 = vunpack.c.h.b16 %v4018
    %v4101 = vunpack.c.l.b16 %v4019
    %v4102 = vunpack.c.h.b16 %v4019
    %v4103 = vunpack.c.l.b16 %v4020
    %v4104 = vunpack.c.h.b16 %v4020
    %v4105 = vunpack.c.l.b16 %v4021
    %v4106 = vunpack.c.h.b16 %v4021
    %v4107 = vunpack.c.l.b16 %v4022
    %v4108 = vunpack.c.h.b16 %v4022
    %v4109 = vunpack.c.l.b16 %v4023
    %v4110 = vunpack.c.h.b16 %v4023
    %v4111 = vunpack.c.l.b16 %v4024
    %v4112 = vunpack.c.h.b16 %v4024
    %v4113 = vunpack.c.l.b16 %v4025
    %v4114 = vunpack.c.h.b16 %v4025
    %v4115 = vunpack.c.l.b16 %v4026
    %v4116 = vunpack.c.h.b16 %v4026
    %v4117 = vunpack.c.l.b16 %v4027
    %v4118 = vunpack.c.h.b16 %v4027
    %v4119 = vunpack.c.l.b16 %v4028
    %v4120 = vunpack.c.h.b16 %v4028
    %v4121 = vunpack.c.l.b16 %v4029
    %v4122 = vunpack.c.h.b16 %v4029
    %v4123 = vunpack.c.l.b16 %v4030
    %v4124 = vunpack.c.h.b16 %v4030
    %v4125 = vunpack.c.l.b16 %v4031
    %v4126 = vunpack.c.h.b16 %v4031
    %v4127 = vunpack.c.l.b16 %v4032
    %v4128 = vunpack.c.h.b16 %v4032
    %v4129 = vpack.c.b16 %v4065, %v4065
    %v4130 = vpack.c.b16 %v4066, %v4066
    %v4131 = vpack.c.b16 %v4067, %v4067
    %v4132 = vpack.c.b16 %v4068, %v4068
    %v4133 = vpack.c.b16 %v4069, %v4069
    %v4134 = vpack.c.b16 %v4070, %v4070
    %v4135 = vpack.c.b16 %v4071, %v4071
    %v4136 = vpack.c.b16 %v4072, %v4072
    %v4137 = vpack.c.b16 %v4073, %v4073
    %v4138 = vpack.c.b16 %v4074, %v4074
    %v4139 = vpack.c.b16 %v4075, %v4075
    %v4140 = vpack.c.b16 %v4076, %v4076
    %v4141 = vpack.c.b16 %v4077, %v4077
    %v4142 = vpack.c.b16 %v4078, %v4078
    %v4143 = vpack.c.b16 %v4079, %v4079
    %v4144 = vpack.c.b16 %v4080, %v4080
    %v4145 = vpack.c.b16 %v4081, %v4081
    %v4146 = vpack.c.b16 %v4082, %v4082
    %v4147 = vpack.c.b16 %v4083, %v4083
    %v4148 = vpack.c.b16 %v4084, %v4084
    %v4149 = vpack.c.b16 %v4085, %v4085
    %v4150 = vpack.c.b16 %v4086, %v4086
    %v4151 = vpack.c.b16 %v4087, %v4087
    %v4152 = vpack.c.b16 %v4088, %v4088
    %v4153 = vpack.c.b16 %v4089, %v4089
    %v4154 = vpack.c.b16 %v4090, %v4090
    %v4155 = vpack.c.b16 %v4091, %v4091
    %v4156 = vpack.c.b16 %v4092, %v4092
    %v4157 = vpack.c.b16 %v4093, %v4093
    %v4158 = vpack.c.b16 %v4094, %v4094
    %v4159 = vpack.c.b16 %v4095, %v4095
    %v4160 = vpack.c.b16 %v4096, %v4096
    %v4161 = vpack.c.b16 %v4097, %v4097
    %v4162 = vpack.c.b16 %v4098, %v4098
    %v4163 = vpack.c.b16 %v4099, %v4099
    %v4164 = vpack.c.b16 %v4100, %v4100
    %v4165 = vpack.c.b16 %v4101, %v4101
    %v4166 = vpack.c.b16 %v4102, %v4102
    %v4167 = vpack.c.b16 %v4103, %v4103
    %v4168 = vpack.c.b16 %v4104, %v4104
    %v4169 = vpack.c.b16 %v4105, %v4105
    %v4170 = vpack.c.b16 %v4106, %v4106
    %v4171 = vpack.c.b16 %v4107, %v4107
    %v4172 = vpack.c.b16 %v4108, %v4108
    %v4173 = vpack.c.b16 %v4109, %v4109
    %v4174 = vpack.c.b16 %v4110, %v4110
    %v4175 = vpack.c.b16 %v4111, %v4111
    %v4176 = vpack.c.b16 %v4112, %v4112
    %v4177 = vpack.c.b16 %v4113, %v4113
    %v4178 = vpack.c.b16 %v4114, %v4114
    %v4179 = vpack.c.b16 %v4115, %v4115
    %v4180 = vpack.c.b16 %v4116, %v4116
    %v4181 = vpack.c.b16 %v4117, %v4117
    %v4182 = vpack.c.b16 %v4118, %v4118
    %v4183 = vpack.c.b16 %v4119, %v4119
    %v4184 = vpack.c.b16 %v4120, %v4120
    %v4185 = vpack.c.b16 %v4121, %v4121
    %v4186 = vpack.c.b16 %v4122, %v4122
    %v4187 = vpack.c.b16 %v4123, %v4123
    %v4188 = vpack.c.b16 %v4124, %v4124
    %v4189 = vpack.c.b16 %v4125, %v4125
    %v4190 = vpack.c.b16 %v4126, %v4126
    %v4191 = vpack.c.b16 %v4127, %v4127
    %v4192 = vpack.c.b16 %v4128, %v4128
    %4257 = vst.msk [vmem:[#allocation3 + $0x8] sm:$0xf] %vm2463, %v4129
    %4258 = vst.msk [vmem:[#allocation3 + $0x1c] sm:$0xf] %vm2463, %v4130
    %4259 = vst.msk [vmem:[#allocation3 + $0x30] sm:$0xf] %vm2463, %v4131
    %4260 = vst.msk [vmem:[#allocation3 + $0x44] sm:$0xf] %vm2463, %v4132
    %4261 = vst.msk [vmem:[#allocation3 + $0x58] sm:$0xf] %vm2463, %v4133
    %4262 = vst.msk [vmem:[#allocation3 + $0x6c] sm:$0xf] %vm2463, %v4134
    %4263 = vst.msk [vmem:[#allocation3 + $0x80] sm:$0xf] %vm2463, %v4135
    %4264 = vst.msk [vmem:[#allocation3 + $0x94] sm:$0xf] %vm2463, %v4136
    %4265 = vst.msk [vmem:[#allocation3 + $0xa8] sm:$0xf] %vm2463, %v4137
    %4266 = vst.msk [vmem:[#allocation3 + $0xbc] sm:$0xf] %vm2463, %v4138
    %4267 = vst.msk [vmem:[#allocation3 + $0xd0] sm:$0xf] %vm2463, %v4139
    %4268 = vst.msk [vmem:[#allocation3 + $0xe4] sm:$0xf] %vm2463, %v4140
    %4269 = vst.msk [vmem:[#allocation3 + $0xf8] sm:$0xf] %vm2463, %v4141
    %4270 = vst.msk [vmem:[#allocation3 + $0x10c] sm:$0xf] %vm2463, %v4142
    %4271 = vst.msk [vmem:[#allocation3 + $0x120] sm:$0xf] %vm2463, %v4143
    %4272 = vst.msk [vmem:[#allocation3 + $0x134] sm:$0xf] %vm2463, %v4144
    %4273 = vst.msk [vmem:[#allocation3 + $0x148] sm:$0xf] %vm2463, %v4145
    %4274 = vst.msk [vmem:[#allocation3 + $0x15c] sm:$0xf] %vm2463, %v4146
    %4275 = vst.msk [vmem:[#allocation3 + $0x170] sm:$0xf] %vm2463, %v4147
    %4276 = vst.msk [vmem:[#allocation3 + $0x184] sm:$0xf] %vm2463, %v4148
    %4277 = vst.msk [vmem:[#allocation3 + $0x198] sm:$0xf] %vm2463, %v4149
    %4278 = vst.msk [vmem:[#allocation3 + $0x1ac] sm:$0xf] %vm2463, %v4150
    %4279 = vst.msk [vmem:[#allocation3 + $0x1c0] sm:$0xf] %vm2463, %v4151
    %4280 = vst.msk [vmem:[#allocation3 + $0x1d4] sm:$0xf] %vm2463, %v4152
    %4281 = vst.msk [vmem:[#allocation3 + $0x1e8] sm:$0xf] %vm2463, %v4153
    %4282 = vst.msk [vmem:[#allocation3 + $0x1fc] sm:$0xf] %vm2463, %v4154
    %4283 = vst.msk [vmem:[#allocation3 + $0x210] sm:$0xf] %vm2463, %v4155
    %4284 = vst.msk [vmem:[#allocation3 + $0x224] sm:$0xf] %vm2463, %v4156
    %4285 = vst.msk [vmem:[#allocation3 + $0x238] sm:$0xf] %vm2463, %v4157
    %4286 = vst.msk [vmem:[#allocation3 + $0x24c] sm:$0xf] %vm2463, %v4158
    %4287 = vst.msk [vmem:[#allocation3 + $0x260] sm:$0xf] %vm2463, %v4159
    %4288 = vst.msk [vmem:[#allocation3 + $0x274] sm:$0xf] %vm2463, %v4160
    %4289 = vst.msk [vmem:[#allocation3 + $0x288] sm:$0xf] %vm2463, %v4161
    %4290 = vst.msk [vmem:[#allocation3 + $0x29c] sm:$0xf] %vm2463, %v4162
    %4291 = vst.msk [vmem:[#allocation3 + $0x2b0] sm:$0xf] %vm2463, %v4163
    %4292 = vst.msk [vmem:[#allocation3 + $0x2c4] sm:$0xf] %vm2463, %v4164
    %4293 = vst.msk [vmem:[#allocation3 + $0x2d8] sm:$0xf] %vm2463, %v4165
    %4294 = vst.msk [vmem:[#allocation3 + $0x2ec] sm:$0xf] %vm2463, %v4166
    %4295 = vst.msk [vmem:[#allocation3 + $0x300] sm:$0xf] %vm2463, %v4167
    %4296 = vst.msk [vmem:[#allocation3 + $0x314] sm:$0xf] %vm2463, %v4168
    %4297 = vst.msk [vmem:[#allocation3 + $0x328] sm:$0xf] %vm2463, %v4169
    %4298 = vst.msk [vmem:[#allocation3 + $0x33c] sm:$0xf] %vm2463, %v4170
    %4299 = vst.msk [vmem:[#allocation3 + $0x350] sm:$0xf] %vm2463, %v4171
    %4300 = vst.msk [vmem:[#allocation3 + $0x364] sm:$0xf] %vm2463, %v4172
    %4301 = vst.msk [vmem:[#allocation3 + $0x378] sm:$0xf] %vm2463, %v4173
    %4302 = vst.msk [vmem:[#allocation3 + $0x38c] sm:$0xf] %vm2463, %v4174
    %4303 = vst.msk [vmem:[#allocation3 + $0x3a0] sm:$0xf] %vm2463, %v4175
    %4304 = vst.msk [vmem:[#allocation3 + $0x3b4] sm:$0xf] %vm2463, %v4176
    %4305 = vst.msk [vmem:[#allocation3 + $0x3c8] sm:$0xf] %vm2463, %v4177
    %4306 = vst.msk [vmem:[#allocation3 + $0x3dc] sm:$0xf] %vm2463, %v4178
    %4307 = vst.msk [vmem:[#allocation3 + $0x3f0] sm:$0xf] %vm2463, %v4179
    %4308 = vst.msk [vmem:[#allocation3 + $0x404] sm:$0xf] %vm2463, %v4180
    %4309 = vst.msk [vmem:[#allocation3 + $0x418] sm:$0xf] %vm2463, %v4181
    %4310 = vst.msk [vmem:[#allocation3 + $0x42c] sm:$0xf] %vm2463, %v4182
    %4311 = vst.msk [vmem:[#allocation3 + $0x440] sm:$0xf] %vm2463, %v4183
    %4312 = vst.msk [vmem:[#allocation3 + $0x454] sm:$0xf] %vm2463, %v4184
    %4313 = vst.msk [vmem:[#allocation3 + $0x468] sm:$0xf] %vm2463, %v4185
    %4314 = vst.msk [vmem:[#allocation3 + $0x47c] sm:$0xf] %vm2463, %v4186
    %4315 = vst.msk [vmem:[#allocation3 + $0x490] sm:$0xf] %vm2463, %v4187
    %4316 = vst.msk [vmem:[#allocation3 + $0x4a4] sm:$0xf] %vm2463, %v4188
    %4317 = vst.msk [vmem:[#allocation3 + $0x4b8] sm:$0xf] %vm2463, %v4189
    %4318 = vst.msk [vmem:[#allocation3 + $0x4cc] sm:$0xf] %vm2463, %v4190
    %4319 = vst.msk [vmem:[#allocation3 + $0x4e0] sm:$0xf] %vm2463, %v4191
    %4320 = vst.msk [vmem:[#allocation3 + $0x4f4] sm:$0xf] %vm2463, %v4192
    %v4321 = vld [vmem:[%s1757 + $0x2] sm:$0xff]
    %v4322 = vld [vmem:[%s1757 + $0xa] sm:$0xff]
    %v4323 = vld [vmem:[%s1757 + $0x1a] sm:$0xff]
    %v4324 = vld [vmem:[%s1757 + $0x22] sm:$0xff]
    %v4325 = vld [vmem:[%s1757 + $0x32] sm:$0xff]
    %v4326 = vld [vmem:[%s1757 + $0x3a] sm:$0xff]
    %v4327 = vld [vmem:[%s1757 + $0x4a] sm:$0xff]
    %v4328 = vld [vmem:[%s1757 + $0x52] sm:$0xff]
    %v4329 = vld [vmem:[%s1757 + $0x62] sm:$0xff]
    %v4330 = vld [vmem:[%s1757 + $0x6a] sm:$0xff]
    %v4331 = vld [vmem:[%s1757 + $0x7a] sm:$0xff]
    %v4332 = vld [vmem:[%s1757 + $0x82] sm:$0xff]
    %v4333 = vld [vmem:[%s1757 + $0x92] sm:$0xff]
    %v4334 = vld [vmem:[%s1757 + $0x9a] sm:$0xff]
    %v4335 = vld [vmem:[%s1757 + $0xaa] sm:$0xff]
    %v4336 = vld [vmem:[%s1757 + $0xb2] sm:$0xff]
    %v4337 = vld [vmem:[%s1757 + $0xc2] sm:$0xff]
    %v4338 = vld [vmem:[%s1757 + $0xca] sm:$0xff]
    %v4339 = vld [vmem:[%s1757 + $0xda] sm:$0xff]
    %v4340 = vld [vmem:[%s1757 + $0xe2] sm:$0xff]
    %v4341 = vld [vmem:[%s1757 + $0xf2] sm:$0xff]
    %v4342 = vld [vmem:[%s1757 + $0xfa] sm:$0xff]
    %v4343 = vld [vmem:[%s1757 + $0x10a] sm:$0xff]
    %v4344 = vld [vmem:[%s1757 + $0x112] sm:$0xff]
    %v4345 = vld [vmem:[%s1757 + $0x122] sm:$0xff]
    %v4346 = vld [vmem:[%s1757 + $0x12a] sm:$0xff]
    %v4347 = vld [vmem:[%s1757 + $0x13a] sm:$0xff]
    %v4348 = vld [vmem:[%s1757 + $0x142] sm:$0xff]
    %v4349 = vld [vmem:[%s1757 + $0x152] sm:$0xff]
    %v4350 = vld [vmem:[%s1757 + $0x15a] sm:$0xff]
    %v4351 = vld [vmem:[%s1757 + $0x16a] sm:$0xff]
    %v4352 = vld [vmem:[%s1757 + $0x172] sm:$0xff]
    %v4353 = vld [vmem:[%s1757 + $0x1b2] sm:$0xff]
    %v4354 = vld [vmem:[%s1757 + $0x1ba] sm:$0xff]
    %v4355 = vld [vmem:[%s1757 + $0x1ca] sm:$0xff]
    %v4356 = vld [vmem:[%s1757 + $0x1d2] sm:$0xff]
    %v4357 = vld [vmem:[%s1757 + $0x1e2] sm:$0xff]
    %v4358 = vld [vmem:[%s1757 + $0x1ea] sm:$0xff]
    %v4359 = vld [vmem:[%s1757 + $0x1fa] sm:$0xff]
    %v4360 = vld [vmem:[%s1757 + $0x202] sm:$0xff]
    %v4361 = vld [vmem:[%s1757 + $0x212] sm:$0xff]
    %v4362 = vld [vmem:[%s1757 + $0x21a] sm:$0xff]
    %v4363 = vld [vmem:[%s1757 + $0x22a] sm:$0xff]
    %v4364 = vld [vmem:[%s1757 + $0x232] sm:$0xff]
    %v4365 = vld [vmem:[%s1757 + $0x242] sm:$0xff]
    %v4366 = vld [vmem:[%s1757 + $0x24a] sm:$0xff]
    %v4367 = vld [vmem:[%s1757 + $0x25a] sm:$0xff]
    %v4368 = vld [vmem:[%s1757 + $0x262] sm:$0xff]
    %v4369 = vld [vmem:[%s1757 + $0x272] sm:$0xff]
    %v4370 = vld [vmem:[%s1757 + $0x27a] sm:$0xff]
    %v4371 = vld [vmem:[%s1757 + $0x28a] sm:$0xff]
    %v4372 = vld [vmem:[%s1757 + $0x292] sm:$0xff]
    %v4373 = vld [vmem:[%s1757 + $0x2a2] sm:$0xff]
    %v4374 = vld [vmem:[%s1757 + $0x2aa] sm:$0xff]
    %v4375 = vld [vmem:[%s1757 + $0x2ba] sm:$0xff]
    %v4376 = vld [vmem:[%s1757 + $0x2c2] sm:$0xff]
    %v4377 = vld [vmem:[%s1757 + $0x2d2] sm:$0xff]
    %v4378 = vld [vmem:[%s1757 + $0x2da] sm:$0xff]
    %v4379 = vld [vmem:[%s1757 + $0x2ea] sm:$0xff]
    %v4380 = vld [vmem:[%s1757 + $0x2f2] sm:$0xff]
    %v4381 = vld [vmem:[%s1757 + $0x302] sm:$0xff]
    %v4382 = vld [vmem:[%s1757 + $0x30a] sm:$0xff]
    %v4383 = vld [vmem:[%s1757 + $0x31a] sm:$0xff]
    %v4384 = vld [vmem:[%s1757 + $0x322] sm:$0xff]
    %v4385 = vpack.c.bf16 %v4322, %v4321
    %v4386 = vpack.c.bf16 %v4324, %v4323
    %v4387 = vpack.c.bf16 %v4326, %v4325
    %v4388 = vpack.c.bf16 %v4328, %v4327
    %v4389 = vpack.c.bf16 %v4330, %v4329
    %v4390 = vpack.c.bf16 %v4332, %v4331
    %v4391 = vpack.c.bf16 %v4334, %v4333
    %v4392 = vpack.c.bf16 %v4336, %v4335
    %v4393 = vpack.c.bf16 %v4338, %v4337
    %v4394 = vpack.c.bf16 %v4340, %v4339
    %v4395 = vpack.c.bf16 %v4342, %v4341
    %v4396 = vpack.c.bf16 %v4344, %v4343
    %v4397 = vpack.c.bf16 %v4346, %v4345
    %v4398 = vpack.c.bf16 %v4348, %v4347
    %v4399 = vpack.c.bf16 %v4350, %v4349
    %v4400 = vpack.c.bf16 %v4352, %v4351
    %v4401 = vpack.c.bf16 %v4354, %v4353
    %v4402 = vpack.c.bf16 %v4356, %v4355
    %v4403 = vpack.c.bf16 %v4358, %v4357
    %v4404 = vpack.c.bf16 %v4360, %v4359
    %v4405 = vpack.c.bf16 %v4362, %v4361
    %v4406 = vpack.c.bf16 %v4364, %v4363
    %v4407 = vpack.c.bf16 %v4366, %v4365
    %v4408 = vpack.c.bf16 %v4368, %v4367
    %v4409 = vpack.c.bf16 %v4370, %v4369
    %v4410 = vpack.c.bf16 %v4372, %v4371
    %v4411 = vpack.c.bf16 %v4374, %v4373
    %v4412 = vpack.c.bf16 %v4376, %v4375
    %v4413 = vpack.c.bf16 %v4378, %v4377
    %v4414 = vpack.c.bf16 %v4380, %v4379
    %v4415 = vpack.c.bf16 %v4382, %v4381
    %v4416 = vpack.c.bf16 %v4384, %v4383
    %v4449 = vunpack.c.l.b16 %v4385
    %v4450 = vunpack.c.h.b16 %v4385
    %v4451 = vunpack.c.l.b16 %v4386
    %v4452 = vunpack.c.h.b16 %v4386
    %v4453 = vunpack.c.l.b16 %v4387
    %v4454 = vunpack.c.h.b16 %v4387
    %v4455 = vunpack.c.l.b16 %v4388
    %v4456 = vunpack.c.h.b16 %v4388
    %v4457 = vunpack.c.l.b16 %v4389
    %v4458 = vunpack.c.h.b16 %v4389
    %v4459 = vunpack.c.l.b16 %v4390
    %v4460 = vunpack.c.h.b16 %v4390
    %v4461 = vunpack.c.l.b16 %v4391
    %v4462 = vunpack.c.h.b16 %v4391
    %v4463 = vunpack.c.l.b16 %v4392
    %v4464 = vunpack.c.h.b16 %v4392
    %v4465 = vunpack.c.l.b16 %v4393
    %v4466 = vunpack.c.h.b16 %v4393
    %v4467 = vunpack.c.l.b16 %v4394
    %v4468 = vunpack.c.h.b16 %v4394
    %v4469 = vunpack.c.l.b16 %v4395
    %v4470 = vunpack.c.h.b16 %v4395
    %v4471 = vunpack.c.l.b16 %v4396
    %v4472 = vunpack.c.h.b16 %v4396
    %v4473 = vunpack.c.l.b16 %v4397
    %v4474 = vunpack.c.h.b16 %v4397
    %v4475 = vunpack.c.l.b16 %v4398
    %v4476 = vunpack.c.h.b16 %v4398
    %v4477 = vunpack.c.l.b16 %v4399
    %v4478 = vunpack.c.h.b16 %v4399
    %v4479 = vunpack.c.l.b16 %v4400
    %v4480 = vunpack.c.h.b16 %v4400
    %v4481 = vunpack.c.l.b16 %v4401
    %v4482 = vunpack.c.h.b16 %v4401
    %v4483 = vunpack.c.l.b16 %v4402
    %v4484 = vunpack.c.h.b16 %v4402
    %v4485 = vunpack.c.l.b16 %v4403
    %v4486 = vunpack.c.h.b16 %v4403
    %v4487 = vunpack.c.l.b16 %v4404
    %v4488 = vunpack.c.h.b16 %v4404
    %v4489 = vunpack.c.l.b16 %v4405
    %v4490 = vunpack.c.h.b16 %v4405
    %v4491 = vunpack.c.l.b16 %v4406
    %v4492 = vunpack.c.h.b16 %v4406
    %v4493 = vunpack.c.l.b16 %v4407
    %v4494 = vunpack.c.h.b16 %v4407
    %v4495 = vunpack.c.l.b16 %v4408
    %v4496 = vunpack.c.h.b16 %v4408
    %v4497 = vunpack.c.l.b16 %v4409
    %v4498 = vunpack.c.h.b16 %v4409
    %v4499 = vunpack.c.l.b16 %v4410
    %v4500 = vunpack.c.h.b16 %v4410
    %v4501 = vunpack.c.l.b16 %v4411
    %v4502 = vunpack.c.h.b16 %v4411
    %v4503 = vunpack.c.l.b16 %v4412
    %v4504 = vunpack.c.h.b16 %v4412
    %v4505 = vunpack.c.l.b16 %v4413
    %v4506 = vunpack.c.h.b16 %v4413
    %v4507 = vunpack.c.l.b16 %v4414
    %v4508 = vunpack.c.h.b16 %v4414
    %v4509 = vunpack.c.l.b16 %v4415
    %v4510 = vunpack.c.h.b16 %v4415
    %v4511 = vunpack.c.l.b16 %v4416
    %v4512 = vunpack.c.h.b16 %v4416
    %v4513 = vpack.c.b16 %v4449, %v4449
    %v4514 = vpack.c.b16 %v4450, %v4450
    %v4515 = vpack.c.b16 %v4451, %v4451
    %v4516 = vpack.c.b16 %v4452, %v4452
    %v4517 = vpack.c.b16 %v4453, %v4453
    %v4518 = vpack.c.b16 %v4454, %v4454
    %v4519 = vpack.c.b16 %v4455, %v4455
    %v4520 = vpack.c.b16 %v4456, %v4456
    %v4521 = vpack.c.b16 %v4457, %v4457
    %v4522 = vpack.c.b16 %v4458, %v4458
    %v4523 = vpack.c.b16 %v4459, %v4459
    %v4524 = vpack.c.b16 %v4460, %v4460
    %v4525 = vpack.c.b16 %v4461, %v4461
    %v4526 = vpack.c.b16 %v4462, %v4462
    %v4527 = vpack.c.b16 %v4463, %v4463
    %v4528 = vpack.c.b16 %v4464, %v4464
    %v4529 = vpack.c.b16 %v4465, %v4465
    %v4530 = vpack.c.b16 %v4466, %v4466
    %v4531 = vpack.c.b16 %v4467, %v4467
    %v4532 = vpack.c.b16 %v4468, %v4468
    %v4533 = vpack.c.b16 %v4469, %v4469
    %v4534 = vpack.c.b16 %v4470, %v4470
    %v4535 = vpack.c.b16 %v4471, %v4471
    %v4536 = vpack.c.b16 %v4472, %v4472
    %v4537 = vpack.c.b16 %v4473, %v4473
    %v4538 = vpack.c.b16 %v4474, %v4474
    %v4539 = vpack.c.b16 %v4475, %v4475
    %v4540 = vpack.c.b16 %v4476, %v4476
    %v4541 = vpack.c.b16 %v4477, %v4477
    %v4542 = vpack.c.b16 %v4478, %v4478
    %v4543 = vpack.c.b16 %v4479, %v4479
    %v4544 = vpack.c.b16 %v4480, %v4480
    %v4545 = vpack.c.b16 %v4481, %v4481
    %v4546 = vpack.c.b16 %v4482, %v4482
    %v4547 = vpack.c.b16 %v4483, %v4483
    %v4548 = vpack.c.b16 %v4484, %v4484
    %v4549 = vpack.c.b16 %v4485, %v4485
    %v4550 = vpack.c.b16 %v4486, %v4486
    %v4551 = vpack.c.b16 %v4487, %v4487
    %v4552 = vpack.c.b16 %v4488, %v4488
    %v4553 = vpack.c.b16 %v4489, %v4489
    %v4554 = vpack.c.b16 %v4490, %v4490
    %v4555 = vpack.c.b16 %v4491, %v4491
    %v4556 = vpack.c.b16 %v4492, %v4492
    %v4557 = vpack.c.b16 %v4493, %v4493
    %v4558 = vpack.c.b16 %v4494, %v4494
    %v4559 = vpack.c.b16 %v4495, %v4495
    %v4560 = vpack.c.b16 %v4496, %v4496
    %v4561 = vpack.c.b16 %v4497, %v4497
    %v4562 = vpack.c.b16 %v4498, %v4498
    %v4563 = vpack.c.b16 %v4499, %v4499
    %v4564 = vpack.c.b16 %v4500, %v4500
    %v4565 = vpack.c.b16 %v4501, %v4501
    %v4566 = vpack.c.b16 %v4502, %v4502
    %v4567 = vpack.c.b16 %v4503, %v4503
    %v4568 = vpack.c.b16 %v4504, %v4504
    %v4569 = vpack.c.b16 %v4505, %v4505
    %v4570 = vpack.c.b16 %v4506, %v4506
    %v4571 = vpack.c.b16 %v4507, %v4507
    %v4572 = vpack.c.b16 %v4508, %v4508
    %v4573 = vpack.c.b16 %v4509, %v4509
    %v4574 = vpack.c.b16 %v4510, %v4510
    %v4575 = vpack.c.b16 %v4511, %v4511
    %v4576 = vpack.c.b16 %v4512, %v4512
    %4577 = vrot.lane.b32.xlu0 %v4513, 64
    %v4578 = vpop.permute.xlu0 %4577
    %4579 = vrot.lane.b32.xlu0 %v4514, 64
    %v4580 = vpop.permute.xlu0 %4579
    %4581 = vrot.lane.b32.xlu0 %v4515, 64
    %v4582 = vpop.permute.xlu0 %4581
    %4583 = vrot.lane.b32.xlu0 %v4516, 64
    %v4584 = vpop.permute.xlu0 %4583
    %4585 = vrot.lane.b32.xlu0 %v4517, 64
    %v4586 = vpop.permute.xlu0 %4585
    %4587 = vrot.lane.b32.xlu0 %v4518, 64
    %v4588 = vpop.permute.xlu0 %4587
    %4589 = vrot.lane.b32.xlu0 %v4519, 64
    %v4590 = vpop.permute.xlu0 %4589
    %4591 = vrot.lane.b32.xlu0 %v4520, 64
    %v4592 = vpop.permute.xlu0 %4591
    %4593 = vrot.lane.b32.xlu0 %v4521, 64
    %v4594 = vpop.permute.xlu0 %4593
    %4595 = vrot.lane.b32.xlu0 %v4522, 64
    %v4596 = vpop.permute.xlu0 %4595
    %4597 = vrot.lane.b32.xlu0 %v4523, 64
    %v4598 = vpop.permute.xlu0 %4597
    %4599 = vrot.lane.b32.xlu0 %v4524, 64
    %v4600 = vpop.permute.xlu0 %4599
    %4601 = vrot.lane.b32.xlu0 %v4525, 64
    %v4602 = vpop.permute.xlu0 %4601
    %4603 = vrot.lane.b32.xlu0 %v4526, 64
    %v4604 = vpop.permute.xlu0 %4603
    %4605 = vrot.lane.b32.xlu0 %v4527, 64
    %v4606 = vpop.permute.xlu0 %4605
    %4607 = vrot.lane.b32.xlu0 %v4528, 64
    %v4608 = vpop.permute.xlu0 %4607
    %4609 = vrot.lane.b32.xlu0 %v4529, 64
    %v4610 = vpop.permute.xlu0 %4609
    %4611 = vrot.lane.b32.xlu0 %v4530, 64
    %v4612 = vpop.permute.xlu0 %4611
    %4613 = vrot.lane.b32.xlu0 %v4531, 64
    %v4614 = vpop.permute.xlu0 %4613
    %4615 = vrot.lane.b32.xlu0 %v4532, 64
    %v4616 = vpop.permute.xlu0 %4615
    %4617 = vrot.lane.b32.xlu0 %v4533, 64
    %v4618 = vpop.permute.xlu0 %4617
    %4619 = vrot.lane.b32.xlu0 %v4534, 64
    %v4620 = vpop.permute.xlu0 %4619
    %4621 = vrot.lane.b32.xlu0 %v4535, 64
    %v4622 = vpop.permute.xlu0 %4621
    %4623 = vrot.lane.b32.xlu0 %v4536, 64
    %v4624 = vpop.permute.xlu0 %4623
    %4625 = vrot.lane.b32.xlu0 %v4537, 64
    %v4626 = vpop.permute.xlu0 %4625
    %4627 = vrot.lane.b32.xlu0 %v4538, 64
    %v4628 = vpop.permute.xlu0 %4627
    %4629 = vrot.lane.b32.xlu0 %v4539, 64
    %v4630 = vpop.permute.xlu0 %4629
    %4631 = vrot.lane.b32.xlu0 %v4540, 64
    %v4632 = vpop.permute.xlu0 %4631
    %4633 = vrot.lane.b32.xlu0 %v4541, 64
    %v4634 = vpop.permute.xlu0 %4633
    %4635 = vrot.lane.b32.xlu0 %v4542, 64
    %v4636 = vpop.permute.xlu0 %4635
    %4637 = vrot.lane.b32.xlu0 %v4543, 64
    %v4638 = vpop.permute.xlu0 %4637
    %4639 = vrot.lane.b32.xlu0 %v4544, 64
    %v4640 = vpop.permute.xlu0 %4639
    %4641 = vrot.lane.b32.xlu0 %v4545, 64
    %v4642 = vpop.permute.xlu0 %4641
    %4643 = vrot.lane.b32.xlu0 %v4546, 64
    %v4644 = vpop.permute.xlu0 %4643
    %4645 = vrot.lane.b32.xlu0 %v4547, 64
    %v4646 = vpop.permute.xlu0 %4645
    %4647 = vrot.lane.b32.xlu0 %v4548, 64
    %v4648 = vpop.permute.xlu0 %4647
    %4649 = vrot.lane.b32.xlu0 %v4549, 64
    %v4650 = vpop.permute.xlu0 %4649
    %4651 = vrot.lane.b32.xlu0 %v4550, 64
    %v4652 = vpop.permute.xlu0 %4651
    %4653 = vrot.lane.b32.xlu0 %v4551, 64
    %v4654 = vpop.permute.xlu0 %4653
    %4655 = vrot.lane.b32.xlu0 %v4552, 64
    %v4656 = vpop.permute.xlu0 %4655
    %4657 = vrot.lane.b32.xlu0 %v4553, 64
    %v4658 = vpop.permute.xlu0 %4657
    %4659 = vrot.lane.b32.xlu0 %v4554, 64
    %v4660 = vpop.permute.xlu0 %4659
    %4661 = vrot.lane.b32.xlu0 %v4555, 64
    %v4662 = vpop.permute.xlu0 %4661
    %4663 = vrot.lane.b32.xlu0 %v4556, 64
    %v4664 = vpop.permute.xlu0 %4663
    %4665 = vrot.lane.b32.xlu0 %v4557, 64
    %v4666 = vpop.permute.xlu0 %4665
    %4667 = vrot.lane.b32.xlu0 %v4558, 64
    %v4668 = vpop.permute.xlu0 %4667
    %4669 = vrot.lane.b32.xlu0 %v4559, 64
    %v4670 = vpop.permute.xlu0 %4669
    %4671 = vrot.lane.b32.xlu0 %v4560, 64
    %v4672 = vpop.permute.xlu0 %4671
    %4673 = vrot.lane.b32.xlu0 %v4561, 64
    %v4674 = vpop.permute.xlu0 %4673
    %4675 = vrot.lane.b32.xlu0 %v4562, 64
    %v4676 = vpop.permute.xlu0 %4675
    %4677 = vrot.lane.b32.xlu0 %v4563, 64
    %v4678 = vpop.permute.xlu0 %4677
    %4679 = vrot.lane.b32.xlu0 %v4564, 64
    %v4680 = vpop.permute.xlu0 %4679
    %4681 = vrot.lane.b32.xlu0 %v4565, 64
    %v4682 = vpop.permute.xlu0 %4681
    %4683 = vrot.lane.b32.xlu0 %v4566, 64
    %v4684 = vpop.permute.xlu0 %4683
    %4685 = vrot.lane.b32.xlu0 %v4567, 64
    %v4686 = vpop.permute.xlu0 %4685
    %4687 = vrot.lane.b32.xlu0 %v4568, 64
    %v4688 = vpop.permute.xlu0 %4687
    %4689 = vrot.lane.b32.xlu0 %v4569, 64
    %v4690 = vpop.permute.xlu0 %4689
    %4691 = vrot.lane.b32.xlu0 %v4570, 64
    %v4692 = vpop.permute.xlu0 %4691
    %4693 = vrot.lane.b32.xlu0 %v4571, 64
    %v4694 = vpop.permute.xlu0 %4693
    %4695 = vrot.lane.b32.xlu0 %v4572, 64
    %v4696 = vpop.permute.xlu0 %4695
    %4697 = vrot.lane.b32.xlu0 %v4573, 64
    %v4698 = vpop.permute.xlu0 %4697
    %4699 = vrot.lane.b32.xlu0 %v4574, 64
    %v4700 = vpop.permute.xlu0 %4699
    %4701 = vrot.lane.b32.xlu0 %v4575, 64
    %v4702 = vpop.permute.xlu0 %4701
    %4703 = vrot.lane.b32.xlu0 %v4576, 64
    %v4704 = vpop.permute.xlu0 %4703
    %4769 = vst.msk [vmem:[#allocation3 + $0x8] sm:$0xf] %vm2976, %v4578
    %4770 = vst.msk [vmem:[#allocation3 + $0x1c] sm:$0xf] %vm2976, %v4580
    %4771 = vst.msk [vmem:[#allocation3 + $0x30] sm:$0xf] %vm2976, %v4582
    %4772 = vst.msk [vmem:[#allocation3 + $0x44] sm:$0xf] %vm2976, %v4584
    %4773 = vst.msk [vmem:[#allocation3 + $0x58] sm:$0xf] %vm2976, %v4586
    %4774 = vst.msk [vmem:[#allocation3 + $0x6c] sm:$0xf] %vm2976, %v4588
    %4775 = vst.msk [vmem:[#allocation3 + $0x80] sm:$0xf] %vm2976, %v4590
    %4776 = vst.msk [vmem:[#allocation3 + $0x94] sm:$0xf] %vm2976, %v4592
    %4777 = vst.msk [vmem:[#allocation3 + $0xa8] sm:$0xf] %vm2976, %v4594
    %4778 = vst.msk [vmem:[#allocation3 + $0xbc] sm:$0xf] %vm2976, %v4596
    %4779 = vst.msk [vmem:[#allocation3 + $0xd0] sm:$0xf] %vm2976, %v4598
    %4780 = vst.msk [vmem:[#allocation3 + $0xe4] sm:$0xf] %vm2976, %v4600
    %4781 = vst.msk [vmem:[#allocation3 + $0xf8] sm:$0xf] %vm2976, %v4602
    %4782 = vst.msk [vmem:[#allocation3 + $0x10c] sm:$0xf] %vm2976, %v4604
    %4783 = vst.msk [vmem:[#allocation3 + $0x120] sm:$0xf] %vm2976, %v4606
    %4784 = vst.msk [vmem:[#allocation3 + $0x134] sm:$0xf] %vm2976, %v4608
    %4785 = vst.msk [vmem:[#allocation3 + $0x148] sm:$0xf] %vm2976, %v4610
    %4786 = vst.msk [vmem:[#allocation3 + $0x15c] sm:$0xf] %vm2976, %v4612
    %4787 = vst.msk [vmem:[#allocation3 + $0x170] sm:$0xf] %vm2976, %v4614
    %4788 = vst.msk [vmem:[#allocation3 + $0x184] sm:$0xf] %vm2976, %v4616
    %4789 = vst.msk [vmem:[#allocation3 + $0x198] sm:$0xf] %vm2976, %v4618
    %4790 = vst.msk [vmem:[#allocation3 + $0x1ac] sm:$0xf] %vm2976, %v4620
    %4791 = vst.msk [vmem:[#allocation3 + $0x1c0] sm:$0xf] %vm2976, %v4622
    %4792 = vst.msk [vmem:[#allocation3 + $0x1d4] sm:$0xf] %vm2976, %v4624
    %4793 = vst.msk [vmem:[#allocation3 + $0x1e8] sm:$0xf] %vm2976, %v4626
    %4794 = vst.msk [vmem:[#allocation3 + $0x1fc] sm:$0xf] %vm2976, %v4628
    %4795 = vst.msk [vmem:[#allocation3 + $0x210] sm:$0xf] %vm2976, %v4630
    %4796 = vst.msk [vmem:[#allocation3 + $0x224] sm:$0xf] %vm2976, %v4632
    %4797 = vst.msk [vmem:[#allocation3 + $0x238] sm:$0xf] %vm2976, %v4634
    %4798 = vst.msk [vmem:[#allocation3 + $0x24c] sm:$0xf] %vm2976, %v4636
    %4799 = vst.msk [vmem:[#allocation3 + $0x260] sm:$0xf] %vm2976, %v4638
    %4800 = vst.msk [vmem:[#allocation3 + $0x274] sm:$0xf] %vm2976, %v4640
    %4801 = vst.msk [vmem:[#allocation3 + $0x288] sm:$0xf] %vm2976, %v4642
    %4802 = vst.msk [vmem:[#allocation3 + $0x29c] sm:$0xf] %vm2976, %v4644
    %4803 = vst.msk [vmem:[#allocation3 + $0x2b0] sm:$0xf] %vm2976, %v4646
    %4804 = vst.msk [vmem:[#allocation3 + $0x2c4] sm:$0xf] %vm2976, %v4648
    %4805 = vst.msk [vmem:[#allocation3 + $0x2d8] sm:$0xf] %vm2976, %v4650
    %4806 = vst.msk [vmem:[#allocation3 + $0x2ec] sm:$0xf] %vm2976, %v4652
    %4807 = vst.msk [vmem:[#allocation3 + $0x300] sm:$0xf] %vm2976, %v4654
    %4808 = vst.msk [vmem:[#allocation3 + $0x314] sm:$0xf] %vm2976, %v4656
    %4809 = vst.msk [vmem:[#allocation3 + $0x328] sm:$0xf] %vm2976, %v4658
    %4810 = vst.msk [vmem:[#allocation3 + $0x33c] sm:$0xf] %vm2976, %v4660
    %4811 = vst.msk [vmem:[#allocation3 + $0x350] sm:$0xf] %vm2976, %v4662
    %4812 = vst.msk [vmem:[#allocation3 + $0x364] sm:$0xf] %vm2976, %v4664
    %4813 = vst.msk [vmem:[#allocation3 + $0x378] sm:$0xf] %vm2976, %v4666
    %4814 = vst.msk [vmem:[#allocation3 + $0x38c] sm:$0xf] %vm2976, %v4668
    %4815 = vst.msk [vmem:[#allocation3 + $0x3a0] sm:$0xf] %vm2976, %v4670
    %4816 = vst.msk [vmem:[#allocation3 + $0x3b4] sm:$0xf] %vm2976, %v4672
    %4817 = vst.msk [vmem:[#allocation3 + $0x3c8] sm:$0xf] %vm2976, %v4674
    %4818 = vst.msk [vmem:[#allocation3 + $0x3dc] sm:$0xf] %vm2976, %v4676
    %4819 = vst.msk [vmem:[#allocation3 + $0x3f0] sm:$0xf] %vm2976, %v4678
    %4820 = vst.msk [vmem:[#allocation3 + $0x404] sm:$0xf] %vm2976, %v4680
    %4821 = vst.msk [vmem:[#allocation3 + $0x418] sm:$0xf] %vm2976, %v4682
    %4822 = vst.msk [vmem:[#allocation3 + $0x42c] sm:$0xf] %vm2976, %v4684
    %4823 = vst.msk [vmem:[#allocation3 + $0x440] sm:$0xf] %vm2976, %v4686
    %4824 = vst.msk [vmem:[#allocation3 + $0x454] sm:$0xf] %vm2976, %v4688
    %4825 = vst.msk [vmem:[#allocation3 + $0x468] sm:$0xf] %vm2976, %v4690
    %4826 = vst.msk [vmem:[#allocation3 + $0x47c] sm:$0xf] %vm2976, %v4692
    %4827 = vst.msk [vmem:[#allocation3 + $0x490] sm:$0xf] %vm2976, %v4694
    %4828 = vst.msk [vmem:[#allocation3 + $0x4a4] sm:$0xf] %vm2976, %v4696
    %4829 = vst.msk [vmem:[#allocation3 + $0x4b8] sm:$0xf] %vm2976, %v4698
    %4830 = vst.msk [vmem:[#allocation3 + $0x4cc] sm:$0xf] %vm2976, %v4700
    %4831 = vst.msk [vmem:[#allocation3 + $0x4e0] sm:$0xf] %vm2976, %v4702
    %4832 = vst.msk [vmem:[#allocation3 + $0x4f4] sm:$0xf] %vm2976, %v4704
    %s4833 = scalar_lea.vmem [#allocation2], 48
    %v4834 = vld [vmem:[%s4833] sm:$0xff]
    %v4835 = vld [vmem:[%s4833 + $0x8] sm:$0xff]
    %v4836 = vld [vmem:[%s4833 + $0x18] sm:$0xff]
    %v4837 = vld [vmem:[%s4833 + $0x20] sm:$0xff]
    %v4838 = vld [vmem:[%s4833 + $0x30] sm:$0xff]
    %v4839 = vld [vmem:[%s4833 + $0x38] sm:$0xff]
    %v4840 = vld [vmem:[%s4833 + $0x48] sm:$0xff]
    %v4841 = vld [vmem:[%s4833 + $0x50] sm:$0xff]
    %v4842 = vld [vmem:[%s4833 + $0x60] sm:$0xff]
    %v4843 = vld [vmem:[%s4833 + $0x68] sm:$0xff]
    %v4844 = vld [vmem:[%s4833 + $0x78] sm:$0xff]
    %v4845 = vld [vmem:[%s4833 + $0x80] sm:$0xff]
    %v4846 = vld [vmem:[%s4833 + $0x90] sm:$0xff]
    %v4847 = vld [vmem:[%s4833 + $0x98] sm:$0xff]
    %v4848 = vld [vmem:[%s4833 + $0xa8] sm:$0xff]
    %v4849 = vld [vmem:[%s4833 + $0xb0] sm:$0xff]
    %v4850 = vld [vmem:[%s4833 + $0xc0] sm:$0xff]
    %v4851 = vld [vmem:[%s4833 + $0xc8] sm:$0xff]
    %v4852 = vld [vmem:[%s4833 + $0xd8] sm:$0xff]
    %v4853 = vld [vmem:[%s4833 + $0xe0] sm:$0xff]
    %v4854 = vld [vmem:[%s4833 + $0xf0] sm:$0xff]
    %v4855 = vld [vmem:[%s4833 + $0xf8] sm:$0xff]
    %v4856 = vld [vmem:[%s4833 + $0x108] sm:$0xff]
    %v4857 = vld [vmem:[%s4833 + $0x110] sm:$0xff]
    %v4858 = vld [vmem:[%s4833 + $0x120] sm:$0xff]
    %v4859 = vld [vmem:[%s4833 + $0x128] sm:$0xff]
    %v4860 = vld [vmem:[%s4833 + $0x138] sm:$0xff]
    %v4861 = vld [vmem:[%s4833 + $0x140] sm:$0xff]
    %v4862 = vld [vmem:[%s4833 + $0x150] sm:$0xff]
    %v4863 = vld [vmem:[%s4833 + $0x158] sm:$0xff]
    %v4864 = vld [vmem:[%s4833 + $0x168] sm:$0xff]
    %v4865 = vld [vmem:[%s4833 + $0x170] sm:$0xff]
    %v4866 = vld [vmem:[%s4833 + $0x1b0] sm:$0xff]
    %v4867 = vld [vmem:[%s4833 + $0x1b8] sm:$0xff]
    %v4868 = vld [vmem:[%s4833 + $0x1c8] sm:$0xff]
    %v4869 = vld [vmem:[%s4833 + $0x1d0] sm:$0xff]
    %v4870 = vld [vmem:[%s4833 + $0x1e0] sm:$0xff]
    %v4871 = vld [vmem:[%s4833 + $0x1e8] sm:$0xff]
    %v4872 = vld [vmem:[%s4833 + $0x1f8] sm:$0xff]
    %v4873 = vld [vmem:[%s4833 + $0x200] sm:$0xff]
    %v4874 = vld [vmem:[%s4833 + $0x210] sm:$0xff]
    %v4875 = vld [vmem:[%s4833 + $0x218] sm:$0xff]
    %v4876 = vld [vmem:[%s4833 + $0x228] sm:$0xff]
    %v4877 = vld [vmem:[%s4833 + $0x230] sm:$0xff]
    %v4878 = vld [vmem:[%s4833 + $0x240] sm:$0xff]
    %v4879 = vld [vmem:[%s4833 + $0x248] sm:$0xff]
    %v4880 = vld [vmem:[%s4833 + $0x258] sm:$0xff]
    %v4881 = vld [vmem:[%s4833 + $0x260] sm:$0xff]
    %v4882 = vld [vmem:[%s4833 + $0x270] sm:$0xff]
    %v4883 = vld [vmem:[%s4833 + $0x278] sm:$0xff]
    %v4884 = vld [vmem:[%s4833 + $0x288] sm:$0xff]
    %v4885 = vld [vmem:[%s4833 + $0x290] sm:$0xff]
    %v4886 = vld [vmem:[%s4833 + $0x2a0] sm:$0xff]
    %v4887 = vld [vmem:[%s4833 + $0x2a8] sm:$0xff]
    %v4888 = vld [vmem:[%s4833 + $0x2b8] sm:$0xff]
    %v4889 = vld [vmem:[%s4833 + $0x2c0] sm:$0xff]
    %v4890 = vld [vmem:[%s4833 + $0x2d0] sm:$0xff]
    %v4891 = vld [vmem:[%s4833 + $0x2d8] sm:$0xff]
    %v4892 = vld [vmem:[%s4833 + $0x2e8] sm:$0xff]
    %v4893 = vld [vmem:[%s4833 + $0x2f0] sm:$0xff]
    %v4894 = vld [vmem:[%s4833 + $0x300] sm:$0xff]
    %v4895 = vld [vmem:[%s4833 + $0x308] sm:$0xff]
    %v4896 = vld [vmem:[%s4833 + $0x318] sm:$0xff]
    %v4897 = vld [vmem:[%s4833 + $0x320] sm:$0xff]
    %v4898 = vpack.c.bf16 %v4835, %v4834
    %v4899 = vpack.c.bf16 %v4837, %v4836
    %v4900 = vpack.c.bf16 %v4839, %v4838
    %v4901 = vpack.c.bf16 %v4841, %v4840
    %v4902 = vpack.c.bf16 %v4843, %v4842
    %v4903 = vpack.c.bf16 %v4845, %v4844
    %v4904 = vpack.c.bf16 %v4847, %v4846
    %v4905 = vpack.c.bf16 %v4849, %v4848
    %v4906 = vpack.c.bf16 %v4851, %v4850
    %v4907 = vpack.c.bf16 %v4853, %v4852
    %v4908 = vpack.c.bf16 %v4855, %v4854
    %v4909 = vpack.c.bf16 %v4857, %v4856
    %v4910 = vpack.c.bf16 %v4859, %v4858
    %v4911 = vpack.c.bf16 %v4861, %v4860
    %v4912 = vpack.c.bf16 %v4863, %v4862
    %v4913 = vpack.c.bf16 %v4865, %v4864
    %v4914 = vpack.c.bf16 %v4867, %v4866
    %v4915 = vpack.c.bf16 %v4869, %v4868
    %v4916 = vpack.c.bf16 %v4871, %v4870
    %v4917 = vpack.c.bf16 %v4873, %v4872
    %v4918 = vpack.c.bf16 %v4875, %v4874
    %v4919 = vpack.c.bf16 %v4877, %v4876
    %v4920 = vpack.c.bf16 %v4879, %v4878
    %v4921 = vpack.c.bf16 %v4881, %v4880
    %v4922 = vpack.c.bf16 %v4883, %v4882
    %v4923 = vpack.c.bf16 %v4885, %v4884
    %v4924 = vpack.c.bf16 %v4887, %v4886
    %v4925 = vpack.c.bf16 %v4889, %v4888
    %v4926 = vpack.c.bf16 %v4891, %v4890
    %v4927 = vpack.c.bf16 %v4893, %v4892
    %v4928 = vpack.c.bf16 %v4895, %v4894
    %v4929 = vpack.c.bf16 %v4897, %v4896
    %v4962 = vunpack.c.l.b16 %v4898
    %v4963 = vunpack.c.h.b16 %v4898
    %v4964 = vunpack.c.l.b16 %v4899
    %v4965 = vunpack.c.h.b16 %v4899
    %v4966 = vunpack.c.l.b16 %v4900
    %v4967 = vunpack.c.h.b16 %v4900
    %v4968 = vunpack.c.l.b16 %v4901
    %v4969 = vunpack.c.h.b16 %v4901
    %v4970 = vunpack.c.l.b16 %v4902
    %v4971 = vunpack.c.h.b16 %v4902
    %v4972 = vunpack.c.l.b16 %v4903
    %v4973 = vunpack.c.h.b16 %v4903
    %v4974 = vunpack.c.l.b16 %v4904
    %v4975 = vunpack.c.h.b16 %v4904
    %v4976 = vunpack.c.l.b16 %v4905
    %v4977 = vunpack.c.h.b16 %v4905
    %v4978 = vunpack.c.l.b16 %v4906
    %v4979 = vunpack.c.h.b16 %v4906
    %v4980 = vunpack.c.l.b16 %v4907
    %v4981 = vunpack.c.h.b16 %v4907
    %v4982 = vunpack.c.l.b16 %v4908
    %v4983 = vunpack.c.h.b16 %v4908
    %v4984 = vunpack.c.l.b16 %v4909
    %v4985 = vunpack.c.h.b16 %v4909
    %v4986 = vunpack.c.l.b16 %v4910
    %v4987 = vunpack.c.h.b16 %v4910
    %v4988 = vunpack.c.l.b16 %v4911
    %v4989 = vunpack.c.h.b16 %v4911
    %v4990 = vunpack.c.l.b16 %v4912
    %v4991 = vunpack.c.h.b16 %v4912
    %v4992 = vunpack.c.l.b16 %v4913
    %v4993 = vunpack.c.h.b16 %v4913
    %v4994 = vunpack.c.l.b16 %v4914
    %v4995 = vunpack.c.h.b16 %v4914
    %v4996 = vunpack.c.l.b16 %v4915
    %v4997 = vunpack.c.h.b16 %v4915
    %v4998 = vunpack.c.l.b16 %v4916
    %v4999 = vunpack.c.h.b16 %v4916
    %v5000 = vunpack.c.l.b16 %v4917
    %v5001 = vunpack.c.h.b16 %v4917
    %v5002 = vunpack.c.l.b16 %v4918
    %v5003 = vunpack.c.h.b16 %v4918
    %v5004 = vunpack.c.l.b16 %v4919
    %v5005 = vunpack.c.h.b16 %v4919
    %v5006 = vunpack.c.l.b16 %v4920
    %v5007 = vunpack.c.h.b16 %v4920
    %v5008 = vunpack.c.l.b16 %v4921
    %v5009 = vunpack.c.h.b16 %v4921
    %v5010 = vunpack.c.l.b16 %v4922
    %v5011 = vunpack.c.h.b16 %v4922
    %v5012 = vunpack.c.l.b16 %v4923
    %v5013 = vunpack.c.h.b16 %v4923
    %v5014 = vunpack.c.l.b16 %v4924
    %v5015 = vunpack.c.h.b16 %v4924
    %v5016 = vunpack.c.l.b16 %v4925
    %v5017 = vunpack.c.h.b16 %v4925
    %v5018 = vunpack.c.l.b16 %v4926
    %v5019 = vunpack.c.h.b16 %v4926
    %v5020 = vunpack.c.l.b16 %v4927
    %v5021 = vunpack.c.h.b16 %v4927
    %v5022 = vunpack.c.l.b16 %v4928
    %v5023 = vunpack.c.h.b16 %v4928
    %v5024 = vunpack.c.l.b16 %v4929
    %v5025 = vunpack.c.h.b16 %v4929
    %v5026 = vpack.c.b16 %v4962, %v4962
    %v5027 = vpack.c.b16 %v4963, %v4963
    %v5028 = vpack.c.b16 %v4964, %v4964
    %v5029 = vpack.c.b16 %v4965, %v4965
    %v5030 = vpack.c.b16 %v4966, %v4966
    %v5031 = vpack.c.b16 %v4967, %v4967
    %v5032 = vpack.c.b16 %v4968, %v4968
    %v5033 = vpack.c.b16 %v4969, %v4969
    %v5034 = vpack.c.b16 %v4970, %v4970
    %v5035 = vpack.c.b16 %v4971, %v4971
    %v5036 = vpack.c.b16 %v4972, %v4972
    %v5037 = vpack.c.b16 %v4973, %v4973
    %v5038 = vpack.c.b16 %v4974, %v4974
    %v5039 = vpack.c.b16 %v4975, %v4975
    %v5040 = vpack.c.b16 %v4976, %v4976
    %v5041 = vpack.c.b16 %v4977, %v4977
    %v5042 = vpack.c.b16 %v4978, %v4978
    %v5043 = vpack.c.b16 %v4979, %v4979
    %v5044 = vpack.c.b16 %v4980, %v4980
    %v5045 = vpack.c.b16 %v4981, %v4981
    %v5046 = vpack.c.b16 %v4982, %v4982
    %v5047 = vpack.c.b16 %v4983, %v4983
    %v5048 = vpack.c.b16 %v4984, %v4984
    %v5049 = vpack.c.b16 %v4985, %v4985
    %v5050 = vpack.c.b16 %v4986, %v4986
    %v5051 = vpack.c.b16 %v4987, %v4987
    %v5052 = vpack.c.b16 %v4988, %v4988
    %v5053 = vpack.c.b16 %v4989, %v4989
    %v5054 = vpack.c.b16 %v4990, %v4990
    %v5055 = vpack.c.b16 %v4991, %v4991
    %v5056 = vpack.c.b16 %v4992, %v4992
    %v5057 = vpack.c.b16 %v4993, %v4993
    %v5058 = vpack.c.b16 %v4994, %v4994
    %v5059 = vpack.c.b16 %v4995, %v4995
    %v5060 = vpack.c.b16 %v4996, %v4996
    %v5061 = vpack.c.b16 %v4997, %v4997
    %v5062 = vpack.c.b16 %v4998, %v4998
    %v5063 = vpack.c.b16 %v4999, %v4999
    %v5064 = vpack.c.b16 %v5000, %v5000
    %v5065 = vpack.c.b16 %v5001, %v5001
    %v5066 = vpack.c.b16 %v5002, %v5002
    %v5067 = vpack.c.b16 %v5003, %v5003
    %v5068 = vpack.c.b16 %v5004, %v5004
    %v5069 = vpack.c.b16 %v5005, %v5005
    %v5070 = vpack.c.b16 %v5006, %v5006
    %v5071 = vpack.c.b16 %v5007, %v5007
    %v5072 = vpack.c.b16 %v5008, %v5008
    %v5073 = vpack.c.b16 %v5009, %v5009
    %v5074 = vpack.c.b16 %v5010, %v5010
    %v5075 = vpack.c.b16 %v5011, %v5011
    %v5076 = vpack.c.b16 %v5012, %v5012
    %v5077 = vpack.c.b16 %v5013, %v5013
    %v5078 = vpack.c.b16 %v5014, %v5014
    %v5079 = vpack.c.b16 %v5015, %v5015
    %v5080 = vpack.c.b16 %v5016, %v5016
    %v5081 = vpack.c.b16 %v5017, %v5017
    %v5082 = vpack.c.b16 %v5018, %v5018
    %v5083 = vpack.c.b16 %v5019, %v5019
    %v5084 = vpack.c.b16 %v5020, %v5020
    %v5085 = vpack.c.b16 %v5021, %v5021
    %v5086 = vpack.c.b16 %v5022, %v5022
    %v5087 = vpack.c.b16 %v5023, %v5023
    %v5088 = vpack.c.b16 %v5024, %v5024
    %v5089 = vpack.c.b16 %v5025, %v5025
    %5154 = vst.msk [vmem:[#allocation3 + $0xc] sm:$0xf] %vm2463, %v5026
    %5155 = vst.msk [vmem:[#allocation3 + $0x20] sm:$0xf] %vm2463, %v5027
    %5156 = vst.msk [vmem:[#allocation3 + $0x34] sm:$0xf] %vm2463, %v5028
    %5157 = vst.msk [vmem:[#allocation3 + $0x48] sm:$0xf] %vm2463, %v5029
    %5158 = vst.msk [vmem:[#allocation3 + $0x5c] sm:$0xf] %vm2463, %v5030
    %5159 = vst.msk [vmem:[#allocation3 + $0x70] sm:$0xf] %vm2463, %v5031
    %5160 = vst.msk [vmem:[#allocation3 + $0x84] sm:$0xf] %vm2463, %v5032
    %5161 = vst.msk [vmem:[#allocation3 + $0x98] sm:$0xf] %vm2463, %v5033
    %5162 = vst.msk [vmem:[#allocation3 + $0xac] sm:$0xf] %vm2463, %v5034
    %5163 = vst.msk [vmem:[#allocation3 + $0xc0] sm:$0xf] %vm2463, %v5035
    %5164 = vst.msk [vmem:[#allocation3 + $0xd4] sm:$0xf] %vm2463, %v5036
    %5165 = vst.msk [vmem:[#allocation3 + $0xe8] sm:$0xf] %vm2463, %v5037
    %5166 = vst.msk [vmem:[#allocation3 + $0xfc] sm:$0xf] %vm2463, %v5038
    %5167 = vst.msk [vmem:[#allocation3 + $0x110] sm:$0xf] %vm2463, %v5039
    %5168 = vst.msk [vmem:[#allocation3 + $0x124] sm:$0xf] %vm2463, %v5040
    %5169 = vst.msk [vmem:[#allocation3 + $0x138] sm:$0xf] %vm2463, %v5041
    %5170 = vst.msk [vmem:[#allocation3 + $0x14c] sm:$0xf] %vm2463, %v5042
    %5171 = vst.msk [vmem:[#allocation3 + $0x160] sm:$0xf] %vm2463, %v5043
    %5172 = vst.msk [vmem:[#allocation3 + $0x174] sm:$0xf] %vm2463, %v5044
    %5173 = vst.msk [vmem:[#allocation3 + $0x188] sm:$0xf] %vm2463, %v5045
    %5174 = vst.msk [vmem:[#allocation3 + $0x19c] sm:$0xf] %vm2463, %v5046
    %5175 = vst.msk [vmem:[#allocation3 + $0x1b0] sm:$0xf] %vm2463, %v5047
    %5176 = vst.msk [vmem:[#allocation3 + $0x1c4] sm:$0xf] %vm2463, %v5048
    %5177 = vst.msk [vmem:[#allocation3 + $0x1d8] sm:$0xf] %vm2463, %v5049
    %5178 = vst.msk [vmem:[#allocation3 + $0x1ec] sm:$0xf] %vm2463, %v5050
    %5179 = vst.msk [vmem:[#allocation3 + $0x200] sm:$0xf] %vm2463, %v5051
    %5180 = vst.msk [vmem:[#allocation3 + $0x214] sm:$0xf] %vm2463, %v5052
    %5181 = vst.msk [vmem:[#allocation3 + $0x228] sm:$0xf] %vm2463, %v5053
    %5182 = vst.msk [vmem:[#allocation3 + $0x23c] sm:$0xf] %vm2463, %v5054
    %5183 = vst.msk [vmem:[#allocation3 + $0x250] sm:$0xf] %vm2463, %v5055
    %5184 = vst.msk [vmem:[#allocation3 + $0x264] sm:$0xf] %vm2463, %v5056
    %5185 = vst.msk [vmem:[#allocation3 + $0x278] sm:$0xf] %vm2463, %v5057
    %5186 = vst.msk [vmem:[#allocation3 + $0x28c] sm:$0xf] %vm2463, %v5058
    %5187 = vst.msk [vmem:[#allocation3 + $0x2a0] sm:$0xf] %vm2463, %v5059
    %5188 = vst.msk [vmem:[#allocation3 + $0x2b4] sm:$0xf] %vm2463, %v5060
    %5189 = vst.msk [vmem:[#allocation3 + $0x2c8] sm:$0xf] %vm2463, %v5061
    %5190 = vst.msk [vmem:[#allocation3 + $0x2dc] sm:$0xf] %vm2463, %v5062
    %5191 = vst.msk [vmem:[#allocation3 + $0x2f0] sm:$0xf] %vm2463, %v5063
    %5192 = vst.msk [vmem:[#allocation3 + $0x304] sm:$0xf] %vm2463, %v5064
    %5193 = vst.msk [vmem:[#allocation3 + $0x318] sm:$0xf] %vm2463, %v5065
    %5194 = vst.msk [vmem:[#allocation3 + $0x32c] sm:$0xf] %vm2463, %v5066
    %5195 = vst.msk [vmem:[#allocation3 + $0x340] sm:$0xf] %vm2463, %v5067
    %5196 = vst.msk [vmem:[#allocation3 + $0x354] sm:$0xf] %vm2463, %v5068
    %5197 = vst.msk [vmem:[#allocation3 + $0x368] sm:$0xf] %vm2463, %v5069
    %5198 = vst.msk [vmem:[#allocation3 + $0x37c] sm:$0xf] %vm2463, %v5070
    %5199 = vst.msk [vmem:[#allocation3 + $0x390] sm:$0xf] %vm2463, %v5071
    %5200 = vst.msk [vmem:[#allocation3 + $0x3a4] sm:$0xf] %vm2463, %v5072
    %5201 = vst.msk [vmem:[#allocation3 + $0x3b8] sm:$0xf] %vm2463, %v5073
    %5202 = vst.msk [vmem:[#allocation3 + $0x3cc] sm:$0xf] %vm2463, %v5074
    %5203 = vst.msk [vmem:[#allocation3 + $0x3e0] sm:$0xf] %vm2463, %v5075
    %5204 = vst.msk [vmem:[#allocation3 + $0x3f4] sm:$0xf] %vm2463, %v5076
    %5205 = vst.msk [vmem:[#allocation3 + $0x408] sm:$0xf] %vm2463, %v5077
    %5206 = vst.msk [vmem:[#allocation3 + $0x41c] sm:$0xf] %vm2463, %v5078
    %5207 = vst.msk [vmem:[#allocation3 + $0x430] sm:$0xf] %vm2463, %v5079
    %5208 = vst.msk [vmem:[#allocation3 + $0x444] sm:$0xf] %vm2463, %v5080
    %5209 = vst.msk [vmem:[#allocation3 + $0x458] sm:$0xf] %vm2463, %v5081
    %5210 = vst.msk [vmem:[#allocation3 + $0x46c] sm:$0xf] %vm2463, %v5082
    %5211 = vst.msk [vmem:[#allocation3 + $0x480] sm:$0xf] %vm2463, %v5083
    %5212 = vst.msk [vmem:[#allocation3 + $0x494] sm:$0xf] %vm2463, %v5084
    %5213 = vst.msk [vmem:[#allocation3 + $0x4a8] sm:$0xf] %vm2463, %v5085
    %5214 = vst.msk [vmem:[#allocation3 + $0x4bc] sm:$0xf] %vm2463, %v5086
    %5215 = vst.msk [vmem:[#allocation3 + $0x4d0] sm:$0xf] %vm2463, %v5087
    %5216 = vst.msk [vmem:[#allocation3 + $0x4e4] sm:$0xf] %vm2463, %v5088
    %5217 = vst.msk [vmem:[#allocation3 + $0x4f8] sm:$0xf] %vm2463, %v5089
    %v5218 = vld [vmem:[%s4833 + $0x1] sm:$0xff]
    %v5219 = vld [vmem:[%s4833 + $0x9] sm:$0xff]
    %v5220 = vld [vmem:[%s4833 + $0x19] sm:$0xff]
    %v5221 = vld [vmem:[%s4833 + $0x21] sm:$0xff]
    %v5222 = vld [vmem:[%s4833 + $0x31] sm:$0xff]
    %v5223 = vld [vmem:[%s4833 + $0x39] sm:$0xff]
    %v5224 = vld [vmem:[%s4833 + $0x49] sm:$0xff]
    %v5225 = vld [vmem:[%s4833 + $0x51] sm:$0xff]
    %v5226 = vld [vmem:[%s4833 + $0x61] sm:$0xff]
    %v5227 = vld [vmem:[%s4833 + $0x69] sm:$0xff]
    %v5228 = vld [vmem:[%s4833 + $0x79] sm:$0xff]
    %v5229 = vld [vmem:[%s4833 + $0x81] sm:$0xff]
    %v5230 = vld [vmem:[%s4833 + $0x91] sm:$0xff]
    %v5231 = vld [vmem:[%s4833 + $0x99] sm:$0xff]
    %v5232 = vld [vmem:[%s4833 + $0xa9] sm:$0xff]
    %v5233 = vld [vmem:[%s4833 + $0xb1] sm:$0xff]
    %v5234 = vld [vmem:[%s4833 + $0xc1] sm:$0xff]
    %v5235 = vld [vmem:[%s4833 + $0xc9] sm:$0xff]
    %v5236 = vld [vmem:[%s4833 + $0xd9] sm:$0xff]
    %v5237 = vld [vmem:[%s4833 + $0xe1] sm:$0xff]
    %v5238 = vld [vmem:[%s4833 + $0xf1] sm:$0xff]
    %v5239 = vld [vmem:[%s4833 + $0xf9] sm:$0xff]
    %v5240 = vld [vmem:[%s4833 + $0x109] sm:$0xff]
    %v5241 = vld [vmem:[%s4833 + $0x111] sm:$0xff]
    %v5242 = vld [vmem:[%s4833 + $0x121] sm:$0xff]
    %v5243 = vld [vmem:[%s4833 + $0x129] sm:$0xff]
    %v5244 = vld [vmem:[%s4833 + $0x139] sm:$0xff]
    %v5245 = vld [vmem:[%s4833 + $0x141] sm:$0xff]
    %v5246 = vld [vmem:[%s4833 + $0x151] sm:$0xff]
    %v5247 = vld [vmem:[%s4833 + $0x159] sm:$0xff]
    %v5248 = vld [vmem:[%s4833 + $0x169] sm:$0xff]
    %v5249 = vld [vmem:[%s4833 + $0x171] sm:$0xff]
    %v5250 = vld [vmem:[%s4833 + $0x1b1] sm:$0xff]
    %v5251 = vld [vmem:[%s4833 + $0x1b9] sm:$0xff]
    %v5252 = vld [vmem:[%s4833 + $0x1c9] sm:$0xff]
    %v5253 = vld [vmem:[%s4833 + $0x1d1] sm:$0xff]
    %v5254 = vld [vmem:[%s4833 + $0x1e1] sm:$0xff]
    %v5255 = vld [vmem:[%s4833 + $0x1e9] sm:$0xff]
    %v5256 = vld [vmem:[%s4833 + $0x1f9] sm:$0xff]
    %v5257 = vld [vmem:[%s4833 + $0x201] sm:$0xff]
    %v5258 = vld [vmem:[%s4833 + $0x211] sm:$0xff]
    %v5259 = vld [vmem:[%s4833 + $0x219] sm:$0xff]
    %v5260 = vld [vmem:[%s4833 + $0x229] sm:$0xff]
    %v5261 = vld [vmem:[%s4833 + $0x231] sm:$0xff]
    %v5262 = vld [vmem:[%s4833 + $0x241] sm:$0xff]
    %v5263 = vld [vmem:[%s4833 + $0x249] sm:$0xff]
    %v5264 = vld [vmem:[%s4833 + $0x259] sm:$0xff]
    %v5265 = vld [vmem:[%s4833 + $0x261] sm:$0xff]
    %v5266 = vld [vmem:[%s4833 + $0x271] sm:$0xff]
    %v5267 = vld [vmem:[%s4833 + $0x279] sm:$0xff]
    %v5268 = vld [vmem:[%s4833 + $0x289] sm:$0xff]
    %v5269 = vld [vmem:[%s4833 + $0x291] sm:$0xff]
    %v5270 = vld [vmem:[%s4833 + $0x2a1] sm:$0xff]
    %v5271 = vld [vmem:[%s4833 + $0x2a9] sm:$0xff]
    %v5272 = vld [vmem:[%s4833 + $0x2b9] sm:$0xff]
    %v5273 = vld [vmem:[%s4833 + $0x2c1] sm:$0xff]
    %v5274 = vld [vmem:[%s4833 + $0x2d1] sm:$0xff]
    %v5275 = vld [vmem:[%s4833 + $0x2d9] sm:$0xff]
    %v5276 = vld [vmem:[%s4833 + $0x2e9] sm:$0xff]
    %v5277 = vld [vmem:[%s4833 + $0x2f1] sm:$0xff]
    %v5278 = vld [vmem:[%s4833 + $0x301] sm:$0xff]
    %v5279 = vld [vmem:[%s4833 + $0x309] sm:$0xff]
    %v5280 = vld [vmem:[%s4833 + $0x319] sm:$0xff]
    %v5281 = vld [vmem:[%s4833 + $0x321] sm:$0xff]
    %v5282 = vpack.c.bf16 %v5219, %v5218
    %v5283 = vpack.c.bf16 %v5221, %v5220
    %v5284 = vpack.c.bf16 %v5223, %v5222
    %v5285 = vpack.c.bf16 %v5225, %v5224
    %v5286 = vpack.c.bf16 %v5227, %v5226
    %v5287 = vpack.c.bf16 %v5229, %v5228
    %v5288 = vpack.c.bf16 %v5231, %v5230
    %v5289 = vpack.c.bf16 %v5233, %v5232
    %v5290 = vpack.c.bf16 %v5235, %v5234
    %v5291 = vpack.c.bf16 %v5237, %v5236
    %v5292 = vpack.c.bf16 %v5239, %v5238
    %v5293 = vpack.c.bf16 %v5241, %v5240
    %v5294 = vpack.c.bf16 %v5243, %v5242
    %v5295 = vpack.c.bf16 %v5245, %v5244
    %v5296 = vpack.c.bf16 %v5247, %v5246
    %v5297 = vpack.c.bf16 %v5249, %v5248
    %v5298 = vpack.c.bf16 %v5251, %v5250
    %v5299 = vpack.c.bf16 %v5253, %v5252
    %v5300 = vpack.c.bf16 %v5255, %v5254
    %v5301 = vpack.c.bf16 %v5257, %v5256
    %v5302 = vpack.c.bf16 %v5259, %v5258
    %v5303 = vpack.c.bf16 %v5261, %v5260
    %v5304 = vpack.c.bf16 %v5263, %v5262
    %v5305 = vpack.c.bf16 %v5265, %v5264
    %v5306 = vpack.c.bf16 %v5267, %v5266
    %v5307 = vpack.c.bf16 %v5269, %v5268
    %v5308 = vpack.c.bf16 %v5271, %v5270
    %v5309 = vpack.c.bf16 %v5273, %v5272
    %v5310 = vpack.c.bf16 %v5275, %v5274
    %v5311 = vpack.c.bf16 %v5277, %v5276
    %v5312 = vpack.c.bf16 %v5279, %v5278
    %v5313 = vpack.c.bf16 %v5281, %v5280
    %v5346 = vunpack.c.l.b16 %v5282
    %v5347 = vunpack.c.h.b16 %v5282
    %v5348 = vunpack.c.l.b16 %v5283
    %v5349 = vunpack.c.h.b16 %v5283
    %v5350 = vunpack.c.l.b16 %v5284
    %v5351 = vunpack.c.h.b16 %v5284
    %v5352 = vunpack.c.l.b16 %v5285
    %v5353 = vunpack.c.h.b16 %v5285
    %v5354 = vunpack.c.l.b16 %v5286
    %v5355 = vunpack.c.h.b16 %v5286
    %v5356 = vunpack.c.l.b16 %v5287
    %v5357 = vunpack.c.h.b16 %v5287
    %v5358 = vunpack.c.l.b16 %v5288
    %v5359 = vunpack.c.h.b16 %v5288
    %v5360 = vunpack.c.l.b16 %v5289
    %v5361 = vunpack.c.h.b16 %v5289
    %v5362 = vunpack.c.l.b16 %v5290
    %v5363 = vunpack.c.h.b16 %v5290
    %v5364 = vunpack.c.l.b16 %v5291
    %v5365 = vunpack.c.h.b16 %v5291
    %v5366 = vunpack.c.l.b16 %v5292
    %v5367 = vunpack.c.h.b16 %v5292
    %v5368 = vunpack.c.l.b16 %v5293
    %v5369 = vunpack.c.h.b16 %v5293
    %v5370 = vunpack.c.l.b16 %v5294
    %v5371 = vunpack.c.h.b16 %v5294
    %v5372 = vunpack.c.l.b16 %v5295
    %v5373 = vunpack.c.h.b16 %v5295
    %v5374 = vunpack.c.l.b16 %v5296
    %v5375 = vunpack.c.h.b16 %v5296
    %v5376 = vunpack.c.l.b16 %v5297
    %v5377 = vunpack.c.h.b16 %v5297
    %v5378 = vunpack.c.l.b16 %v5298
    %v5379 = vunpack.c.h.b16 %v5298
    %v5380 = vunpack.c.l.b16 %v5299
    %v5381 = vunpack.c.h.b16 %v5299
    %v5382 = vunpack.c.l.b16 %v5300
    %v5383 = vunpack.c.h.b16 %v5300
    %v5384 = vunpack.c.l.b16 %v5301
    %v5385 = vunpack.c.h.b16 %v5301
    %v5386 = vunpack.c.l.b16 %v5302
    %v5387 = vunpack.c.h.b16 %v5302
    %v5388 = vunpack.c.l.b16 %v5303
    %v5389 = vunpack.c.h.b16 %v5303
    %v5390 = vunpack.c.l.b16 %v5304
    %v5391 = vunpack.c.h.b16 %v5304
    %v5392 = vunpack.c.l.b16 %v5305
    %v5393 = vunpack.c.h.b16 %v5305
    %v5394 = vunpack.c.l.b16 %v5306
    %v5395 = vunpack.c.h.b16 %v5306
    %v5396 = vunpack.c.l.b16 %v5307
    %v5397 = vunpack.c.h.b16 %v5307
    %v5398 = vunpack.c.l.b16 %v5308
    %v5399 = vunpack.c.h.b16 %v5308
    %v5400 = vunpack.c.l.b16 %v5309
    %v5401 = vunpack.c.h.b16 %v5309
    %v5402 = vunpack.c.l.b16 %v5310
    %v5403 = vunpack.c.h.b16 %v5310
    %v5404 = vunpack.c.l.b16 %v5311
    %v5405 = vunpack.c.h.b16 %v5311
    %v5406 = vunpack.c.l.b16 %v5312
    %v5407 = vunpack.c.h.b16 %v5312
    %v5408 = vunpack.c.l.b16 %v5313
    %v5409 = vunpack.c.h.b16 %v5313
    %v5410 = vpack.c.b16 %v5346, %v5346
    %v5411 = vpack.c.b16 %v5347, %v5347
    %v5412 = vpack.c.b16 %v5348, %v5348
    %v5413 = vpack.c.b16 %v5349, %v5349
    %v5414 = vpack.c.b16 %v5350, %v5350
    %v5415 = vpack.c.b16 %v5351, %v5351
    %v5416 = vpack.c.b16 %v5352, %v5352
    %v5417 = vpack.c.b16 %v5353, %v5353
    %v5418 = vpack.c.b16 %v5354, %v5354
    %v5419 = vpack.c.b16 %v5355, %v5355
    %v5420 = vpack.c.b16 %v5356, %v5356
    %v5421 = vpack.c.b16 %v5357, %v5357
    %v5422 = vpack.c.b16 %v5358, %v5358
    %v5423 = vpack.c.b16 %v5359, %v5359
    %v5424 = vpack.c.b16 %v5360, %v5360
    %v5425 = vpack.c.b16 %v5361, %v5361
    %v5426 = vpack.c.b16 %v5362, %v5362
    %v5427 = vpack.c.b16 %v5363, %v5363
    %v5428 = vpack.c.b16 %v5364, %v5364
    %v5429 = vpack.c.b16 %v5365, %v5365
    %v5430 = vpack.c.b16 %v5366, %v5366
    %v5431 = vpack.c.b16 %v5367, %v5367
    %v5432 = vpack.c.b16 %v5368, %v5368
    %v5433 = vpack.c.b16 %v5369, %v5369
    %v5434 = vpack.c.b16 %v5370, %v5370
    %v5435 = vpack.c.b16 %v5371, %v5371
    %v5436 = vpack.c.b16 %v5372, %v5372
    %v5437 = vpack.c.b16 %v5373, %v5373
    %v5438 = vpack.c.b16 %v5374, %v5374
    %v5439 = vpack.c.b16 %v5375, %v5375
    %v5440 = vpack.c.b16 %v5376, %v5376
    %v5441 = vpack.c.b16 %v5377, %v5377
    %v5442 = vpack.c.b16 %v5378, %v5378
    %v5443 = vpack.c.b16 %v5379, %v5379
    %v5444 = vpack.c.b16 %v5380, %v5380
    %v5445 = vpack.c.b16 %v5381, %v5381
    %v5446 = vpack.c.b16 %v5382, %v5382
    %v5447 = vpack.c.b16 %v5383, %v5383
    %v5448 = vpack.c.b16 %v5384, %v5384
    %v5449 = vpack.c.b16 %v5385, %v5385
    %v5450 = vpack.c.b16 %v5386, %v5386
    %v5451 = vpack.c.b16 %v5387, %v5387
    %v5452 = vpack.c.b16 %v5388, %v5388
    %v5453 = vpack.c.b16 %v5389, %v5389
    %v5454 = vpack.c.b16 %v5390, %v5390
    %v5455 = vpack.c.b16 %v5391, %v5391
    %v5456 = vpack.c.b16 %v5392, %v5392
    %v5457 = vpack.c.b16 %v5393, %v5393
    %v5458 = vpack.c.b16 %v5394, %v5394
    %v5459 = vpack.c.b16 %v5395, %v5395
    %v5460 = vpack.c.b16 %v5396, %v5396
    %v5461 = vpack.c.b16 %v5397, %v5397
    %v5462 = vpack.c.b16 %v5398, %v5398
    %v5463 = vpack.c.b16 %v5399, %v5399
    %v5464 = vpack.c.b16 %v5400, %v5400
    %v5465 = vpack.c.b16 %v5401, %v5401
    %v5466 = vpack.c.b16 %v5402, %v5402
    %v5467 = vpack.c.b16 %v5403, %v5403
    %v5468 = vpack.c.b16 %v5404, %v5404
    %v5469 = vpack.c.b16 %v5405, %v5405
    %v5470 = vpack.c.b16 %v5406, %v5406
    %v5471 = vpack.c.b16 %v5407, %v5407
    %v5472 = vpack.c.b16 %v5408, %v5408
    %v5473 = vpack.c.b16 %v5409, %v5409
    %5474 = vrot.lane.b32.xlu0 %v5410, 64
    %v5475 = vpop.permute.xlu0 %5474
    %5476 = vrot.lane.b32.xlu0 %v5411, 64
    %v5477 = vpop.permute.xlu0 %5476
    %5478 = vrot.lane.b32.xlu0 %v5412, 64
    %v5479 = vpop.permute.xlu0 %5478
    %5480 = vrot.lane.b32.xlu0 %v5413, 64
    %v5481 = vpop.permute.xlu0 %5480
    %5482 = vrot.lane.b32.xlu0 %v5414, 64
    %v5483 = vpop.permute.xlu0 %5482
    %5484 = vrot.lane.b32.xlu0 %v5415, 64
    %v5485 = vpop.permute.xlu0 %5484
    %5486 = vrot.lane.b32.xlu0 %v5416, 64
    %v5487 = vpop.permute.xlu0 %5486
    %5488 = vrot.lane.b32.xlu0 %v5417, 64
    %v5489 = vpop.permute.xlu0 %5488
    %5490 = vrot.lane.b32.xlu0 %v5418, 64
    %v5491 = vpop.permute.xlu0 %5490
    %5492 = vrot.lane.b32.xlu0 %v5419, 64
    %v5493 = vpop.permute.xlu0 %5492
    %5494 = vrot.lane.b32.xlu0 %v5420, 64
    %v5495 = vpop.permute.xlu0 %5494
    %5496 = vrot.lane.b32.xlu0 %v5421, 64
    %v5497 = vpop.permute.xlu0 %5496
    %5498 = vrot.lane.b32.xlu0 %v5422, 64
    %v5499 = vpop.permute.xlu0 %5498
    %5500 = vrot.lane.b32.xlu0 %v5423, 64
    %v5501 = vpop.permute.xlu0 %5500
    %5502 = vrot.lane.b32.xlu0 %v5424, 64
    %v5503 = vpop.permute.xlu0 %5502
    %5504 = vrot.lane.b32.xlu0 %v5425, 64
    %v5505 = vpop.permute.xlu0 %5504
    %5506 = vrot.lane.b32.xlu0 %v5426, 64
    %v5507 = vpop.permute.xlu0 %5506
    %5508 = vrot.lane.b32.xlu0 %v5427, 64
    %v5509 = vpop.permute.xlu0 %5508
    %5510 = vrot.lane.b32.xlu0 %v5428, 64
    %v5511 = vpop.permute.xlu0 %5510
    %5512 = vrot.lane.b32.xlu0 %v5429, 64
    %v5513 = vpop.permute.xlu0 %5512
    %5514 = vrot.lane.b32.xlu0 %v5430, 64
    %v5515 = vpop.permute.xlu0 %5514
    %5516 = vrot.lane.b32.xlu0 %v5431, 64
    %v5517 = vpop.permute.xlu0 %5516
    %5518 = vrot.lane.b32.xlu0 %v5432, 64
    %v5519 = vpop.permute.xlu0 %5518
    %5520 = vrot.lane.b32.xlu0 %v5433, 64
    %v5521 = vpop.permute.xlu0 %5520
    %5522 = vrot.lane.b32.xlu0 %v5434, 64
    %v5523 = vpop.permute.xlu0 %5522
    %5524 = vrot.lane.b32.xlu0 %v5435, 64
    %v5525 = vpop.permute.xlu0 %5524
    %5526 = vrot.lane.b32.xlu0 %v5436, 64
    %v5527 = vpop.permute.xlu0 %5526
    %5528 = vrot.lane.b32.xlu0 %v5437, 64
    %v5529 = vpop.permute.xlu0 %5528
    %5530 = vrot.lane.b32.xlu0 %v5438, 64
    %v5531 = vpop.permute.xlu0 %5530
    %5532 = vrot.lane.b32.xlu0 %v5439, 64
    %v5533 = vpop.permute.xlu0 %5532
    %5534 = vrot.lane.b32.xlu0 %v5440, 64
    %v5535 = vpop.permute.xlu0 %5534
    %5536 = vrot.lane.b32.xlu0 %v5441, 64
    %v5537 = vpop.permute.xlu0 %5536
    %5538 = vrot.lane.b32.xlu0 %v5442, 64
    %v5539 = vpop.permute.xlu0 %5538
    %5540 = vrot.lane.b32.xlu0 %v5443, 64
    %v5541 = vpop.permute.xlu0 %5540
    %5542 = vrot.lane.b32.xlu0 %v5444, 64
    %v5543 = vpop.permute.xlu0 %5542
    %5544 = vrot.lane.b32.xlu0 %v5445, 64
    %v5545 = vpop.permute.xlu0 %5544
    %5546 = vrot.lane.b32.xlu0 %v5446, 64
    %v5547 = vpop.permute.xlu0 %5546
    %5548 = vrot.lane.b32.xlu0 %v5447, 64
    %v5549 = vpop.permute.xlu0 %5548
    %5550 = vrot.lane.b32.xlu0 %v5448, 64
    %v5551 = vpop.permute.xlu0 %5550
    %5552 = vrot.lane.b32.xlu0 %v5449, 64
    %v5553 = vpop.permute.xlu0 %5552
    %5554 = vrot.lane.b32.xlu0 %v5450, 64
    %v5555 = vpop.permute.xlu0 %5554
    %5556 = vrot.lane.b32.xlu0 %v5451, 64
    %v5557 = vpop.permute.xlu0 %5556
    %5558 = vrot.lane.b32.xlu0 %v5452, 64
    %v5559 = vpop.permute.xlu0 %5558
    %5560 = vrot.lane.b32.xlu0 %v5453, 64
    %v5561 = vpop.permute.xlu0 %5560
    %5562 = vrot.lane.b32.xlu0 %v5454, 64
    %v5563 = vpop.permute.xlu0 %5562
    %5564 = vrot.lane.b32.xlu0 %v5455, 64
    %v5565 = vpop.permute.xlu0 %5564
    %5566 = vrot.lane.b32.xlu0 %v5456, 64
    %v5567 = vpop.permute.xlu0 %5566
    %5568 = vrot.lane.b32.xlu0 %v5457, 64
    %v5569 = vpop.permute.xlu0 %5568
    %5570 = vrot.lane.b32.xlu0 %v5458, 64
    %v5571 = vpop.permute.xlu0 %5570
    %5572 = vrot.lane.b32.xlu0 %v5459, 64
    %v5573 = vpop.permute.xlu0 %5572
    %5574 = vrot.lane.b32.xlu0 %v5460, 64
    %v5575 = vpop.permute.xlu0 %5574
    %5576 = vrot.lane.b32.xlu0 %v5461, 64
    %v5577 = vpop.permute.xlu0 %5576
    %5578 = vrot.lane.b32.xlu0 %v5462, 64
    %v5579 = vpop.permute.xlu0 %5578
    %5580 = vrot.lane.b32.xlu0 %v5463, 64
    %v5581 = vpop.permute.xlu0 %5580
    %5582 = vrot.lane.b32.xlu0 %v5464, 64
    %v5583 = vpop.permute.xlu0 %5582
    %5584 = vrot.lane.b32.xlu0 %v5465, 64
    %v5585 = vpop.permute.xlu0 %5584
    %5586 = vrot.lane.b32.xlu0 %v5466, 64
    %v5587 = vpop.permute.xlu0 %5586
    %5588 = vrot.lane.b32.xlu0 %v5467, 64
    %v5589 = vpop.permute.xlu0 %5588
    %5590 = vrot.lane.b32.xlu0 %v5468, 64
    %v5591 = vpop.permute.xlu0 %5590
    %5592 = vrot.lane.b32.xlu0 %v5469, 64
    %v5593 = vpop.permute.xlu0 %5592
    %5594 = vrot.lane.b32.xlu0 %v5470, 64
    %v5595 = vpop.permute.xlu0 %5594
    %5596 = vrot.lane.b32.xlu0 %v5471, 64
    %v5597 = vpop.permute.xlu0 %5596
    %5598 = vrot.lane.b32.xlu0 %v5472, 64
    %v5599 = vpop.permute.xlu0 %5598
    %5600 = vrot.lane.b32.xlu0 %v5473, 64
    %v5601 = vpop.permute.xlu0 %5600
    %5666 = vst.msk [vmem:[#allocation3 + $0xc] sm:$0xf] %vm2976, %v5475
    %5667 = vst.msk [vmem:[#allocation3 + $0x20] sm:$0xf] %vm2976, %v5477
    %5668 = vst.msk [vmem:[#allocation3 + $0x34] sm:$0xf] %vm2976, %v5479
    %5669 = vst.msk [vmem:[#allocation3 + $0x48] sm:$0xf] %vm2976, %v5481
    %5670 = vst.msk [vmem:[#allocation3 + $0x5c] sm:$0xf] %vm2976, %v5483
    %5671 = vst.msk [vmem:[#allocation3 + $0x70] sm:$0xf] %vm2976, %v5485
    %5672 = vst.msk [vmem:[#allocation3 + $0x84] sm:$0xf] %vm2976, %v5487
    %5673 = vst.msk [vmem:[#allocation3 + $0x98] sm:$0xf] %vm2976, %v5489
    %5674 = vst.msk [vmem:[#allocation3 + $0xac] sm:$0xf] %vm2976, %v5491
    %5675 = vst.msk [vmem:[#allocation3 + $0xc0] sm:$0xf] %vm2976, %v5493
    %5676 = vst.msk [vmem:[#allocation3 + $0xd4] sm:$0xf] %vm2976, %v5495
    %5677 = vst.msk [vmem:[#allocation3 + $0xe8] sm:$0xf] %vm2976, %v5497
    %5678 = vst.msk [vmem:[#allocation3 + $0xfc] sm:$0xf] %vm2976, %v5499
    %5679 = vst.msk [vmem:[#allocation3 + $0x110] sm:$0xf] %vm2976, %v5501
    %5680 = vst.msk [vmem:[#allocation3 + $0x124] sm:$0xf] %vm2976, %v5503
    %5681 = vst.msk [vmem:[#allocation3 + $0x138] sm:$0xf] %vm2976, %v5505
    %5682 = vst.msk [vmem:[#allocation3 + $0x14c] sm:$0xf] %vm2976, %v5507
    %5683 = vst.msk [vmem:[#allocation3 + $0x160] sm:$0xf] %vm2976, %v5509
    %5684 = vst.msk [vmem:[#allocation3 + $0x174] sm:$0xf] %vm2976, %v5511
    %5685 = vst.msk [vmem:[#allocation3 + $0x188] sm:$0xf] %vm2976, %v5513
    %5686 = vst.msk [vmem:[#allocation3 + $0x19c] sm:$0xf] %vm2976, %v5515
    %5687 = vst.msk [vmem:[#allocation3 + $0x1b0] sm:$0xf] %vm2976, %v5517
    %5688 = vst.msk [vmem:[#allocation3 + $0x1c4] sm:$0xf] %vm2976, %v5519
    %5689 = vst.msk [vmem:[#allocation3 + $0x1d8] sm:$0xf] %vm2976, %v5521
    %5690 = vst.msk [vmem:[#allocation3 + $0x1ec] sm:$0xf] %vm2976, %v5523
    %5691 = vst.msk [vmem:[#allocation3 + $0x200] sm:$0xf] %vm2976, %v5525
    %5692 = vst.msk [vmem:[#allocation3 + $0x214] sm:$0xf] %vm2976, %v5527
    %5693 = vst.msk [vmem:[#allocation3 + $0x228] sm:$0xf] %vm2976, %v5529
    %5694 = vst.msk [vmem:[#allocation3 + $0x23c] sm:$0xf] %vm2976, %v5531
    %5695 = vst.msk [vmem:[#allocation3 + $0x250] sm:$0xf] %vm2976, %v5533
    %5696 = vst.msk [vmem:[#allocation3 + $0x264] sm:$0xf] %vm2976, %v5535
    %5697 = vst.msk [vmem:[#allocation3 + $0x278] sm:$0xf] %vm2976, %v5537
    %5698 = vst.msk [vmem:[#allocation3 + $0x28c] sm:$0xf] %vm2976, %v5539
    %5699 = vst.msk [vmem:[#allocation3 + $0x2a0] sm:$0xf] %vm2976, %v5541
    %5700 = vst.msk [vmem:[#allocation3 + $0x2b4] sm:$0xf] %vm2976, %v5543
    %5701 = vst.msk [vmem:[#allocation3 + $0x2c8] sm:$0xf] %vm2976, %v5545
    %5702 = vst.msk [vmem:[#allocation3 + $0x2dc] sm:$0xf] %vm2976, %v5547
    %5703 = vst.msk [vmem:[#allocation3 + $0x2f0] sm:$0xf] %vm2976, %v5549
    %5704 = vst.msk [vmem:[#allocation3 + $0x304] sm:$0xf] %vm2976, %v5551
    %5705 = vst.msk [vmem:[#allocation3 + $0x318] sm:$0xf] %vm2976, %v5553
    %5706 = vst.msk [vmem:[#allocation3 + $0x32c] sm:$0xf] %vm2976, %v5555
    %5707 = vst.msk [vmem:[#allocation3 + $0x340] sm:$0xf] %vm2976, %v5557
    %5708 = vst.msk [vmem:[#allocation3 + $0x354] sm:$0xf] %vm2976, %v5559
    %5709 = vst.msk [vmem:[#allocation3 + $0x368] sm:$0xf] %vm2976, %v5561
    %5710 = vst.msk [vmem:[#allocation3 + $0x37c] sm:$0xf] %vm2976, %v5563
    %5711 = vst.msk [vmem:[#allocation3 + $0x390] sm:$0xf] %vm2976, %v5565
    %5712 = vst.msk [vmem:[#allocation3 + $0x3a4] sm:$0xf] %vm2976, %v5567
    %5713 = vst.msk [vmem:[#allocation3 + $0x3b8] sm:$0xf] %vm2976, %v5569
    %5714 = vst.msk [vmem:[#allocation3 + $0x3cc] sm:$0xf] %vm2976, %v5571
    %5715 = vst.msk [vmem:[#allocation3 + $0x3e0] sm:$0xf] %vm2976, %v5573
    %5716 = vst.msk [vmem:[#allocation3 + $0x3f4] sm:$0xf] %vm2976, %v5575
    %5717 = vst.msk [vmem:[#allocation3 + $0x408] sm:$0xf] %vm2976, %v5577
    %5718 = vst.msk [vmem:[#allocation3 + $0x41c] sm:$0xf] %vm2976, %v5579
    %5719 = vst.msk [vmem:[#allocation3 + $0x430] sm:$0xf] %vm2976, %v5581
    %5720 = vst.msk [vmem:[#allocation3 + $0x444] sm:$0xf] %vm2976, %v5583
    %5721 = vst.msk [vmem:[#allocation3 + $0x458] sm:$0xf] %vm2976, %v5585
    %5722 = vst.msk [vmem:[#allocation3 + $0x46c] sm:$0xf] %vm2976, %v5587
    %5723 = vst.msk [vmem:[#allocation3 + $0x480] sm:$0xf] %vm2976, %v5589
    %5724 = vst.msk [vmem:[#allocation3 + $0x494] sm:$0xf] %vm2976, %v5591
    %5725 = vst.msk [vmem:[#allocation3 + $0x4a8] sm:$0xf] %vm2976, %v5593
    %5726 = vst.msk [vmem:[#allocation3 + $0x4bc] sm:$0xf] %vm2976, %v5595
    %5727 = vst.msk [vmem:[#allocation3 + $0x4d0] sm:$0xf] %vm2976, %v5597
    %5728 = vst.msk [vmem:[#allocation3 + $0x4e4] sm:$0xf] %vm2976, %v5599
    %5729 = vst.msk [vmem:[#allocation3 + $0x4f8] sm:$0xf] %vm2976, %v5601
    %v5730 = vld [vmem:[%s4833 + $0x2] sm:$0xff]
    %v5731 = vld [vmem:[%s4833 + $0xa] sm:$0xff]
    %v5732 = vld [vmem:[%s4833 + $0x1a] sm:$0xff]
    %v5733 = vld [vmem:[%s4833 + $0x22] sm:$0xff]
    %v5734 = vld [vmem:[%s4833 + $0x32] sm:$0xff]
    %v5735 = vld [vmem:[%s4833 + $0x3a] sm:$0xff]
    %v5736 = vld [vmem:[%s4833 + $0x4a] sm:$0xff]
    %v5737 = vld [vmem:[%s4833 + $0x52] sm:$0xff]
    %v5738 = vld [vmem:[%s4833 + $0x62] sm:$0xff]
    %v5739 = vld [vmem:[%s4833 + $0x6a] sm:$0xff]
    %v5740 = vld [vmem:[%s4833 + $0x7a] sm:$0xff]
    %v5741 = vld [vmem:[%s4833 + $0x82] sm:$0xff]
    %v5742 = vld [vmem:[%s4833 + $0x92] sm:$0xff]
    %v5743 = vld [vmem:[%s4833 + $0x9a] sm:$0xff]
    %v5744 = vld [vmem:[%s4833 + $0xaa] sm:$0xff]
    %v5745 = vld [vmem:[%s4833 + $0xb2] sm:$0xff]
    %v5746 = vld [vmem:[%s4833 + $0xc2] sm:$0xff]
    %v5747 = vld [vmem:[%s4833 + $0xca] sm:$0xff]
    %v5748 = vld [vmem:[%s4833 + $0xda] sm:$0xff]
    %v5749 = vld [vmem:[%s4833 + $0xe2] sm:$0xff]
    %v5750 = vld [vmem:[%s4833 + $0xf2] sm:$0xff]
    %v5751 = vld [vmem:[%s4833 + $0xfa] sm:$0xff]
    %v5752 = vld [vmem:[%s4833 + $0x10a] sm:$0xff]
    %v5753 = vld [vmem:[%s4833 + $0x112] sm:$0xff]
    %v5754 = vld [vmem:[%s4833 + $0x122] sm:$0xff]
    %v5755 = vld [vmem:[%s4833 + $0x12a] sm:$0xff]
    %v5756 = vld [vmem:[%s4833 + $0x13a] sm:$0xff]
    %v5757 = vld [vmem:[%s4833 + $0x142] sm:$0xff]
    %v5758 = vld [vmem:[%s4833 + $0x152] sm:$0xff]
    %v5759 = vld [vmem:[%s4833 + $0x15a] sm:$0xff]
    %v5760 = vld [vmem:[%s4833 + $0x16a] sm:$0xff]
    %v5761 = vld [vmem:[%s4833 + $0x172] sm:$0xff]
    %v5762 = vld [vmem:[%s4833 + $0x1b2] sm:$0xff]
    %v5763 = vld [vmem:[%s4833 + $0x1ba] sm:$0xff]
    %v5764 = vld [vmem:[%s4833 + $0x1ca] sm:$0xff]
    %v5765 = vld [vmem:[%s4833 + $0x1d2] sm:$0xff]
    %v5766 = vld [vmem:[%s4833 + $0x1e2] sm:$0xff]
    %v5767 = vld [vmem:[%s4833 + $0x1ea] sm:$0xff]
    %v5768 = vld [vmem:[%s4833 + $0x1fa] sm:$0xff]
    %v5769 = vld [vmem:[%s4833 + $0x202] sm:$0xff]
    %v5770 = vld [vmem:[%s4833 + $0x212] sm:$0xff]
    %v5771 = vld [vmem:[%s4833 + $0x21a] sm:$0xff]
    %v5772 = vld [vmem:[%s4833 + $0x22a] sm:$0xff]
    %v5773 = vld [vmem:[%s4833 + $0x232] sm:$0xff]
    %v5774 = vld [vmem:[%s4833 + $0x242] sm:$0xff]
    %v5775 = vld [vmem:[%s4833 + $0x24a] sm:$0xff]
    %v5776 = vld [vmem:[%s4833 + $0x25a] sm:$0xff]
    %v5777 = vld [vmem:[%s4833 + $0x262] sm:$0xff]
    %v5778 = vld [vmem:[%s4833 + $0x272] sm:$0xff]
    %v5779 = vld [vmem:[%s4833 + $0x27a] sm:$0xff]
    %v5780 = vld [vmem:[%s4833 + $0x28a] sm:$0xff]
    %v5781 = vld [vmem:[%s4833 + $0x292] sm:$0xff]
    %v5782 = vld [vmem:[%s4833 + $0x2a2] sm:$0xff]
    %v5783 = vld [vmem:[%s4833 + $0x2aa] sm:$0xff]
    %v5784 = vld [vmem:[%s4833 + $0x2ba] sm:$0xff]
    %v5785 = vld [vmem:[%s4833 + $0x2c2] sm:$0xff]
    %v5786 = vld [vmem:[%s4833 + $0x2d2] sm:$0xff]
    %v5787 = vld [vmem:[%s4833 + $0x2da] sm:$0xff]
    %v5788 = vld [vmem:[%s4833 + $0x2ea] sm:$0xff]
    %v5789 = vld [vmem:[%s4833 + $0x2f2] sm:$0xff]
    %v5790 = vld [vmem:[%s4833 + $0x302] sm:$0xff]
    %v5791 = vld [vmem:[%s4833 + $0x30a] sm:$0xff]
    %v5792 = vld [vmem:[%s4833 + $0x31a] sm:$0xff]
    %v5793 = vld [vmem:[%s4833 + $0x322] sm:$0xff]
    %v5794 = vpack.c.bf16 %v5731, %v5730
    %v5795 = vpack.c.bf16 %v5733, %v5732
    %v5796 = vpack.c.bf16 %v5735, %v5734
    %v5797 = vpack.c.bf16 %v5737, %v5736
    %v5798 = vpack.c.bf16 %v5739, %v5738
    %v5799 = vpack.c.bf16 %v5741, %v5740
    %v5800 = vpack.c.bf16 %v5743, %v5742
    %v5801 = vpack.c.bf16 %v5745, %v5744
    %v5802 = vpack.c.bf16 %v5747, %v5746
    %v5803 = vpack.c.bf16 %v5749, %v5748
    %v5804 = vpack.c.bf16 %v5751, %v5750
    %v5805 = vpack.c.bf16 %v5753, %v5752
    %v5806 = vpack.c.bf16 %v5755, %v5754
    %v5807 = vpack.c.bf16 %v5757, %v5756
    %v5808 = vpack.c.bf16 %v5759, %v5758
    %v5809 = vpack.c.bf16 %v5761, %v5760
    %v5810 = vpack.c.bf16 %v5763, %v5762
    %v5811 = vpack.c.bf16 %v5765, %v5764
    %v5812 = vpack.c.bf16 %v5767, %v5766
    %v5813 = vpack.c.bf16 %v5769, %v5768
    %v5814 = vpack.c.bf16 %v5771, %v5770
    %v5815 = vpack.c.bf16 %v5773, %v5772
    %v5816 = vpack.c.bf16 %v5775, %v5774
    %v5817 = vpack.c.bf16 %v5777, %v5776
    %v5818 = vpack.c.bf16 %v5779, %v5778
    %v5819 = vpack.c.bf16 %v5781, %v5780
    %v5820 = vpack.c.bf16 %v5783, %v5782
    %v5821 = vpack.c.bf16 %v5785, %v5784
    %v5822 = vpack.c.bf16 %v5787, %v5786
    %v5823 = vpack.c.bf16 %v5789, %v5788
    %v5824 = vpack.c.bf16 %v5791, %v5790
    %v5825 = vpack.c.bf16 %v5793, %v5792
    %v5858 = vunpack.c.l.b16 %v5794
    %v5859 = vunpack.c.h.b16 %v5794
    %v5860 = vunpack.c.l.b16 %v5795
    %v5861 = vunpack.c.h.b16 %v5795
    %v5862 = vunpack.c.l.b16 %v5796
    %v5863 = vunpack.c.h.b16 %v5796
    %v5864 = vunpack.c.l.b16 %v5797
    %v5865 = vunpack.c.h.b16 %v5797
    %v5866 = vunpack.c.l.b16 %v5798
    %v5867 = vunpack.c.h.b16 %v5798
    %v5868 = vunpack.c.l.b16 %v5799
    %v5869 = vunpack.c.h.b16 %v5799
    %v5870 = vunpack.c.l.b16 %v5800
    %v5871 = vunpack.c.h.b16 %v5800
    %v5872 = vunpack.c.l.b16 %v5801
    %v5873 = vunpack.c.h.b16 %v5801
    %v5874 = vunpack.c.l.b16 %v5802
    %v5875 = vunpack.c.h.b16 %v5802
    %v5876 = vunpack.c.l.b16 %v5803
    %v5877 = vunpack.c.h.b16 %v5803
    %v5878 = vunpack.c.l.b16 %v5804
    %v5879 = vunpack.c.h.b16 %v5804
    %v5880 = vunpack.c.l.b16 %v5805
    %v5881 = vunpack.c.h.b16 %v5805
    %v5882 = vunpack.c.l.b16 %v5806
    %v5883 = vunpack.c.h.b16 %v5806
    %v5884 = vunpack.c.l.b16 %v5807
    %v5885 = vunpack.c.h.b16 %v5807
    %v5886 = vunpack.c.l.b16 %v5808
    %v5887 = vunpack.c.h.b16 %v5808
    %v5888 = vunpack.c.l.b16 %v5809
    %v5889 = vunpack.c.h.b16 %v5809
    %v5890 = vunpack.c.l.b16 %v5810
    %v5891 = vunpack.c.h.b16 %v5810
    %v5892 = vunpack.c.l.b16 %v5811
    %v5893 = vunpack.c.h.b16 %v5811
    %v5894 = vunpack.c.l.b16 %v5812
    %v5895 = vunpack.c.h.b16 %v5812
    %v5896 = vunpack.c.l.b16 %v5813
    %v5897 = vunpack.c.h.b16 %v5813
    %v5898 = vunpack.c.l.b16 %v5814
    %v5899 = vunpack.c.h.b16 %v5814
    %v5900 = vunpack.c.l.b16 %v5815
    %v5901 = vunpack.c.h.b16 %v5815
    %v5902 = vunpack.c.l.b16 %v5816
    %v5903 = vunpack.c.h.b16 %v5816
    %v5904 = vunpack.c.l.b16 %v5817
    %v5905 = vunpack.c.h.b16 %v5817
    %v5906 = vunpack.c.l.b16 %v5818
    %v5907 = vunpack.c.h.b16 %v5818
    %v5908 = vunpack.c.l.b16 %v5819
    %v5909 = vunpack.c.h.b16 %v5819
    %v5910 = vunpack.c.l.b16 %v5820
    %v5911 = vunpack.c.h.b16 %v5820
    %v5912 = vunpack.c.l.b16 %v5821
    %v5913 = vunpack.c.h.b16 %v5821
    %v5914 = vunpack.c.l.b16 %v5822
    %v5915 = vunpack.c.h.b16 %v5822
    %v5916 = vunpack.c.l.b16 %v5823
    %v5917 = vunpack.c.h.b16 %v5823
    %v5918 = vunpack.c.l.b16 %v5824
    %v5919 = vunpack.c.h.b16 %v5824
    %v5920 = vunpack.c.l.b16 %v5825
    %v5921 = vunpack.c.h.b16 %v5825
    %v5922 = vpack.c.b16 %v5858, %v5858
    %v5923 = vpack.c.b16 %v5859, %v5859
    %v5924 = vpack.c.b16 %v5860, %v5860
    %v5925 = vpack.c.b16 %v5861, %v5861
    %v5926 = vpack.c.b16 %v5862, %v5862
    %v5927 = vpack.c.b16 %v5863, %v5863
    %v5928 = vpack.c.b16 %v5864, %v5864
    %v5929 = vpack.c.b16 %v5865, %v5865
    %v5930 = vpack.c.b16 %v5866, %v5866
    %v5931 = vpack.c.b16 %v5867, %v5867
    %v5932 = vpack.c.b16 %v5868, %v5868
    %v5933 = vpack.c.b16 %v5869, %v5869
    %v5934 = vpack.c.b16 %v5870, %v5870
    %v5935 = vpack.c.b16 %v5871, %v5871
    %v5936 = vpack.c.b16 %v5872, %v5872
    %v5937 = vpack.c.b16 %v5873, %v5873
    %v5938 = vpack.c.b16 %v5874, %v5874
    %v5939 = vpack.c.b16 %v5875, %v5875
    %v5940 = vpack.c.b16 %v5876, %v5876
    %v5941 = vpack.c.b16 %v5877, %v5877
    %v5942 = vpack.c.b16 %v5878, %v5878
    %v5943 = vpack.c.b16 %v5879, %v5879
    %v5944 = vpack.c.b16 %v5880, %v5880
    %v5945 = vpack.c.b16 %v5881, %v5881
    %v5946 = vpack.c.b16 %v5882, %v5882
    %v5947 = vpack.c.b16 %v5883, %v5883
    %v5948 = vpack.c.b16 %v5884, %v5884
    %v5949 = vpack.c.b16 %v5885, %v5885
    %v5950 = vpack.c.b16 %v5886, %v5886
    %v5951 = vpack.c.b16 %v5887, %v5887
    %v5952 = vpack.c.b16 %v5888, %v5888
    %v5953 = vpack.c.b16 %v5889, %v5889
    %v5954 = vpack.c.b16 %v5890, %v5890
    %v5955 = vpack.c.b16 %v5891, %v5891
    %v5956 = vpack.c.b16 %v5892, %v5892
    %v5957 = vpack.c.b16 %v5893, %v5893
    %v5958 = vpack.c.b16 %v5894, %v5894
    %v5959 = vpack.c.b16 %v5895, %v5895
    %v5960 = vpack.c.b16 %v5896, %v5896
    %v5961 = vpack.c.b16 %v5897, %v5897
    %v5962 = vpack.c.b16 %v5898, %v5898
    %v5963 = vpack.c.b16 %v5899, %v5899
    %v5964 = vpack.c.b16 %v5900, %v5900
    %v5965 = vpack.c.b16 %v5901, %v5901
    %v5966 = vpack.c.b16 %v5902, %v5902
    %v5967 = vpack.c.b16 %v5903, %v5903
    %v5968 = vpack.c.b16 %v5904, %v5904
    %v5969 = vpack.c.b16 %v5905, %v5905
    %v5970 = vpack.c.b16 %v5906, %v5906
    %v5971 = vpack.c.b16 %v5907, %v5907
    %v5972 = vpack.c.b16 %v5908, %v5908
    %v5973 = vpack.c.b16 %v5909, %v5909
    %v5974 = vpack.c.b16 %v5910, %v5910
    %v5975 = vpack.c.b16 %v5911, %v5911
    %v5976 = vpack.c.b16 %v5912, %v5912
    %v5977 = vpack.c.b16 %v5913, %v5913
    %v5978 = vpack.c.b16 %v5914, %v5914
    %v5979 = vpack.c.b16 %v5915, %v5915
    %v5980 = vpack.c.b16 %v5916, %v5916
    %v5981 = vpack.c.b16 %v5917, %v5917
    %v5982 = vpack.c.b16 %v5918, %v5918
    %v5983 = vpack.c.b16 %v5919, %v5919
    %v5984 = vpack.c.b16 %v5920, %v5920
    %v5985 = vpack.c.b16 %v5921, %v5921
    %6050 = vst.msk [vmem:[#allocation3 + $0x10] sm:$0xf] %vm2463, %v5922
    %6051 = vst.msk [vmem:[#allocation3 + $0x24] sm:$0xf] %vm2463, %v5923
    %6052 = vst.msk [vmem:[#allocation3 + $0x38] sm:$0xf] %vm2463, %v5924
    %6053 = vst.msk [vmem:[#allocation3 + $0x4c] sm:$0xf] %vm2463, %v5925
    %6054 = vst.msk [vmem:[#allocation3 + $0x60] sm:$0xf] %vm2463, %v5926
    %6055 = vst.msk [vmem:[#allocation3 + $0x74] sm:$0xf] %vm2463, %v5927
    %6056 = vst.msk [vmem:[#allocation3 + $0x88] sm:$0xf] %vm2463, %v5928
    %6057 = vst.msk [vmem:[#allocation3 + $0x9c] sm:$0xf] %vm2463, %v5929
    %6058 = vst.msk [vmem:[#allocation3 + $0xb0] sm:$0xf] %vm2463, %v5930
    %6059 = vst.msk [vmem:[#allocation3 + $0xc4] sm:$0xf] %vm2463, %v5931
    %6060 = vst.msk [vmem:[#allocation3 + $0xd8] sm:$0xf] %vm2463, %v5932
    %6061 = vst.msk [vmem:[#allocation3 + $0xec] sm:$0xf] %vm2463, %v5933
    %6062 = vst.msk [vmem:[#allocation3 + $0x100] sm:$0xf] %vm2463, %v5934
    %6063 = vst.msk [vmem:[#allocation3 + $0x114] sm:$0xf] %vm2463, %v5935
    %6064 = vst.msk [vmem:[#allocation3 + $0x128] sm:$0xf] %vm2463, %v5936
    %6065 = vst.msk [vmem:[#allocation3 + $0x13c] sm:$0xf] %vm2463, %v5937
    %6066 = vst.msk [vmem:[#allocation3 + $0x150] sm:$0xf] %vm2463, %v5938
    %6067 = vst.msk [vmem:[#allocation3 + $0x164] sm:$0xf] %vm2463, %v5939
    %6068 = vst.msk [vmem:[#allocation3 + $0x178] sm:$0xf] %vm2463, %v5940
    %6069 = vst.msk [vmem:[#allocation3 + $0x18c] sm:$0xf] %vm2463, %v5941
    %6070 = vst.msk [vmem:[#allocation3 + $0x1a0] sm:$0xf] %vm2463, %v5942
    %6071 = vst.msk [vmem:[#allocation3 + $0x1b4] sm:$0xf] %vm2463, %v5943
    %6072 = vst.msk [vmem:[#allocation3 + $0x1c8] sm:$0xf] %vm2463, %v5944
    %6073 = vst.msk [vmem:[#allocation3 + $0x1dc] sm:$0xf] %vm2463, %v5945
    %6074 = vst.msk [vmem:[#allocation3 + $0x1f0] sm:$0xf] %vm2463, %v5946
    %6075 = vst.msk [vmem:[#allocation3 + $0x204] sm:$0xf] %vm2463, %v5947
    %6076 = vst.msk [vmem:[#allocation3 + $0x218] sm:$0xf] %vm2463, %v5948
    %6077 = vst.msk [vmem:[#allocation3 + $0x22c] sm:$0xf] %vm2463, %v5949
    %6078 = vst.msk [vmem:[#allocation3 + $0x240] sm:$0xf] %vm2463, %v5950
    %6079 = vst.msk [vmem:[#allocation3 + $0x254] sm:$0xf] %vm2463, %v5951
    %6080 = vst.msk [vmem:[#allocation3 + $0x268] sm:$0xf] %vm2463, %v5952
    %6081 = vst.msk [vmem:[#allocation3 + $0x27c] sm:$0xf] %vm2463, %v5953
    %6082 = vst.msk [vmem:[#allocation3 + $0x290] sm:$0xf] %vm2463, %v5954
    %6083 = vst.msk [vmem:[#allocation3 + $0x2a4] sm:$0xf] %vm2463, %v5955
    %6084 = vst.msk [vmem:[#allocation3 + $0x2b8] sm:$0xf] %vm2463, %v5956
    %6085 = vst.msk [vmem:[#allocation3 + $0x2cc] sm:$0xf] %vm2463, %v5957
    %6086 = vst.msk [vmem:[#allocation3 + $0x2e0] sm:$0xf] %vm2463, %v5958
    %6087 = vst.msk [vmem:[#allocation3 + $0x2f4] sm:$0xf] %vm2463, %v5959
    %6088 = vst.msk [vmem:[#allocation3 + $0x308] sm:$0xf] %vm2463, %v5960
    %6089 = vst.msk [vmem:[#allocation3 + $0x31c] sm:$0xf] %vm2463, %v5961
    %6090 = vst.msk [vmem:[#allocation3 + $0x330] sm:$0xf] %vm2463, %v5962
    %6091 = vst.msk [vmem:[#allocation3 + $0x344] sm:$0xf] %vm2463, %v5963
    %6092 = vst.msk [vmem:[#allocation3 + $0x358] sm:$0xf] %vm2463, %v5964
    %6093 = vst.msk [vmem:[#allocation3 + $0x36c] sm:$0xf] %vm2463, %v5965
    %6094 = vst.msk [vmem:[#allocation3 + $0x380] sm:$0xf] %vm2463, %v5966
    %6095 = vst.msk [vmem:[#allocation3 + $0x394] sm:$0xf] %vm2463, %v5967
    %6096 = vst.msk [vmem:[#allocation3 + $0x3a8] sm:$0xf] %vm2463, %v5968
    %6097 = vst.msk [vmem:[#allocation3 + $0x3bc] sm:$0xf] %vm2463, %v5969
    %6098 = vst.msk [vmem:[#allocation3 + $0x3d0] sm:$0xf] %vm2463, %v5970
    %6099 = vst.msk [vmem:[#allocation3 + $0x3e4] sm:$0xf] %vm2463, %v5971
    %6100 = vst.msk [vmem:[#allocation3 + $0x3f8] sm:$0xf] %vm2463, %v5972
    %6101 = vst.msk [vmem:[#allocation3 + $0x40c] sm:$0xf] %vm2463, %v5973
    %6102 = vst.msk [vmem:[#allocation3 + $0x420] sm:$0xf] %vm2463, %v5974
    %6103 = vst.msk [vmem:[#allocation3 + $0x434] sm:$0xf] %vm2463, %v5975
    %6104 = vst.msk [vmem:[#allocation3 + $0x448] sm:$0xf] %vm2463, %v5976
    %6105 = vst.msk [vmem:[#allocation3 + $0x45c] sm:$0xf] %vm2463, %v5977
    %6106 = vst.msk [vmem:[#allocation3 + $0x470] sm:$0xf] %vm2463, %v5978
    %6107 = vst.msk [vmem:[#allocation3 + $0x484] sm:$0xf] %vm2463, %v5979
    %6108 = vst.msk [vmem:[#allocation3 + $0x498] sm:$0xf] %vm2463, %v5980
    %6109 = vst.msk [vmem:[#allocation3 + $0x4ac] sm:$0xf] %vm2463, %v5981
    %6110 = vst.msk [vmem:[#allocation3 + $0x4c0] sm:$0xf] %vm2463, %v5982
    %6111 = vst.msk [vmem:[#allocation3 + $0x4d4] sm:$0xf] %vm2463, %v5983
    %6112 = vst.msk [vmem:[#allocation3 + $0x4e8] sm:$0xf] %vm2463, %v5984
    %6113 = vst.msk [vmem:[#allocation3 + $0x4fc] sm:$0xf] %vm2463, %v5985
    %v6114 = vpack.c.bf16 %v166, %v165
    %v6115 = vpack.c.bf16 %v168, %v167
    %v6116 = vpack.c.bf16 %v170, %v169
    %v6117 = vpack.c.bf16 %v172, %v171
    %v6118 = vpack.c.bf16 %v174, %v173
    %v6119 = vpack.c.bf16 %v176, %v175
    %v6120 = vpack.c.bf16 %v178, %v177
    %v6121 = vpack.c.bf16 %v180, %v179
    %v6122 = vpack.c.bf16 %v182, %v181
    %v6123 = vpack.c.bf16 %v184, %v183
    %v6124 = vpack.c.bf16 %v186, %v185
    %v6125 = vpack.c.bf16 %v188, %v187
    %v6126 = vpack.c.bf16 %v190, %v189
    %v6127 = vpack.c.bf16 %v192, %v191
    %v6128 = vpack.c.bf16 %v194, %v193
    %v6129 = vpack.c.bf16 %v196, %v195
    %v6130 = vpack.c.bf16 %v198, %v197
    %v6131 = vpack.c.bf16 %v200, %v199
    %v6132 = vpack.c.bf16 %v202, %v201
    %v6133 = vpack.c.bf16 %v204, %v203
    %v6134 = vpack.c.bf16 %v206, %v205
    %v6135 = vpack.c.bf16 %v208, %v207
    %v6136 = vpack.c.bf16 %v210, %v209
    %v6137 = vpack.c.bf16 %v212, %v211
    %v6138 = vpack.c.bf16 %v214, %v213
    %v6139 = vpack.c.bf16 %v216, %v215
    %v6140 = vpack.c.bf16 %v218, %v217
    %v6141 = vpack.c.bf16 %v220, %v219
    %v6142 = vpack.c.bf16 %v222, %v221
    %v6143 = vpack.c.bf16 %v224, %v223
    %v6144 = vpack.c.bf16 %v226, %v225
    %v6145 = vpack.c.bf16 %v228, %v227
    %v6178 = vunpack.c.l.b16 %v6114
    %v6179 = vunpack.c.h.b16 %v6114
    %v6180 = vunpack.c.l.b16 %v6115
    %v6181 = vunpack.c.h.b16 %v6115
    %v6182 = vunpack.c.l.b16 %v6116
    %v6183 = vunpack.c.h.b16 %v6116
    %v6184 = vunpack.c.l.b16 %v6117
    %v6185 = vunpack.c.h.b16 %v6117
    %v6186 = vunpack.c.l.b16 %v6118
    %v6187 = vunpack.c.h.b16 %v6118
    %v6188 = vunpack.c.l.b16 %v6119
    %v6189 = vunpack.c.h.b16 %v6119
    %v6190 = vunpack.c.l.b16 %v6120
    %v6191 = vunpack.c.h.b16 %v6120
    %v6192 = vunpack.c.l.b16 %v6121
    %v6193 = vunpack.c.h.b16 %v6121
    %v6194 = vunpack.c.l.b16 %v6122
    %v6195 = vunpack.c.h.b16 %v6122
    %v6196 = vunpack.c.l.b16 %v6123
    %v6197 = vunpack.c.h.b16 %v6123
    %v6198 = vunpack.c.l.b16 %v6124
    %v6199 = vunpack.c.h.b16 %v6124
    %v6200 = vunpack.c.l.b16 %v6125
    %v6201 = vunpack.c.h.b16 %v6125
    %v6202 = vunpack.c.l.b16 %v6126
    %v6203 = vunpack.c.h.b16 %v6126
    %v6204 = vunpack.c.l.b16 %v6127
    %v6205 = vunpack.c.h.b16 %v6127
    %v6206 = vunpack.c.l.b16 %v6128
    %v6207 = vunpack.c.h.b16 %v6128
    %v6208 = vunpack.c.l.b16 %v6129
    %v6209 = vunpack.c.h.b16 %v6129
    %v6210 = vunpack.c.l.b16 %v6130
    %v6211 = vunpack.c.h.b16 %v6130
    %v6212 = vunpack.c.l.b16 %v6131
    %v6213 = vunpack.c.h.b16 %v6131
    %v6214 = vunpack.c.l.b16 %v6132
    %v6215 = vunpack.c.h.b16 %v6132
    %v6216 = vunpack.c.l.b16 %v6133
    %v6217 = vunpack.c.h.b16 %v6133
    %v6218 = vunpack.c.l.b16 %v6134
    %v6219 = vunpack.c.h.b16 %v6134
    %v6220 = vunpack.c.l.b16 %v6135
    %v6221 = vunpack.c.h.b16 %v6135
    %v6222 = vunpack.c.l.b16 %v6136
    %v6223 = vunpack.c.h.b16 %v6136
    %v6224 = vunpack.c.l.b16 %v6137
    %v6225 = vunpack.c.h.b16 %v6137
    %v6226 = vunpack.c.l.b16 %v6138
    %v6227 = vunpack.c.h.b16 %v6138
    %v6228 = vunpack.c.l.b16 %v6139
    %v6229 = vunpack.c.h.b16 %v6139
    %v6230 = vunpack.c.l.b16 %v6140
    %v6231 = vunpack.c.h.b16 %v6140
    %v6232 = vunpack.c.l.b16 %v6141
    %v6233 = vunpack.c.h.b16 %v6141
    %v6234 = vunpack.c.l.b16 %v6142
    %v6235 = vunpack.c.h.b16 %v6142
    %v6236 = vunpack.c.l.b16 %v6143
    %v6237 = vunpack.c.h.b16 %v6143
    %v6238 = vunpack.c.l.b16 %v6144
    %v6239 = vunpack.c.h.b16 %v6144
    %v6240 = vunpack.c.l.b16 %v6145
    %v6241 = vunpack.c.h.b16 %v6145
    %v6242 = vpack.c.b16 %v6178, %v6178
    %v6243 = vpack.c.b16 %v6179, %v6179
    %v6244 = vpack.c.b16 %v6180, %v6180
    %v6245 = vpack.c.b16 %v6181, %v6181
    %v6246 = vpack.c.b16 %v6182, %v6182
    %v6247 = vpack.c.b16 %v6183, %v6183
    %v6248 = vpack.c.b16 %v6184, %v6184
    %v6249 = vpack.c.b16 %v6185, %v6185
    %v6250 = vpack.c.b16 %v6186, %v6186
    %v6251 = vpack.c.b16 %v6187, %v6187
    %v6252 = vpack.c.b16 %v6188, %v6188
    %v6253 = vpack.c.b16 %v6189, %v6189
    %v6254 = vpack.c.b16 %v6190, %v6190
    %v6255 = vpack.c.b16 %v6191, %v6191
    %v6256 = vpack.c.b16 %v6192, %v6192
    %v6257 = vpack.c.b16 %v6193, %v6193
    %v6258 = vpack.c.b16 %v6194, %v6194
    %v6259 = vpack.c.b16 %v6195, %v6195
    %v6260 = vpack.c.b16 %v6196, %v6196
    %v6261 = vpack.c.b16 %v6197, %v6197
    %v6262 = vpack.c.b16 %v6198, %v6198
    %v6263 = vpack.c.b16 %v6199, %v6199
    %v6264 = vpack.c.b16 %v6200, %v6200
    %v6265 = vpack.c.b16 %v6201, %v6201
    %v6266 = vpack.c.b16 %v6202, %v6202
    %v6267 = vpack.c.b16 %v6203, %v6203
    %v6268 = vpack.c.b16 %v6204, %v6204
    %v6269 = vpack.c.b16 %v6205, %v6205
    %v6270 = vpack.c.b16 %v6206, %v6206
    %v6271 = vpack.c.b16 %v6207, %v6207
    %v6272 = vpack.c.b16 %v6208, %v6208
    %v6273 = vpack.c.b16 %v6209, %v6209
    %v6274 = vpack.c.b16 %v6210, %v6210
    %v6275 = vpack.c.b16 %v6211, %v6211
    %v6276 = vpack.c.b16 %v6212, %v6212
    %v6277 = vpack.c.b16 %v6213, %v6213
    %v6278 = vpack.c.b16 %v6214, %v6214
    %v6279 = vpack.c.b16 %v6215, %v6215
    %v6280 = vpack.c.b16 %v6216, %v6216
    %v6281 = vpack.c.b16 %v6217, %v6217
    %v6282 = vpack.c.b16 %v6218, %v6218
    %v6283 = vpack.c.b16 %v6219, %v6219
    %v6284 = vpack.c.b16 %v6220, %v6220
    %v6285 = vpack.c.b16 %v6221, %v6221
    %v6286 = vpack.c.b16 %v6222, %v6222
    %v6287 = vpack.c.b16 %v6223, %v6223
    %v6288 = vpack.c.b16 %v6224, %v6224
    %v6289 = vpack.c.b16 %v6225, %v6225
    %v6290 = vpack.c.b16 %v6226, %v6226
    %v6291 = vpack.c.b16 %v6227, %v6227
    %v6292 = vpack.c.b16 %v6228, %v6228
    %v6293 = vpack.c.b16 %v6229, %v6229
    %v6294 = vpack.c.b16 %v6230, %v6230
    %v6295 = vpack.c.b16 %v6231, %v6231
    %v6296 = vpack.c.b16 %v6232, %v6232
    %v6297 = vpack.c.b16 %v6233, %v6233
    %v6298 = vpack.c.b16 %v6234, %v6234
    %v6299 = vpack.c.b16 %v6235, %v6235
    %v6300 = vpack.c.b16 %v6236, %v6236
    %v6301 = vpack.c.b16 %v6237, %v6237
    %v6302 = vpack.c.b16 %v6238, %v6238
    %v6303 = vpack.c.b16 %v6239, %v6239
    %v6304 = vpack.c.b16 %v6240, %v6240
    %v6305 = vpack.c.b16 %v6241, %v6241
    %6306 = vrot.lane.b32.xlu0 %v6242, 64
    %v6307 = vpop.permute.xlu0 %6306
    %6308 = vrot.lane.b32.xlu0 %v6243, 64
    %v6309 = vpop.permute.xlu0 %6308
    %6310 = vrot.lane.b32.xlu0 %v6244, 64
    %v6311 = vpop.permute.xlu0 %6310
    %6312 = vrot.lane.b32.xlu0 %v6245, 64
    %v6313 = vpop.permute.xlu0 %6312
    %6314 = vrot.lane.b32.xlu0 %v6246, 64
    %v6315 = vpop.permute.xlu0 %6314
    %6316 = vrot.lane.b32.xlu0 %v6247, 64
    %v6317 = vpop.permute.xlu0 %6316
    %6318 = vrot.lane.b32.xlu0 %v6248, 64
    %v6319 = vpop.permute.xlu0 %6318
    %6320 = vrot.lane.b32.xlu0 %v6249, 64
    %v6321 = vpop.permute.xlu0 %6320
    %6322 = vrot.lane.b32.xlu0 %v6250, 64
    %v6323 = vpop.permute.xlu0 %6322
    %6324 = vrot.lane.b32.xlu0 %v6251, 64
    %v6325 = vpop.permute.xlu0 %6324
    %6326 = vrot.lane.b32.xlu0 %v6252, 64
    %v6327 = vpop.permute.xlu0 %6326
    %6328 = vrot.lane.b32.xlu0 %v6253, 64
    %v6329 = vpop.permute.xlu0 %6328
    %6330 = vrot.lane.b32.xlu0 %v6254, 64
    %v6331 = vpop.permute.xlu0 %6330
    %6332 = vrot.lane.b32.xlu0 %v6255, 64
    %v6333 = vpop.permute.xlu0 %6332
    %6334 = vrot.lane.b32.xlu0 %v6256, 64
    %v6335 = vpop.permute.xlu0 %6334
    %6336 = vrot.lane.b32.xlu0 %v6257, 64
    %v6337 = vpop.permute.xlu0 %6336
    %6338 = vrot.lane.b32.xlu0 %v6258, 64
    %v6339 = vpop.permute.xlu0 %6338
    %6340 = vrot.lane.b32.xlu0 %v6259, 64
    %v6341 = vpop.permute.xlu0 %6340
    %6342 = vrot.lane.b32.xlu0 %v6260, 64
    %v6343 = vpop.permute.xlu0 %6342
    %6344 = vrot.lane.b32.xlu0 %v6261, 64
    %v6345 = vpop.permute.xlu0 %6344
    %6346 = vrot.lane.b32.xlu0 %v6262, 64
    %v6347 = vpop.permute.xlu0 %6346
    %6348 = vrot.lane.b32.xlu0 %v6263, 64
    %v6349 = vpop.permute.xlu0 %6348
    %6350 = vrot.lane.b32.xlu0 %v6264, 64
    %v6351 = vpop.permute.xlu0 %6350
    %6352 = vrot.lane.b32.xlu0 %v6265, 64
    %v6353 = vpop.permute.xlu0 %6352
    %6354 = vrot.lane.b32.xlu0 %v6266, 64
    %v6355 = vpop.permute.xlu0 %6354
    %6356 = vrot.lane.b32.xlu0 %v6267, 64
    %v6357 = vpop.permute.xlu0 %6356
    %6358 = vrot.lane.b32.xlu0 %v6268, 64
    %v6359 = vpop.permute.xlu0 %6358
    %6360 = vrot.lane.b32.xlu0 %v6269, 64
    %v6361 = vpop.permute.xlu0 %6360
    %6362 = vrot.lane.b32.xlu0 %v6270, 64
    %v6363 = vpop.permute.xlu0 %6362
    %6364 = vrot.lane.b32.xlu0 %v6271, 64
    %v6365 = vpop.permute.xlu0 %6364
    %6366 = vrot.lane.b32.xlu0 %v6272, 64
    %v6367 = vpop.permute.xlu0 %6366
    %6368 = vrot.lane.b32.xlu0 %v6273, 64
    %v6369 = vpop.permute.xlu0 %6368
    %6370 = vrot.lane.b32.xlu0 %v6274, 64
    %v6371 = vpop.permute.xlu0 %6370
    %6372 = vrot.lane.b32.xlu0 %v6275, 64
    %v6373 = vpop.permute.xlu0 %6372
    %6374 = vrot.lane.b32.xlu0 %v6276, 64
    %v6375 = vpop.permute.xlu0 %6374
    %6376 = vrot.lane.b32.xlu0 %v6277, 64
    %v6377 = vpop.permute.xlu0 %6376
    %6378 = vrot.lane.b32.xlu0 %v6278, 64
    %v6379 = vpop.permute.xlu0 %6378
    %6380 = vrot.lane.b32.xlu0 %v6279, 64
    %v6381 = vpop.permute.xlu0 %6380
    %6382 = vrot.lane.b32.xlu0 %v6280, 64
    %v6383 = vpop.permute.xlu0 %6382
    %6384 = vrot.lane.b32.xlu0 %v6281, 64
    %v6385 = vpop.permute.xlu0 %6384
    %6386 = vrot.lane.b32.xlu0 %v6282, 64
    %v6387 = vpop.permute.xlu0 %6386
    %6388 = vrot.lane.b32.xlu0 %v6283, 64
    %v6389 = vpop.permute.xlu0 %6388
    %6390 = vrot.lane.b32.xlu0 %v6284, 64
    %v6391 = vpop.permute.xlu0 %6390
    %6392 = vrot.lane.b32.xlu0 %v6285, 64
    %v6393 = vpop.permute.xlu0 %6392
    %6394 = vrot.lane.b32.xlu0 %v6286, 64
    %v6395 = vpop.permute.xlu0 %6394
    %6396 = vrot.lane.b32.xlu0 %v6287, 64
    %v6397 = vpop.permute.xlu0 %6396
    %6398 = vrot.lane.b32.xlu0 %v6288, 64
    %v6399 = vpop.permute.xlu0 %6398
    %6400 = vrot.lane.b32.xlu0 %v6289, 64
    %v6401 = vpop.permute.xlu0 %6400
    %6402 = vrot.lane.b32.xlu0 %v6290, 64
    %v6403 = vpop.permute.xlu0 %6402
    %6404 = vrot.lane.b32.xlu0 %v6291, 64
    %v6405 = vpop.permute.xlu0 %6404
    %6406 = vrot.lane.b32.xlu0 %v6292, 64
    %v6407 = vpop.permute.xlu0 %6406
    %6408 = vrot.lane.b32.xlu0 %v6293, 64
    %v6409 = vpop.permute.xlu0 %6408
    %6410 = vrot.lane.b32.xlu0 %v6294, 64
    %v6411 = vpop.permute.xlu0 %6410
    %6412 = vrot.lane.b32.xlu0 %v6295, 64
    %v6413 = vpop.permute.xlu0 %6412
    %6414 = vrot.lane.b32.xlu0 %v6296, 64
    %v6415 = vpop.permute.xlu0 %6414
    %6416 = vrot.lane.b32.xlu0 %v6297, 64
    %v6417 = vpop.permute.xlu0 %6416
    %6418 = vrot.lane.b32.xlu0 %v6298, 64
    %v6419 = vpop.permute.xlu0 %6418
    %6420 = vrot.lane.b32.xlu0 %v6299, 64
    %v6421 = vpop.permute.xlu0 %6420
    %6422 = vrot.lane.b32.xlu0 %v6300, 64
    %v6423 = vpop.permute.xlu0 %6422
    %6424 = vrot.lane.b32.xlu0 %v6301, 64
    %v6425 = vpop.permute.xlu0 %6424
    %6426 = vrot.lane.b32.xlu0 %v6302, 64
    %v6427 = vpop.permute.xlu0 %6426
    %6428 = vrot.lane.b32.xlu0 %v6303, 64
    %v6429 = vpop.permute.xlu0 %6428
    %6430 = vrot.lane.b32.xlu0 %v6304, 64
    %v6431 = vpop.permute.xlu0 %6430
    %6432 = vrot.lane.b32.xlu0 %v6305, 64
    %v6433 = vpop.permute.xlu0 %6432
    %vm6498 = vcmask 781824
    %6499 = vst.msk [vmem:[#allocation3 + $0x10] sm:$0xf] %vm6498, %v6307
    %6500 = vst.msk [vmem:[#allocation3 + $0x24] sm:$0xf] %vm6498, %v6309
    %6501 = vst.msk [vmem:[#allocation3 + $0x38] sm:$0xf] %vm6498, %v6311
    %6502 = vst.msk [vmem:[#allocation3 + $0x4c] sm:$0xf] %vm6498, %v6313
    %6503 = vst.msk [vmem:[#allocation3 + $0x60] sm:$0xf] %vm6498, %v6315
    %6504 = vst.msk [vmem:[#allocation3 + $0x74] sm:$0xf] %vm6498, %v6317
    %6505 = vst.msk [vmem:[#allocation3 + $0x88] sm:$0xf] %vm6498, %v6319
    %6506 = vst.msk [vmem:[#allocation3 + $0x9c] sm:$0xf] %vm6498, %v6321
    %6507 = vst.msk [vmem:[#allocation3 + $0xb0] sm:$0xf] %vm6498, %v6323
    %6508 = vst.msk [vmem:[#allocation3 + $0xc4] sm:$0xf] %vm6498, %v6325
    %6509 = vst.msk [vmem:[#allocation3 + $0xd8] sm:$0xf] %vm6498, %v6327
    %6510 = vst.msk [vmem:[#allocation3 + $0xec] sm:$0xf] %vm6498, %v6329
    %6511 = vst.msk [vmem:[#allocation3 + $0x100] sm:$0xf] %vm6498, %v6331
    %6512 = vst.msk [vmem:[#allocation3 + $0x114] sm:$0xf] %vm6498, %v6333
    %6513 = vst.msk [vmem:[#allocation3 + $0x128] sm:$0xf] %vm6498, %v6335
    %6514 = vst.msk [vmem:[#allocation3 + $0x13c] sm:$0xf] %vm6498, %v6337
    %6515 = vst.msk [vmem:[#allocation3 + $0x150] sm:$0xf] %vm6498, %v6339
    %6516 = vst.msk [vmem:[#allocation3 + $0x164] sm:$0xf] %vm6498, %v6341
    %6517 = vst.msk [vmem:[#allocation3 + $0x178] sm:$0xf] %vm6498, %v6343
    %6518 = vst.msk [vmem:[#allocation3 + $0x18c] sm:$0xf] %vm6498, %v6345
    %6519 = vst.msk [vmem:[#allocation3 + $0x1a0] sm:$0xf] %vm6498, %v6347
    %6520 = vst.msk [vmem:[#allocation3 + $0x1b4] sm:$0xf] %vm6498, %v6349
    %6521 = vst.msk [vmem:[#allocation3 + $0x1c8] sm:$0xf] %vm6498, %v6351
    %6522 = vst.msk [vmem:[#allocation3 + $0x1dc] sm:$0xf] %vm6498, %v6353
    %6523 = vst.msk [vmem:[#allocation3 + $0x1f0] sm:$0xf] %vm6498, %v6355
    %6524 = vst.msk [vmem:[#allocation3 + $0x204] sm:$0xf] %vm6498, %v6357
    %6525 = vst.msk [vmem:[#allocation3 + $0x218] sm:$0xf] %vm6498, %v6359
    %6526 = vst.msk [vmem:[#allocation3 + $0x22c] sm:$0xf] %vm6498, %v6361
    %6527 = vst.msk [vmem:[#allocation3 + $0x240] sm:$0xf] %vm6498, %v6363
    %6528 = vst.msk [vmem:[#allocation3 + $0x254] sm:$0xf] %vm6498, %v6365
    %6529 = vst.msk [vmem:[#allocation3 + $0x268] sm:$0xf] %vm6498, %v6367
    %6530 = vst.msk [vmem:[#allocation3 + $0x27c] sm:$0xf] %vm6498, %v6369
    %6531 = vst.msk [vmem:[#allocation3 + $0x290] sm:$0xf] %vm6498, %v6371
    %6532 = vst.msk [vmem:[#allocation3 + $0x2a4] sm:$0xf] %vm6498, %v6373
    %6533 = vst.msk [vmem:[#allocation3 + $0x2b8] sm:$0xf] %vm6498, %v6375
    %6534 = vst.msk [vmem:[#allocation3 + $0x2cc] sm:$0xf] %vm6498, %v6377
    %6535 = vst.msk [vmem:[#allocation3 + $0x2e0] sm:$0xf] %vm6498, %v6379
    %6536 = vst.msk [vmem:[#allocation3 + $0x2f4] sm:$0xf] %vm6498, %v6381
    %6537 = vst.msk [vmem:[#allocation3 + $0x308] sm:$0xf] %vm6498, %v6383
    %6538 = vst.msk [vmem:[#allocation3 + $0x31c] sm:$0xf] %vm6498, %v6385
    %6539 = vst.msk [vmem:[#allocation3 + $0x330] sm:$0xf] %vm6498, %v6387
    %6540 = vst.msk [vmem:[#allocation3 + $0x344] sm:$0xf] %vm6498, %v6389
    %6541 = vst.msk [vmem:[#allocation3 + $0x358] sm:$0xf] %vm6498, %v6391
    %6542 = vst.msk [vmem:[#allocation3 + $0x36c] sm:$0xf] %vm6498, %v6393
    %6543 = vst.msk [vmem:[#allocation3 + $0x380] sm:$0xf] %vm6498, %v6395
    %6544 = vst.msk [vmem:[#allocation3 + $0x394] sm:$0xf] %vm6498, %v6397
    %6545 = vst.msk [vmem:[#allocation3 + $0x3a8] sm:$0xf] %vm6498, %v6399
    %6546 = vst.msk [vmem:[#allocation3 + $0x3bc] sm:$0xf] %vm6498, %v6401
    %6547 = vst.msk [vmem:[#allocation3 + $0x3d0] sm:$0xf] %vm6498, %v6403
    %6548 = vst.msk [vmem:[#allocation3 + $0x3e4] sm:$0xf] %vm6498, %v6405
    %6549 = vst.msk [vmem:[#allocation3 + $0x3f8] sm:$0xf] %vm6498, %v6407
    %6550 = vst.msk [vmem:[#allocation3 + $0x40c] sm:$0xf] %vm6498, %v6409
    %6551 = vst.msk [vmem:[#allocation3 + $0x420] sm:$0xf] %vm6498, %v6411
    %6552 = vst.msk [vmem:[#allocation3 + $0x434] sm:$0xf] %vm6498, %v6413
    %6553 = vst.msk [vmem:[#allocation3 + $0x448] sm:$0xf] %vm6498, %v6415
    %6554 = vst.msk [vmem:[#allocation3 + $0x45c] sm:$0xf] %vm6498, %v6417
    %6555 = vst.msk [vmem:[#allocation3 + $0x470] sm:$0xf] %vm6498, %v6419
    %6556 = vst.msk [vmem:[#allocation3 + $0x484] sm:$0xf] %vm6498, %v6421
    %6557 = vst.msk [vmem:[#allocation3 + $0x498] sm:$0xf] %vm6498, %v6423
    %6558 = vst.msk [vmem:[#allocation3 + $0x4ac] sm:$0xf] %vm6498, %v6425
    %6559 = vst.msk [vmem:[#allocation3 + $0x4c0] sm:$0xf] %vm6498, %v6427
    %6560 = vst.msk [vmem:[#allocation3 + $0x4d4] sm:$0xf] %vm6498, %v6429
    %6561 = vst.msk [vmem:[#allocation3 + $0x4e8] sm:$0xf] %vm6498, %v6431
    %6562 = vst.msk [vmem:[#allocation3 + $0x4fc] sm:$0xf] %vm6498, %v6433
    %v6563 = vpack.c.bf16 %v230, %v229
    %v6564 = vpack.c.bf16 %v232, %v231
    %v6565 = vpack.c.bf16 %v234, %v233
    %v6566 = vpack.c.bf16 %v236, %v235
    %v6567 = vpack.c.bf16 %v238, %v237
    %v6568 = vpack.c.bf16 %v240, %v239
    %v6569 = vpack.c.bf16 %v242, %v241
    %v6570 = vpack.c.bf16 %v244, %v243
    %v6571 = vpack.c.bf16 %v246, %v245
    %v6572 = vpack.c.bf16 %v248, %v247
    %v6573 = vpack.c.bf16 %v250, %v249
    %v6574 = vpack.c.bf16 %v252, %v251
    %v6575 = vpack.c.bf16 %v254, %v253
    %v6576 = vpack.c.bf16 %v256, %v255
    %v6577 = vpack.c.bf16 %v258, %v257
    %v6578 = vpack.c.bf16 %v260, %v259
    %v6579 = vpack.c.bf16 %v262, %v261
    %v6580 = vpack.c.bf16 %v264, %v263
    %v6581 = vpack.c.bf16 %v266, %v265
    %v6582 = vpack.c.bf16 %v268, %v267
    %v6583 = vpack.c.bf16 %v270, %v269
    %v6584 = vpack.c.bf16 %v272, %v271
    %v6585 = vpack.c.bf16 %v274, %v273
    %v6586 = vpack.c.bf16 %v276, %v275
    %v6587 = vpack.c.bf16 %v278, %v277
    %v6588 = vpack.c.bf16 %v280, %v279
    %v6589 = vpack.c.bf16 %v282, %v281
    %v6590 = vpack.c.bf16 %v284, %v283
    %v6591 = vpack.c.bf16 %v286, %v285
    %v6592 = vpack.c.bf16 %v288, %v287
    %v6593 = vpack.c.bf16 %v290, %v289
    %v6594 = vpack.c.bf16 %v292, %v291
    %v6627 = vunpack.c.l.b16 %v6563
    %v6628 = vunpack.c.h.b16 %v6563
    %v6629 = vunpack.c.l.b16 %v6564
    %v6630 = vunpack.c.h.b16 %v6564
    %v6631 = vunpack.c.l.b16 %v6565
    %v6632 = vunpack.c.h.b16 %v6565
    %v6633 = vunpack.c.l.b16 %v6566
    %v6634 = vunpack.c.h.b16 %v6566
    %v6635 = vunpack.c.l.b16 %v6567
    %v6636 = vunpack.c.h.b16 %v6567
    %v6637 = vunpack.c.l.b16 %v6568
    %v6638 = vunpack.c.h.b16 %v6568
    %v6639 = vunpack.c.l.b16 %v6569
    %v6640 = vunpack.c.h.b16 %v6569
    %v6641 = vunpack.c.l.b16 %v6570
    %v6642 = vunpack.c.h.b16 %v6570
    %v6643 = vunpack.c.l.b16 %v6571
    %v6644 = vunpack.c.h.b16 %v6571
    %v6645 = vunpack.c.l.b16 %v6572
    %v6646 = vunpack.c.h.b16 %v6572
    %v6647 = vunpack.c.l.b16 %v6573
    %v6648 = vunpack.c.h.b16 %v6573
    %v6649 = vunpack.c.l.b16 %v6574
    %v6650 = vunpack.c.h.b16 %v6574
    %v6651 = vunpack.c.l.b16 %v6575
    %v6652 = vunpack.c.h.b16 %v6575
    %v6653 = vunpack.c.l.b16 %v6576
    %v6654 = vunpack.c.h.b16 %v6576
    %v6655 = vunpack.c.l.b16 %v6577
    %v6656 = vunpack.c.h.b16 %v6577
    %v6657 = vunpack.c.l.b16 %v6578
    %v6658 = vunpack.c.h.b16 %v6578
    %v6659 = vunpack.c.l.b16 %v6579
    %v6660 = vunpack.c.h.b16 %v6579
    %v6661 = vunpack.c.l.b16 %v6580
    %v6662 = vunpack.c.h.b16 %v6580
    %v6663 = vunpack.c.l.b16 %v6581
    %v6664 = vunpack.c.h.b16 %v6581
    %v6665 = vunpack.c.l.b16 %v6582
    %v6666 = vunpack.c.h.b16 %v6582
    %v6667 = vunpack.c.l.b16 %v6583
    %v6668 = vunpack.c.h.b16 %v6583
    %v6669 = vunpack.c.l.b16 %v6584
    %v6670 = vunpack.c.h.b16 %v6584
    %v6671 = vunpack.c.l.b16 %v6585
    %v6672 = vunpack.c.h.b16 %v6585
    %v6673 = vunpack.c.l.b16 %v6586
    %v6674 = vunpack.c.h.b16 %v6586
    %v6675 = vunpack.c.l.b16 %v6587
    %v6676 = vunpack.c.h.b16 %v6587
    %v6677 = vunpack.c.l.b16 %v6588
    %v6678 = vunpack.c.h.b16 %v6588
    %v6679 = vunpack.c.l.b16 %v6589
    %v6680 = vunpack.c.h.b16 %v6589
    %v6681 = vunpack.c.l.b16 %v6590
    %v6682 = vunpack.c.h.b16 %v6590
    %v6683 = vunpack.c.l.b16 %v6591
    %v6684 = vunpack.c.h.b16 %v6591
    %v6685 = vunpack.c.l.b16 %v6592
    %v6686 = vunpack.c.h.b16 %v6592
    %v6687 = vunpack.c.l.b16 %v6593
    %v6688 = vunpack.c.h.b16 %v6593
    %v6689 = vunpack.c.l.b16 %v6594
    %v6690 = vunpack.c.h.b16 %v6594
    %v6691 = vpack.c.b16 %v6627, %v6627
    %v6692 = vpack.c.b16 %v6628, %v6628
    %v6693 = vpack.c.b16 %v6629, %v6629
    %v6694 = vpack.c.b16 %v6630, %v6630
    %v6695 = vpack.c.b16 %v6631, %v6631
    %v6696 = vpack.c.b16 %v6632, %v6632
    %v6697 = vpack.c.b16 %v6633, %v6633
    %v6698 = vpack.c.b16 %v6634, %v6634
    %v6699 = vpack.c.b16 %v6635, %v6635
    %v6700 = vpack.c.b16 %v6636, %v6636
    %v6701 = vpack.c.b16 %v6637, %v6637
    %v6702 = vpack.c.b16 %v6638, %v6638
    %v6703 = vpack.c.b16 %v6639, %v6639
    %v6704 = vpack.c.b16 %v6640, %v6640
    %v6705 = vpack.c.b16 %v6641, %v6641
    %v6706 = vpack.c.b16 %v6642, %v6642
    %v6707 = vpack.c.b16 %v6643, %v6643
    %v6708 = vpack.c.b16 %v6644, %v6644
    %v6709 = vpack.c.b16 %v6645, %v6645
    %v6710 = vpack.c.b16 %v6646, %v6646
    %v6711 = vpack.c.b16 %v6647, %v6647
    %v6712 = vpack.c.b16 %v6648, %v6648
    %v6713 = vpack.c.b16 %v6649, %v6649
    %v6714 = vpack.c.b16 %v6650, %v6650
    %v6715 = vpack.c.b16 %v6651, %v6651
    %v6716 = vpack.c.b16 %v6652, %v6652
    %v6717 = vpack.c.b16 %v6653, %v6653
    %v6718 = vpack.c.b16 %v6654, %v6654
    %v6719 = vpack.c.b16 %v6655, %v6655
    %v6720 = vpack.c.b16 %v6656, %v6656
    %v6721 = vpack.c.b16 %v6657, %v6657
    %v6722 = vpack.c.b16 %v6658, %v6658
    %v6723 = vpack.c.b16 %v6659, %v6659
    %v6724 = vpack.c.b16 %v6660, %v6660
    %v6725 = vpack.c.b16 %v6661, %v6661
    %v6726 = vpack.c.b16 %v6662, %v6662
    %v6727 = vpack.c.b16 %v6663, %v6663
    %v6728 = vpack.c.b16 %v6664, %v6664
    %v6729 = vpack.c.b16 %v6665, %v6665
    %v6730 = vpack.c.b16 %v6666, %v6666
    %v6731 = vpack.c.b16 %v6667, %v6667
    %v6732 = vpack.c.b16 %v6668, %v6668
    %v6733 = vpack.c.b16 %v6669, %v6669
    %v6734 = vpack.c.b16 %v6670, %v6670
    %v6735 = vpack.c.b16 %v6671, %v6671
    %v6736 = vpack.c.b16 %v6672, %v6672
    %v6737 = vpack.c.b16 %v6673, %v6673
    %v6738 = vpack.c.b16 %v6674, %v6674
    %v6739 = vpack.c.b16 %v6675, %v6675
    %v6740 = vpack.c.b16 %v6676, %v6676
    %v6741 = vpack.c.b16 %v6677, %v6677
    %v6742 = vpack.c.b16 %v6678, %v6678
    %v6743 = vpack.c.b16 %v6679, %v6679
    %v6744 = vpack.c.b16 %v6680, %v6680
    %v6745 = vpack.c.b16 %v6681, %v6681
    %v6746 = vpack.c.b16 %v6682, %v6682
    %v6747 = vpack.c.b16 %v6683, %v6683
    %v6748 = vpack.c.b16 %v6684, %v6684
    %v6749 = vpack.c.b16 %v6685, %v6685
    %v6750 = vpack.c.b16 %v6686, %v6686
    %v6751 = vpack.c.b16 %v6687, %v6687
    %v6752 = vpack.c.b16 %v6688, %v6688
    %v6753 = vpack.c.b16 %v6689, %v6689
    %v6754 = vpack.c.b16 %v6690, %v6690
    %6755 = vrot.lane.b32.xlu0 %v6691, 96
    %v6756 = vpop.permute.xlu0 %6755
    %6757 = vrot.lane.b32.xlu0 %v6692, 96
    %v6758 = vpop.permute.xlu0 %6757
    %6759 = vrot.lane.b32.xlu0 %v6693, 96
    %v6760 = vpop.permute.xlu0 %6759
    %6761 = vrot.lane.b32.xlu0 %v6694, 96
    %v6762 = vpop.permute.xlu0 %6761
    %6763 = vrot.lane.b32.xlu0 %v6695, 96
    %v6764 = vpop.permute.xlu0 %6763
    %6765 = vrot.lane.b32.xlu0 %v6696, 96
    %v6766 = vpop.permute.xlu0 %6765
    %6767 = vrot.lane.b32.xlu0 %v6697, 96
    %v6768 = vpop.permute.xlu0 %6767
    %6769 = vrot.lane.b32.xlu0 %v6698, 96
    %v6770 = vpop.permute.xlu0 %6769
    %6771 = vrot.lane.b32.xlu0 %v6699, 96
    %v6772 = vpop.permute.xlu0 %6771
    %6773 = vrot.lane.b32.xlu0 %v6700, 96
    %v6774 = vpop.permute.xlu0 %6773
    %6775 = vrot.lane.b32.xlu0 %v6701, 96
    %v6776 = vpop.permute.xlu0 %6775
    %6777 = vrot.lane.b32.xlu0 %v6702, 96
    %v6778 = vpop.permute.xlu0 %6777
    %6779 = vrot.lane.b32.xlu0 %v6703, 96
    %v6780 = vpop.permute.xlu0 %6779
    %6781 = vrot.lane.b32.xlu0 %v6704, 96
    %v6782 = vpop.permute.xlu0 %6781
    %6783 = vrot.lane.b32.xlu0 %v6705, 96
    %v6784 = vpop.permute.xlu0 %6783
    %6785 = vrot.lane.b32.xlu0 %v6706, 96
    %v6786 = vpop.permute.xlu0 %6785
    %6787 = vrot.lane.b32.xlu0 %v6707, 96
    %v6788 = vpop.permute.xlu0 %6787
    %6789 = vrot.lane.b32.xlu0 %v6708, 96
    %v6790 = vpop.permute.xlu0 %6789
    %6791 = vrot.lane.b32.xlu0 %v6709, 96
    %v6792 = vpop.permute.xlu0 %6791
    %6793 = vrot.lane.b32.xlu0 %v6710, 96
    %v6794 = vpop.permute.xlu0 %6793
    %6795 = vrot.lane.b32.xlu0 %v6711, 96
    %v6796 = vpop.permute.xlu0 %6795
    %6797 = vrot.lane.b32.xlu0 %v6712, 96
    %v6798 = vpop.permute.xlu0 %6797
    %6799 = vrot.lane.b32.xlu0 %v6713, 96
    %v6800 = vpop.permute.xlu0 %6799
    %6801 = vrot.lane.b32.xlu0 %v6714, 96
    %v6802 = vpop.permute.xlu0 %6801
    %6803 = vrot.lane.b32.xlu0 %v6715, 96
    %v6804 = vpop.permute.xlu0 %6803
    %6805 = vrot.lane.b32.xlu0 %v6716, 96
    %v6806 = vpop.permute.xlu0 %6805
    %6807 = vrot.lane.b32.xlu0 %v6717, 96
    %v6808 = vpop.permute.xlu0 %6807
    %6809 = vrot.lane.b32.xlu0 %v6718, 96
    %v6810 = vpop.permute.xlu0 %6809
    %6811 = vrot.lane.b32.xlu0 %v6719, 96
    %v6812 = vpop.permute.xlu0 %6811
    %6813 = vrot.lane.b32.xlu0 %v6720, 96
    %v6814 = vpop.permute.xlu0 %6813
    %6815 = vrot.lane.b32.xlu0 %v6721, 96
    %v6816 = vpop.permute.xlu0 %6815
    %6817 = vrot.lane.b32.xlu0 %v6722, 96
    %v6818 = vpop.permute.xlu0 %6817
    %6819 = vrot.lane.b32.xlu0 %v6723, 96
    %v6820 = vpop.permute.xlu0 %6819
    %6821 = vrot.lane.b32.xlu0 %v6724, 96
    %v6822 = vpop.permute.xlu0 %6821
    %6823 = vrot.lane.b32.xlu0 %v6725, 96
    %v6824 = vpop.permute.xlu0 %6823
    %6825 = vrot.lane.b32.xlu0 %v6726, 96
    %v6826 = vpop.permute.xlu0 %6825
    %6827 = vrot.lane.b32.xlu0 %v6727, 96
    %v6828 = vpop.permute.xlu0 %6827
    %6829 = vrot.lane.b32.xlu0 %v6728, 96
    %v6830 = vpop.permute.xlu0 %6829
    %6831 = vrot.lane.b32.xlu0 %v6729, 96
    %v6832 = vpop.permute.xlu0 %6831
    %6833 = vrot.lane.b32.xlu0 %v6730, 96
    %v6834 = vpop.permute.xlu0 %6833
    %6835 = vrot.lane.b32.xlu0 %v6731, 96
    %v6836 = vpop.permute.xlu0 %6835
    %6837 = vrot.lane.b32.xlu0 %v6732, 96
    %v6838 = vpop.permute.xlu0 %6837
    %6839 = vrot.lane.b32.xlu0 %v6733, 96
    %v6840 = vpop.permute.xlu0 %6839
    %6841 = vrot.lane.b32.xlu0 %v6734, 96
    %v6842 = vpop.permute.xlu0 %6841
    %6843 = vrot.lane.b32.xlu0 %v6735, 96
    %v6844 = vpop.permute.xlu0 %6843
    %6845 = vrot.lane.b32.xlu0 %v6736, 96
    %v6846 = vpop.permute.xlu0 %6845
    %6847 = vrot.lane.b32.xlu0 %v6737, 96
    %v6848 = vpop.permute.xlu0 %6847
    %6849 = vrot.lane.b32.xlu0 %v6738, 96
    %v6850 = vpop.permute.xlu0 %6849
    %6851 = vrot.lane.b32.xlu0 %v6739, 96
    %v6852 = vpop.permute.xlu0 %6851
    %6853 = vrot.lane.b32.xlu0 %v6740, 96
    %v6854 = vpop.permute.xlu0 %6853
    %6855 = vrot.lane.b32.xlu0 %v6741, 96
    %v6856 = vpop.permute.xlu0 %6855
    %6857 = vrot.lane.b32.xlu0 %v6742, 96
    %v6858 = vpop.permute.xlu0 %6857
    %6859 = vrot.lane.b32.xlu0 %v6743, 96
    %v6860 = vpop.permute.xlu0 %6859
    %6861 = vrot.lane.b32.xlu0 %v6744, 96
    %v6862 = vpop.permute.xlu0 %6861
    %6863 = vrot.lane.b32.xlu0 %v6745, 96
    %v6864 = vpop.permute.xlu0 %6863
    %6865 = vrot.lane.b32.xlu0 %v6746, 96
    %v6866 = vpop.permute.xlu0 %6865
    %6867 = vrot.lane.b32.xlu0 %v6747, 96
    %v6868 = vpop.permute.xlu0 %6867
    %6869 = vrot.lane.b32.xlu0 %v6748, 96
    %v6870 = vpop.permute.xlu0 %6869
    %6871 = vrot.lane.b32.xlu0 %v6749, 96
    %v6872 = vpop.permute.xlu0 %6871
    %6873 = vrot.lane.b32.xlu0 %v6750, 96
    %v6874 = vpop.permute.xlu0 %6873
    %6875 = vrot.lane.b32.xlu0 %v6751, 96
    %v6876 = vpop.permute.xlu0 %6875
    %6877 = vrot.lane.b32.xlu0 %v6752, 96
    %v6878 = vpop.permute.xlu0 %6877
    %6879 = vrot.lane.b32.xlu0 %v6753, 96
    %v6880 = vpop.permute.xlu0 %6879
    %6881 = vrot.lane.b32.xlu0 %v6754, 96
    %v6882 = vpop.permute.xlu0 %6881
    %vm6947 = vcmask 1044224
    %6948 = vst.msk [vmem:[#allocation3 + $0x10] sm:$0xf] %vm6947, %v6756
    %6949 = vst.msk [vmem:[#allocation3 + $0x24] sm:$0xf] %vm6947, %v6758
    %6950 = vst.msk [vmem:[#allocation3 + $0x38] sm:$0xf] %vm6947, %v6760
    %6951 = vst.msk [vmem:[#allocation3 + $0x4c] sm:$0xf] %vm6947, %v6762
    %6952 = vst.msk [vmem:[#allocation3 + $0x60] sm:$0xf] %vm6947, %v6764
    %6953 = vst.msk [vmem:[#allocation3 + $0x74] sm:$0xf] %vm6947, %v6766
    %6954 = vst.msk [vmem:[#allocation3 + $0x88] sm:$0xf] %vm6947, %v6768
    %6955 = vst.msk [vmem:[#allocation3 + $0x9c] sm:$0xf] %vm6947, %v6770
    %6956 = vst.msk [vmem:[#allocation3 + $0xb0] sm:$0xf] %vm6947, %v6772
    %6957 = vst.msk [vmem:[#allocation3 + $0xc4] sm:$0xf] %vm6947, %v6774
    %6958 = vst.msk [vmem:[#allocation3 + $0xd8] sm:$0xf] %vm6947, %v6776
    %6959 = vst.msk [vmem:[#allocation3 + $0xec] sm:$0xf] %vm6947, %v6778
    %6960 = vst.msk [vmem:[#allocation3 + $0x100] sm:$0xf] %vm6947, %v6780
    %6961 = vst.msk [vmem:[#allocation3 + $0x114] sm:$0xf] %vm6947, %v6782
    %6962 = vst.msk [vmem:[#allocation3 + $0x128] sm:$0xf] %vm6947, %v6784
    %6963 = vst.msk [vmem:[#allocation3 + $0x13c] sm:$0xf] %vm6947, %v6786
    %6964 = vst.msk [vmem:[#allocation3 + $0x150] sm:$0xf] %vm6947, %v6788
    %6965 = vst.msk [vmem:[#allocation3 + $0x164] sm:$0xf] %vm6947, %v6790
    %6966 = vst.msk [vmem:[#allocation3 + $0x178] sm:$0xf] %vm6947, %v6792
    %6967 = vst.msk [vmem:[#allocation3 + $0x18c] sm:$0xf] %vm6947, %v6794
    %6968 = vst.msk [vmem:[#allocation3 + $0x1a0] sm:$0xf] %vm6947, %v6796
    %6969 = vst.msk [vmem:[#allocation3 + $0x1b4] sm:$0xf] %vm6947, %v6798
    %6970 = vst.msk [vmem:[#allocation3 + $0x1c8] sm:$0xf] %vm6947, %v6800
    %6971 = vst.msk [vmem:[#allocation3 + $0x1dc] sm:$0xf] %vm6947, %v6802
    %6972 = vst.msk [vmem:[#allocation3 + $0x1f0] sm:$0xf] %vm6947, %v6804
    %6973 = vst.msk [vmem:[#allocation3 + $0x204] sm:$0xf] %vm6947, %v6806
    %6974 = vst.msk [vmem:[#allocation3 + $0x218] sm:$0xf] %vm6947, %v6808
    %6975 = vst.msk [vmem:[#allocation3 + $0x22c] sm:$0xf] %vm6947, %v6810
    %6976 = vst.msk [vmem:[#allocation3 + $0x240] sm:$0xf] %vm6947, %v6812
    %6977 = vst.msk [vmem:[#allocation3 + $0x254] sm:$0xf] %vm6947, %v6814
    %6978 = vst.msk [vmem:[#allocation3 + $0x268] sm:$0xf] %vm6947, %v6816
    %6979 = vst.msk [vmem:[#allocation3 + $0x27c] sm:$0xf] %vm6947, %v6818
    %6980 = vst.msk [vmem:[#allocation3 + $0x290] sm:$0xf] %vm6947, %v6820
    %6981 = vst.msk [vmem:[#allocation3 + $0x2a4] sm:$0xf] %vm6947, %v6822
    %6982 = vst.msk [vmem:[#allocation3 + $0x2b8] sm:$0xf] %vm6947, %v6824
    %6983 = vst.msk [vmem:[#allocation3 + $0x2cc] sm:$0xf] %vm6947, %v6826
    %6984 = vst.msk [vmem:[#allocation3 + $0x2e0] sm:$0xf] %vm6947, %v6828
    %6985 = vst.msk [vmem:[#allocation3 + $0x2f4] sm:$0xf] %vm6947, %v6830
    %6986 = vst.msk [vmem:[#allocation3 + $0x308] sm:$0xf] %vm6947, %v6832
    %6987 = vst.msk [vmem:[#allocation3 + $0x31c] sm:$0xf] %vm6947, %v6834
    %6988 = vst.msk [vmem:[#allocation3 + $0x330] sm:$0xf] %vm6947, %v6836
    %6989 = vst.msk [vmem:[#allocation3 + $0x344] sm:$0xf] %vm6947, %v6838
    %6990 = vst.msk [vmem:[#allocation3 + $0x358] sm:$0xf] %vm6947, %v6840
    %6991 = vst.msk [vmem:[#allocation3 + $0x36c] sm:$0xf] %vm6947, %v6842
    %6992 = vst.msk [vmem:[#allocation3 + $0x380] sm:$0xf] %vm6947, %v6844
    %6993 = vst.msk [vmem:[#allocation3 + $0x394] sm:$0xf] %vm6947, %v6846
    %6994 = vst.msk [vmem:[#allocation3 + $0x3a8] sm:$0xf] %vm6947, %v6848
    %6995 = vst.msk [vmem:[#allocation3 + $0x3bc] sm:$0xf] %vm6947, %v6850
    %6996 = vst.msk [vmem:[#allocation3 + $0x3d0] sm:$0xf] %vm6947, %v6852
    %6997 = vst.msk [vmem:[#allocation3 + $0x3e4] sm:$0xf] %vm6947, %v6854
    %6998 = vst.msk [vmem:[#allocation3 + $0x3f8] sm:$0xf] %vm6947, %v6856
    %6999 = vst.msk [vmem:[#allocation3 + $0x40c] sm:$0xf] %vm6947, %v6858
    %7000 = vst.msk [vmem:[#allocation3 + $0x420] sm:$0xf] %vm6947, %v6860
    %7001 = vst.msk [vmem:[#allocation3 + $0x434] sm:$0xf] %vm6947, %v6862
    %7002 = vst.msk [vmem:[#allocation3 + $0x448] sm:$0xf] %vm6947, %v6864
    %7003 = vst.msk [vmem:[#allocation3 + $0x45c] sm:$0xf] %vm6947, %v6866
    %7004 = vst.msk [vmem:[#allocation3 + $0x470] sm:$0xf] %vm6947, %v6868
    %7005 = vst.msk [vmem:[#allocation3 + $0x484] sm:$0xf] %vm6947, %v6870
    %7006 = vst.msk [vmem:[#allocation3 + $0x498] sm:$0xf] %vm6947, %v6872
    %7007 = vst.msk [vmem:[#allocation3 + $0x4ac] sm:$0xf] %vm6947, %v6874
    %7008 = vst.msk [vmem:[#allocation3 + $0x4c0] sm:$0xf] %vm6947, %v6876
    %7009 = vst.msk [vmem:[#allocation3 + $0x4d4] sm:$0xf] %vm6947, %v6878
    %7010 = vst.msk [vmem:[#allocation3 + $0x4e8] sm:$0xf] %vm6947, %v6880
    %7011 = vst.msk [vmem:[#allocation3 + $0x4fc] sm:$0xf] %vm6947, %v6882
    %v7012 = vld [vmem:[#allocation3] sm:$0xff]
    %v7013 = vld [vmem:[#allocation3 + $0x8] sm:$0xff]
    %v7014 = vld [vmem:[#allocation3 + $0x10] sm:$0xf]
    %v7015 = vld [vmem:[#allocation3 + $0x14] sm:$0xff]
    %v7016 = vld [vmem:[#allocation3 + $0x1c] sm:$0xff]
    %v7017 = vld [vmem:[#allocation3 + $0x24] sm:$0xf]
    %v7018 = vld [vmem:[#allocation3 + $0x28] sm:$0xff]
    %v7019 = vld [vmem:[#allocation3 + $0x30] sm:$0xff]
    %v7020 = vld [vmem:[#allocation3 + $0x38] sm:$0xf]
    %v7021 = vld [vmem:[#allocation3 + $0x3c] sm:$0xff]
    %v7022 = vld [vmem:[#allocation3 + $0x44] sm:$0xff]
    %v7023 = vld [vmem:[#allocation3 + $0x4c] sm:$0xf]
    %v7024 = vld [vmem:[#allocation3 + $0x50] sm:$0xff]
    %v7025 = vld [vmem:[#allocation3 + $0x58] sm:$0xff]
    %v7026 = vld [vmem:[#allocation3 + $0x60] sm:$0xf]
    %v7027 = vld [vmem:[#allocation3 + $0x64] sm:$0xff]
    %v7028 = vld [vmem:[#allocation3 + $0x6c] sm:$0xff]
    %v7029 = vld [vmem:[#allocation3 + $0x74] sm:$0xf]
    %v7030 = vld [vmem:[#allocation3 + $0x78] sm:$0xff]
    %v7031 = vld [vmem:[#allocation3 + $0x80] sm:$0xff]
    %v7032 = vld [vmem:[#allocation3 + $0x88] sm:$0xf]
    %v7033 = vld [vmem:[#allocation3 + $0x8c] sm:$0xff]
    %v7034 = vld [vmem:[#allocation3 + $0x94] sm:$0xff]
    %v7035 = vld [vmem:[#allocation3 + $0x9c] sm:$0xf]
    %v7036 = vld [vmem:[#allocation3 + $0xa0] sm:$0xff]
    %v7037 = vld [vmem:[#allocation3 + $0xa8] sm:$0xff]
    %v7038 = vld [vmem:[#allocation3 + $0xb0] sm:$0xf]
    %v7039 = vld [vmem:[#allocation3 + $0xb4] sm:$0xff]
    %v7040 = vld [vmem:[#allocation3 + $0xbc] sm:$0xff]
    %v7041 = vld [vmem:[#allocation3 + $0xc4] sm:$0xf]
    %v7042 = vld [vmem:[#allocation3 + $0xc8] sm:$0xff]
    %v7043 = vld [vmem:[#allocation3 + $0xd0] sm:$0xff]
    %v7044 = vld [vmem:[#allocation3 + $0xd8] sm:$0xf]
    %v7045 = vld [vmem:[#allocation3 + $0xdc] sm:$0xff]
    %v7046 = vld [vmem:[#allocation3 + $0xe4] sm:$0xff]
    %v7047 = vld [vmem:[#allocation3 + $0xec] sm:$0xf]
    %v7048 = vld [vmem:[#allocation3 + $0xf0] sm:$0xff]
    %v7049 = vld [vmem:[#allocation3 + $0xf8] sm:$0xff]
    %v7050 = vld [vmem:[#allocation3 + $0x100] sm:$0xf]
    %v7051 = vld [vmem:[#allocation3 + $0x104] sm:$0xff]
    %v7052 = vld [vmem:[#allocation3 + $0x10c] sm:$0xff]
    %v7053 = vld [vmem:[#allocation3 + $0x114] sm:$0xf]
    %v7054 = vld [vmem:[#allocation3 + $0x118] sm:$0xff]
    %v7055 = vld [vmem:[#allocation3 + $0x120] sm:$0xff]
    %v7056 = vld [vmem:[#allocation3 + $0x128] sm:$0xf]
    %v7057 = vld [vmem:[#allocation3 + $0x12c] sm:$0xff]
    %v7058 = vld [vmem:[#allocation3 + $0x134] sm:$0xff]
    %v7059 = vld [vmem:[#allocation3 + $0x13c] sm:$0xf]
    %v7060 = vld [vmem:[#allocation3 + $0x140] sm:$0xff]
    %v7061 = vld [vmem:[#allocation3 + $0x148] sm:$0xff]
    %v7062 = vld [vmem:[#allocation3 + $0x150] sm:$0xf]
    %v7063 = vld [vmem:[#allocation3 + $0x154] sm:$0xff]
    %v7064 = vld [vmem:[#allocation3 + $0x15c] sm:$0xff]
    %v7065 = vld [vmem:[#allocation3 + $0x164] sm:$0xf]
    %v7066 = vld [vmem:[#allocation3 + $0x168] sm:$0xff]
    %v7067 = vld [vmem:[#allocation3 + $0x170] sm:$0xff]
    %v7068 = vld [vmem:[#allocation3 + $0x178] sm:$0xf]
    %v7069 = vld [vmem:[#allocation3 + $0x17c] sm:$0xff]
    %v7070 = vld [vmem:[#allocation3 + $0x184] sm:$0xff]
    %v7071 = vld [vmem:[#allocation3 + $0x18c] sm:$0xf]
    %v7072 = vld [vmem:[#allocation3 + $0x190] sm:$0xff]
    %v7073 = vld [vmem:[#allocation3 + $0x198] sm:$0xff]
    %v7074 = vld [vmem:[#allocation3 + $0x1a0] sm:$0xf]
    %v7075 = vld [vmem:[#allocation3 + $0x1a4] sm:$0xff]
    %v7076 = vld [vmem:[#allocation3 + $0x1ac] sm:$0xff]
    %v7077 = vld [vmem:[#allocation3 + $0x1b4] sm:$0xf]
    %v7078 = vld [vmem:[#allocation3 + $0x1b8] sm:$0xff]
    %v7079 = vld [vmem:[#allocation3 + $0x1c0] sm:$0xff]
    %v7080 = vld [vmem:[#allocation3 + $0x1c8] sm:$0xf]
    %v7081 = vld [vmem:[#allocation3 + $0x1cc] sm:$0xff]
    %v7082 = vld [vmem:[#allocation3 + $0x1d4] sm:$0xff]
    %v7083 = vld [vmem:[#allocation3 + $0x1dc] sm:$0xf]
    %v7084 = vld [vmem:[#allocation3 + $0x1e0] sm:$0xff]
    %v7085 = vld [vmem:[#allocation3 + $0x1e8] sm:$0xff]
    %v7086 = vld [vmem:[#allocation3 + $0x1f0] sm:$0xf]
    %v7087 = vld [vmem:[#allocation3 + $0x1f4] sm:$0xff]
    %v7088 = vld [vmem:[#allocation3 + $0x1fc] sm:$0xff]
    %v7089 = vld [vmem:[#allocation3 + $0x204] sm:$0xf]
    %v7090 = vld [vmem:[#allocation3 + $0x208] sm:$0xff]
    %v7091 = vld [vmem:[#allocation3 + $0x210] sm:$0xff]
    %v7092 = vld [vmem:[#allocation3 + $0x218] sm:$0xf]
    %v7093 = vld [vmem:[#allocation3 + $0x21c] sm:$0xff]
    %v7094 = vld [vmem:[#allocation3 + $0x224] sm:$0xff]
    %v7095 = vld [vmem:[#allocation3 + $0x22c] sm:$0xf]
    %v7096 = vld [vmem:[#allocation3 + $0x230] sm:$0xff]
    %v7097 = vld [vmem:[#allocation3 + $0x238] sm:$0xff]
    %v7098 = vld [vmem:[#allocation3 + $0x240] sm:$0xf]
    %v7099 = vld [vmem:[#allocation3 + $0x244] sm:$0xff]
    %v7100 = vld [vmem:[#allocation3 + $0x24c] sm:$0xff]
    %v7101 = vld [vmem:[#allocation3 + $0x254] sm:$0xf]
    %v7102 = vld [vmem:[#allocation3 + $0x258] sm:$0xff]
    %v7103 = vld [vmem:[#allocation3 + $0x260] sm:$0xff]
    %v7104 = vld [vmem:[#allocation3 + $0x268] sm:$0xf]
    %v7105 = vld [vmem:[#allocation3 + $0x26c] sm:$0xff]
    %v7106 = vld [vmem:[#allocation3 + $0x274] sm:$0xff]
    %v7107 = vld [vmem:[#allocation3 + $0x27c] sm:$0xf]
    %v7108 = vld [vmem:[#allocation3 + $0x280] sm:$0xff]
    %v7109 = vld [vmem:[#allocation3 + $0x288] sm:$0xff]
    %v7110 = vld [vmem:[#allocation3 + $0x290] sm:$0xf]
    %v7111 = vld [vmem:[#allocation3 + $0x294] sm:$0xff]
    %v7112 = vld [vmem:[#allocation3 + $0x29c] sm:$0xff]
    %v7113 = vld [vmem:[#allocation3 + $0x2a4] sm:$0xf]
    %v7114 = vld [vmem:[#allocation3 + $0x2a8] sm:$0xff]
    %v7115 = vld [vmem:[#allocation3 + $0x2b0] sm:$0xff]
    %v7116 = vld [vmem:[#allocation3 + $0x2b8] sm:$0xf]
    %v7117 = vld [vmem:[#allocation3 + $0x2bc] sm:$0xff]
    %v7118 = vld [vmem:[#allocation3 + $0x2c4] sm:$0xff]
    %v7119 = vld [vmem:[#allocation3 + $0x2cc] sm:$0xf]
    %v7120 = vld [vmem:[#allocation3 + $0x2d0] sm:$0xff]
    %v7121 = vld [vmem:[#allocation3 + $0x2d8] sm:$0xff]
    %v7122 = vld [vmem:[#allocation3 + $0x2e0] sm:$0xf]
    %v7123 = vld [vmem:[#allocation3 + $0x2e4] sm:$0xff]
    %v7124 = vld [vmem:[#allocation3 + $0x2ec] sm:$0xff]
    %v7125 = vld [vmem:[#allocation3 + $0x2f4] sm:$0xf]
    %v7126 = vld [vmem:[#allocation3 + $0x2f8] sm:$0xff]
    %v7127 = vld [vmem:[#allocation3 + $0x300] sm:$0xff]
    %v7128 = vld [vmem:[#allocation3 + $0x308] sm:$0xf]
    %v7129 = vld [vmem:[#allocation3 + $0x30c] sm:$0xff]
    %v7130 = vld [vmem:[#allocation3 + $0x314] sm:$0xff]
    %v7131 = vld [vmem:[#allocation3 + $0x31c] sm:$0xf]
    %v7132 = vld [vmem:[#allocation3 + $0x320] sm:$0xff]
    %v7133 = vld [vmem:[#allocation3 + $0x328] sm:$0xff]
    %v7134 = vld [vmem:[#allocation3 + $0x330] sm:$0xf]
    %v7135 = vld [vmem:[#allocation3 + $0x334] sm:$0xff]
    %v7136 = vld [vmem:[#allocation3 + $0x33c] sm:$0xff]
    %v7137 = vld [vmem:[#allocation3 + $0x344] sm:$0xf]
    %v7138 = vld [vmem:[#allocation3 + $0x348] sm:$0xff]
    %v7139 = vld [vmem:[#allocation3 + $0x350] sm:$0xff]
    %v7140 = vld [vmem:[#allocation3 + $0x358] sm:$0xf]
    %v7141 = vld [vmem:[#allocation3 + $0x35c] sm:$0xff]
    %v7142 = vld [vmem:[#allocation3 + $0x364] sm:$0xff]
    %v7143 = vld [vmem:[#allocation3 + $0x36c] sm:$0xf]
    %v7144 = vld [vmem:[#allocation3 + $0x370] sm:$0xff]
    %v7145 = vld [vmem:[#allocation3 + $0x378] sm:$0xff]
    %v7146 = vld [vmem:[#allocation3 + $0x380] sm:$0xf]
    %v7147 = vld [vmem:[#allocation3 + $0x384] sm:$0xff]
    %v7148 = vld [vmem:[#allocation3 + $0x38c] sm:$0xff]
    %v7149 = vld [vmem:[#allocation3 + $0x394] sm:$0xf]
    %v7150 = vld [vmem:[#allocation3 + $0x398] sm:$0xff]
    %v7151 = vld [vmem:[#allocation3 + $0x3a0] sm:$0xff]
    %v7152 = vld [vmem:[#allocation3 + $0x3a8] sm:$0xf]
    %v7153 = vld [vmem:[#allocation3 + $0x3ac] sm:$0xff]
    %v7154 = vld [vmem:[#allocation3 + $0x3b4] sm:$0xff]
    %v7155 = vld [vmem:[#allocation3 + $0x3bc] sm:$0xf]
    %v7156 = vld [vmem:[#allocation3 + $0x3c0] sm:$0xff]
    %v7157 = vld [vmem:[#allocation3 + $0x3c8] sm:$0xff]
    %v7158 = vld [vmem:[#allocation3 + $0x3d0] sm:$0xf]
    %v7159 = vld [vmem:[#allocation3 + $0x3d4] sm:$0xff]
    %v7160 = vld [vmem:[#allocation3 + $0x3dc] sm:$0xff]
    %v7161 = vld [vmem:[#allocation3 + $0x3e4] sm:$0xf]
    %v7162 = vld [vmem:[#allocation3 + $0x3e8] sm:$0xff]
    %v7163 = vld [vmem:[#allocation3 + $0x3f0] sm:$0xff]
    %v7164 = vld [vmem:[#allocation3 + $0x3f8] sm:$0xf]
    %v7165 = vld [vmem:[#allocation3 + $0x3fc] sm:$0xff]
    %v7166 = vld [vmem:[#allocation3 + $0x404] sm:$0xff]
    %v7167 = vld [vmem:[#allocation3 + $0x40c] sm:$0xf]
    %v7168 = vld [vmem:[#allocation3 + $0x410] sm:$0xff]
    %v7169 = vld [vmem:[#allocation3 + $0x418] sm:$0xff]
    %v7170 = vld [vmem:[#allocation3 + $0x420] sm:$0xf]
    %v7171 = vld [vmem:[#allocation3 + $0x424] sm:$0xff]
    %v7172 = vld [vmem:[#allocation3 + $0x42c] sm:$0xff]
    %v7173 = vld [vmem:[#allocation3 + $0x434] sm:$0xf]
    %v7174 = vld [vmem:[#allocation3 + $0x438] sm:$0xff]
    %v7175 = vld [vmem:[#allocation3 + $0x440] sm:$0xff]
    %v7176 = vld [vmem:[#allocation3 + $0x448] sm:$0xf]
    %v7177 = vld [vmem:[#allocation3 + $0x44c] sm:$0xff]
    %v7178 = vld [vmem:[#allocation3 + $0x454] sm:$0xff]
    %v7179 = vld [vmem:[#allocation3 + $0x45c] sm:$0xf]
    %v7180 = vld [vmem:[#allocation3 + $0x460] sm:$0xff]
    %v7181 = vld [vmem:[#allocation3 + $0x468] sm:$0xff]
    %v7182 = vld [vmem:[#allocation3 + $0x470] sm:$0xf]
    %v7183 = vld [vmem:[#allocation3 + $0x474] sm:$0xff]
    %v7184 = vld [vmem:[#allocation3 + $0x47c] sm:$0xff]
    %v7185 = vld [vmem:[#allocation3 + $0x484] sm:$0xf]
    %v7186 = vld [vmem:[#allocation3 + $0x488] sm:$0xff]
    %v7187 = vld [vmem:[#allocation3 + $0x490] sm:$0xff]
    %v7188 = vld [vmem:[#allocation3 + $0x498] sm:$0xf]
    %v7189 = vld [vmem:[#allocation3 + $0x49c] sm:$0xff]
    %v7190 = vld [vmem:[#allocation3 + $0x4a4] sm:$0xff]
    %v7191 = vld [vmem:[#allocation3 + $0x4ac] sm:$0xf]
    %v7192 = vld [vmem:[#allocation3 + $0x4b0] sm:$0xff]
    %v7193 = vld [vmem:[#allocation3 + $0x4b8] sm:$0xff]
    %v7194 = vld [vmem:[#allocation3 + $0x4c0] sm:$0xf]
    %v7195 = vld [vmem:[#allocation3 + $0x4c4] sm:$0xff]
    %v7196 = vld [vmem:[#allocation3 + $0x4cc] sm:$0xff]
    %v7197 = vld [vmem:[#allocation3 + $0x4d4] sm:$0xf]
    %v7198 = vld [vmem:[#allocation3 + $0x4d8] sm:$0xff]
    %v7199 = vld [vmem:[#allocation3 + $0x4e0] sm:$0xff]
    %v7200 = vld [vmem:[#allocation3 + $0x4e8] sm:$0xf]
    %v7201 = vld [vmem:[#allocation3 + $0x4ec] sm:$0xff]
    %v7202 = vld [vmem:[#allocation3 + $0x4f4] sm:$0xff]
    %v7203 = vld [vmem:[#allocation3 + $0x4fc] sm:$0xf]
    %v7204 = vld [vmem:[%s6] sm:$0xff]
    %v7205 = vld [vmem:[%s6 + $0x8] sm:$0xff]
    %v7206 = vld [vmem:[%s6 + $0x10] sm:$0xff]
    %v7207 = vld [vmem:[%s6 + $0x18] sm:$0xff]
    %v7208 = vld [vmem:[%s6 + $0x20] sm:$0xff]
    %v7209 = vld [vmem:[%s6 + $0x28] sm:$0xff]
    %v7210 = vld [vmem:[%s6 + $0x30] sm:$0xff]
    %v7211 = vld [vmem:[%s6 + $0x38] sm:$0xff]
    %v7212 = vld [vmem:[%s6 + $0x40] sm:$0xff]
    %v7213 = vld [vmem:[%s6 + $0x48] sm:$0xff]
    %v7214 = vld [vmem:[%s6 + $0x50] sm:$0xff]
    %v7215 = vld [vmem:[%s6 + $0x58] sm:$0xff]
    %v7216 = vld [vmem:[%s6 + $0x60] sm:$0xff]
    %v7217 = vld [vmem:[%s6 + $0x68] sm:$0xff]
    %v7218 = vld [vmem:[%s6 + $0x70] sm:$0xff]
    %v7219 = vld [vmem:[%s6 + $0x78] sm:$0xff]
    %v7220 = vld [vmem:[%s6 + $0x80] sm:$0xff]
    %v7221 = vld [vmem:[%s6 + $0x88] sm:$0xff]
    %v7222 = vld [vmem:[%s6 + $0x90] sm:$0xff]
    %v7223 = vld [vmem:[%s6 + $0x98] sm:$0xff]
    %v7224 = vld [vmem:[%s6 + $0xa0] sm:$0xff]
    %v7225 = vld [vmem:[%s6 + $0xa8] sm:$0xff]
    %v7226 = vld [vmem:[%s6 + $0xb0] sm:$0xff]
    %v7227 = vld [vmem:[%s6 + $0xb8] sm:$0xff]
    %v7228 = vld [vmem:[%s6 + $0xc0] sm:$0xff]
    %v7229 = vld [vmem:[%s6 + $0xc8] sm:$0xff]
    %v7230 = vld [vmem:[%s6 + $0xd0] sm:$0xff]
    %v7231 = vld [vmem:[%s6 + $0xd8] sm:$0xff]
    %v7232 = vld [vmem:[%s6 + $0xe0] sm:$0xff]
    %v7233 = vld [vmem:[%s6 + $0xe8] sm:$0xff]
    %v7234 = vld [vmem:[%s6 + $0xf0] sm:$0xff]
    %v7235 = vld [vmem:[%s6 + $0xf8] sm:$0xff]
    %v7236 = vld [vmem:[%s6 + $0x100] sm:$0xff]
    %v7237 = vld [vmem:[%s6 + $0x108] sm:$0xff]
    %v7238 = vld [vmem:[%s6 + $0x110] sm:$0xff]
    %v7239 = vld [vmem:[%s6 + $0x118] sm:$0xff]
    %v7240 = vld [vmem:[%s6 + $0x120] sm:$0xff]
    %v7241 = vld [vmem:[%s6 + $0x128] sm:$0xff]
    %v7242 = vld [vmem:[%s6 + $0x130] sm:$0xff]
    %v7243 = vld [vmem:[%s6 + $0x138] sm:$0xff]
    %v7244 = vld [vmem:[%s6 + $0x140] sm:$0xff]
    %v7245 = vld [vmem:[%s6 + $0x148] sm:$0xff]
    %v7246 = vld [vmem:[%s6 + $0x150] sm:$0xff]
    %v7247 = vld [vmem:[%s6 + $0x158] sm:$0xff]
    %v7248 = vld [vmem:[%s6 + $0x160] sm:$0xff]
    %v7249 = vld [vmem:[%s6 + $0x168] sm:$0xff]
    %v7250 = vld [vmem:[%s6 + $0x170] sm:$0xff]
    %v7251 = vld [vmem:[%s6 + $0x178] sm:$0xff]
    %v7252 = vld [vmem:[%s6 + $0x180] sm:$0xff]
    %v7253 = vld [vmem:[%s6 + $0x188] sm:$0xff]
    %v7254 = vld [vmem:[%s6 + $0x190] sm:$0xff]
    %v7255 = vld [vmem:[%s6 + $0x198] sm:$0xff]
    %v7256 = vld [vmem:[%s6 + $0x1a0] sm:$0xff]
    %v7257 = vld [vmem:[%s6 + $0x1a8] sm:$0xff]
    %v7258 = vld [vmem:[%s6 + $0x1b0] sm:$0xff]
    %v7259 = vld [vmem:[%s6 + $0x1b8] sm:$0xff]
    %v7260 = vld [vmem:[%s6 + $0x1c0] sm:$0xff]
    %v7261 = vld [vmem:[%s6 + $0x1c8] sm:$0xff]
    %v7262 = vld [vmem:[%s6 + $0x1d0] sm:$0xff]
    %v7263 = vld [vmem:[%s6 + $0x1d8] sm:$0xff]
    %v7264 = vld [vmem:[%s6 + $0x1e0] sm:$0xff]
    %v7265 = vld [vmem:[%s6 + $0x1e8] sm:$0xff]
    %v7266 = vld [vmem:[%s6 + $0x1f0] sm:$0xff]
    %v7267 = vld [vmem:[%s6 + $0x1f8] sm:$0xff]
    %v7268 = vld [vmem:[%s6 + $0x200] sm:$0xff]
    %v7269 = vld [vmem:[%s6 + $0x208] sm:$0xff]
    %v7270 = vld [vmem:[%s6 + $0x210] sm:$0xff]
    %v7271 = vld [vmem:[%s6 + $0x218] sm:$0xff]
    %v7272 = vld [vmem:[%s6 + $0x220] sm:$0xff]
    %v7273 = vld [vmem:[%s6 + $0x228] sm:$0xff]
    %v7274 = vld [vmem:[%s6 + $0x230] sm:$0xff]
    %v7275 = vld [vmem:[%s6 + $0x238] sm:$0xff]
    %v7276 = vld [vmem:[%s6 + $0x240] sm:$0xff]
    %v7277 = vld [vmem:[%s6 + $0x248] sm:$0xff]
    %v7278 = vld [vmem:[%s6 + $0x250] sm:$0xff]
    %v7279 = vld [vmem:[%s6 + $0x258] sm:$0xff]
    %v7280 = vld [vmem:[%s6 + $0x260] sm:$0xff]
    %v7281 = vld [vmem:[%s6 + $0x268] sm:$0xff]
    %v7282 = vld [vmem:[%s6 + $0x270] sm:$0xff]
    %v7283 = vld [vmem:[%s6 + $0x278] sm:$0xff]
    %v7476 = vunpack.c.l.b16 %v7012
    %v7477 = vunpack.c.h.b16 %v7012
    %v7478 = vunpack.c.l.b16 %v7013
    %v7479 = vunpack.c.h.b16 %v7013
    %v7480 = vunpack.c.l.b16 %v7014
    %v7481 = vunpack.c.l.b16 %v7015
    %v7482 = vunpack.c.h.b16 %v7015
    %v7483 = vunpack.c.l.b16 %v7016
    %v7484 = vunpack.c.h.b16 %v7016
    %v7485 = vunpack.c.l.b16 %v7017
    %v7486 = vunpack.c.l.b16 %v7018
    %v7487 = vunpack.c.h.b16 %v7018
    %v7488 = vunpack.c.l.b16 %v7019
    %v7489 = vunpack.c.h.b16 %v7019
    %v7490 = vunpack.c.l.b16 %v7020
    %v7491 = vunpack.c.l.b16 %v7021
    %v7492 = vunpack.c.h.b16 %v7021
    %v7493 = vunpack.c.l.b16 %v7022
    %v7494 = vunpack.c.h.b16 %v7022
    %v7495 = vunpack.c.l.b16 %v7023
    %v7496 = vunpack.c.l.b16 %v7024
    %v7497 = vunpack.c.h.b16 %v7024
    %v7498 = vunpack.c.l.b16 %v7025
    %v7499 = vunpack.c.h.b16 %v7025
    %v7500 = vunpack.c.l.b16 %v7026
    %v7501 = vunpack.c.l.b16 %v7027
    %v7502 = vunpack.c.h.b16 %v7027
    %v7503 = vunpack.c.l.b16 %v7028
    %v7504 = vunpack.c.h.b16 %v7028
    %v7505 = vunpack.c.l.b16 %v7029
    %v7506 = vunpack.c.l.b16 %v7030
    %v7507 = vunpack.c.h.b16 %v7030
    %v7508 = vunpack.c.l.b16 %v7031
    %v7509 = vunpack.c.h.b16 %v7031
    %v7510 = vunpack.c.l.b16 %v7032
    %v7511 = vunpack.c.l.b16 %v7033
    %v7512 = vunpack.c.h.b16 %v7033
    %v7513 = vunpack.c.l.b16 %v7034
    %v7514 = vunpack.c.h.b16 %v7034
    %v7515 = vunpack.c.l.b16 %v7035
    %v7516 = vunpack.c.l.b16 %v7036
    %v7517 = vunpack.c.h.b16 %v7036
    %v7518 = vunpack.c.l.b16 %v7037
    %v7519 = vunpack.c.h.b16 %v7037
    %v7520 = vunpack.c.l.b16 %v7038
    %v7521 = vunpack.c.l.b16 %v7039
    %v7522 = vunpack.c.h.b16 %v7039
    %v7523 = vunpack.c.l.b16 %v7040
    %v7524 = vunpack.c.h.b16 %v7040
    %v7525 = vunpack.c.l.b16 %v7041
    %v7526 = vunpack.c.l.b16 %v7042
    %v7527 = vunpack.c.h.b16 %v7042
    %v7528 = vunpack.c.l.b16 %v7043
    %v7529 = vunpack.c.h.b16 %v7043
    %v7530 = vunpack.c.l.b16 %v7044
    %v7531 = vunpack.c.l.b16 %v7045
    %v7532 = vunpack.c.h.b16 %v7045
    %v7533 = vunpack.c.l.b16 %v7046
    %v7534 = vunpack.c.h.b16 %v7046
    %v7535 = vunpack.c.l.b16 %v7047
    %v7536 = vunpack.c.l.b16 %v7048
    %v7537 = vunpack.c.h.b16 %v7048
    %v7538 = vunpack.c.l.b16 %v7049
    %v7539 = vunpack.c.h.b16 %v7049
    %v7540 = vunpack.c.l.b16 %v7050
    %v7541 = vunpack.c.l.b16 %v7051
    %v7542 = vunpack.c.h.b16 %v7051
    %v7543 = vunpack.c.l.b16 %v7052
    %v7544 = vunpack.c.h.b16 %v7052
    %v7545 = vunpack.c.l.b16 %v7053
    %v7546 = vunpack.c.l.b16 %v7054
    %v7547 = vunpack.c.h.b16 %v7054
    %v7548 = vunpack.c.l.b16 %v7055
    %v7549 = vunpack.c.h.b16 %v7055
    %v7550 = vunpack.c.l.b16 %v7056
    %v7551 = vunpack.c.l.b16 %v7057
    %v7552 = vunpack.c.h.b16 %v7057
    %v7553 = vunpack.c.l.b16 %v7058
    %v7554 = vunpack.c.h.b16 %v7058
    %v7555 = vunpack.c.l.b16 %v7059
    %v7556 = vunpack.c.l.b16 %v7060
    %v7557 = vunpack.c.h.b16 %v7060
    %v7558 = vunpack.c.l.b16 %v7061
    %v7559 = vunpack.c.h.b16 %v7061
    %v7560 = vunpack.c.l.b16 %v7062
    %v7561 = vunpack.c.l.b16 %v7063
    %v7562 = vunpack.c.h.b16 %v7063
    %v7563 = vunpack.c.l.b16 %v7064
    %v7564 = vunpack.c.h.b16 %v7064
    %v7565 = vunpack.c.l.b16 %v7065
    %v7566 = vunpack.c.l.b16 %v7066
    %v7567 = vunpack.c.h.b16 %v7066
    %v7568 = vunpack.c.l.b16 %v7067
    %v7569 = vunpack.c.h.b16 %v7067
    %v7570 = vunpack.c.l.b16 %v7068
    %v7571 = vunpack.c.l.b16 %v7069
    %v7572 = vunpack.c.h.b16 %v7069
    %v7573 = vunpack.c.l.b16 %v7070
    %v7574 = vunpack.c.h.b16 %v7070
    %v7575 = vunpack.c.l.b16 %v7071
    %v7576 = vunpack.c.l.b16 %v7072
    %v7577 = vunpack.c.h.b16 %v7072
    %v7578 = vunpack.c.l.b16 %v7073
    %v7579 = vunpack.c.h.b16 %v7073
    %v7580 = vunpack.c.l.b16 %v7074
    %v7581 = vunpack.c.l.b16 %v7075
    %v7582 = vunpack.c.h.b16 %v7075
    %v7583 = vunpack.c.l.b16 %v7076
    %v7584 = vunpack.c.h.b16 %v7076
    %v7585 = vunpack.c.l.b16 %v7077
    %v7586 = vunpack.c.l.b16 %v7078
    %v7587 = vunpack.c.h.b16 %v7078
    %v7588 = vunpack.c.l.b16 %v7079
    %v7589 = vunpack.c.h.b16 %v7079
    %v7590 = vunpack.c.l.b16 %v7080
    %v7591 = vunpack.c.l.b16 %v7081
    %v7592 = vunpack.c.h.b16 %v7081
    %v7593 = vunpack.c.l.b16 %v7082
    %v7594 = vunpack.c.h.b16 %v7082
    %v7595 = vunpack.c.l.b16 %v7083
    %v7596 = vunpack.c.l.b16 %v7084
    %v7597 = vunpack.c.h.b16 %v7084
    %v7598 = vunpack.c.l.b16 %v7085
    %v7599 = vunpack.c.h.b16 %v7085
    %v7600 = vunpack.c.l.b16 %v7086
    %v7601 = vunpack.c.l.b16 %v7087
    %v7602 = vunpack.c.h.b16 %v7087
    %v7603 = vunpack.c.l.b16 %v7088
    %v7604 = vunpack.c.h.b16 %v7088
    %v7605 = vunpack.c.l.b16 %v7089
    %v7606 = vunpack.c.l.b16 %v7090
    %v7607 = vunpack.c.h.b16 %v7090
    %v7608 = vunpack.c.l.b16 %v7091
    %v7609 = vunpack.c.h.b16 %v7091
    %v7610 = vunpack.c.l.b16 %v7092
    %v7611 = vunpack.c.l.b16 %v7093
    %v7612 = vunpack.c.h.b16 %v7093
    %v7613 = vunpack.c.l.b16 %v7094
    %v7614 = vunpack.c.h.b16 %v7094
    %v7615 = vunpack.c.l.b16 %v7095
    %v7616 = vunpack.c.l.b16 %v7096
    %v7617 = vunpack.c.h.b16 %v7096
    %v7618 = vunpack.c.l.b16 %v7097
    %v7619 = vunpack.c.h.b16 %v7097
    %v7620 = vunpack.c.l.b16 %v7098
    %v7621 = vunpack.c.l.b16 %v7099
    %v7622 = vunpack.c.h.b16 %v7099
    %v7623 = vunpack.c.l.b16 %v7100
    %v7624 = vunpack.c.h.b16 %v7100
    %v7625 = vunpack.c.l.b16 %v7101
    %v7626 = vunpack.c.l.b16 %v7102
    %v7627 = vunpack.c.h.b16 %v7102
    %v7628 = vunpack.c.l.b16 %v7103
    %v7629 = vunpack.c.h.b16 %v7103
    %v7630 = vunpack.c.l.b16 %v7104
    %v7631 = vunpack.c.l.b16 %v7105
    %v7632 = vunpack.c.h.b16 %v7105
    %v7633 = vunpack.c.l.b16 %v7106
    %v7634 = vunpack.c.h.b16 %v7106
    %v7635 = vunpack.c.l.b16 %v7107
    %v7636 = vunpack.c.l.b16 %v7108
    %v7637 = vunpack.c.h.b16 %v7108
    %v7638 = vunpack.c.l.b16 %v7109
    %v7639 = vunpack.c.h.b16 %v7109
    %v7640 = vunpack.c.l.b16 %v7110
    %v7641 = vunpack.c.l.b16 %v7111
    %v7642 = vunpack.c.h.b16 %v7111
    %v7643 = vunpack.c.l.b16 %v7112
    %v7644 = vunpack.c.h.b16 %v7112
    %v7645 = vunpack.c.l.b16 %v7113
    %v7646 = vunpack.c.l.b16 %v7114
    %v7647 = vunpack.c.h.b16 %v7114
    %v7648 = vunpack.c.l.b16 %v7115
    %v7649 = vunpack.c.h.b16 %v7115
    %v7650 = vunpack.c.l.b16 %v7116
    %v7651 = vunpack.c.l.b16 %v7117
    %v7652 = vunpack.c.h.b16 %v7117
    %v7653 = vunpack.c.l.b16 %v7118
    %v7654 = vunpack.c.h.b16 %v7118
    %v7655 = vunpack.c.l.b16 %v7119
    %v7656 = vunpack.c.l.b16 %v7120
    %v7657 = vunpack.c.h.b16 %v7120
    %v7658 = vunpack.c.l.b16 %v7121
    %v7659 = vunpack.c.h.b16 %v7121
    %v7660 = vunpack.c.l.b16 %v7122
    %v7661 = vunpack.c.l.b16 %v7123
    %v7662 = vunpack.c.h.b16 %v7123
    %v7663 = vunpack.c.l.b16 %v7124
    %v7664 = vunpack.c.h.b16 %v7124
    %v7665 = vunpack.c.l.b16 %v7125
    %v7666 = vunpack.c.l.b16 %v7126
    %v7667 = vunpack.c.h.b16 %v7126
    %v7668 = vunpack.c.l.b16 %v7127
    %v7669 = vunpack.c.h.b16 %v7127
    %v7670 = vunpack.c.l.b16 %v7128
    %v7671 = vunpack.c.l.b16 %v7129
    %v7672 = vunpack.c.h.b16 %v7129
    %v7673 = vunpack.c.l.b16 %v7130
    %v7674 = vunpack.c.h.b16 %v7130
    %v7675 = vunpack.c.l.b16 %v7131
    %v7676 = vunpack.c.l.b16 %v7132
    %v7677 = vunpack.c.h.b16 %v7132
    %v7678 = vunpack.c.l.b16 %v7133
    %v7679 = vunpack.c.h.b16 %v7133
    %v7680 = vunpack.c.l.b16 %v7134
    %v7681 = vunpack.c.l.b16 %v7135
    %v7682 = vunpack.c.h.b16 %v7135
    %v7683 = vunpack.c.l.b16 %v7136
    %v7684 = vunpack.c.h.b16 %v7136
    %v7685 = vunpack.c.l.b16 %v7137
    %v7686 = vunpack.c.l.b16 %v7138
    %v7687 = vunpack.c.h.b16 %v7138
    %v7688 = vunpack.c.l.b16 %v7139
    %v7689 = vunpack.c.h.b16 %v7139
    %v7690 = vunpack.c.l.b16 %v7140
    %v7691 = vunpack.c.l.b16 %v7141
    %v7692 = vunpack.c.h.b16 %v7141
    %v7693 = vunpack.c.l.b16 %v7142
    %v7694 = vunpack.c.h.b16 %v7142
    %v7695 = vunpack.c.l.b16 %v7143
    %v7696 = vunpack.c.l.b16 %v7144
    %v7697 = vunpack.c.h.b16 %v7144
    %v7698 = vunpack.c.l.b16 %v7145
    %v7699 = vunpack.c.h.b16 %v7145
    %v7700 = vunpack.c.l.b16 %v7146
    %v7701 = vunpack.c.l.b16 %v7147
    %v7702 = vunpack.c.h.b16 %v7147
    %v7703 = vunpack.c.l.b16 %v7148
    %v7704 = vunpack.c.h.b16 %v7148
    %v7705 = vunpack.c.l.b16 %v7149
    %v7706 = vunpack.c.l.b16 %v7150
    %v7707 = vunpack.c.h.b16 %v7150
    %v7708 = vunpack.c.l.b16 %v7151
    %v7709 = vunpack.c.h.b16 %v7151
    %v7710 = vunpack.c.l.b16 %v7152
    %v7711 = vunpack.c.l.b16 %v7153
    %v7712 = vunpack.c.h.b16 %v7153
    %v7713 = vunpack.c.l.b16 %v7154
    %v7714 = vunpack.c.h.b16 %v7154
    %v7715 = vunpack.c.l.b16 %v7155
    %v7716 = vunpack.c.l.b16 %v7156
    %v7717 = vunpack.c.h.b16 %v7156
    %v7718 = vunpack.c.l.b16 %v7157
    %v7719 = vunpack.c.h.b16 %v7157
    %v7720 = vunpack.c.l.b16 %v7158
    %v7721 = vunpack.c.l.b16 %v7159
    %v7722 = vunpack.c.h.b16 %v7159
    %v7723 = vunpack.c.l.b16 %v7160
    %v7724 = vunpack.c.h.b16 %v7160
    %v7725 = vunpack.c.l.b16 %v7161
    %v7726 = vunpack.c.l.b16 %v7162
    %v7727 = vunpack.c.h.b16 %v7162
    %v7728 = vunpack.c.l.b16 %v7163
    %v7729 = vunpack.c.h.b16 %v7163
    %v7730 = vunpack.c.l.b16 %v7164
    %v7731 = vunpack.c.l.b16 %v7165
    %v7732 = vunpack.c.h.b16 %v7165
    %v7733 = vunpack.c.l.b16 %v7166
    %v7734 = vunpack.c.h.b16 %v7166
    %v7735 = vunpack.c.l.b16 %v7167
    %v7736 = vunpack.c.l.b16 %v7168
    %v7737 = vunpack.c.h.b16 %v7168
    %v7738 = vunpack.c.l.b16 %v7169
    %v7739 = vunpack.c.h.b16 %v7169
    %v7740 = vunpack.c.l.b16 %v7170
    %v7741 = vunpack.c.l.b16 %v7171
    %v7742 = vunpack.c.h.b16 %v7171
    %v7743 = vunpack.c.l.b16 %v7172
    %v7744 = vunpack.c.h.b16 %v7172
    %v7745 = vunpack.c.l.b16 %v7173
    %v7746 = vunpack.c.l.b16 %v7174
    %v7747 = vunpack.c.h.b16 %v7174
    %v7748 = vunpack.c.l.b16 %v7175
    %v7749 = vunpack.c.h.b16 %v7175
    %v7750 = vunpack.c.l.b16 %v7176
    %v7751 = vunpack.c.l.b16 %v7177
    %v7752 = vunpack.c.h.b16 %v7177
    %v7753 = vunpack.c.l.b16 %v7178
    %v7754 = vunpack.c.h.b16 %v7178
    %v7755 = vunpack.c.l.b16 %v7179
    %v7756 = vunpack.c.l.b16 %v7180
    %v7757 = vunpack.c.h.b16 %v7180
    %v7758 = vunpack.c.l.b16 %v7181
    %v7759 = vunpack.c.h.b16 %v7181
    %v7760 = vunpack.c.l.b16 %v7182
    %v7761 = vunpack.c.l.b16 %v7183
    %v7762 = vunpack.c.h.b16 %v7183
    %v7763 = vunpack.c.l.b16 %v7184
    %v7764 = vunpack.c.h.b16 %v7184
    %v7765 = vunpack.c.l.b16 %v7185
    %v7766 = vunpack.c.l.b16 %v7186
    %v7767 = vunpack.c.h.b16 %v7186
    %v7768 = vunpack.c.l.b16 %v7187
    %v7769 = vunpack.c.h.b16 %v7187
    %v7770 = vunpack.c.l.b16 %v7188
    %v7771 = vunpack.c.l.b16 %v7189
    %v7772 = vunpack.c.h.b16 %v7189
    %v7773 = vunpack.c.l.b16 %v7190
    %v7774 = vunpack.c.h.b16 %v7190
    %v7775 = vunpack.c.l.b16 %v7191
    %v7776 = vunpack.c.l.b16 %v7192
    %v7777 = vunpack.c.h.b16 %v7192
    %v7778 = vunpack.c.l.b16 %v7193
    %v7779 = vunpack.c.h.b16 %v7193
    %v7780 = vunpack.c.l.b16 %v7194
    %v7781 = vunpack.c.l.b16 %v7195
    %v7782 = vunpack.c.h.b16 %v7195
    %v7783 = vunpack.c.l.b16 %v7196
    %v7784 = vunpack.c.h.b16 %v7196
    %v7785 = vunpack.c.l.b16 %v7197
    %v7786 = vunpack.c.l.b16 %v7198
    %v7787 = vunpack.c.h.b16 %v7198
    %v7788 = vunpack.c.l.b16 %v7199
    %v7789 = vunpack.c.h.b16 %v7199
    %v7790 = vunpack.c.l.b16 %v7200
    %v7791 = vunpack.c.l.b16 %v7201
    %v7792 = vunpack.c.h.b16 %v7201
    %v7793 = vunpack.c.l.b16 %v7202
    %v7794 = vunpack.c.h.b16 %v7202
    %v7795 = vunpack.c.l.b16 %v7203
    %v7796 = vpack.c.b16 %v7481, %v7476
    %v7797 = vpack.c.b16 %v7482, %v7477
    %v7798 = vpack.c.b16 %v7483, %v7478
    %v7799 = vpack.c.b16 %v7484, %v7479
    %v7800 = vpack.c.b16 %v7485, %v7480
    %v7801 = vpack.c.b16 %v7491, %v7486
    %v7802 = vpack.c.b16 %v7492, %v7487
    %v7803 = vpack.c.b16 %v7493, %v7488
    %v7804 = vpack.c.b16 %v7494, %v7489
    %v7805 = vpack.c.b16 %v7495, %v7490
    %v7806 = vpack.c.b16 %v7501, %v7496
    %v7807 = vpack.c.b16 %v7502, %v7497
    %v7808 = vpack.c.b16 %v7503, %v7498
    %v7809 = vpack.c.b16 %v7504, %v7499
    %v7810 = vpack.c.b16 %v7505, %v7500
    %v7811 = vpack.c.b16 %v7511, %v7506
    %v7812 = vpack.c.b16 %v7512, %v7507
    %v7813 = vpack.c.b16 %v7513, %v7508
    %v7814 = vpack.c.b16 %v7514, %v7509
    %v7815 = vpack.c.b16 %v7515, %v7510
    %v7816 = vpack.c.b16 %v7521, %v7516
    %v7817 = vpack.c.b16 %v7522, %v7517
    %v7818 = vpack.c.b16 %v7523, %v7518
    %v7819 = vpack.c.b16 %v7524, %v7519
    %v7820 = vpack.c.b16 %v7525, %v7520
    %v7821 = vpack.c.b16 %v7531, %v7526
    %v7822 = vpack.c.b16 %v7532, %v7527
    %v7823 = vpack.c.b16 %v7533, %v7528
    %v7824 = vpack.c.b16 %v7534, %v7529
    %v7825 = vpack.c.b16 %v7535, %v7530
    %v7826 = vpack.c.b16 %v7541, %v7536
    %v7827 = vpack.c.b16 %v7542, %v7537
    %v7828 = vpack.c.b16 %v7543, %v7538
    %v7829 = vpack.c.b16 %v7544, %v7539
    %v7830 = vpack.c.b16 %v7545, %v7540
    %v7831 = vpack.c.b16 %v7551, %v7546
    %v7832 = vpack.c.b16 %v7552, %v7547
    %v7833 = vpack.c.b16 %v7553, %v7548
    %v7834 = vpack.c.b16 %v7554, %v7549
    %v7835 = vpack.c.b16 %v7555, %v7550
    %v7836 = vpack.c.b16 %v7561, %v7556
    %v7837 = vpack.c.b16 %v7562, %v7557
    %v7838 = vpack.c.b16 %v7563, %v7558
    %v7839 = vpack.c.b16 %v7564, %v7559
    %v7840 = vpack.c.b16 %v7565, %v7560
    %v7841 = vpack.c.b16 %v7571, %v7566
    %v7842 = vpack.c.b16 %v7572, %v7567
    %v7843 = vpack.c.b16 %v7573, %v7568
    %v7844 = vpack.c.b16 %v7574, %v7569
    %v7845 = vpack.c.b16 %v7575, %v7570
    %v7846 = vpack.c.b16 %v7581, %v7576
    %v7847 = vpack.c.b16 %v7582, %v7577
    %v7848 = vpack.c.b16 %v7583, %v7578
    %v7849 = vpack.c.b16 %v7584, %v7579
    %v7850 = vpack.c.b16 %v7585, %v7580
    %v7851 = vpack.c.b16 %v7591, %v7586
    %v7852 = vpack.c.b16 %v7592, %v7587
    %v7853 = vpack.c.b16 %v7593, %v7588
    %v7854 = vpack.c.b16 %v7594, %v7589
    %v7855 = vpack.c.b16 %v7595, %v7590
    %v7856 = vpack.c.b16 %v7601, %v7596
    %v7857 = vpack.c.b16 %v7602, %v7597
    %v7858 = vpack.c.b16 %v7603, %v7598
    %v7859 = vpack.c.b16 %v7604, %v7599
    %v7860 = vpack.c.b16 %v7605, %v7600
    %v7861 = vpack.c.b16 %v7611, %v7606
    %v7862 = vpack.c.b16 %v7612, %v7607
    %v7863 = vpack.c.b16 %v7613, %v7608
    %v7864 = vpack.c.b16 %v7614, %v7609
    %v7865 = vpack.c.b16 %v7615, %v7610
    %v7866 = vpack.c.b16 %v7621, %v7616
    %v7867 = vpack.c.b16 %v7622, %v7617
    %v7868 = vpack.c.b16 %v7623, %v7618
    %v7869 = vpack.c.b16 %v7624, %v7619
    %v7870 = vpack.c.b16 %v7625, %v7620
    %v7871 = vpack.c.b16 %v7631, %v7626
    %v7872 = vpack.c.b16 %v7632, %v7627
    %v7873 = vpack.c.b16 %v7633, %v7628
    %v7874 = vpack.c.b16 %v7634, %v7629
    %v7875 = vpack.c.b16 %v7635, %v7630
    %v7876 = vpack.c.b16 %v7641, %v7636
    %v7877 = vpack.c.b16 %v7642, %v7637
    %v7878 = vpack.c.b16 %v7643, %v7638
    %v7879 = vpack.c.b16 %v7644, %v7639
    %v7880 = vpack.c.b16 %v7645, %v7640
    %v7881 = vpack.c.b16 %v7651, %v7646
    %v7882 = vpack.c.b16 %v7652, %v7647
    %v7883 = vpack.c.b16 %v7653, %v7648
    %v7884 = vpack.c.b16 %v7654, %v7649
    %v7885 = vpack.c.b16 %v7655, %v7650
    %v7886 = vpack.c.b16 %v7661, %v7656
    %v7887 = vpack.c.b16 %v7662, %v7657
    %v7888 = vpack.c.b16 %v7663, %v7658
    %v7889 = vpack.c.b16 %v7664, %v7659
    %v7890 = vpack.c.b16 %v7665, %v7660
    %v7891 = vpack.c.b16 %v7671, %v7666
    %v7892 = vpack.c.b16 %v7672, %v7667
    %v7893 = vpack.c.b16 %v7673, %v7668
    %v7894 = vpack.c.b16 %v7674, %v7669
    %v7895 = vpack.c.b16 %v7675, %v7670
    %v7896 = vpack.c.b16 %v7681, %v7676
    %v7897 = vpack.c.b16 %v7682, %v7677
    %v7898 = vpack.c.b16 %v7683, %v7678
    %v7899 = vpack.c.b16 %v7684, %v7679
    %v7900 = vpack.c.b16 %v7685, %v7680
    %v7901 = vpack.c.b16 %v7691, %v7686
    %v7902 = vpack.c.b16 %v7692, %v7687
    %v7903 = vpack.c.b16 %v7693, %v7688
    %v7904 = vpack.c.b16 %v7694, %v7689
    %v7905 = vpack.c.b16 %v7695, %v7690
    %v7906 = vpack.c.b16 %v7701, %v7696
    %v7907 = vpack.c.b16 %v7702, %v7697
    %v7908 = vpack.c.b16 %v7703, %v7698
    %v7909 = vpack.c.b16 %v7704, %v7699
    %v7910 = vpack.c.b16 %v7705, %v7700
    %v7911 = vpack.c.b16 %v7711, %v7706
    %v7912 = vpack.c.b16 %v7712, %v7707
    %v7913 = vpack.c.b16 %v7713, %v7708
    %v7914 = vpack.c.b16 %v7714, %v7709
    %v7915 = vpack.c.b16 %v7715, %v7710
    %v7916 = vpack.c.b16 %v7721, %v7716
    %v7917 = vpack.c.b16 %v7722, %v7717
    %v7918 = vpack.c.b16 %v7723, %v7718
    %v7919 = vpack.c.b16 %v7724, %v7719
    %v7920 = vpack.c.b16 %v7725, %v7720
    %v7921 = vpack.c.b16 %v7731, %v7726
    %v7922 = vpack.c.b16 %v7732, %v7727
    %v7923 = vpack.c.b16 %v7733, %v7728
    %v7924 = vpack.c.b16 %v7734, %v7729
    %v7925 = vpack.c.b16 %v7735, %v7730
    %v7926 = vpack.c.b16 %v7741, %v7736
    %v7927 = vpack.c.b16 %v7742, %v7737
    %v7928 = vpack.c.b16 %v7743, %v7738
    %v7929 = vpack.c.b16 %v7744, %v7739
    %v7930 = vpack.c.b16 %v7745, %v7740
    %v7931 = vpack.c.b16 %v7751, %v7746
    %v7932 = vpack.c.b16 %v7752, %v7747
    %v7933 = vpack.c.b16 %v7753, %v7748
    %v7934 = vpack.c.b16 %v7754, %v7749
    %v7935 = vpack.c.b16 %v7755, %v7750
    %v7936 = vpack.c.b16 %v7761, %v7756
    %v7937 = vpack.c.b16 %v7762, %v7757
    %v7938 = vpack.c.b16 %v7763, %v7758
    %v7939 = vpack.c.b16 %v7764, %v7759
    %v7940 = vpack.c.b16 %v7765, %v7760
    %v7941 = vpack.c.b16 %v7771, %v7766
    %v7942 = vpack.c.b16 %v7772, %v7767
    %v7943 = vpack.c.b16 %v7773, %v7768
    %v7944 = vpack.c.b16 %v7774, %v7769
    %v7945 = vpack.c.b16 %v7775, %v7770
    %v7946 = vpack.c.b16 %v7781, %v7776
    %v7947 = vpack.c.b16 %v7782, %v7777
    %v7948 = vpack.c.b16 %v7783, %v7778
    %v7949 = vpack.c.b16 %v7784, %v7779
    %v7950 = vpack.c.b16 %v7785, %v7780
    %v7951 = vpack.c.b16 %v7791, %v7786
    %v7952 = vpack.c.b16 %v7792, %v7787
    %v7953 = vpack.c.b16 %v7793, %v7788
    %v7954 = vpack.c.b16 %v7794, %v7789
    %v7955 = vpack.c.b16 %v7795, %v7790
    %v8196 = vunpack.c.l.b16 %v7204
    %v8197 = vunpack.c.h.b16 %v7204
    %v8198 = vunpack.c.l.b16 %v7205
    %v8199 = vunpack.c.h.b16 %v7205
    %v8200 = vunpack.c.l.b16 %v7206
    %v8201 = vunpack.c.h.b16 %v7206
    %v8202 = vunpack.c.l.b16 %v7207
    %v8203 = vunpack.c.h.b16 %v7207
    %v8204 = vunpack.c.l.b16 %v7208
    %v8205 = vunpack.c.h.b16 %v7208
    %v8206 = vunpack.c.l.b16 %v7209
    %v8207 = vunpack.c.h.b16 %v7209
    %v8208 = vunpack.c.l.b16 %v7210
    %v8209 = vunpack.c.h.b16 %v7210
    %v8210 = vunpack.c.l.b16 %v7211
    %v8211 = vunpack.c.h.b16 %v7211
    %v8212 = vunpack.c.l.b16 %v7212
    %v8213 = vunpack.c.h.b16 %v7212
    %v8214 = vunpack.c.l.b16 %v7213
    %v8215 = vunpack.c.h.b16 %v7213
    %v8216 = vunpack.c.l.b16 %v7214
    %v8217 = vunpack.c.h.b16 %v7214
    %v8218 = vunpack.c.l.b16 %v7215
    %v8219 = vunpack.c.h.b16 %v7215
    %v8220 = vunpack.c.l.b16 %v7216
    %v8221 = vunpack.c.h.b16 %v7216
    %v8222 = vunpack.c.l.b16 %v7217
    %v8223 = vunpack.c.h.b16 %v7217
    %v8224 = vunpack.c.l.b16 %v7218
    %v8225 = vunpack.c.h.b16 %v7218
    %v8226 = vunpack.c.l.b16 %v7219
    %v8227 = vunpack.c.h.b16 %v7219
    %v8228 = vunpack.c.l.b16 %v7220
    %v8229 = vunpack.c.h.b16 %v7220
    %v8230 = vunpack.c.l.b16 %v7221
    %v8231 = vunpack.c.h.b16 %v7221
    %v8232 = vunpack.c.l.b16 %v7222
    %v8233 = vunpack.c.h.b16 %v7222
    %v8234 = vunpack.c.l.b16 %v7223
    %v8235 = vunpack.c.h.b16 %v7223
    %v8236 = vunpack.c.l.b16 %v7224
    %v8237 = vunpack.c.h.b16 %v7224
    %v8238 = vunpack.c.l.b16 %v7225
    %v8239 = vunpack.c.h.b16 %v7225
    %v8240 = vunpack.c.l.b16 %v7226
    %v8241 = vunpack.c.h.b16 %v7226
    %v8242 = vunpack.c.l.b16 %v7227
    %v8243 = vunpack.c.h.b16 %v7227
    %v8244 = vunpack.c.l.b16 %v7228
    %v8245 = vunpack.c.h.b16 %v7228
    %v8246 = vunpack.c.l.b16 %v7229
    %v8247 = vunpack.c.h.b16 %v7229
    %v8248 = vunpack.c.l.b16 %v7230
    %v8249 = vunpack.c.h.b16 %v7230
    %v8250 = vunpack.c.l.b16 %v7231
    %v8251 = vunpack.c.h.b16 %v7231
    %v8252 = vunpack.c.l.b16 %v7232
    %v8253 = vunpack.c.h.b16 %v7232
    %v8254 = vunpack.c.l.b16 %v7233
    %v8255 = vunpack.c.h.b16 %v7233
    %v8256 = vunpack.c.l.b16 %v7234
    %v8257 = vunpack.c.h.b16 %v7234
    %v8258 = vunpack.c.l.b16 %v7235
    %v8259 = vunpack.c.h.b16 %v7235
    %v8260 = vunpack.c.l.b16 %v7236
    %v8261 = vunpack.c.h.b16 %v7236
    %v8262 = vunpack.c.l.b16 %v7237
    %v8263 = vunpack.c.h.b16 %v7237
    %v8264 = vunpack.c.l.b16 %v7238
    %v8265 = vunpack.c.h.b16 %v7238
    %v8266 = vunpack.c.l.b16 %v7239
    %v8267 = vunpack.c.h.b16 %v7239
    %v8268 = vunpack.c.l.b16 %v7240
    %v8269 = vunpack.c.h.b16 %v7240
    %v8270 = vunpack.c.l.b16 %v7241
    %v8271 = vunpack.c.h.b16 %v7241
    %v8272 = vunpack.c.l.b16 %v7242
    %v8273 = vunpack.c.h.b16 %v7242
    %v8274 = vunpack.c.l.b16 %v7243
    %v8275 = vunpack.c.h.b16 %v7243
    %v8276 = vunpack.c.l.b16 %v7244
    %v8277 = vunpack.c.h.b16 %v7244
    %v8278 = vunpack.c.l.b16 %v7245
    %v8279 = vunpack.c.h.b16 %v7245
    %v8280 = vunpack.c.l.b16 %v7246
    %v8281 = vunpack.c.h.b16 %v7246
    %v8282 = vunpack.c.l.b16 %v7247
    %v8283 = vunpack.c.h.b16 %v7247
    %v8284 = vunpack.c.l.b16 %v7248
    %v8285 = vunpack.c.h.b16 %v7248
    %v8286 = vunpack.c.l.b16 %v7249
    %v8287 = vunpack.c.h.b16 %v7249
    %v8288 = vunpack.c.l.b16 %v7250
    %v8289 = vunpack.c.h.b16 %v7250
    %v8290 = vunpack.c.l.b16 %v7251
    %v8291 = vunpack.c.h.b16 %v7251
    %v8292 = vunpack.c.l.b16 %v7252
    %v8293 = vunpack.c.h.b16 %v7252
    %v8294 = vunpack.c.l.b16 %v7253
    %v8295 = vunpack.c.h.b16 %v7253
    %v8296 = vunpack.c.l.b16 %v7254
    %v8297 = vunpack.c.h.b16 %v7254
    %v8298 = vunpack.c.l.b16 %v7255
    %v8299 = vunpack.c.h.b16 %v7255
    %v8300 = vunpack.c.l.b16 %v7256
    %v8301 = vunpack.c.h.b16 %v7256
    %v8302 = vunpack.c.l.b16 %v7257
    %v8303 = vunpack.c.h.b16 %v7257
    %v8304 = vunpack.c.l.b16 %v7258
    %v8305 = vunpack.c.h.b16 %v7258
    %v8306 = vunpack.c.l.b16 %v7259
    %v8307 = vunpack.c.h.b16 %v7259
    %v8308 = vunpack.c.l.b16 %v7260
    %v8309 = vunpack.c.h.b16 %v7260
    %v8310 = vunpack.c.l.b16 %v7261
    %v8311 = vunpack.c.h.b16 %v7261
    %v8312 = vunpack.c.l.b16 %v7262
    %v8313 = vunpack.c.h.b16 %v7262
    %v8314 = vunpack.c.l.b16 %v7263
    %v8315 = vunpack.c.h.b16 %v7263
    %v8316 = vunpack.c.l.b16 %v7264
    %v8317 = vunpack.c.h.b16 %v7264
    %v8318 = vunpack.c.l.b16 %v7265
    %v8319 = vunpack.c.h.b16 %v7265
    %v8320 = vunpack.c.l.b16 %v7266
    %v8321 = vunpack.c.h.b16 %v7266
    %v8322 = vunpack.c.l.b16 %v7267
    %v8323 = vunpack.c.h.b16 %v7267
    %v8324 = vunpack.c.l.b16 %v7268
    %v8325 = vunpack.c.h.b16 %v7268
    %v8326 = vunpack.c.l.b16 %v7269
    %v8327 = vunpack.c.h.b16 %v7269
    %v8328 = vunpack.c.l.b16 %v7270
    %v8329 = vunpack.c.h.b16 %v7270
    %v8330 = vunpack.c.l.b16 %v7271
    %v8331 = vunpack.c.h.b16 %v7271
    %v8332 = vunpack.c.l.b16 %v7272
    %v8333 = vunpack.c.h.b16 %v7272
    %v8334 = vunpack.c.l.b16 %v7273
    %v8335 = vunpack.c.h.b16 %v7273
    %v8336 = vunpack.c.l.b16 %v7274
    %v8337 = vunpack.c.h.b16 %v7274
    %v8338 = vunpack.c.l.b16 %v7275
    %v8339 = vunpack.c.h.b16 %v7275
    %v8340 = vunpack.c.l.b16 %v7276
    %v8341 = vunpack.c.h.b16 %v7276
    %v8342 = vunpack.c.l.b16 %v7277
    %v8343 = vunpack.c.h.b16 %v7277
    %v8344 = vunpack.c.l.b16 %v7278
    %v8345 = vunpack.c.h.b16 %v7278
    %v8346 = vunpack.c.l.b16 %v7279
    %v8347 = vunpack.c.h.b16 %v7279
    %v8348 = vunpack.c.l.b16 %v7280
    %v8349 = vunpack.c.h.b16 %v7280
    %v8350 = vunpack.c.l.b16 %v7281
    %v8351 = vunpack.c.h.b16 %v7281
    %v8352 = vunpack.c.l.b16 %v7282
    %v8353 = vunpack.c.h.b16 %v7282
    %v8354 = vunpack.c.l.b16 %v7283
    %v8355 = vunpack.c.h.b16 %v7283
    %v8356 = vpack.c.b16 %v8198, %v8196
    %v8357 = vpack.c.b16 %v8199, %v8197
    %v8358 = vpack.c.b16 %v8202, %v8200
    %v8359 = vpack.c.b16 %v8203, %v8201
    %v8360 = vpack.c.b16 %v8206, %v8204
    %v8361 = vpack.c.b16 %v8207, %v8205
    %v8362 = vpack.c.b16 %v8210, %v8208
    %v8363 = vpack.c.b16 %v8211, %v8209
    %v8364 = vpack.c.b16 %v8214, %v8212
    %v8365 = vpack.c.b16 %v8215, %v8213
    %v8366 = vpack.c.b16 %v8218, %v8216
    %v8367 = vpack.c.b16 %v8219, %v8217
    %v8368 = vpack.c.b16 %v8222, %v8220
    %v8369 = vpack.c.b16 %v8223, %v8221
    %v8370 = vpack.c.b16 %v8226, %v8224
    %v8371 = vpack.c.b16 %v8227, %v8225
    %v8372 = vpack.c.b16 %v8230, %v8228
    %v8373 = vpack.c.b16 %v8231, %v8229
    %v8374 = vpack.c.b16 %v8234, %v8232
    %v8375 = vpack.c.b16 %v8235, %v8233
    %v8376 = vpack.c.b16 %v8238, %v8236
    %v8377 = vpack.c.b16 %v8239, %v8237
    %v8378 = vpack.c.b16 %v8242, %v8240
    %v8379 = vpack.c.b16 %v8243, %v8241
    %v8380 = vpack.c.b16 %v8246, %v8244
    %v8381 = vpack.c.b16 %v8247, %v8245
    %v8382 = vpack.c.b16 %v8250, %v8248
    %v8383 = vpack.c.b16 %v8251, %v8249
    %v8384 = vpack.c.b16 %v8254, %v8252
    %v8385 = vpack.c.b16 %v8255, %v8253
    %v8386 = vpack.c.b16 %v8258, %v8256
    %v8387 = vpack.c.b16 %v8259, %v8257
    %v8388 = vpack.c.b16 %v8262, %v8260
    %v8389 = vpack.c.b16 %v8263, %v8261
    %v8390 = vpack.c.b16 %v8266, %v8264
    %v8391 = vpack.c.b16 %v8267, %v8265
    %v8392 = vpack.c.b16 %v8270, %v8268
    %v8393 = vpack.c.b16 %v8271, %v8269
    %v8394 = vpack.c.b16 %v8274, %v8272
    %v8395 = vpack.c.b16 %v8275, %v8273
    %v8396 = vpack.c.b16 %v8278, %v8276
    %v8397 = vpack.c.b16 %v8279, %v8277
    %v8398 = vpack.c.b16 %v8282, %v8280
    %v8399 = vpack.c.b16 %v8283, %v8281
    %v8400 = vpack.c.b16 %v8286, %v8284
    %v8401 = vpack.c.b16 %v8287, %v8285
    %v8402 = vpack.c.b16 %v8290, %v8288
    %v8403 = vpack.c.b16 %v8291, %v8289
    %v8404 = vpack.c.b16 %v8294, %v8292
    %v8405 = vpack.c.b16 %v8295, %v8293
    %v8406 = vpack.c.b16 %v8298, %v8296
    %v8407 = vpack.c.b16 %v8299, %v8297
    %v8408 = vpack.c.b16 %v8302, %v8300
    %v8409 = vpack.c.b16 %v8303, %v8301
    %v8410 = vpack.c.b16 %v8306, %v8304
    %v8411 = vpack.c.b16 %v8307, %v8305
    %v8412 = vpack.c.b16 %v8310, %v8308
    %v8413 = vpack.c.b16 %v8311, %v8309
    %v8414 = vpack.c.b16 %v8314, %v8312
    %v8415 = vpack.c.b16 %v8315, %v8313
    %v8416 = vpack.c.b16 %v8318, %v8316
    %v8417 = vpack.c.b16 %v8319, %v8317
    %v8418 = vpack.c.b16 %v8322, %v8320
    %v8419 = vpack.c.b16 %v8323, %v8321
    %v8420 = vpack.c.b16 %v8326, %v8324
    %v8421 = vpack.c.b16 %v8327, %v8325
    %v8422 = vpack.c.b16 %v8330, %v8328
    %v8423 = vpack.c.b16 %v8331, %v8329
    %v8424 = vpack.c.b16 %v8334, %v8332
    %v8425 = vpack.c.b16 %v8335, %v8333
    %v8426 = vpack.c.b16 %v8338, %v8336
    %v8427 = vpack.c.b16 %v8339, %v8337
    %v8428 = vpack.c.b16 %v8342, %v8340
    %v8429 = vpack.c.b16 %v8343, %v8341
    %v8430 = vpack.c.b16 %v8346, %v8344
    %v8431 = vpack.c.b16 %v8347, %v8345
    %v8432 = vpack.c.b16 %v8350, %v8348
    %v8433 = vpack.c.b16 %v8351, %v8349
    %v8434 = vpack.c.b16 %v8354, %v8352
    %v8435 = vpack.c.b16 %v8355, %v8353
    %8516 = vmatprep.subr.bf16.mxu0 %v8371
    %8517 = vmatpush1.bf16.msra.mxu0 %v8370
    %8518 = vmatprep.subr.bf16.mxu0 %v8369
    %8519 = vmatpush1.bf16.msra.mxu0 %v8368
    %8520 = vmatprep.subr.bf16.mxu0 %v8367
    %8521 = vmatpush1.bf16.msra.mxu0 %v8366
    %8522 = vmatprep.subr.bf16.mxu0 %v8365
    %8523 = vmatpush1.bf16.msra.mxu0 %v8364
    %8524 = vmatprep.subr.bf16.mxu0 %v8363
    %8525 = vmatpush1.bf16.msra.mxu0 %v8362
    %8526 = vmatprep.subr.bf16.mxu0 %v8361
    %8527 = vmatpush1.bf16.msra.mxu0 %v8360
    %8528 = vmatprep.subr.bf16.mxu0 %v8359
    %8529 = vmatpush1.bf16.msra.mxu0 %v8358
    %8530 = vmatprep.subr.bf16.mxu0 %v8357
    %8531 = vmatpush1.bf16.msra.mxu0 %v8356
    %8532 = vmatprep.subr.bf16.mxu0 %v8387
    %8533 = vmatpush2.bf16.msra.mxu0 %v8386
    %8534 = vmatprep.subr.bf16.mxu0 %v8385
    %8535 = vmatpush2.bf16.msra.mxu0 %v8384
    %8536 = vmatprep.subr.bf16.mxu0 %v8383
    %8537 = vmatpush2.bf16.msra.mxu0 %v8382
    %8538 = vmatprep.subr.bf16.mxu0 %v8381
    %8539 = vmatpush2.bf16.msra.mxu0 %v8380
    %8540 = vmatprep.subr.bf16.mxu0 %v8379
    %8541 = vmatpush2.bf16.msra.mxu0 %v8378
    %8542 = vmatprep.subr.bf16.mxu0 %v8377
    %8543 = vmatpush2.bf16.msra.mxu0 %v8376
    %8544 = vmatprep.subr.bf16.mxu0 %v8375
    %8545 = vmatpush2.bf16.msra.mxu0 %v8374
    %8546 = vmatprep.subr.bf16.mxu0 %v8373
    %8547 = vmatpush2.bf16.msra.mxu0 %v8372
    %8548 = vmatprep.mubr.bf16.mxu0 %v7797
    %8549 = vmatmul.mubr.bf16.gmra.mxu0 %v7796
    %v8550 = vpop.f32.mrf.mxu0
    %v8551 = vadd.f32 0.0, %v8550
    %v8552 = vpop.f32.mrf.mxu0
    %v8553 = vadd.f32 0.0, %v8552
    %v8554 = vpop.f32.mrf.mxu0
    %v8555 = vadd.f32 0.0, %v8554
    %v8556 = vpop.f32.mrf.mxu0
    %v8557 = vadd.f32 0.0, %v8556
    %8558 = vmatprep.mubr.bf16.mxu0 %v7802
    %8559 = vmatmul.mubr.bf16.gmra.mxu0 %v7801
    %v8560 = vpop.f32.mrf.mxu0
    %v8561 = vadd.f32 0.0, %v8560
    %v8562 = vpop.f32.mrf.mxu0
    %v8563 = vadd.f32 0.0, %v8562
    %v8564 = vpop.f32.mrf.mxu0
    %v8565 = vadd.f32 0.0, %v8564
    %v8566 = vpop.f32.mrf.mxu0
    %v8567 = vadd.f32 0.0, %v8566
    %8568 = vmatprep.mubr.bf16.mxu0 %v7807
    %8569 = vmatmul.mubr.bf16.gmra.mxu0 %v7806
    %v8570 = vpop.f32.mrf.mxu0
    %v8571 = vadd.f32 0.0, %v8570
    %v8572 = vpop.f32.mrf.mxu0
    %v8573 = vadd.f32 0.0, %v8572
    %v8574 = vpop.f32.mrf.mxu0
    %v8575 = vadd.f32 0.0, %v8574
    %v8576 = vpop.f32.mrf.mxu0
    %v8577 = vadd.f32 0.0, %v8576
    %8578 = vmatprep.mubr.bf16.mxu0 %v7812
    %8579 = vmatmul.mubr.bf16.gmra.mxu0 %v7811
    %v8580 = vpop.f32.mrf.mxu0
    %v8581 = vadd.f32 0.0, %v8580
    %v8582 = vpop.f32.mrf.mxu0
    %v8583 = vadd.f32 0.0, %v8582
    %v8584 = vpop.f32.mrf.mxu0
    %v8585 = vadd.f32 0.0, %v8584
    %v8586 = vpop.f32.mrf.mxu0
    %v8587 = vadd.f32 0.0, %v8586
    %8588 = vmatprep.mubr.bf16.mxu0 %v7817
    %8589 = vmatmul.mubr.bf16.gmra.mxu0 %v7816
    %v8590 = vpop.f32.mrf.mxu0
    %v8591 = vadd.f32 0.0, %v8590
    %v8592 = vpop.f32.mrf.mxu0
    %v8593 = vadd.f32 0.0, %v8592
    %v8594 = vpop.f32.mrf.mxu0
    %v8595 = vadd.f32 0.0, %v8594
    %v8596 = vpop.f32.mrf.mxu0
    %v8597 = vadd.f32 0.0, %v8596
    %8598 = vmatprep.mubr.bf16.mxu0 %v7822
    %8599 = vmatmul.mubr.bf16.gmra.mxu0 %v7821
    %v8600 = vpop.f32.mrf.mxu0
    %v8601 = vadd.f32 0.0, %v8600
    %v8602 = vpop.f32.mrf.mxu0
    %v8603 = vadd.f32 0.0, %v8602
    %v8604 = vpop.f32.mrf.mxu0
    %v8605 = vadd.f32 0.0, %v8604
    %v8606 = vpop.f32.mrf.mxu0
    %v8607 = vadd.f32 0.0, %v8606
    %8608 = vmatprep.mubr.bf16.mxu0 %v7827
    %8609 = vmatmul.mubr.bf16.gmra.mxu0 %v7826
    %v8610 = vpop.f32.mrf.mxu0
    %v8611 = vadd.f32 0.0, %v8610
    %v8612 = vpop.f32.mrf.mxu0
    %v8613 = vadd.f32 0.0, %v8612
    %v8614 = vpop.f32.mrf.mxu0
    %v8615 = vadd.f32 0.0, %v8614
    %v8616 = vpop.f32.mrf.mxu0
    %v8617 = vadd.f32 0.0, %v8616
    %8618 = vmatprep.mubr.bf16.mxu0 %v7832
    %8619 = vmatmul.mubr.bf16.gmra.mxu0 %v7831
    %v8620 = vpop.f32.mrf.mxu0
    %v8621 = vadd.f32 0.0, %v8620
    %v8622 = vpop.f32.mrf.mxu0
    %v8623 = vadd.f32 0.0, %v8622
    %v8624 = vpop.f32.mrf.mxu0
    %v8625 = vadd.f32 0.0, %v8624
    %v8626 = vpop.f32.mrf.mxu0
    %v8627 = vadd.f32 0.0, %v8626
    %8628 = vmatprep.mubr.bf16.mxu0 %v7837
    %8629 = vmatmul.mubr.bf16.gmra.mxu0 %v7836
    %v8630 = vpop.f32.mrf.mxu0
    %v8631 = vadd.f32 0.0, %v8630
    %v8632 = vpop.f32.mrf.mxu0
    %v8633 = vadd.f32 0.0, %v8632
    %v8634 = vpop.f32.mrf.mxu0
    %v8635 = vadd.f32 0.0, %v8634
    %v8636 = vpop.f32.mrf.mxu0
    %v8637 = vadd.f32 0.0, %v8636
    %8638 = vmatprep.mubr.bf16.mxu0 %v7842
    %8639 = vmatmul.mubr.bf16.gmra.mxu0 %v7841
    %v8640 = vpop.f32.mrf.mxu0
    %v8641 = vadd.f32 0.0, %v8640
    %v8642 = vpop.f32.mrf.mxu0
    %v8643 = vadd.f32 0.0, %v8642
    %v8644 = vpop.f32.mrf.mxu0
    %v8645 = vadd.f32 0.0, %v8644
    %v8646 = vpop.f32.mrf.mxu0
    %v8647 = vadd.f32 0.0, %v8646
    %8648 = vmatprep.mubr.bf16.mxu0 %v7847
    %8649 = vmatmul.mubr.bf16.gmra.mxu0 %v7846
    %v8650 = vpop.f32.mrf.mxu0
    %v8651 = vadd.f32 0.0, %v8650
    %v8652 = vpop.f32.mrf.mxu0
    %v8653 = vadd.f32 0.0, %v8652
    %v8654 = vpop.f32.mrf.mxu0
    %v8655 = vadd.f32 0.0, %v8654
    %v8656 = vpop.f32.mrf.mxu0
    %v8657 = vadd.f32 0.0, %v8656
    %8658 = vmatprep.mubr.bf16.mxu0 %v7852
    %8659 = vmatmul.mubr.bf16.gmra.mxu0 %v7851
    %v8660 = vpop.f32.mrf.mxu0
    %v8661 = vadd.f32 0.0, %v8660
    %v8662 = vpop.f32.mrf.mxu0
    %v8663 = vadd.f32 0.0, %v8662
    %v8664 = vpop.f32.mrf.mxu0
    %v8665 = vadd.f32 0.0, %v8664
    %v8666 = vpop.f32.mrf.mxu0
    %v8667 = vadd.f32 0.0, %v8666
    %8668 = vmatprep.mubr.bf16.mxu0 %v7857
    %8669 = vmatmul.mubr.bf16.gmra.mxu0 %v7856
    %v8670 = vpop.f32.mrf.mxu0
    %v8671 = vadd.f32 0.0, %v8670
    %v8672 = vpop.f32.mrf.mxu0
    %v8673 = vadd.f32 0.0, %v8672
    %v8674 = vpop.f32.mrf.mxu0
    %v8675 = vadd.f32 0.0, %v8674
    %v8676 = vpop.f32.mrf.mxu0
    %v8677 = vadd.f32 0.0, %v8676
    %8678 = vmatprep.mubr.bf16.mxu0 %v7862
    %8679 = vmatmul.mubr.bf16.gmra.mxu0 %v7861
    %v8680 = vpop.f32.mrf.mxu0
    %v8681 = vadd.f32 0.0, %v8680
    %v8682 = vpop.f32.mrf.mxu0
    %v8683 = vadd.f32 0.0, %v8682
    %v8684 = vpop.f32.mrf.mxu0
    %v8685 = vadd.f32 0.0, %v8684
    %v8686 = vpop.f32.mrf.mxu0
    %v8687 = vadd.f32 0.0, %v8686
    %8688 = vmatprep.mubr.bf16.mxu0 %v7867
    %8689 = vmatmul.mubr.bf16.gmra.mxu0 %v7866
    %v8690 = vpop.f32.mrf.mxu0
    %v8691 = vadd.f32 0.0, %v8690
    %v8692 = vpop.f32.mrf.mxu0
    %v8693 = vadd.f32 0.0, %v8692
    %v8694 = vpop.f32.mrf.mxu0
    %v8695 = vadd.f32 0.0, %v8694
    %v8696 = vpop.f32.mrf.mxu0
    %v8697 = vadd.f32 0.0, %v8696
    %8698 = vmatprep.mubr.bf16.mxu0 %v7872
    %8699 = vmatmul.mubr.bf16.gmra.mxu0 %v7871
    %v8700 = vpop.f32.mrf.mxu0
    %v8701 = vadd.f32 0.0, %v8700
    %v8702 = vpop.f32.mrf.mxu0
    %v8703 = vadd.f32 0.0, %v8702
    %v8704 = vpop.f32.mrf.mxu0
    %v8705 = vadd.f32 0.0, %v8704
    %v8706 = vpop.f32.mrf.mxu0
    %v8707 = vadd.f32 0.0, %v8706
    %8708 = vmatprep.mubr.bf16.mxu0 %v7877
    %8709 = vmatmul.mubr.bf16.gmra.mxu0 %v7876
    %v8710 = vpop.f32.mrf.mxu0
    %v8711 = vadd.f32 0.0, %v8710
    %v8712 = vpop.f32.mrf.mxu0
    %v8713 = vadd.f32 0.0, %v8712
    %v8714 = vpop.f32.mrf.mxu0
    %v8715 = vadd.f32 0.0, %v8714
    %v8716 = vpop.f32.mrf.mxu0
    %v8717 = vadd.f32 0.0, %v8716
    %8718 = vmatprep.mubr.bf16.mxu0 %v7882
    %8719 = vmatmul.mubr.bf16.gmra.mxu0 %v7881
    %v8720 = vpop.f32.mrf.mxu0
    %v8721 = vadd.f32 0.0, %v8720
    %v8722 = vpop.f32.mrf.mxu0
    %v8723 = vadd.f32 0.0, %v8722
    %v8724 = vpop.f32.mrf.mxu0
    %v8725 = vadd.f32 0.0, %v8724
    %v8726 = vpop.f32.mrf.mxu0
    %v8727 = vadd.f32 0.0, %v8726
    %8728 = vmatprep.mubr.bf16.mxu0 %v7887
    %8729 = vmatmul.mubr.bf16.gmra.mxu0 %v7886
    %v8730 = vpop.f32.mrf.mxu0
    %v8731 = vadd.f32 0.0, %v8730
    %v8732 = vpop.f32.mrf.mxu0
    %v8733 = vadd.f32 0.0, %v8732
    %v8734 = vpop.f32.mrf.mxu0
    %v8735 = vadd.f32 0.0, %v8734
    %v8736 = vpop.f32.mrf.mxu0
    %v8737 = vadd.f32 0.0, %v8736
    %8738 = vmatprep.mubr.bf16.mxu0 %v7892
    %8739 = vmatmul.mubr.bf16.gmra.mxu0 %v7891
    %v8740 = vpop.f32.mrf.mxu0
    %v8741 = vadd.f32 0.0, %v8740
    %v8742 = vpop.f32.mrf.mxu0
    %v8743 = vadd.f32 0.0, %v8742
    %v8744 = vpop.f32.mrf.mxu0
    %v8745 = vadd.f32 0.0, %v8744
    %v8746 = vpop.f32.mrf.mxu0
    %v8747 = vadd.f32 0.0, %v8746
    %8748 = vmatprep.mubr.bf16.mxu0 %v7897
    %8749 = vmatmul.mubr.bf16.gmra.mxu0 %v7896
    %v8750 = vpop.f32.mrf.mxu0
    %v8751 = vadd.f32 0.0, %v8750
    %v8752 = vpop.f32.mrf.mxu0
    %v8753 = vadd.f32 0.0, %v8752
    %v8754 = vpop.f32.mrf.mxu0
    %v8755 = vadd.f32 0.0, %v8754
    %v8756 = vpop.f32.mrf.mxu0
    %v8757 = vadd.f32 0.0, %v8756
    %8758 = vmatprep.mubr.bf16.mxu0 %v7902
    %8759 = vmatmul.mubr.bf16.gmra.mxu0 %v7901
    %v8760 = vpop.f32.mrf.mxu0
    %v8761 = vadd.f32 0.0, %v8760
    %v8762 = vpop.f32.mrf.mxu0
    %v8763 = vadd.f32 0.0, %v8762
    %v8764 = vpop.f32.mrf.mxu0
    %v8765 = vadd.f32 0.0, %v8764
    %v8766 = vpop.f32.mrf.mxu0
    %v8767 = vadd.f32 0.0, %v8766
    %8768 = vmatprep.mubr.bf16.mxu0 %v7907
    %8769 = vmatmul.mubr.bf16.gmra.mxu0 %v7906
    %v8770 = vpop.f32.mrf.mxu0
    %v8771 = vadd.f32 0.0, %v8770
    %v8772 = vpop.f32.mrf.mxu0
    %v8773 = vadd.f32 0.0, %v8772
    %v8774 = vpop.f32.mrf.mxu0
    %v8775 = vadd.f32 0.0, %v8774
    %v8776 = vpop.f32.mrf.mxu0
    %v8777 = vadd.f32 0.0, %v8776
    %8778 = vmatprep.mubr.bf16.mxu0 %v7912
    %8779 = vmatmul.mubr.bf16.gmra.mxu0 %v7911
    %v8780 = vpop.f32.mrf.mxu0
    %v8781 = vadd.f32 0.0, %v8780
    %v8782 = vpop.f32.mrf.mxu0
    %v8783 = vadd.f32 0.0, %v8782
    %v8784 = vpop.f32.mrf.mxu0
    %v8785 = vadd.f32 0.0, %v8784
    %v8786 = vpop.f32.mrf.mxu0
    %v8787 = vadd.f32 0.0, %v8786
    %8788 = vmatprep.mubr.bf16.mxu0 %v7917
    %8789 = vmatmul.mubr.bf16.gmra.mxu0 %v7916
    %v8790 = vpop.f32.mrf.mxu0
    %v8791 = vadd.f32 0.0, %v8790
    %v8792 = vpop.f32.mrf.mxu0
    %v8793 = vadd.f32 0.0, %v8792
    %v8794 = vpop.f32.mrf.mxu0
    %v8795 = vadd.f32 0.0, %v8794
    %v8796 = vpop.f32.mrf.mxu0
    %v8797 = vadd.f32 0.0, %v8796
    %8798 = vmatprep.mubr.bf16.mxu0 %v7922
    %8799 = vmatmul.mubr.bf16.gmra.mxu0 %v7921
    %v8800 = vpop.f32.mrf.mxu0
    %v8801 = vadd.f32 0.0, %v8800
    %v8802 = vpop.f32.mrf.mxu0
    %v8803 = vadd.f32 0.0, %v8802
    %v8804 = vpop.f32.mrf.mxu0
    %v8805 = vadd.f32 0.0, %v8804
    %v8806 = vpop.f32.mrf.mxu0
    %v8807 = vadd.f32 0.0, %v8806
    %8808 = vmatprep.mubr.bf16.mxu0 %v7927
    %8809 = vmatmul.mubr.bf16.gmra.mxu0 %v7926
    %v8810 = vpop.f32.mrf.mxu0
    %v8811 = vadd.f32 0.0, %v8810
    %v8812 = vpop.f32.mrf.mxu0
    %v8813 = vadd.f32 0.0, %v8812
    %v8814 = vpop.f32.mrf.mxu0
    %v8815 = vadd.f32 0.0, %v8814
    %v8816 = vpop.f32.mrf.mxu0
    %v8817 = vadd.f32 0.0, %v8816
    %8818 = vmatprep.mubr.bf16.mxu0 %v7932
    %8819 = vmatmul.mubr.bf16.gmra.mxu0 %v7931
    %v8820 = vpop.f32.mrf.mxu0
    %v8821 = vadd.f32 0.0, %v8820
    %v8822 = vpop.f32.mrf.mxu0
    %v8823 = vadd.f32 0.0, %v8822
    %v8824 = vpop.f32.mrf.mxu0
    %v8825 = vadd.f32 0.0, %v8824
    %v8826 = vpop.f32.mrf.mxu0
    %v8827 = vadd.f32 0.0, %v8826
    %8828 = vmatprep.mubr.bf16.mxu0 %v7937
    %8829 = vmatmul.mubr.bf16.gmra.mxu0 %v7936
    %v8830 = vpop.f32.mrf.mxu0
    %v8831 = vadd.f32 0.0, %v8830
    %v8832 = vpop.f32.mrf.mxu0
    %v8833 = vadd.f32 0.0, %v8832
    %v8834 = vpop.f32.mrf.mxu0
    %v8835 = vadd.f32 0.0, %v8834
    %v8836 = vpop.f32.mrf.mxu0
    %v8837 = vadd.f32 0.0, %v8836
    %8838 = vmatprep.mubr.bf16.mxu0 %v7942
    %8839 = vmatmul.mubr.bf16.gmra.mxu0 %v7941
    %v8840 = vpop.f32.mrf.mxu0
    %v8841 = vadd.f32 0.0, %v8840
    %v8842 = vpop.f32.mrf.mxu0
    %v8843 = vadd.f32 0.0, %v8842
    %v8844 = vpop.f32.mrf.mxu0
    %v8845 = vadd.f32 0.0, %v8844
    %v8846 = vpop.f32.mrf.mxu0
    %v8847 = vadd.f32 0.0, %v8846
    %8848 = vmatprep.mubr.bf16.mxu0 %v7947
    %8849 = vmatmul.mubr.bf16.gmra.mxu0 %v7946
    %v8850 = vpop.f32.mrf.mxu0
    %v8851 = vadd.f32 0.0, %v8850
    %v8852 = vpop.f32.mrf.mxu0
    %v8853 = vadd.f32 0.0, %v8852
    %v8854 = vpop.f32.mrf.mxu0
    %v8855 = vadd.f32 0.0, %v8854
    %v8856 = vpop.f32.mrf.mxu0
    %v8857 = vadd.f32 0.0, %v8856
    %8858 = vmatprep.mubr.bf16.mxu0 %v7952
    %8859 = vmatmul.mubr.bf16.gmra.mxu0 %v7951
    %v8860 = vpop.f32.mrf.mxu0
    %v8861 = vadd.f32 0.0, %v8860
    %v8862 = vpop.f32.mrf.mxu0
    %v8863 = vadd.f32 0.0, %v8862
    %v8864 = vpop.f32.mrf.mxu0
    %v8865 = vadd.f32 0.0, %v8864
    %v8866 = vpop.f32.mrf.mxu0
    %v8867 = vadd.f32 0.0, %v8866
    %8868 = vdwg.mxu0
    %8869 = vmatprep.subr.bf16.mxu0 %v8403
    %8870 = vmatpush1.bf16.msra.mxu0 %v8402
    %8871 = vmatprep.subr.bf16.mxu0 %v8401
    %8872 = vmatpush1.bf16.msra.mxu0 %v8400
    %8873 = vmatprep.subr.bf16.mxu0 %v8399
    %8874 = vmatpush1.bf16.msra.mxu0 %v8398
    %8875 = vmatprep.subr.bf16.mxu0 %v8397
    %8876 = vmatpush1.bf16.msra.mxu0 %v8396
    %8877 = vmatprep.subr.bf16.mxu0 %v8395
    %8878 = vmatpush1.bf16.msra.mxu0 %v8394
    %8879 = vmatprep.subr.bf16.mxu0 %v8393
    %8880 = vmatpush1.bf16.msra.mxu0 %v8392
    %8881 = vmatprep.subr.bf16.mxu0 %v8391
    %8882 = vmatpush1.bf16.msra.mxu0 %v8390
    %8883 = vmatprep.subr.bf16.mxu0 %v8389
    %8884 = vmatpush1.bf16.msra.mxu0 %v8388
    %8885 = vmatprep.subr.bf16.mxu0 %v8419
    %8886 = vmatpush2.bf16.msra.mxu0 %v8418
    %8887 = vmatprep.subr.bf16.mxu0 %v8417
    %8888 = vmatpush2.bf16.msra.mxu0 %v8416
    %8889 = vmatprep.subr.bf16.mxu0 %v8415
    %8890 = vmatpush2.bf16.msra.mxu0 %v8414
    %8891 = vmatprep.subr.bf16.mxu0 %v8413
    %8892 = vmatpush2.bf16.msra.mxu0 %v8412
    %8893 = vmatprep.subr.bf16.mxu0 %v8411
    %8894 = vmatpush2.bf16.msra.mxu0 %v8410
    %8895 = vmatprep.subr.bf16.mxu0 %v8409
    %8896 = vmatpush2.bf16.msra.mxu0 %v8408
    %8897 = vmatprep.subr.bf16.mxu0 %v8407
    %8898 = vmatpush2.bf16.msra.mxu0 %v8406
    %8899 = vmatprep.subr.bf16.mxu0 %v8405
    %8900 = vmatpush2.bf16.msra.mxu0 %v8404
    %8901 = vmatprep.mubr.bf16.mxu0 %v7799
    %8902 = vmatmul.mubr.bf16.gmra.mxu0 %v7798
    %v8903 = vpop.f32.mrf.mxu0
    %v8904 = vadd.f32 %v8551, %v8903
    %v8905 = vpop.f32.mrf.mxu0
    %v8906 = vadd.f32 %v8553, %v8905
    %v8907 = vpop.f32.mrf.mxu0
    %v8908 = vadd.f32 %v8555, %v8907
    %v8909 = vpop.f32.mrf.mxu0
    %v8910 = vadd.f32 %v8557, %v8909
    %8911 = vmatprep.mubr.bf16.mxu0 %v7804
    %8912 = vmatmul.mubr.bf16.gmra.mxu0 %v7803
    %v8913 = vpop.f32.mrf.mxu0
    %v8914 = vadd.f32 %v8561, %v8913
    %v8915 = vpop.f32.mrf.mxu0
    %v8916 = vadd.f32 %v8563, %v8915
    %v8917 = vpop.f32.mrf.mxu0
    %v8918 = vadd.f32 %v8565, %v8917
    %v8919 = vpop.f32.mrf.mxu0
    %v8920 = vadd.f32 %v8567, %v8919
    %8921 = vmatprep.mubr.bf16.mxu0 %v7809
    %8922 = vmatmul.mubr.bf16.gmra.mxu0 %v7808
    %v8923 = vpop.f32.mrf.mxu0
    %v8924 = vadd.f32 %v8571, %v8923
    %v8925 = vpop.f32.mrf.mxu0
    %v8926 = vadd.f32 %v8573, %v8925
    %v8927 = vpop.f32.mrf.mxu0
    %v8928 = vadd.f32 %v8575, %v8927
    %v8929 = vpop.f32.mrf.mxu0
    %v8930 = vadd.f32 %v8577, %v8929
    %8931 = vmatprep.mubr.bf16.mxu0 %v7814
    %8932 = vmatmul.mubr.bf16.gmra.mxu0 %v7813
    %v8933 = vpop.f32.mrf.mxu0
    %v8934 = vadd.f32 %v8581, %v8933
    %v8935 = vpop.f32.mrf.mxu0
    %v8936 = vadd.f32 %v8583, %v8935
    %v8937 = vpop.f32.mrf.mxu0
    %v8938 = vadd.f32 %v8585, %v8937
    %v8939 = vpop.f32.mrf.mxu0
    %v8940 = vadd.f32 %v8587, %v8939
    %8941 = vmatprep.mubr.bf16.mxu0 %v7819
    %8942 = vmatmul.mubr.bf16.gmra.mxu0 %v7818
    %v8943 = vpop.f32.mrf.mxu0
    %v8944 = vadd.f32 %v8591, %v8943
    %v8945 = vpop.f32.mrf.mxu0
    %v8946 = vadd.f32 %v8593, %v8945
    %v8947 = vpop.f32.mrf.mxu0
    %v8948 = vadd.f32 %v8595, %v8947
    %v8949 = vpop.f32.mrf.mxu0
    %v8950 = vadd.f32 %v8597, %v8949
    %8951 = vmatprep.mubr.bf16.mxu0 %v7824
    %8952 = vmatmul.mubr.bf16.gmra.mxu0 %v7823
    %v8953 = vpop.f32.mrf.mxu0
    %v8954 = vadd.f32 %v8601, %v8953
    %v8955 = vpop.f32.mrf.mxu0
    %v8956 = vadd.f32 %v8603, %v8955
    %v8957 = vpop.f32.mrf.mxu0
    %v8958 = vadd.f32 %v8605, %v8957
    %v8959 = vpop.f32.mrf.mxu0
    %v8960 = vadd.f32 %v8607, %v8959
    %8961 = vmatprep.mubr.bf16.mxu0 %v7829
    %8962 = vmatmul.mubr.bf16.gmra.mxu0 %v7828
    %v8963 = vpop.f32.mrf.mxu0
    %v8964 = vadd.f32 %v8611, %v8963
    %v8965 = vpop.f32.mrf.mxu0
    %v8966 = vadd.f32 %v8613, %v8965
    %v8967 = vpop.f32.mrf.mxu0
    %v8968 = vadd.f32 %v8615, %v8967
    %v8969 = vpop.f32.mrf.mxu0
    %v8970 = vadd.f32 %v8617, %v8969
    %8971 = vmatprep.mubr.bf16.mxu0 %v7834
    %8972 = vmatmul.mubr.bf16.gmra.mxu0 %v7833
    %v8973 = vpop.f32.mrf.mxu0
    %v8974 = vadd.f32 %v8621, %v8973
    %v8975 = vpop.f32.mrf.mxu0
    %v8976 = vadd.f32 %v8623, %v8975
    %v8977 = vpop.f32.mrf.mxu0
    %v8978 = vadd.f32 %v8625, %v8977
    %v8979 = vpop.f32.mrf.mxu0
    %v8980 = vadd.f32 %v8627, %v8979
    %8981 = vmatprep.mubr.bf16.mxu0 %v7839
    %8982 = vmatmul.mubr.bf16.gmra.mxu0 %v7838
    %v8983 = vpop.f32.mrf.mxu0
    %v8984 = vadd.f32 %v8631, %v8983
    %v8985 = vpop.f32.mrf.mxu0
    %v8986 = vadd.f32 %v8633, %v8985
    %v8987 = vpop.f32.mrf.mxu0
    %v8988 = vadd.f32 %v8635, %v8987
    %v8989 = vpop.f32.mrf.mxu0
    %v8990 = vadd.f32 %v8637, %v8989
    %8991 = vmatprep.mubr.bf16.mxu0 %v7844
    %8992 = vmatmul.mubr.bf16.gmra.mxu0 %v7843
    %v8993 = vpop.f32.mrf.mxu0
    %v8994 = vadd.f32 %v8641, %v8993
    %v8995 = vpop.f32.mrf.mxu0
    %v8996 = vadd.f32 %v8643, %v8995
    %v8997 = vpop.f32.mrf.mxu0
    %v8998 = vadd.f32 %v8645, %v8997
    %v8999 = vpop.f32.mrf.mxu0
    %v9000 = vadd.f32 %v8647, %v8999
    %9001 = vmatprep.mubr.bf16.mxu0 %v7849
    %9002 = vmatmul.mubr.bf16.gmra.mxu0 %v7848
    %v9003 = vpop.f32.mrf.mxu0
    %v9004 = vadd.f32 %v8651, %v9003
    %v9005 = vpop.f32.mrf.mxu0
    %v9006 = vadd.f32 %v8653, %v9005
    %v9007 = vpop.f32.mrf.mxu0
    %v9008 = vadd.f32 %v8655, %v9007
    %v9009 = vpop.f32.mrf.mxu0
    %v9010 = vadd.f32 %v8657, %v9009
    %9011 = vmatprep.mubr.bf16.mxu0 %v7854
    %9012 = vmatmul.mubr.bf16.gmra.mxu0 %v7853
    %v9013 = vpop.f32.mrf.mxu0
    %v9014 = vadd.f32 %v8661, %v9013
    %v9015 = vpop.f32.mrf.mxu0
    %v9016 = vadd.f32 %v8663, %v9015
    %v9017 = vpop.f32.mrf.mxu0
    %v9018 = vadd.f32 %v8665, %v9017
    %v9019 = vpop.f32.mrf.mxu0
    %v9020 = vadd.f32 %v8667, %v9019
    %9021 = vmatprep.mubr.bf16.mxu0 %v7859
    %9022 = vmatmul.mubr.bf16.gmra.mxu0 %v7858
    %v9023 = vpop.f32.mrf.mxu0
    %v9024 = vadd.f32 %v8671, %v9023
    %v9025 = vpop.f32.mrf.mxu0
    %v9026 = vadd.f32 %v8673, %v9025
    %v9027 = vpop.f32.mrf.mxu0
    %v9028 = vadd.f32 %v8675, %v9027
    %v9029 = vpop.f32.mrf.mxu0
    %v9030 = vadd.f32 %v8677, %v9029
    %9031 = vmatprep.mubr.bf16.mxu0 %v7864
    %9032 = vmatmul.mubr.bf16.gmra.mxu0 %v7863
    %v9033 = vpop.f32.mrf.mxu0
    %v9034 = vadd.f32 %v8681, %v9033
    %v9035 = vpop.f32.mrf.mxu0
    %v9036 = vadd.f32 %v8683, %v9035
    %v9037 = vpop.f32.mrf.mxu0
    %v9038 = vadd.f32 %v8685, %v9037
    %v9039 = vpop.f32.mrf.mxu0
    %v9040 = vadd.f32 %v8687, %v9039
    %9041 = vmatprep.mubr.bf16.mxu0 %v7869
    %9042 = vmatmul.mubr.bf16.gmra.mxu0 %v7868
    %v9043 = vpop.f32.mrf.mxu0
    %v9044 = vadd.f32 %v8691, %v9043
    %v9045 = vpop.f32.mrf.mxu0
    %v9046 = vadd.f32 %v8693, %v9045
    %v9047 = vpop.f32.mrf.mxu0
    %v9048 = vadd.f32 %v8695, %v9047
    %v9049 = vpop.f32.mrf.mxu0
    %v9050 = vadd.f32 %v8697, %v9049
    %9051 = vmatprep.mubr.bf16.mxu0 %v7874
    %9052 = vmatmul.mubr.bf16.gmra.mxu0 %v7873
    %v9053 = vpop.f32.mrf.mxu0
    %v9054 = vadd.f32 %v8701, %v9053
    %v9055 = vpop.f32.mrf.mxu0
    %v9056 = vadd.f32 %v8703, %v9055
    %v9057 = vpop.f32.mrf.mxu0
    %v9058 = vadd.f32 %v8705, %v9057
    %v9059 = vpop.f32.mrf.mxu0
    %v9060 = vadd.f32 %v8707, %v9059
    %9061 = vmatprep.mubr.bf16.mxu0 %v7879
    %9062 = vmatmul.mubr.bf16.gmra.mxu0 %v7878
    %v9063 = vpop.f32.mrf.mxu0
    %v9064 = vadd.f32 %v8711, %v9063
    %v9065 = vpop.f32.mrf.mxu0
    %v9066 = vadd.f32 %v8713, %v9065
    %v9067 = vpop.f32.mrf.mxu0
    %v9068 = vadd.f32 %v8715, %v9067
    %v9069 = vpop.f32.mrf.mxu0
    %v9070 = vadd.f32 %v8717, %v9069
    %9071 = vmatprep.mubr.bf16.mxu0 %v7884
    %9072 = vmatmul.mubr.bf16.gmra.mxu0 %v7883
    %v9073 = vpop.f32.mrf.mxu0
    %v9074 = vadd.f32 %v8721, %v9073
    %v9075 = vpop.f32.mrf.mxu0
    %v9076 = vadd.f32 %v8723, %v9075
    %v9077 = vpop.f32.mrf.mxu0
    %v9078 = vadd.f32 %v8725, %v9077
    %v9079 = vpop.f32.mrf.mxu0
    %v9080 = vadd.f32 %v8727, %v9079
    %9081 = vmatprep.mubr.bf16.mxu0 %v7889
    %9082 = vmatmul.mubr.bf16.gmra.mxu0 %v7888
    %v9083 = vpop.f32.mrf.mxu0
    %v9084 = vadd.f32 %v8731, %v9083
    %v9085 = vpop.f32.mrf.mxu0
    %v9086 = vadd.f32 %v8733, %v9085
    %v9087 = vpop.f32.mrf.mxu0
    %v9088 = vadd.f32 %v8735, %v9087
    %v9089 = vpop.f32.mrf.mxu0
    %v9090 = vadd.f32 %v8737, %v9089
    %9091 = vmatprep.mubr.bf16.mxu0 %v7894
    %9092 = vmatmul.mubr.bf16.gmra.mxu0 %v7893
    %v9093 = vpop.f32.mrf.mxu0
    %v9094 = vadd.f32 %v8741, %v9093
    %v9095 = vpop.f32.mrf.mxu0
    %v9096 = vadd.f32 %v8743, %v9095
    %v9097 = vpop.f32.mrf.mxu0
    %v9098 = vadd.f32 %v8745, %v9097
    %v9099 = vpop.f32.mrf.mxu0
    %v9100 = vadd.f32 %v8747, %v9099
    %9101 = vmatprep.mubr.bf16.mxu0 %v7899
    %9102 = vmatmul.mubr.bf16.gmra.mxu0 %v7898
    %v9103 = vpop.f32.mrf.mxu0
    %v9104 = vadd.f32 %v8751, %v9103
    %v9105 = vpop.f32.mrf.mxu0
    %v9106 = vadd.f32 %v8753, %v9105
    %v9107 = vpop.f32.mrf.mxu0
    %v9108 = vadd.f32 %v8755, %v9107
    %v9109 = vpop.f32.mrf.mxu0
    %v9110 = vadd.f32 %v8757, %v9109
    %9111 = vmatprep.mubr.bf16.mxu0 %v7904
    %9112 = vmatmul.mubr.bf16.gmra.mxu0 %v7903
    %v9113 = vpop.f32.mrf.mxu0
    %v9114 = vadd.f32 %v8761, %v9113
    %v9115 = vpop.f32.mrf.mxu0
    %v9116 = vadd.f32 %v8763, %v9115
    %v9117 = vpop.f32.mrf.mxu0
    %v9118 = vadd.f32 %v8765, %v9117
    %v9119 = vpop.f32.mrf.mxu0
    %v9120 = vadd.f32 %v8767, %v9119
    %9121 = vmatprep.mubr.bf16.mxu0 %v7909
    %9122 = vmatmul.mubr.bf16.gmra.mxu0 %v7908
    %v9123 = vpop.f32.mrf.mxu0
    %v9124 = vadd.f32 %v8771, %v9123
    %v9125 = vpop.f32.mrf.mxu0
    %v9126 = vadd.f32 %v8773, %v9125
    %v9127 = vpop.f32.mrf.mxu0
    %v9128 = vadd.f32 %v8775, %v9127
    %v9129 = vpop.f32.mrf.mxu0
    %v9130 = vadd.f32 %v8777, %v9129
    %9131 = vmatprep.mubr.bf16.mxu0 %v7914
    %9132 = vmatmul.mubr.bf16.gmra.mxu0 %v7913
    %v9133 = vpop.f32.mrf.mxu0
    %v9134 = vadd.f32 %v8781, %v9133
    %v9135 = vpop.f32.mrf.mxu0
    %v9136 = vadd.f32 %v8783, %v9135
    %v9137 = vpop.f32.mrf.mxu0
    %v9138 = vadd.f32 %v8785, %v9137
    %v9139 = vpop.f32.mrf.mxu0
    %v9140 = vadd.f32 %v8787, %v9139
    %9141 = vmatprep.mubr.bf16.mxu0 %v7919
    %9142 = vmatmul.mubr.bf16.gmra.mxu0 %v7918
    %v9143 = vpop.f32.mrf.mxu0
    %v9144 = vadd.f32 %v8791, %v9143
    %v9145 = vpop.f32.mrf.mxu0
    %v9146 = vadd.f32 %v8793, %v9145
    %v9147 = vpop.f32.mrf.mxu0
    %v9148 = vadd.f32 %v8795, %v9147
    %v9149 = vpop.f32.mrf.mxu0
    %v9150 = vadd.f32 %v8797, %v9149
    %9151 = vmatprep.mubr.bf16.mxu0 %v7924
    %9152 = vmatmul.mubr.bf16.gmra.mxu0 %v7923
    %v9153 = vpop.f32.mrf.mxu0
    %v9154 = vadd.f32 %v8801, %v9153
    %v9155 = vpop.f32.mrf.mxu0
    %v9156 = vadd.f32 %v8803, %v9155
    %v9157 = vpop.f32.mrf.mxu0
    %v9158 = vadd.f32 %v8805, %v9157
    %v9159 = vpop.f32.mrf.mxu0
    %v9160 = vadd.f32 %v8807, %v9159
    %9161 = vmatprep.mubr.bf16.mxu0 %v7929
    %9162 = vmatmul.mubr.bf16.gmra.mxu0 %v7928
    %v9163 = vpop.f32.mrf.mxu0
    %v9164 = vadd.f32 %v8811, %v9163
    %v9165 = vpop.f32.mrf.mxu0
    %v9166 = vadd.f32 %v8813, %v9165
    %v9167 = vpop.f32.mrf.mxu0
    %v9168 = vadd.f32 %v8815, %v9167
    %v9169 = vpop.f32.mrf.mxu0
    %v9170 = vadd.f32 %v8817, %v9169
    %9171 = vmatprep.mubr.bf16.mxu0 %v7934
    %9172 = vmatmul.mubr.bf16.gmra.mxu0 %v7933
    %v9173 = vpop.f32.mrf.mxu0
    %v9174 = vadd.f32 %v8821, %v9173
    %v9175 = vpop.f32.mrf.mxu0
    %v9176 = vadd.f32 %v8823, %v9175
    %v9177 = vpop.f32.mrf.mxu0
    %v9178 = vadd.f32 %v8825, %v9177
    %v9179 = vpop.f32.mrf.mxu0
    %v9180 = vadd.f32 %v8827, %v9179
    %9181 = vmatprep.mubr.bf16.mxu0 %v7939
    %9182 = vmatmul.mubr.bf16.gmra.mxu0 %v7938
    %v9183 = vpop.f32.mrf.mxu0
    %v9184 = vadd.f32 %v8831, %v9183
    %v9185 = vpop.f32.mrf.mxu0
    %v9186 = vadd.f32 %v8833, %v9185
    %v9187 = vpop.f32.mrf.mxu0
    %v9188 = vadd.f32 %v8835, %v9187
    %v9189 = vpop.f32.mrf.mxu0
    %v9190 = vadd.f32 %v8837, %v9189
    %9191 = vmatprep.mubr.bf16.mxu0 %v7944
    %9192 = vmatmul.mubr.bf16.gmra.mxu0 %v7943
    %v9193 = vpop.f32.mrf.mxu0
    %v9194 = vadd.f32 %v8841, %v9193
    %v9195 = vpop.f32.mrf.mxu0
    %v9196 = vadd.f32 %v8843, %v9195
    %v9197 = vpop.f32.mrf.mxu0
    %v9198 = vadd.f32 %v8845, %v9197
    %v9199 = vpop.f32.mrf.mxu0
    %v9200 = vadd.f32 %v8847, %v9199
    %9201 = vmatprep.mubr.bf16.mxu0 %v7949
    %9202 = vmatmul.mubr.bf16.gmra.mxu0 %v7948
    %v9203 = vpop.f32.mrf.mxu0
    %v9204 = vadd.f32 %v8851, %v9203
    %v9205 = vpop.f32.mrf.mxu0
    %v9206 = vadd.f32 %v8853, %v9205
    %v9207 = vpop.f32.mrf.mxu0
    %v9208 = vadd.f32 %v8855, %v9207
    %v9209 = vpop.f32.mrf.mxu0
    %v9210 = vadd.f32 %v8857, %v9209
    %9211 = vmatprep.mubr.bf16.mxu0 %v7954
    %9212 = vmatmul.mubr.bf16.gmra.mxu0 %v7953
    %v9213 = vpop.f32.mrf.mxu0
    %v9214 = vadd.f32 %v8861, %v9213
    %v9215 = vpop.f32.mrf.mxu0
    %v9216 = vadd.f32 %v8863, %v9215
    %v9217 = vpop.f32.mrf.mxu0
    %v9218 = vadd.f32 %v8865, %v9217
    %v9219 = vpop.f32.mrf.mxu0
    %v9220 = vadd.f32 %v8867, %v9219
    %9221 = vdwg.mxu0
    %9222 = vmatprep.subr.bf16.mxu0 %v8435
    %9223 = vmatpush1.bf16.msra.mxu0 %v8434
    %9224 = vmatprep.subr.bf16.mxu0 %v8433
    %9225 = vmatpush1.bf16.msra.mxu0 %v8432
    %9226 = vmatprep.subr.bf16.mxu0 %v8431
    %9227 = vmatpush1.bf16.msra.mxu0 %v8430
    %9228 = vmatprep.subr.bf16.mxu0 %v8429
    %9229 = vmatpush1.bf16.msra.mxu0 %v8428
    %9230 = vmatprep.subr.bf16.mxu0 %v8427
    %9231 = vmatpush1.bf16.msra.mxu0 %v8426
    %9232 = vmatprep.subr.bf16.mxu0 %v8425
    %9233 = vmatpush1.bf16.msra.mxu0 %v8424
    %9234 = vmatprep.subr.bf16.mxu0 %v8423
    %9235 = vmatpush1.bf16.msra.mxu0 %v8422
    %9236 = vmatprep.subr.bf16.mxu0 %v8421
    %9237 = vmatpush1.bf16.msra.mxu0 %v8420
    %9238 = vmatprep.subr.bf16.mxu0 0
    %9239 = vmatpush2.bf16.msra.mxu0 0
    %9240 = vmatprep.subr.bf16.mxu0 0
    %9241 = vmatpush2.bf16.msra.mxu0 0
    %9242 = vmatprep.subr.bf16.mxu0 0
    %9243 = vmatpush2.bf16.msra.mxu0 0
    %9244 = vmatprep.subr.bf16.mxu0 0
    %9245 = vmatpush2.bf16.msra.mxu0 0
    %9246 = vmatprep.subr.bf16.mxu0 0
    %9247 = vmatpush2.bf16.msra.mxu0 0
    %9248 = vmatprep.subr.bf16.mxu0 0
    %9249 = vmatpush2.bf16.msra.mxu0 0
    %9250 = vmatprep.subr.bf16.mxu0 0
    %9251 = vmatpush2.bf16.msra.mxu0 0
    %9252 = vmatprep.subr.bf16.mxu0 0
    %9253 = vmatpush2.bf16.msra.mxu0 0
    %9254 = vmatprep.mubr.bf16.mxu0 0
    %9255 = vmatmul.mubr.bf16.gmra.mxu0 %v7800
    %v9256 = vpop.f32.mrf.mxu0
    %v9257 = vadd.f32 %v8904, %v9256
    %v9258 = vpop.f32.mrf.mxu0
    %v9259 = vadd.f32 %v8906, %v9258
    %v9260 = vpop.f32.mrf.mxu0
    %v9261 = vadd.f32 %v8908, %v9260
    %v9262 = vpop.f32.mrf.mxu0
    %v9263 = vadd.f32 %v8910, %v9262
    %9264 = vmatprep.mubr.bf16.mxu0 0
    %9265 = vmatmul.mubr.bf16.gmra.mxu0 %v7805
    %v9266 = vpop.f32.mrf.mxu0
    %v9267 = vadd.f32 %v8914, %v9266
    %v9268 = vpop.f32.mrf.mxu0
    %v9269 = vadd.f32 %v8916, %v9268
    %v9270 = vpop.f32.mrf.mxu0
    %v9271 = vadd.f32 %v8918, %v9270
    %v9272 = vpop.f32.mrf.mxu0
    %v9273 = vadd.f32 %v8920, %v9272
    %9274 = vmatprep.mubr.bf16.mxu0 0
    %9275 = vmatmul.mubr.bf16.gmra.mxu0 %v7810
    %v9276 = vpop.f32.mrf.mxu0
    %v9277 = vadd.f32 %v8924, %v9276
    %v9278 = vpop.f32.mrf.mxu0
    %v9279 = vadd.f32 %v8926, %v9278
    %v9280 = vpop.f32.mrf.mxu0
    %v9281 = vadd.f32 %v8928, %v9280
    %v9282 = vpop.f32.mrf.mxu0
    %v9283 = vadd.f32 %v8930, %v9282
    %9284 = vmatprep.mubr.bf16.mxu0 0
    %9285 = vmatmul.mubr.bf16.gmra.mxu0 %v7815
    %v9286 = vpop.f32.mrf.mxu0
    %v9287 = vadd.f32 %v8934, %v9286
    %v9288 = vpop.f32.mrf.mxu0
    %v9289 = vadd.f32 %v8936, %v9288
    %v9290 = vpop.f32.mrf.mxu0
    %v9291 = vadd.f32 %v8938, %v9290
    %v9292 = vpop.f32.mrf.mxu0
    %v9293 = vadd.f32 %v8940, %v9292
    %9294 = vmatprep.mubr.bf16.mxu0 0
    %9295 = vmatmul.mubr.bf16.gmra.mxu0 %v7820
    %v9296 = vpop.f32.mrf.mxu0
    %v9297 = vadd.f32 %v8944, %v9296
    %v9298 = vpop.f32.mrf.mxu0
    %v9299 = vadd.f32 %v8946, %v9298
    %v9300 = vpop.f32.mrf.mxu0
    %v9301 = vadd.f32 %v8948, %v9300
    %v9302 = vpop.f32.mrf.mxu0
    %v9303 = vadd.f32 %v8950, %v9302
    %9304 = vmatprep.mubr.bf16.mxu0 0
    %9305 = vmatmul.mubr.bf16.gmra.mxu0 %v7825
    %v9306 = vpop.f32.mrf.mxu0
    %v9307 = vadd.f32 %v8954, %v9306
    %v9308 = vpop.f32.mrf.mxu0
    %v9309 = vadd.f32 %v8956, %v9308
    %v9310 = vpop.f32.mrf.mxu0
    %v9311 = vadd.f32 %v8958, %v9310
    %v9312 = vpop.f32.mrf.mxu0
    %v9313 = vadd.f32 %v8960, %v9312
    %9314 = vmatprep.mubr.bf16.mxu0 0
    %9315 = vmatmul.mubr.bf16.gmra.mxu0 %v7830
    %v9316 = vpop.f32.mrf.mxu0
    %v9317 = vadd.f32 %v8964, %v9316
    %v9318 = vpop.f32.mrf.mxu0
    %v9319 = vadd.f32 %v8966, %v9318
    %v9320 = vpop.f32.mrf.mxu0
    %v9321 = vadd.f32 %v8968, %v9320
    %v9322 = vpop.f32.mrf.mxu0
    %v9323 = vadd.f32 %v8970, %v9322
    %9324 = vmatprep.mubr.bf16.mxu0 0
    %9325 = vmatmul.mubr.bf16.gmra.mxu0 %v7835
    %v9326 = vpop.f32.mrf.mxu0
    %v9327 = vadd.f32 %v8974, %v9326
    %v9328 = vpop.f32.mrf.mxu0
    %v9329 = vadd.f32 %v8976, %v9328
    %v9330 = vpop.f32.mrf.mxu0
    %v9331 = vadd.f32 %v8978, %v9330
    %v9332 = vpop.f32.mrf.mxu0
    %v9333 = vadd.f32 %v8980, %v9332
    %9334 = vmatprep.mubr.bf16.mxu0 0
    %9335 = vmatmul.mubr.bf16.gmra.mxu0 %v7840
    %v9336 = vpop.f32.mrf.mxu0
    %v9337 = vadd.f32 %v8984, %v9336
    %v9338 = vpop.f32.mrf.mxu0
    %v9339 = vadd.f32 %v8986, %v9338
    %v9340 = vpop.f32.mrf.mxu0
    %v9341 = vadd.f32 %v8988, %v9340
    %v9342 = vpop.f32.mrf.mxu0
    %v9343 = vadd.f32 %v8990, %v9342
    %9344 = vmatprep.mubr.bf16.mxu0 0
    %9345 = vmatmul.mubr.bf16.gmra.mxu0 %v7845
    %v9346 = vpop.f32.mrf.mxu0
    %v9347 = vadd.f32 %v8994, %v9346
    %v9348 = vpop.f32.mrf.mxu0
    %v9349 = vadd.f32 %v8996, %v9348
    %v9350 = vpop.f32.mrf.mxu0
    %v9351 = vadd.f32 %v8998, %v9350
    %v9352 = vpop.f32.mrf.mxu0
    %v9353 = vadd.f32 %v9000, %v9352
    %9354 = vmatprep.mubr.bf16.mxu0 0
    %9355 = vmatmul.mubr.bf16.gmra.mxu0 %v7850
    %v9356 = vpop.f32.mrf.mxu0
    %v9357 = vadd.f32 %v9004, %v9356
    %v9358 = vpop.f32.mrf.mxu0
    %v9359 = vadd.f32 %v9006, %v9358
    %v9360 = vpop.f32.mrf.mxu0
    %v9361 = vadd.f32 %v9008, %v9360
    %v9362 = vpop.f32.mrf.mxu0
    %v9363 = vadd.f32 %v9010, %v9362
    %9364 = vmatprep.mubr.bf16.mxu0 0
    %9365 = vmatmul.mubr.bf16.gmra.mxu0 %v7855
    %v9366 = vpop.f32.mrf.mxu0
    %v9367 = vadd.f32 %v9014, %v9366
    %v9368 = vpop.f32.mrf.mxu0
    %v9369 = vadd.f32 %v9016, %v9368
    %v9370 = vpop.f32.mrf.mxu0
    %v9371 = vadd.f32 %v9018, %v9370
    %v9372 = vpop.f32.mrf.mxu0
    %v9373 = vadd.f32 %v9020, %v9372
    %9374 = vmatprep.mubr.bf16.mxu0 0
    %9375 = vmatmul.mubr.bf16.gmra.mxu0 %v7860
    %v9376 = vpop.f32.mrf.mxu0
    %v9377 = vadd.f32 %v9024, %v9376
    %v9378 = vpop.f32.mrf.mxu0
    %v9379 = vadd.f32 %v9026, %v9378
    %v9380 = vpop.f32.mrf.mxu0
    %v9381 = vadd.f32 %v9028, %v9380
    %v9382 = vpop.f32.mrf.mxu0
    %v9383 = vadd.f32 %v9030, %v9382
    %9384 = vmatprep.mubr.bf16.mxu0 0
    %9385 = vmatmul.mubr.bf16.gmra.mxu0 %v7865
    %v9386 = vpop.f32.mrf.mxu0
    %v9387 = vadd.f32 %v9034, %v9386
    %v9388 = vpop.f32.mrf.mxu0
    %v9389 = vadd.f32 %v9036, %v9388
    %v9390 = vpop.f32.mrf.mxu0
    %v9391 = vadd.f32 %v9038, %v9390
    %v9392 = vpop.f32.mrf.mxu0
    %v9393 = vadd.f32 %v9040, %v9392
    %9394 = vmatprep.mubr.bf16.mxu0 0
    %9395 = vmatmul.mubr.bf16.gmra.mxu0 %v7870
    %v9396 = vpop.f32.mrf.mxu0
    %v9397 = vadd.f32 %v9044, %v9396
    %v9398 = vpop.f32.mrf.mxu0
    %v9399 = vadd.f32 %v9046, %v9398
    %v9400 = vpop.f32.mrf.mxu0
    %v9401 = vadd.f32 %v9048, %v9400
    %v9402 = vpop.f32.mrf.mxu0
    %v9403 = vadd.f32 %v9050, %v9402
    %9404 = vmatprep.mubr.bf16.mxu0 0
    %9405 = vmatmul.mubr.bf16.gmra.mxu0 %v7875
    %v9406 = vpop.f32.mrf.mxu0
    %v9407 = vadd.f32 %v9054, %v9406
    %v9408 = vpop.f32.mrf.mxu0
    %v9409 = vadd.f32 %v9056, %v9408
    %v9410 = vpop.f32.mrf.mxu0
    %v9411 = vadd.f32 %v9058, %v9410
    %v9412 = vpop.f32.mrf.mxu0
    %v9413 = vadd.f32 %v9060, %v9412
    %9414 = vmatprep.mubr.bf16.mxu0 0
    %9415 = vmatmul.mubr.bf16.gmra.mxu0 %v7880
    %v9416 = vpop.f32.mrf.mxu0
    %v9417 = vadd.f32 %v9064, %v9416
    %v9418 = vpop.f32.mrf.mxu0
    %v9419 = vadd.f32 %v9066, %v9418
    %v9420 = vpop.f32.mrf.mxu0
    %v9421 = vadd.f32 %v9068, %v9420
    %v9422 = vpop.f32.mrf.mxu0
    %v9423 = vadd.f32 %v9070, %v9422
    %9424 = vmatprep.mubr.bf16.mxu0 0
    %9425 = vmatmul.mubr.bf16.gmra.mxu0 %v7885
    %v9426 = vpop.f32.mrf.mxu0
    %v9427 = vadd.f32 %v9074, %v9426
    %v9428 = vpop.f32.mrf.mxu0
    %v9429 = vadd.f32 %v9076, %v9428
    %v9430 = vpop.f32.mrf.mxu0
    %v9431 = vadd.f32 %v9078, %v9430
    %v9432 = vpop.f32.mrf.mxu0
    %v9433 = vadd.f32 %v9080, %v9432
    %9434 = vmatprep.mubr.bf16.mxu0 0
    %9435 = vmatmul.mubr.bf16.gmra.mxu0 %v7890
    %v9436 = vpop.f32.mrf.mxu0
    %v9437 = vadd.f32 %v9084, %v9436
    %v9438 = vpop.f32.mrf.mxu0
    %v9439 = vadd.f32 %v9086, %v9438
    %v9440 = vpop.f32.mrf.mxu0
    %v9441 = vadd.f32 %v9088, %v9440
    %v9442 = vpop.f32.mrf.mxu0
    %v9443 = vadd.f32 %v9090, %v9442
    %9444 = vmatprep.mubr.bf16.mxu0 0
    %9445 = vmatmul.mubr.bf16.gmra.mxu0 %v7895
    %v9446 = vpop.f32.mrf.mxu0
    %v9447 = vadd.f32 %v9094, %v9446
    %v9448 = vpop.f32.mrf.mxu0
    %v9449 = vadd.f32 %v9096, %v9448
    %v9450 = vpop.f32.mrf.mxu0
    %v9451 = vadd.f32 %v9098, %v9450
    %v9452 = vpop.f32.mrf.mxu0
    %v9453 = vadd.f32 %v9100, %v9452
    %9454 = vmatprep.mubr.bf16.mxu0 0
    %9455 = vmatmul.mubr.bf16.gmra.mxu0 %v7900
    %v9456 = vpop.f32.mrf.mxu0
    %v9457 = vadd.f32 %v9104, %v9456
    %v9458 = vpop.f32.mrf.mxu0
    %v9459 = vadd.f32 %v9106, %v9458
    %v9460 = vpop.f32.mrf.mxu0
    %v9461 = vadd.f32 %v9108, %v9460
    %v9462 = vpop.f32.mrf.mxu0
    %v9463 = vadd.f32 %v9110, %v9462
    %9464 = vmatprep.mubr.bf16.mxu0 0
    %9465 = vmatmul.mubr.bf16.gmra.mxu0 %v7905
    %v9466 = vpop.f32.mrf.mxu0
    %v9467 = vadd.f32 %v9114, %v9466
    %v9468 = vpop.f32.mrf.mxu0
    %v9469 = vadd.f32 %v9116, %v9468
    %v9470 = vpop.f32.mrf.mxu0
    %v9471 = vadd.f32 %v9118, %v9470
    %v9472 = vpop.f32.mrf.mxu0
    %v9473 = vadd.f32 %v9120, %v9472
    %9474 = vmatprep.mubr.bf16.mxu0 0
    %9475 = vmatmul.mubr.bf16.gmra.mxu0 %v7910
    %v9476 = vpop.f32.mrf.mxu0
    %v9477 = vadd.f32 %v9124, %v9476
    %v9478 = vpop.f32.mrf.mxu0
    %v9479 = vadd.f32 %v9126, %v9478
    %v9480 = vpop.f32.mrf.mxu0
    %v9481 = vadd.f32 %v9128, %v9480
    %v9482 = vpop.f32.mrf.mxu0
    %v9483 = vadd.f32 %v9130, %v9482
    %9484 = vmatprep.mubr.bf16.mxu0 0
    %9485 = vmatmul.mubr.bf16.gmra.mxu0 %v7915
    %v9486 = vpop.f32.mrf.mxu0
    %v9487 = vadd.f32 %v9134, %v9486
    %v9488 = vpop.f32.mrf.mxu0
    %v9489 = vadd.f32 %v9136, %v9488
    %v9490 = vpop.f32.mrf.mxu0
    %v9491 = vadd.f32 %v9138, %v9490
    %v9492 = vpop.f32.mrf.mxu0
    %v9493 = vadd.f32 %v9140, %v9492
    %9494 = vmatprep.mubr.bf16.mxu0 0
    %9495 = vmatmul.mubr.bf16.gmra.mxu0 %v7920
    %v9496 = vpop.f32.mrf.mxu0
    %v9497 = vadd.f32 %v9144, %v9496
    %v9498 = vpop.f32.mrf.mxu0
    %v9499 = vadd.f32 %v9146, %v9498
    %v9500 = vpop.f32.mrf.mxu0
    %v9501 = vadd.f32 %v9148, %v9500
    %v9502 = vpop.f32.mrf.mxu0
    %v9503 = vadd.f32 %v9150, %v9502
    %9504 = vmatprep.mubr.bf16.mxu0 0
    %9505 = vmatmul.mubr.bf16.gmra.mxu0 %v7925
    %v9506 = vpop.f32.mrf.mxu0
    %v9507 = vadd.f32 %v9154, %v9506
    %v9508 = vpop.f32.mrf.mxu0
    %v9509 = vadd.f32 %v9156, %v9508
    %v9510 = vpop.f32.mrf.mxu0
    %v9511 = vadd.f32 %v9158, %v9510
    %v9512 = vpop.f32.mrf.mxu0
    %v9513 = vadd.f32 %v9160, %v9512
    %9514 = vmatprep.mubr.bf16.mxu0 0
    %9515 = vmatmul.mubr.bf16.gmra.mxu0 %v7930
    %v9516 = vpop.f32.mrf.mxu0
    %v9517 = vadd.f32 %v9164, %v9516
    %v9518 = vpop.f32.mrf.mxu0
    %v9519 = vadd.f32 %v9166, %v9518
    %v9520 = vpop.f32.mrf.mxu0
    %v9521 = vadd.f32 %v9168, %v9520
    %v9522 = vpop.f32.mrf.mxu0
    %v9523 = vadd.f32 %v9170, %v9522
    %9524 = vmatprep.mubr.bf16.mxu0 0
    %9525 = vmatmul.mubr.bf16.gmra.mxu0 %v7935
    %v9526 = vpop.f32.mrf.mxu0
    %v9527 = vadd.f32 %v9174, %v9526
    %v9528 = vpop.f32.mrf.mxu0
    %v9529 = vadd.f32 %v9176, %v9528
    %v9530 = vpop.f32.mrf.mxu0
    %v9531 = vadd.f32 %v9178, %v9530
    %v9532 = vpop.f32.mrf.mxu0
    %v9533 = vadd.f32 %v9180, %v9532
    %9534 = vmatprep.mubr.bf16.mxu0 0
    %9535 = vmatmul.mubr.bf16.gmra.mxu0 %v7940
    %v9536 = vpop.f32.mrf.mxu0
    %v9537 = vadd.f32 %v9184, %v9536
    %v9538 = vpop.f32.mrf.mxu0
    %v9539 = vadd.f32 %v9186, %v9538
    %v9540 = vpop.f32.mrf.mxu0
    %v9541 = vadd.f32 %v9188, %v9540
    %v9542 = vpop.f32.mrf.mxu0
    %v9543 = vadd.f32 %v9190, %v9542
    %9544 = vmatprep.mubr.bf16.mxu0 0
    %9545 = vmatmul.mubr.bf16.gmra.mxu0 %v7945
    %v9546 = vpop.f32.mrf.mxu0
    %v9547 = vadd.f32 %v9194, %v9546
    %v9548 = vpop.f32.mrf.mxu0
    %v9549 = vadd.f32 %v9196, %v9548
    %v9550 = vpop.f32.mrf.mxu0
    %v9551 = vadd.f32 %v9198, %v9550
    %v9552 = vpop.f32.mrf.mxu0
    %v9553 = vadd.f32 %v9200, %v9552
    %9554 = vmatprep.mubr.bf16.mxu0 0
    %9555 = vmatmul.mubr.bf16.gmra.mxu0 %v7950
    %v9556 = vpop.f32.mrf.mxu0
    %v9557 = vadd.f32 %v9204, %v9556
    %v9558 = vpop.f32.mrf.mxu0
    %v9559 = vadd.f32 %v9206, %v9558
    %v9560 = vpop.f32.mrf.mxu0
    %v9561 = vadd.f32 %v9208, %v9560
    %v9562 = vpop.f32.mrf.mxu0
    %v9563 = vadd.f32 %v9210, %v9562
    %9564 = vmatprep.mubr.bf16.mxu0 0
    %9565 = vmatmul.mubr.bf16.gmra.mxu0 %v7955
    %v9566 = vpop.f32.mrf.mxu0
    %v9567 = vadd.f32 %v9214, %v9566
    %v9568 = vpop.f32.mrf.mxu0
    %v9569 = vadd.f32 %v9216, %v9568
    %v9570 = vpop.f32.mrf.mxu0
    %v9571 = vadd.f32 %v9218, %v9570
    %v9572 = vpop.f32.mrf.mxu0
    %v9573 = vadd.f32 %v9220, %v9572
    %9574 = vdwg.mxu0
    %v9575 = vld [vmem:[%s9] sm:$0x1]
    %v9577 = vlaneseq
    %v9578 = vshrl.u32 %v9577, 7
    %v9579 = vsub.s32 0, %v9578
    %v9580 = vrot.slane %v9575, %v9579
    %v9582 = vadd.f32 %v9259, %v9580
    %v9583 = vadd.f32 %v9263, %v9580
    %v9584 = vadd.f32 %v9269, %v9580
    %v9585 = vadd.f32 %v9273, %v9580
    %v9586 = vadd.f32 %v9279, %v9580
    %v9587 = vadd.f32 %v9283, %v9580
    %v9588 = vadd.f32 %v9289, %v9580
    %v9589 = vadd.f32 %v9293, %v9580
    %v9590 = vadd.f32 %v9299, %v9580
    %v9591 = vadd.f32 %v9303, %v9580
    %v9592 = vadd.f32 %v9309, %v9580
    %v9593 = vadd.f32 %v9313, %v9580
    %v9594 = vadd.f32 %v9319, %v9580
    %v9595 = vadd.f32 %v9323, %v9580
    %v9596 = vadd.f32 %v9329, %v9580
    %v9597 = vadd.f32 %v9333, %v9580
    %v9598 = vadd.f32 %v9339, %v9580
    %v9599 = vadd.f32 %v9343, %v9580
    %v9600 = vadd.f32 %v9349, %v9580
    %v9601 = vadd.f32 %v9353, %v9580
    %v9602 = vadd.f32 %v9359, %v9580
    %v9603 = vadd.f32 %v9363, %v9580
    %v9604 = vadd.f32 %v9369, %v9580
    %v9605 = vadd.f32 %v9373, %v9580
    %v9606 = vadd.f32 %v9379, %v9580
    %v9607 = vadd.f32 %v9383, %v9580
    %v9608 = vadd.f32 %v9389, %v9580
    %v9609 = vadd.f32 %v9393, %v9580
    %v9610 = vadd.f32 %v9399, %v9580
    %v9611 = vadd.f32 %v9403, %v9580
    %v9612 = vadd.f32 %v9409, %v9580
    %v9613 = vadd.f32 %v9413, %v9580
    %v9614 = vadd.f32 %v9419, %v9580
    %v9615 = vadd.f32 %v9423, %v9580
    %v9616 = vadd.f32 %v9429, %v9580
    %v9617 = vadd.f32 %v9433, %v9580
    %v9618 = vadd.f32 %v9439, %v9580
    %v9619 = vadd.f32 %v9443, %v9580
    %v9620 = vadd.f32 %v9449, %v9580
    %v9621 = vadd.f32 %v9453, %v9580
    %v9622 = vadd.f32 %v9459, %v9580
    %v9623 = vadd.f32 %v9463, %v9580
    %v9624 = vadd.f32 %v9469, %v9580
    %v9625 = vadd.f32 %v9473, %v9580
    %v9626 = vadd.f32 %v9479, %v9580
    %v9627 = vadd.f32 %v9483, %v9580
    %v9628 = vadd.f32 %v9489, %v9580
    %v9629 = vadd.f32 %v9493, %v9580
    %v9630 = vadd.f32 %v9499, %v9580
    %v9631 = vadd.f32 %v9503, %v9580
    %v9632 = vadd.f32 %v9509, %v9580
    %v9633 = vadd.f32 %v9513, %v9580
    %v9634 = vadd.f32 %v9519, %v9580
    %v9635 = vadd.f32 %v9523, %v9580
    %v9636 = vadd.f32 %v9529, %v9580
    %v9637 = vadd.f32 %v9533, %v9580
    %v9638 = vadd.f32 %v9539, %v9580
    %v9639 = vadd.f32 %v9543, %v9580
    %v9640 = vadd.f32 %v9549, %v9580
    %v9641 = vadd.f32 %v9553, %v9580
    %v9642 = vadd.f32 %v9559, %v9580
    %v9643 = vadd.f32 %v9563, %v9580
    %v9644 = vadd.f32 %v9569, %v9580
    %v9645 = vadd.f32 %v9573, %v9580
    %v9646 = vadd.f32 %v9257, %v9261
    %v9647 = vadd.f32 %v9646, %v9267
    %v9648 = vadd.f32 %v9647, %v9271
    %v9649 = vadd.f32 %v9648, %v9277
    %v9650 = vadd.f32 %v9649, %v9281
    %v9651 = vadd.f32 %v9650, %v9287
    %v9652 = vadd.f32 %v9651, %v9291
    %v9653 = vadd.f32 %v9652, %v9297
    %v9654 = vadd.f32 %v9653, %v9301
    %v9655 = vadd.f32 %v9654, %v9307
    %v9656 = vadd.f32 %v9655, %v9311
    %v9657 = vadd.f32 %v9656, %v9317
    %v9658 = vadd.f32 %v9657, %v9321
    %v9659 = vadd.f32 %v9658, %v9327
    %v9660 = vadd.f32 %v9659, %v9331
    %v9661 = vadd.f32 %v9660, %v9337
    %v9662 = vadd.f32 %v9661, %v9341
    %v9663 = vadd.f32 %v9662, %v9347
    %v9664 = vadd.f32 %v9663, %v9351
    %v9665 = vadd.f32 %v9664, %v9357
    %v9666 = vadd.f32 %v9665, %v9361
    %v9667 = vadd.f32 %v9666, %v9367
    %v9668 = vadd.f32 %v9667, %v9371
    %v9669 = vadd.f32 %v9668, %v9377
    %v9670 = vadd.f32 %v9669, %v9381
    %v9671 = vadd.f32 %v9670, %v9387
    %v9672 = vadd.f32 %v9671, %v9391
    %v9673 = vadd.f32 %v9672, %v9397
    %v9674 = vadd.f32 %v9673, %v9401
    %v9675 = vadd.f32 %v9674, %v9407
    %v9676 = vadd.f32 %v9675, %v9411
    %v9677 = vadd.f32 %v9676, %v9417
    %v9678 = vadd.f32 %v9677, %v9421
    %v9679 = vadd.f32 %v9678, %v9427
    %v9680 = vadd.f32 %v9679, %v9431
    %v9681 = vadd.f32 %v9680, %v9437
    %v9682 = vadd.f32 %v9681, %v9441
    %v9683 = vadd.f32 %v9682, %v9447
    %v9684 = vadd.f32 %v9683, %v9451
    %v9685 = vadd.f32 %v9684, %v9457
    %v9686 = vadd.f32 %v9685, %v9461
    %v9687 = vadd.f32 %v9686, %v9467
    %v9688 = vadd.f32 %v9687, %v9471
    %v9689 = vadd.f32 %v9688, %v9477
    %v9690 = vadd.f32 %v9689, %v9481
    %v9691 = vadd.f32 %v9690, %v9487
    %v9692 = vadd.f32 %v9691, %v9491
    %v9693 = vadd.f32 %v9692, %v9497
    %v9694 = vadd.f32 %v9693, %v9501
    %v9695 = vadd.f32 %v9694, %v9507
    %v9696 = vadd.f32 %v9695, %v9511
    %v9697 = vadd.f32 %v9696, %v9517
    %v9698 = vadd.f32 %v9697, %v9521
    %v9699 = vadd.f32 %v9698, %v9527
    %v9700 = vadd.f32 %v9699, %v9531
    %v9701 = vadd.f32 %v9700, %v9537
    %v9702 = vadd.f32 %v9701, %v9541
    %v9703 = vadd.f32 %v9702, %v9547
    %v9704 = vadd.f32 %v9703, %v9551
    %v9705 = vadd.f32 %v9704, %v9557
    %v9706 = vadd.f32 %v9705, %v9561
    %v9707 = vadd.f32 %v9706, %v9567
    %v9708 = vadd.f32 %v9707, %v9571
    %v9709 = vrot.slane %v9708, 4
    %v9710 = vadd.f32 %v9708, %v9709
    %v9711 = vrot.slane %v9710, 2
    %v9712 = vadd.f32 %v9710, %v9711
    %v9713 = vrot.slane %v9712, 1
    %v9714 = vadd.f32 %v9712, %v9713
    %v9715 = vmul.f32 %v9714, 0.001953125
    %v9716 = vsub.f32 %v9257, %v9715
    %v9717 = vsub.f32 %v9261, %v9715
    %v9718 = vsub.f32 %v9267, %v9715
    %v9719 = vsub.f32 %v9271, %v9715
    %v9720 = vsub.f32 %v9277, %v9715
    %v9721 = vsub.f32 %v9281, %v9715
    %v9722 = vsub.f32 %v9287, %v9715
    %v9723 = vsub.f32 %v9291, %v9715
    %v9724 = vsub.f32 %v9297, %v9715
    %v9725 = vsub.f32 %v9301, %v9715
    %v9726 = vsub.f32 %v9307, %v9715
    %v9727 = vsub.f32 %v9311, %v9715
    %v9728 = vsub.f32 %v9317, %v9715
    %v9729 = vsub.f32 %v9321, %v9715
    %v9730 = vsub.f32 %v9327, %v9715
    %v9731 = vsub.f32 %v9331, %v9715
    %v9732 = vsub.f32 %v9337, %v9715
    %v9733 = vsub.f32 %v9341, %v9715
    %v9734 = vsub.f32 %v9347, %v9715
    %v9735 = vsub.f32 %v9351, %v9715
    %v9736 = vsub.f32 %v9357, %v9715
    %v9737 = vsub.f32 %v9361, %v9715
    %v9738 = vsub.f32 %v9367, %v9715
    %v9739 = vsub.f32 %v9371, %v9715
    %v9740 = vsub.f32 %v9377, %v9715
    %v9741 = vsub.f32 %v9381, %v9715
    %v9742 = vsub.f32 %v9387, %v9715
    %v9743 = vsub.f32 %v9391, %v9715
    %v9744 = vsub.f32 %v9397, %v9715
    %v9745 = vsub.f32 %v9401, %v9715
    %v9746 = vsub.f32 %v9407, %v9715
    %v9747 = vsub.f32 %v9411, %v9715
    %v9748 = vsub.f32 %v9417, %v9715
    %v9749 = vsub.f32 %v9421, %v9715
    %v9750 = vsub.f32 %v9427, %v9715
    %v9751 = vsub.f32 %v9431, %v9715
    %v9752 = vsub.f32 %v9437, %v9715
    %v9753 = vsub.f32 %v9441, %v9715
    %v9754 = vsub.f32 %v9447, %v9715
    %v9755 = vsub.f32 %v9451, %v9715
    %v9756 = vsub.f32 %v9457, %v9715
    %v9757 = vsub.f32 %v9461, %v9715
    %v9758 = vsub.f32 %v9467, %v9715
    %v9759 = vsub.f32 %v9471, %v9715
    %v9760 = vsub.f32 %v9477, %v9715
    %v9761 = vsub.f32 %v9481, %v9715
    %v9762 = vsub.f32 %v9487, %v9715
    %v9763 = vsub.f32 %v9491, %v9715
    %v9764 = vsub.f32 %v9497, %v9715
    %v9765 = vsub.f32 %v9501, %v9715
    %v9766 = vsub.f32 %v9507, %v9715
    %v9767 = vsub.f32 %v9511, %v9715
    %v9768 = vsub.f32 %v9517, %v9715
    %v9769 = vsub.f32 %v9521, %v9715
    %v9770 = vsub.f32 %v9527, %v9715
    %v9771 = vsub.f32 %v9531, %v9715
    %v9772 = vsub.f32 %v9537, %v9715
    %v9773 = vsub.f32 %v9541, %v9715
    %v9774 = vsub.f32 %v9547, %v9715
    %v9775 = vsub.f32 %v9551, %v9715
    %v9776 = vsub.f32 %v9557, %v9715
    %v9777 = vsub.f32 %v9561, %v9715
    %v9778 = vsub.f32 %v9567, %v9715
    %v9779 = vsub.f32 %v9571, %v9715
    %v9780 = vmul.f32 %v9716, %v9716
    %v9781 = vmul.f32 %v9717, %v9717
    %v9782 = vmul.f32 %v9718, %v9718
    %v9783 = vmul.f32 %v9719, %v9719
    %v9784 = vmul.f32 %v9720, %v9720
    %v9785 = vmul.f32 %v9721, %v9721
    %v9786 = vmul.f32 %v9722, %v9722
    %v9787 = vmul.f32 %v9723, %v9723
    %v9788 = vmul.f32 %v9724, %v9724
    %v9789 = vmul.f32 %v9725, %v9725
    %v9790 = vmul.f32 %v9726, %v9726
    %v9791 = vmul.f32 %v9727, %v9727
    %v9792 = vmul.f32 %v9728, %v9728
    %v9793 = vmul.f32 %v9729, %v9729
    %v9794 = vmul.f32 %v9730, %v9730
    %v9795 = vmul.f32 %v9731, %v9731
    %v9796 = vmul.f32 %v9732, %v9732
    %v9797 = vmul.f32 %v9733, %v9733
    %v9798 = vmul.f32 %v9734, %v9734
    %v9799 = vmul.f32 %v9735, %v9735
    %v9800 = vmul.f32 %v9736, %v9736
    %v9801 = vmul.f32 %v9737, %v9737
    %v9802 = vmul.f32 %v9738, %v9738
    %v9803 = vmul.f32 %v9739, %v9739
    %v9804 = vmul.f32 %v9740, %v9740
    %v9805 = vmul.f32 %v9741, %v9741
    %v9806 = vmul.f32 %v9742, %v9742
    %v9807 = vmul.f32 %v9743, %v9743
    %v9808 = vmul.f32 %v9744, %v9744
    %v9809 = vmul.f32 %v9745, %v9745
    %v9810 = vmul.f32 %v9746, %v9746
    %v9811 = vmul.f32 %v9747, %v9747
    %v9812 = vmul.f32 %v9748, %v9748
    %v9813 = vmul.f32 %v9749, %v9749
    %v9814 = vmul.f32 %v9750, %v9750
    %v9815 = vmul.f32 %v9751, %v9751
    %v9816 = vmul.f32 %v9752, %v9752
    %v9817 = vmul.f32 %v9753, %v9753
    %v9818 = vmul.f32 %v9754, %v9754
    %v9819 = vmul.f32 %v9755, %v9755
    %v9820 = vmul.f32 %v9756, %v9756
    %v9821 = vmul.f32 %v9757, %v9757
    %v9822 = vmul.f32 %v9758, %v9758
    %v9823 = vmul.f32 %v9759, %v9759
    %v9824 = vmul.f32 %v9760, %v9760
    %v9825 = vmul.f32 %v9761, %v9761
    %v9826 = vmul.f32 %v9762, %v9762
    %v9827 = vmul.f32 %v9763, %v9763
    %v9828 = vmul.f32 %v9764, %v9764
    %v9829 = vmul.f32 %v9765, %v9765
    %v9830 = vmul.f32 %v9766, %v9766
    %v9831 = vmul.f32 %v9767, %v9767
    %v9832 = vmul.f32 %v9768, %v9768
    %v9833 = vmul.f32 %v9769, %v9769
    %v9834 = vmul.f32 %v9770, %v9770
    %v9835 = vmul.f32 %v9771, %v9771
    %v9836 = vmul.f32 %v9772, %v9772
    %v9837 = vmul.f32 %v9773, %v9773
    %v9838 = vmul.f32 %v9774, %v9774
    %v9839 = vmul.f32 %v9775, %v9775
    %v9840 = vmul.f32 %v9776, %v9776
    %v9841 = vmul.f32 %v9777, %v9777
    %v9842 = vmul.f32 %v9778, %v9778
    %v9843 = vmul.f32 %v9779, %v9779
    %v9844 = vadd.f32 %v9780, %v9781
    %v9845 = vadd.f32 %v9844, %v9782
    %v9846 = vadd.f32 %v9845, %v9783
    %v9847 = vadd.f32 %v9846, %v9784
    %v9848 = vadd.f32 %v9847, %v9785
    %v9849 = vadd.f32 %v9848, %v9786
    %v9850 = vadd.f32 %v9849, %v9787
    %v9851 = vadd.f32 %v9850, %v9788
    %v9852 = vadd.f32 %v9851, %v9789
    %v9853 = vadd.f32 %v9852, %v9790
    %v9854 = vadd.f32 %v9853, %v9791
    %v9855 = vadd.f32 %v9854, %v9792
    %v9856 = vadd.f32 %v9855, %v9793
    %v9857 = vadd.f32 %v9856, %v9794
    %v9858 = vadd.f32 %v9857, %v9795
    %v9859 = vadd.f32 %v9858, %v9796
    %v9860 = vadd.f32 %v9859, %v9797
    %v9861 = vadd.f32 %v9860, %v9798
    %v9862 = vadd.f32 %v9861, %v9799
    %v9863 = vadd.f32 %v9862, %v9800
    %v9864 = vadd.f32 %v9863, %v9801
    %v9865 = vadd.f32 %v9864, %v9802
    %v9866 = vadd.f32 %v9865, %v9803
    %v9867 = vadd.f32 %v9866, %v9804
    %v9868 = vadd.f32 %v9867, %v9805
    %v9869 = vadd.f32 %v9868, %v9806
    %v9870 = vadd.f32 %v9869, %v9807
    %v9871 = vadd.f32 %v9870, %v9808
    %v9872 = vadd.f32 %v9871, %v9809
    %v9873 = vadd.f32 %v9872, %v9810
    %v9874 = vadd.f32 %v9873, %v9811
    %v9875 = vadd.f32 %v9874, %v9812
    %v9876 = vadd.f32 %v9875, %v9813
    %v9877 = vadd.f32 %v9876, %v9814
    %v9878 = vadd.f32 %v9877, %v9815
    %v9879 = vadd.f32 %v9878, %v9816
    %v9880 = vadd.f32 %v9879, %v9817
    %v9881 = vadd.f32 %v9880, %v9818
    %v9882 = vadd.f32 %v9881, %v9819
    %v9883 = vadd.f32 %v9882, %v9820
    %v9884 = vadd.f32 %v9883, %v9821
    %v9885 = vadd.f32 %v9884, %v9822
    %v9886 = vadd.f32 %v9885, %v9823
    %v9887 = vadd.f32 %v9886, %v9824
    %v9888 = vadd.f32 %v9887, %v9825
    %v9889 = vadd.f32 %v9888, %v9826
    %v9890 = vadd.f32 %v9889, %v9827
    %v9891 = vadd.f32 %v9890, %v9828
    %v9892 = vadd.f32 %v9891, %v9829
    %v9893 = vadd.f32 %v9892, %v9830
    %v9894 = vadd.f32 %v9893, %v9831
    %v9895 = vadd.f32 %v9894, %v9832
    %v9896 = vadd.f32 %v9895, %v9833
    %v9897 = vadd.f32 %v9896, %v9834
    %v9898 = vadd.f32 %v9897, %v9835
    %v9899 = vadd.f32 %v9898, %v9836
    %v9900 = vadd.f32 %v9899, %v9837
    %v9901 = vadd.f32 %v9900, %v9838
    %v9902 = vadd.f32 %v9901, %v9839
    %v9903 = vadd.f32 %v9902, %v9840
    %v9904 = vadd.f32 %v9903, %v9841
    %v9905 = vadd.f32 %v9904, %v9842
    %v9906 = vadd.f32 %v9905, %v9843
    %v9907 = vrot.slane %v9906, 4
    %v9908 = vadd.f32 %v9906, %v9907
    %v9909 = vrot.slane %v9908, 2
    %v9910 = vadd.f32 %v9908, %v9909
    %v9911 = vrot.slane %v9910, 1
    %v9912 = vadd.f32 %v9910, %v9911
    %v9913 = vmul.f32 %v9912, 0.001953125
    %v9914 = vadd.f32 %v9913, 1e-05
    %v9915 = vrsqrt.pop %v9914
    %v9916 = vld [vmem:[%s7] sm:$0x1]
    %v9917 = vmul.f32 %v9915, %v9916
    %v9918 = vlaneseq
    %v9919 = vshrl.u32 %v9918, 7
    %v9920 = vsub.s32 0, %v9919
    %v9921 = vrot.slane %v9917, %v9920
    %v9922 = vmul.f32 %v9716, %v9921
    %v9923 = vmul.f32 %v9717, %v9921
    %v9924 = vmul.f32 %v9718, %v9921
    %v9925 = vmul.f32 %v9719, %v9921
    %v9926 = vmul.f32 %v9720, %v9921
    %v9927 = vmul.f32 %v9721, %v9921
    %v9928 = vmul.f32 %v9722, %v9921
    %v9929 = vmul.f32 %v9723, %v9921
    %v9930 = vmul.f32 %v9724, %v9921
    %v9931 = vmul.f32 %v9725, %v9921
    %v9932 = vmul.f32 %v9726, %v9921
    %v9933 = vmul.f32 %v9727, %v9921
    %v9934 = vmul.f32 %v9728, %v9921
    %v9935 = vmul.f32 %v9729, %v9921
    %v9936 = vmul.f32 %v9730, %v9921
    %v9937 = vmul.f32 %v9731, %v9921
    %v9938 = vmul.f32 %v9732, %v9921
    %v9939 = vmul.f32 %v9733, %v9921
    %v9940 = vmul.f32 %v9734, %v9921
    %v9941 = vmul.f32 %v9735, %v9921
    %v9942 = vmul.f32 %v9736, %v9921
    %v9943 = vmul.f32 %v9737, %v9921
    %v9944 = vmul.f32 %v9738, %v9921
    %v9945 = vmul.f32 %v9739, %v9921
    %v9946 = vmul.f32 %v9740, %v9921
    %v9947 = vmul.f32 %v9741, %v9921
    %v9948 = vmul.f32 %v9742, %v9921
    %v9949 = vmul.f32 %v9743, %v9921
    %v9950 = vmul.f32 %v9744, %v9921
    %v9951 = vmul.f32 %v9745, %v9921
    %v9952 = vmul.f32 %v9746, %v9921
    %v9953 = vmul.f32 %v9747, %v9921
    %v9954 = vmul.f32 %v9748, %v9921
    %v9955 = vmul.f32 %v9749, %v9921
    %v9956 = vmul.f32 %v9750, %v9921
    %v9957 = vmul.f32 %v9751, %v9921
    %v9958 = vmul.f32 %v9752, %v9921
    %v9959 = vmul.f32 %v9753, %v9921
    %v9960 = vmul.f32 %v9754, %v9921
    %v9961 = vmul.f32 %v9755, %v9921
    %v9962 = vmul.f32 %v9756, %v9921
    %v9963 = vmul.f32 %v9757, %v9921
    %v9964 = vmul.f32 %v9758, %v9921
    %v9965 = vmul.f32 %v9759, %v9921
    %v9966 = vmul.f32 %v9760, %v9921
    %v9967 = vmul.f32 %v9761, %v9921
    %v9968 = vmul.f32 %v9762, %v9921
    %v9969 = vmul.f32 %v9763, %v9921
    %v9970 = vmul.f32 %v9764, %v9921
    %v9971 = vmul.f32 %v9765, %v9921
    %v9972 = vmul.f32 %v9766, %v9921
    %v9973 = vmul.f32 %v9767, %v9921
    %v9974 = vmul.f32 %v9768, %v9921
    %v9975 = vmul.f32 %v9769, %v9921
    %v9976 = vmul.f32 %v9770, %v9921
    %v9977 = vmul.f32 %v9771, %v9921
    %v9978 = vmul.f32 %v9772, %v9921
    %v9979 = vmul.f32 %v9773, %v9921
    %v9980 = vmul.f32 %v9774, %v9921
    %v9981 = vmul.f32 %v9775, %v9921
    %v9982 = vmul.f32 %v9776, %v9921
    %v9983 = vmul.f32 %v9777, %v9921
    %v9984 = vmul.f32 %v9778, %v9921
    %v9985 = vmul.f32 %v9779, %v9921
    %v9986 = vld [vmem:[%s8] sm:$0x1]
    %v9988 = vlaneseq
    %v9989 = vshrl.u32 %v9988, 7
    %v9990 = vsub.s32 0, %v9989
    %v9991 = vrot.slane %v9986, %v9990
    %v9993 = vadd.f32 %v9922, %v9991
    %v9994 = vadd.f32 %v9923, %v9991
    %v9995 = vadd.f32 %v9924, %v9991
    %v9996 = vadd.f32 %v9925, %v9991
    %v9997 = vadd.f32 %v9926, %v9991
    %v9998 = vadd.f32 %v9927, %v9991
    %v9999 = vadd.f32 %v9928, %v9991
    %v10000 = vadd.f32 %v9929, %v9991
    %v10001 = vadd.f32 %v9930, %v9991
    %v10002 = vadd.f32 %v9931, %v9991
    %v10003 = vadd.f32 %v9932, %v9991
    %v10004 = vadd.f32 %v9933, %v9991
    %v10005 = vadd.f32 %v9934, %v9991
    %v10006 = vadd.f32 %v9935, %v9991
    %v10007 = vadd.f32 %v9936, %v9991
    %v10008 = vadd.f32 %v9937, %v9991
    %v10009 = vadd.f32 %v9938, %v9991
    %v10010 = vadd.f32 %v9939, %v9991
    %v10011 = vadd.f32 %v9940, %v9991
    %v10012 = vadd.f32 %v9941, %v9991
    %v10013 = vadd.f32 %v9942, %v9991
    %v10014 = vadd.f32 %v9943, %v9991
    %v10015 = vadd.f32 %v9944, %v9991
    %v10016 = vadd.f32 %v9945, %v9991
    %v10017 = vadd.f32 %v9946, %v9991
    %v10018 = vadd.f32 %v9947, %v9991
    %v10019 = vadd.f32 %v9948, %v9991
    %v10020 = vadd.f32 %v9949, %v9991
    %v10021 = vadd.f32 %v9950, %v9991
    %v10022 = vadd.f32 %v9951, %v9991
    %v10023 = vadd.f32 %v9952, %v9991
    %v10024 = vadd.f32 %v9953, %v9991
    %v10025 = vadd.f32 %v9954, %v9991
    %v10026 = vadd.f32 %v9955, %v9991
    %v10027 = vadd.f32 %v9956, %v9991
    %v10028 = vadd.f32 %v9957, %v9991
    %v10029 = vadd.f32 %v9958, %v9991
    %v10030 = vadd.f32 %v9959, %v9991
    %v10031 = vadd.f32 %v9960, %v9991
    %v10032 = vadd.f32 %v9961, %v9991
    %v10033 = vadd.f32 %v9962, %v9991
    %v10034 = vadd.f32 %v9963, %v9991
    %v10035 = vadd.f32 %v9964, %v9991
    %v10036 = vadd.f32 %v9965, %v9991
    %v10037 = vadd.f32 %v9966, %v9991
    %v10038 = vadd.f32 %v9967, %v9991
    %v10039 = vadd.f32 %v9968, %v9991
    %v10040 = vadd.f32 %v9969, %v9991
    %v10041 = vadd.f32 %v9970, %v9991
    %v10042 = vadd.f32 %v9971, %v9991
    %v10043 = vadd.f32 %v9972, %v9991
    %v10044 = vadd.f32 %v9973, %v9991
    %v10045 = vadd.f32 %v9974, %v9991
    %v10046 = vadd.f32 %v9975, %v9991
    %v10047 = vadd.f32 %v9976, %v9991
    %v10048 = vadd.f32 %v9977, %v9991
    %v10049 = vadd.f32 %v9978, %v9991
    %v10050 = vadd.f32 %v9979, %v9991
    %v10051 = vadd.f32 %v9980, %v9991
    %v10052 = vadd.f32 %v9981, %v9991
    %v10053 = vadd.f32 %v9982, %v9991
    %v10054 = vadd.f32 %v9983, %v9991
    %v10055 = vadd.f32 %v9984, %v9991
    %v10056 = vadd.f32 %v9985, %v9991
    %vm10057 = vcmp.ge.f32.partialorder %v9993, 0.0
    %vm10058 = vcmp.ge.f32.partialorder %v9994, 0.0
    %vm10059 = vcmp.ge.f32.partialorder %v9995, 0.0
    %vm10060 = vcmp.ge.f32.partialorder %v9996, 0.0
    %vm10061 = vcmp.ge.f32.partialorder %v9997, 0.0
    %vm10062 = vcmp.ge.f32.partialorder %v9998, 0.0
    %vm10063 = vcmp.ge.f32.partialorder %v9999, 0.0
    %vm10064 = vcmp.ge.f32.partialorder %v10000, 0.0
    %vm10065 = vcmp.ge.f32.partialorder %v10001, 0.0
    %vm10066 = vcmp.ge.f32.partialorder %v10002, 0.0
    %vm10067 = vcmp.ge.f32.partialorder %v10003, 0.0
    %vm10068 = vcmp.ge.f32.partialorder %v10004, 0.0
    %vm10069 = vcmp.ge.f32.partialorder %v10005, 0.0
    %vm10070 = vcmp.ge.f32.partialorder %v10006, 0.0
    %vm10071 = vcmp.ge.f32.partialorder %v10007, 0.0
    %vm10072 = vcmp.ge.f32.partialorder %v10008, 0.0
    %vm10073 = vcmp.ge.f32.partialorder %v10009, 0.0
    %vm10074 = vcmp.ge.f32.partialorder %v10010, 0.0
    %vm10075 = vcmp.ge.f32.partialorder %v10011, 0.0
    %vm10076 = vcmp.ge.f32.partialorder %v10012, 0.0
    %vm10077 = vcmp.ge.f32.partialorder %v10013, 0.0
    %vm10078 = vcmp.ge.f32.partialorder %v10014, 0.0
    %vm10079 = vcmp.ge.f32.partialorder %v10015, 0.0
    %vm10080 = vcmp.ge.f32.partialorder %v10016, 0.0
    %vm10081 = vcmp.ge.f32.partialorder %v10017, 0.0
    %vm10082 = vcmp.ge.f32.partialorder %v10018, 0.0
    %vm10083 = vcmp.ge.f32.partialorder %v10019, 0.0
    %vm10084 = vcmp.ge.f32.partialorder %v10020, 0.0
    %vm10085 = vcmp.ge.f32.partialorder %v10021, 0.0
    %vm10086 = vcmp.ge.f32.partialorder %v10022, 0.0
    %vm10087 = vcmp.ge.f32.partialorder %v10023, 0.0
    %vm10088 = vcmp.ge.f32.partialorder %v10024, 0.0
    %vm10089 = vcmp.ge.f32.partialorder %v10025, 0.0
    %vm10090 = vcmp.ge.f32.partialorder %v10026, 0.0
    %vm10091 = vcmp.ge.f32.partialorder %v10027, 0.0
    %vm10092 = vcmp.ge.f32.partialorder %v10028, 0.0
    %vm10093 = vcmp.ge.f32.partialorder %v10029, 0.0
    %vm10094 = vcmp.ge.f32.partialorder %v10030, 0.0
    %vm10095 = vcmp.ge.f32.partialorder %v10031, 0.0
    %vm10096 = vcmp.ge.f32.partialorder %v10032, 0.0
    %vm10097 = vcmp.ge.f32.partialorder %v10033, 0.0
    %vm10098 = vcmp.ge.f32.partialorder %v10034, 0.0
    %vm10099 = vcmp.ge.f32.partialorder %v10035, 0.0
    %vm10100 = vcmp.ge.f32.partialorder %v10036, 0.0
    %vm10101 = vcmp.ge.f32.partialorder %v10037, 0.0
    %vm10102 = vcmp.ge.f32.partialorder %v10038, 0.0
    %vm10103 = vcmp.ge.f32.partialorder %v10039, 0.0
    %vm10104 = vcmp.ge.f32.partialorder %v10040, 0.0
    %vm10105 = vcmp.ge.f32.partialorder %v10041, 0.0
    %vm10106 = vcmp.ge.f32.partialorder %v10042, 0.0
    %vm10107 = vcmp.ge.f32.partialorder %v10043, 0.0
    %vm10108 = vcmp.ge.f32.partialorder %v10044, 0.0
    %vm10109 = vcmp.ge.f32.partialorder %v10045, 0.0
    %vm10110 = vcmp.ge.f32.partialorder %v10046, 0.0
    %vm10111 = vcmp.ge.f32.partialorder %v10047, 0.0
    %vm10112 = vcmp.ge.f32.partialorder %v10048, 0.0
    %vm10113 = vcmp.ge.f32.partialorder %v10049, 0.0
    %vm10114 = vcmp.ge.f32.partialorder %v10050, 0.0
    %vm10115 = vcmp.ge.f32.partialorder %v10051, 0.0
    %vm10116 = vcmp.ge.f32.partialorder %v10052, 0.0
    %vm10117 = vcmp.ge.f32.partialorder %v10053, 0.0
    %vm10118 = vcmp.ge.f32.partialorder %v10054, 0.0
    %vm10119 = vcmp.ge.f32.partialorder %v10055, 0.0
    %vm10120 = vcmp.ge.f32.partialorder %v10056, 0.0
    %v10121 = vstv %s54
    %v10122 = vmul.f32 %v10121, %v9993
    %v10123 = vmul.f32 %v10121, %v9994
    %v10124 = vmul.f32 %v10121, %v9995
    %v10125 = vmul.f32 %v10121, %v9996
    %v10126 = vmul.f32 %v10121, %v9997
    %v10127 = vmul.f32 %v10121, %v9998
    %v10128 = vmul.f32 %v10121, %v9999
    %v10129 = vmul.f32 %v10121, %v10000
    %v10130 = vmul.f32 %v10121, %v10001
    %v10131 = vmul.f32 %v10121, %v10002
    %v10132 = vmul.f32 %v10121, %v10003
    %v10133 = vmul.f32 %v10121, %v10004
    %v10134 = vmul.f32 %v10121, %v10005
    %v10135 = vmul.f32 %v10121, %v10006
    %v10136 = vmul.f32 %v10121, %v10007
    %v10137 = vmul.f32 %v10121, %v10008
    %v10138 = vmul.f32 %v10121, %v10009
    %v10139 = vmul.f32 %v10121, %v10010
    %v10140 = vmul.f32 %v10121, %v10011
    %v10141 = vmul.f32 %v10121, %v10012
    %v10142 = vmul.f32 %v10121, %v10013
    %v10143 = vmul.f32 %v10121, %v10014
    %v10144 = vmul.f32 %v10121, %v10015
    %v10145 = vmul.f32 %v10121, %v10016
    %v10146 = vmul.f32 %v10121, %v10017
    %v10147 = vmul.f32 %v10121, %v10018
    %v10148 = vmul.f32 %v10121, %v10019
    %v10149 = vmul.f32 %v10121, %v10020
    %v10150 = vmul.f32 %v10121, %v10021
    %v10151 = vmul.f32 %v10121, %v10022
    %v10152 = vmul.f32 %v10121, %v10023
    %v10153 = vmul.f32 %v10121, %v10024
    %v10154 = vmul.f32 %v10121, %v10025
    %v10155 = vmul.f32 %v10121, %v10026
    %v10156 = vmul.f32 %v10121, %v10027
    %v10157 = vmul.f32 %v10121, %v10028
    %v10158 = vmul.f32 %v10121, %v10029
    %v10159 = vmul.f32 %v10121, %v10030
    %v10160 = vmul.f32 %v10121, %v10031
    %v10161 = vmul.f32 %v10121, %v10032
    %v10162 = vmul.f32 %v10121, %v10033
    %v10163 = vmul.f32 %v10121, %v10034
    %v10164 = vmul.f32 %v10121, %v10035
    %v10165 = vmul.f32 %v10121, %v10036
    %v10166 = vmul.f32 %v10121, %v10037
    %v10167 = vmul.f32 %v10121, %v10038
    %v10168 = vmul.f32 %v10121, %v10039
    %v10169 = vmul.f32 %v10121, %v10040
    %v10170 = vmul.f32 %v10121, %v10041
    %v10171 = vmul.f32 %v10121, %v10042
    %v10172 = vmul.f32 %v10121, %v10043
    %v10173 = vmul.f32 %v10121, %v10044
    %v10174 = vmul.f32 %v10121, %v10045
    %v10175 = vmul.f32 %v10121, %v10046
    %v10176 = vmul.f32 %v10121, %v10047
    %v10177 = vmul.f32 %v10121, %v10048
    %v10178 = vmul.f32 %v10121, %v10049
    %v10179 = vmul.f32 %v10121, %v10050
    %v10180 = vmul.f32 %v10121, %v10051
    %v10181 = vmul.f32 %v10121, %v10052
    %v10182 = vmul.f32 %v10121, %v10053
    %v10183 = vmul.f32 %v10121, %v10054
    %v10184 = vmul.f32 %v10121, %v10055
    %v10185 = vmul.f32 %v10121, %v10056
    %v10186 = vsel %vm10057, %v9993, %v10122
    %v10187 = vsel %vm10058, %v9994, %v10123
    %v10188 = vsel %vm10059, %v9995, %v10124
    %v10189 = vsel %vm10060, %v9996, %v10125
    %v10190 = vsel %vm10061, %v9997, %v10126
    %v10191 = vsel %vm10062, %v9998, %v10127
    %v10192 = vsel %vm10063, %v9999, %v10128
    %v10193 = vsel %vm10064, %v10000, %v10129
    %v10194 = vsel %vm10065, %v10001, %v10130
    %v10195 = vsel %vm10066, %v10002, %v10131
    %v10196 = vsel %vm10067, %v10003, %v10132
    %v10197 = vsel %vm10068, %v10004, %v10133
    %v10198 = vsel %vm10069, %v10005, %v10134
    %v10199 = vsel %vm10070, %v10006, %v10135
    %v10200 = vsel %vm10071, %v10007, %v10136
    %v10201 = vsel %vm10072, %v10008, %v10137
    %v10202 = vsel %vm10073, %v10009, %v10138
    %v10203 = vsel %vm10074, %v10010, %v10139
    %v10204 = vsel %vm10075, %v10011, %v10140
    %v10205 = vsel %vm10076, %v10012, %v10141
    %v10206 = vsel %vm10077, %v10013, %v10142
    %v10207 = vsel %vm10078, %v10014, %v10143
    %v10208 = vsel %vm10079, %v10015, %v10144
    %v10209 = vsel %vm10080, %v10016, %v10145
    %v10210 = vsel %vm10081, %v10017, %v10146
    %v10211 = vsel %vm10082, %v10018, %v10147
    %v10212 = vsel %vm10083, %v10019, %v10148
    %v10213 = vsel %vm10084, %v10020, %v10149
    %v10214 = vsel %vm10085, %v10021, %v10150
    %v10215 = vsel %vm10086, %v10022, %v10151
    %v10216 = vsel %vm10087, %v10023, %v10152
    %v10217 = vsel %vm10088, %v10024, %v10153
    %v10218 = vsel %vm10089, %v10025, %v10154
    %v10219 = vsel %vm10090, %v10026, %v10155
    %v10220 = vsel %vm10091, %v10027, %v10156
    %v10221 = vsel %vm10092, %v10028, %v10157
    %v10222 = vsel %vm10093, %v10029, %v10158
    %v10223 = vsel %vm10094, %v10030, %v10159
    %v10224 = vsel %vm10095, %v10031, %v10160
    %v10225 = vsel %vm10096, %v10032, %v10161
    %v10226 = vsel %vm10097, %v10033, %v10162
    %v10227 = vsel %vm10098, %v10034, %v10163
    %v10228 = vsel %vm10099, %v10035, %v10164
    %v10229 = vsel %vm10100, %v10036, %v10165
    %v10230 = vsel %vm10101, %v10037, %v10166
    %v10231 = vsel %vm10102, %v10038, %v10167
    %v10232 = vsel %vm10103, %v10039, %v10168
    %v10233 = vsel %vm10104, %v10040, %v10169
    %v10234 = vsel %vm10105, %v10041, %v10170
    %v10235 = vsel %vm10106, %v10042, %v10171
    %v10236 = vsel %vm10107, %v10043, %v10172
    %v10237 = vsel %vm10108, %v10044, %v10173
    %v10238 = vsel %vm10109, %v10045, %v10174
    %v10239 = vsel %vm10110, %v10046, %v10175
    %v10240 = vsel %vm10111, %v10047, %v10176
    %v10241 = vsel %vm10112, %v10048, %v10177
    %v10242 = vsel %vm10113, %v10049, %v10178
    %v10243 = vsel %vm10114, %v10050, %v10179
    %v10244 = vsel %vm10115, %v10051, %v10180
    %v10245 = vsel %vm10116, %v10052, %v10181
    %v10246 = vsel %vm10117, %v10053, %v10182
    %v10247 = vsel %vm10118, %v10054, %v10183
    %v10248 = vsel %vm10119, %v10055, %v10184
    %v10249 = vsel %vm10120, %v10056, %v10185
    %v10250 = vadd.f32 %v10186, %v9582
    %v10251 = vadd.f32 %v10187, %v9583
    %v10252 = vadd.f32 %v10188, %v9584
    %v10253 = vadd.f32 %v10189, %v9585
    %v10254 = vadd.f32 %v10190, %v9586
    %v10255 = vadd.f32 %v10191, %v9587
    %v10256 = vadd.f32 %v10192, %v9588
    %v10257 = vadd.f32 %v10193, %v9589
    %v10258 = vadd.f32 %v10194, %v9590
    %v10259 = vadd.f32 %v10195, %v9591
    %v10260 = vadd.f32 %v10196, %v9592
    %v10261 = vadd.f32 %v10197, %v9593
    %v10262 = vadd.f32 %v10198, %v9594
    %v10263 = vadd.f32 %v10199, %v9595
    %v10264 = vadd.f32 %v10200, %v9596
    %v10265 = vadd.f32 %v10201, %v9597
    %v10266 = vadd.f32 %v10202, %v9598
    %v10267 = vadd.f32 %v10203, %v9599
    %v10268 = vadd.f32 %v10204, %v9600
    %v10269 = vadd.f32 %v10205, %v9601
    %v10270 = vadd.f32 %v10206, %v9602
    %v10271 = vadd.f32 %v10207, %v9603
    %v10272 = vadd.f32 %v10208, %v9604
    %v10273 = vadd.f32 %v10209, %v9605
    %v10274 = vadd.f32 %v10210, %v9606
    %v10275 = vadd.f32 %v10211, %v9607
    %v10276 = vadd.f32 %v10212, %v9608
    %v10277 = vadd.f32 %v10213, %v9609
    %v10278 = vadd.f32 %v10214, %v9610
    %v10279 = vadd.f32 %v10215, %v9611
    %v10280 = vadd.f32 %v10216, %v9612
    %v10281 = vadd.f32 %v10217, %v9613
    %v10282 = vadd.f32 %v10218, %v9614
    %v10283 = vadd.f32 %v10219, %v9615
    %v10284 = vadd.f32 %v10220, %v9616
    %v10285 = vadd.f32 %v10221, %v9617
    %v10286 = vadd.f32 %v10222, %v9618
    %v10287 = vadd.f32 %v10223, %v9619
    %v10288 = vadd.f32 %v10224, %v9620
    %v10289 = vadd.f32 %v10225, %v9621
    %v10290 = vadd.f32 %v10226, %v9622
    %v10291 = vadd.f32 %v10227, %v9623
    %v10292 = vadd.f32 %v10228, %v9624
    %v10293 = vadd.f32 %v10229, %v9625
    %v10294 = vadd.f32 %v10230, %v9626
    %v10295 = vadd.f32 %v10231, %v9627
    %v10296 = vadd.f32 %v10232, %v9628
    %v10297 = vadd.f32 %v10233, %v9629
    %v10298 = vadd.f32 %v10234, %v9630
    %v10299 = vadd.f32 %v10235, %v9631
    %v10300 = vadd.f32 %v10236, %v9632
    %v10301 = vadd.f32 %v10237, %v9633
    %v10302 = vadd.f32 %v10238, %v9634
    %v10303 = vadd.f32 %v10239, %v9635
    %v10304 = vadd.f32 %v10240, %v9636
    %v10305 = vadd.f32 %v10241, %v9637
    %v10306 = vadd.f32 %v10242, %v9638
    %v10307 = vadd.f32 %v10243, %v9639
    %v10308 = vadd.f32 %v10244, %v9640
    %v10309 = vadd.f32 %v10245, %v9641
    %v10310 = vadd.f32 %v10246, %v9642
    %v10311 = vadd.f32 %v10247, %v9643
    %v10312 = vadd.f32 %v10248, %v9644
    %v10313 = vadd.f32 %v10249, %v9645
    %10314 = vst [vmem:[#allocation7] sm:$0xff] %v10250
    %10315 = vst [vmem:[#allocation7 + $0x8] sm:$0xff] %v10251
    %10316 = vst [vmem:[#allocation7 + $0x10] sm:$0xff] %v10252
    %10317 = vst [vmem:[#allocation7 + $0x18] sm:$0xff] %v10253
    %10318 = vst [vmem:[#allocation7 + $0x20] sm:$0xff] %v10254
    %10319 = vst [vmem:[#allocation7 + $0x28] sm:$0xff] %v10255
    %10320 = vst [vmem:[#allocation7 + $0x30] sm:$0xff] %v10256
    %10321 = vst [vmem:[#allocation7 + $0x38] sm:$0xff] %v10257
    %10322 = vst [vmem:[#allocation7 + $0x40] sm:$0xff] %v10258
    %10323 = vst [vmem:[#allocation7 + $0x48] sm:$0xff] %v10259
    %10324 = vst [vmem:[#allocation7 + $0x50] sm:$0xff] %v10260
    %10325 = vst [vmem:[#allocation7 + $0x58] sm:$0xff] %v10261
    %10326 = vst [vmem:[#allocation7 + $0x60] sm:$0xff] %v10262
    %10327 = vst [vmem:[#allocation7 + $0x68] sm:$0xff] %v10263
    %10328 = vst [vmem:[#allocation7 + $0x70] sm:$0xff] %v10264
    %10329 = vst [vmem:[#allocation7 + $0x78] sm:$0xff] %v10265
    %10330 = vst [vmem:[#allocation7 + $0x80] sm:$0xff] %v10266
    %10331 = vst [vmem:[#allocation7 + $0x88] sm:$0xff] %v10267
    %10332 = vst [vmem:[#allocation7 + $0x90] sm:$0xff] %v10268
    %10333 = vst [vmem:[#allocation7 + $0x98] sm:$0xff] %v10269
    %10334 = vst [vmem:[#allocation7 + $0xa0] sm:$0xff] %v10270
    %10335 = vst [vmem:[#allocation7 + $0xa8] sm:$0xff] %v10271
    %10336 = vst [vmem:[#allocation7 + $0xb0] sm:$0xff] %v10272
    %10337 = vst [vmem:[#allocation7 + $0xb8] sm:$0xff] %v10273
    %10338 = vst [vmem:[#allocation7 + $0xc0] sm:$0xff] %v10274
    %10339 = vst [vmem:[#allocation7 + $0xc8] sm:$0xff] %v10275
    %10340 = vst [vmem:[#allocation7 + $0xd0] sm:$0xff] %v10276
    %10341 = vst [vmem:[#allocation7 + $0xd8] sm:$0xff] %v10277
    %10342 = vst [vmem:[#allocation7 + $0xe0] sm:$0xff] %v10278
    %10343 = vst [vmem:[#allocation7 + $0xe8] sm:$0xff] %v10279
    %10344 = vst [vmem:[#allocation7 + $0xf0] sm:$0xff] %v10280
    %10345 = vst [vmem:[#allocation7 + $0xf8] sm:$0xff] %v10281
    %10346 = vst [vmem:[#allocation7 + $0x100] sm:$0xff] %v10282
    %10347 = vst [vmem:[#allocation7 + $0x108] sm:$0xff] %v10283
    %10348 = vst [vmem:[#allocation7 + $0x110] sm:$0xff] %v10284
    %10349 = vst [vmem:[#allocation7 + $0x118] sm:$0xff] %v10285
    %10350 = vst [vmem:[#allocation7 + $0x120] sm:$0xff] %v10286
    %10351 = vst [vmem:[#allocation7 + $0x128] sm:$0xff] %v10287
    %10352 = vst [vmem:[#allocation7 + $0x130] sm:$0xff] %v10288
    %10353 = vst [vmem:[#allocation7 + $0x138] sm:$0xff] %v10289
    %10354 = vst [vmem:[#allocation7 + $0x140] sm:$0xff] %v10290
    %10355 = vst [vmem:[#allocation7 + $0x148] sm:$0xff] %v10291
    %10356 = vst [vmem:[#allocation7 + $0x150] sm:$0xff] %v10292
    %10357 = vst [vmem:[#allocation7 + $0x158] sm:$0xff] %v10293
    %10358 = vst [vmem:[#allocation7 + $0x160] sm:$0xff] %v10294
    %10359 = vst [vmem:[#allocation7 + $0x168] sm:$0xff] %v10295
    %10360 = vst [vmem:[#allocation7 + $0x170] sm:$0xff] %v10296
    %10361 = vst [vmem:[#allocation7 + $0x178] sm:$0xff] %v10297
    %10362 = vst [vmem:[#allocation7 + $0x180] sm:$0xff] %v10298
    %10363 = vst [vmem:[#allocation7 + $0x188] sm:$0xff] %v10299
    %10364 = vst [vmem:[#allocation7 + $0x190] sm:$0xff] %v10300
    %10365 = vst [vmem:[#allocation7 + $0x198] sm:$0xff] %v10301
    %10366 = vst [vmem:[#allocation7 + $0x1a0] sm:$0xff] %v10302
    %10367 = vst [vmem:[#allocation7 + $0x1a8] sm:$0xff] %v10303
    %10368 = vst [vmem:[#allocation7 + $0x1b0] sm:$0xff] %v10304
    %10369 = vst [vmem:[#allocation7 + $0x1b8] sm:$0xff] %v10305
    %10370 = vst [vmem:[#allocation7 + $0x1c0] sm:$0xff] %v10306
    %10371 = vst [vmem:[#allocation7 + $0x1c8] sm:$0xff] %v10307
    %10372 = vst [vmem:[#allocation7 + $0x1d0] sm:$0xff] %v10308
    %10373 = vst [vmem:[#allocation7 + $0x1d8] sm:$0xff] %v10309
    %10374 = vst [vmem:[#allocation7 + $0x1e0] sm:$0xff] %v10310
    %10375 = vst [vmem:[#allocation7 + $0x1e8] sm:$0xff] %v10311
    %10376 = vst [vmem:[#allocation7 + $0x1f0] sm:$0xff] %v10312
    %10377 = vst [vmem:[#allocation7 + $0x1f8] sm:$0xff] %v10313
    // Predicated region
    $region50: #{decoder_block_forward.1} parent=1 // pred_check
      _
    $region51: #{decoder_block_forward.1} parent=1 // pred_check_branch
      %10379 = sbr.rel (0) target = $region53
    $region52: #{decoder_block_forward.1} parent=1 // pred_region
      %s10381 = ssub.s32 8192, 8192
      %10382 = vsyncadd [#allocation5], %s10381
      %s10383 = sshll.u32 [#allocation7], 4
      %s10384 = int_to_ptr.vmem [resolvable:$true] %s10383
      %10389 = dma.vmem_to_hbm [thread:$0]  %s10384, 8192, %s11, [#allocation5], 128, 128, 8
    $region53: #{decoder_block_forward.1} parent=1 // pred_fallthru
      _
    // Predicated region
    $region54: #{decoder_block_forward.1} parent=1 // pred_check
      _
    $region55: #{decoder_block_forward.1} parent=1 // pred_check_branch
      %10391 = sbr.rel (0) target = $region57
    $region56: #{decoder_block_forward.1} parent=1 // pred_region
      %10392 = dma.done [#allocation5], 8192
    $region57: #{decoder_block_forward.1} parent=1 // pred_fallthru
      _
    %10393 = vsyncpa [#allocation5], 1
    %10394 = vsyncpa [#allocation6], 1

</llo_original>
